<compile_context>
chip_gen: v6e
topology: v6e:2x2x1
jax: 0.10.0
libtpu: 0.0.40
codegen_flags: <defaults>
</compile_context>

<pallas_src>
import jax
import jax.numpy as jnp
from jax.experimental import pallas as pl
from jax.experimental.pallas import tpu as pltpu

# ----------------------------- synthetic config -----------------------------
VOCAB_SIZE = 32
PAD_TOKEN_ID = 0
EMBEDDING_SIZE = 36               # divisible by 4 (atom props) and 3 (bond props)
POS_DIM = 20
HIDDEN_SIZE = 3 * EMBEDDING_SIZE + POS_DIM   # 36 + 20 + 36 + 36 = 128
LN_EPS = 1e-12

NUM_TOKEN_TYPES = 8
TOKEN_TYPE_DESC = 5
TOKEN_TYPE_TGT = 6

N_HYBRIDIZATION = 8               # len(HybridizationType.values)
N_CHIRAL = 4                      # len(ChiralType.values)
N_STEREO = 6                      # len(StereoType.values)

E4 = EMBEDDING_SIZE // 4          # per-atom-property embedding size (9)
E3 = EMBEDDING_SIZE // 3          # per-bond-property embedding size (12)

# column offsets of the concatenated hidden vector [inp | pos | type | prop]
OFF_INP = 0
OFF_POS = EMBEDDING_SIZE
OFF_TYPE = EMBEDDING_SIZE + POS_DIM
OFF_PROP = 2 * EMBEDDING_SIZE + POS_DIM

# merged lookup table layout: (num_rows, column_offset) per source table, in the
# same order as the packed id columns.  Rows [0:POS_DIM) of the merged table are
# reserved for the pos-identity block, so all table row offsets start at POS_DIM.
TABLE_LAYOUT = (
    (VOCAB_SIZE, OFF_INP),                       # word
    (NUM_TOKEN_TYPES, OFF_TYPE),                 # token type
    (3, OFF_PROP + 0 * E4),                      # in_ring
    (4, OFF_PROP + 1 * E4),                      # charge
    (N_HYBRIDIZATION + 1, OFF_PROP + 2 * E4),    # hybridization
    (N_CHIRAL + 1, OFF_PROP + 3 * E4),           # chirality
    (3, OFF_PROP + 0 * E3),                      # aromatic      (overlaps atom cols)
    (3, OFF_PROP + 1 * E3),                      # conjugated    (overlaps atom cols)
    (N_STEREO + 1, OFF_PROP + 2 * E3),           # stereo        (overlaps atom cols)
)
_row_offsets = []
_acc = POS_DIM                       # rows [0:POS_DIM) = pos identity
for _rows, _ in TABLE_LAYOUT:
    _row_offsets.append(_acc)
    _acc += _rows
ROW_OFFSETS = tuple(_row_offsets)    # (20, 52, 60, 63, 67, 76, 81, 84, 87)
TOTAL_ROWS = _acc                    # 94
MERGED_K = 128                       # merged table rows padded to one MXU tile
assert TOTAL_ROWS <= MERGED_K
assert MERGED_K == HIDDEN_SIZE       # lets the kernel reuse a single lane iota

NUM_IDS = 9                          # input_id, token_type, 4 atom props, 3 bond props
PACK_W = 16                          # 9 ids + 2 bitcast f32 scalars + 5 pad lanes

# token-type compare constants after the host-side row-offset pre-add
TT_DESC_OFF = TOKEN_TYPE_DESC + ROW_OFFSETS[1]
TT_TGT_OFF = TOKEN_TYPE_TGT + ROW_OFFSETS[1]


# --------------------------------- kernel -----------------------------------
def molt_embeddings_kernel(packed_ref, pos_ref, table_ref, gamma_ref, beta_ref,
                           out_ref):
    packed = packed_ref[...]                        # (TM, 16) int32, ids pre-offset
    tm = packed.shape[0]

    # lanes [9,11) carry mol_desc / target_value as f32 bit patterns
    packed_f = pltpu.bitcast(packed, jnp.float32)   # reinterpret, no data movement
    desc_val = packed_f[:, NUM_IDS:NUM_IDS + 1]     # (TM, 1)
    tgt_val = packed_f[:, NUM_IDS + 1:NUM_IDS + 2]  # (TM, 1)

    # MolDescriptorEmbedder / RegressionTargetEmbedder scale, (TM,1) narrow ops:
    #   inp *= (1 + desc_mask*desc) * (1 + tgt_mask*tgt)
    tt = packed[:, 1:2]                             # token_type id + row offset
    scale_row = (1.0 + jnp.where(tt == TT_DESC_OFF, desc_val, 0.0)) * \
                (1.0 + jnp.where(tt == TT_TGT_OFF, tgt_val, 0.0))

    lane = jax.lax.broadcasted_iota(jnp.int32, (tm, MERGED_K), 1)

    # LHS init: pos placed into LHS lanes [0:POS_DIM); identity rows of the
    # merged table route it to output columns [OFF_POS:OFF_POS+POS_DIM).
    pos = pos_ref[...]                              # (TM, POS_DIM) f32
    mh = jnp.concatenate(
        [pos, jnp.zeros((tm, MERGED_K - POS_DIM), jnp.float32)], axis=-1)

    # word one-hot carries the desc/target scale (exact: columns [0:E) receive
    # only the word-table contribution)
    mh = mh + (lane == packed[:, 0:1]).astype(jnp.float32) * scale_row
    # remaining 8 ids: plain one-hots (ids already carry their row offsets)
    for c in range(1, NUM_IDS):
        mh = mh + (lane == packed[:, c:c + 1]).astype(jnp.float32)

    # single 128x128 MXU matmul reproduces word + pos + type + (atom + bond)
    emb = jnp.dot(mh, table_ref[...], preferred_element_type=jnp.float32)

    # LayerNorm over the hidden (lane) axis, fused sums + EUP rsqrt
    inv_h = 1.0 / HIDDEN_SIZE
    s1 = jnp.sum(emb, axis=-1, keepdims=True)
    s2 = jnp.sum(emb * emb, axis=-1, keepdims=True)
    mean = s1 * inv_h
    var = s2 * inv_h - mean * mean
    inv = jax.lax.rsqrt(var + LN_EPS)
    out_ref[...] = (emb - mean) * inv * gamma_ref[...] + beta_ref[...]
    # TODO(synk): nn.Dropout omitted (identity in eval mode).


# -------------------------------- wrapper ------------------------------------
def _choose_tile(n, tm_max):
    """Row tile: multiple of 8, grid length >= 2 (even when possible) for v7x."""
    nb = max(2, pl.cdiv(n, tm_max))
    if nb % 2:
        nb += 1
    tm = ((pl.cdiv(n, nb) + 7) // 8) * 8
    return max(tm, 8)


def molt_embeddings(packed, pos, merged_table, gamma, beta, *, tm_max=2048):
    n = packed.shape[0]
    tm = _choose_tile(n, tm_max)
    grid = (pl.cdiv(n, tm),)                        # ragged tail clipped by Pallas
    return pl.pallas_call(
        molt_embeddings_kernel,
        out_shape=jax.ShapeDtypeStruct((n, HIDDEN_SIZE), jnp.float32),
        grid=grid,
        in_specs=[
            pl.BlockSpec((tm, PACK_W), lambda i: (i, 0)),
            pl.BlockSpec((tm, POS_DIM), lambda i: (i, 0)),
            pl.BlockSpec((MERGED_K, HIDDEN_SIZE), lambda i: (0, 0)),  # grid-invariant
            pl.BlockSpec((1, HIDDEN_SIZE), lambda i: (0, 0)),
            pl.BlockSpec((1, HIDDEN_SIZE), lambda i: (0, 0)),
        ],
        out_specs=pl.BlockSpec((tm, HIDDEN_SIZE), lambda i: (i, 0)),
        compiler_params=pltpu.CompilerParams(
            dimension_semantics=("parallel",)),      # rows independent -> both v7x TCs
    )(packed, pos, merged_table, gamma, beta)


# --------------------------- params / glue (plain JAX) -----------------------
def init_params(key):
    ks = jax.random.split(key, 9)

    def emb(k, rows, cols, pad0=True):
        w = 0.02 * jax.random.normal(k, (rows, cols), jnp.float32)
        if pad0:                                    # padding_idx=0 -> zero row
            w = w.at[0].set(0.0)
        return w

    return dict(
        word=emb(ks[0], VOCAB_SIZE, EMBEDDING_SIZE),
        typ=emb(ks[1], NUM_TOKEN_TYPES, EMBEDDING_SIZE, pad0=False),
        ring=emb(ks[2], 3, E4),
        charge=emb(ks[3], 4, E4),
        hyb=emb(ks[4], N_HYBRIDIZATION + 1, E4),
        chir=emb(ks[5], N_CHIRAL + 1, E4),
        arom=emb(ks[6], 3, E3),
        conj=emb(ks[7], 3, E3),
        stereo=emb(ks[8], N_STEREO + 1, E3),
        gamma=jnp.ones((1, HIDDEN_SIZE), jnp.float32),
        beta=jnp.zeros((1, HIDDEN_SIZE), jnp.float32),
    )


def build_merged_table(p):
    """Stack all 9 tables row-wise (placed in their final column ranges) plus a
    POS_DIM x POS_DIM identity block routing pos into its column range."""
    merged = jnp.zeros((MERGED_K, HIDDEN_SIZE), jnp.float32)
    merged = merged.at[0:POS_DIM, OFF_POS:OFF_POS + POS_DIM].set(
        jnp.eye(POS_DIM, dtype=jnp.float32))
    tables = [p['word'], p['typ'], p['ring'], p['charge'], p['hyb'], p['chir'],
              p['arom'], p['conj'], p['stereo']]
    for t, roff, (_, coff) in zip(tables, ROW_OFFSETS, TABLE_LAYOUT):
        merged = merged.at[roff:roff + t.shape[0], coff:coff + t.shape[1]].set(t)
    return merged


def pack_inputs(input_ids, token_type_ids, atom_props, bond_props,
                mol_desc, target_values):
    """Pack 9 ids (pre-offset by merged-table row offsets) + 2 bitcast f32
    scalars into a single (N, 16) int32 operand."""
    n = input_ids.size
    ids = jnp.concatenate([input_ids[..., None], token_type_ids[..., None],
                           atom_props, bond_props],
                          axis=-1).reshape(n, NUM_IDS).astype(jnp.int32)
    ids = ids + jnp.asarray(ROW_OFFSETS, jnp.int32)[None, :]
    scal = jnp.stack([mol_desc, target_values],
                     axis=-1).reshape(n, 2).astype(jnp.float32)
    return jnp.concatenate(
        [ids, jax.lax.bitcast_convert_type(scal, jnp.int32),
         jnp.zeros((n, PACK_W - NUM_IDS - 2), jnp.int32)], axis=-1)


def reference_forward(p, input_ids, token_type_ids, pos, atom_props, bond_props,
                      mol_desc, target_values):
    inp = p['word'][input_ids]
    typ = p['typ'][token_type_ids]
    desc_mask = (token_type_ids == TOKEN_TYPE_DESC)[..., None]
    inp = inp + jnp.where(desc_mask, inp * mol_desc[..., None], 0.0)
    tgt_mask = (token_type_ids == TOKEN_TYPE_TGT)[..., None]
    inp = inp + jnp.where(tgt_mask, inp * target_values[..., None], 0.0)
    atom = jnp.concatenate([p['ring'][atom_props[..., 0]], p['charge'][atom_props[..., 1]],
                            p['hyb'][atom_props[..., 2]], p['chir'][atom_props[..., 3]]], axis=-1)
    bond = jnp.concatenate([p['arom'][bond_props[..., 0]], p['conj'][bond_props[..., 1]],
                            p['stereo'][bond_props[..., 2]]], axis=-1)
    prop = atom + bond
    emb = jnp.concatenate([inp, pos, typ, prop], axis=-1)
    mean = emb.mean(-1, keepdims=True)
    var = ((emb - mean) ** 2).mean(-1, keepdims=True)
    normed = (emb - mean) / jnp.sqrt(var + LN_EPS)
    return normed * p['gamma'][0] + p['beta'][0]


# ----------------------------------- main ------------------------------------
if __name__ == "__main__":
    key = jax.random.PRNGKey(0)
    kp, ki = jax.random.split(key)
    params = init_params(kp)

    B, S = 8, 130                     # N = 1040 rows -> tile 520, grid of 2
    N = B * S
    kk = jax.random.split(ki, 12)
    input_ids = jax.random.randint(kk[0], (B, S), 0, VOCAB_SIZE)
    token_type_ids = jax.random.randint(kk[1], (B, S), 0, NUM_TOKEN_TYPES)
    # pos_embeds arrive flattened with a shape tensor, as in the PyTorch module
    pos_embeds_flat = jax.random.normal(kk[2], (B, S * POS_DIM), jnp.float32)
    pos_embeds_shape = jnp.array([[S, POS_DIM]], dtype=jnp.int32)
    # TODO(synk): unpack_atom_properties/unpack_bond_properties have no reference
    # implementation; properties are supplied pre-stacked along the last axis.
    atom_props = jnp.stack([
        jax.random.randint(kk[3], (B, S), 0, 3),
        jax.random.randint(kk[4], (B, S), 0, 4),
        jax.random.randint(kk[5], (B, S), 0, N_HYBRIDIZATION + 1),
        jax.random.randint(kk[6], (B, S), 0, N_CHIRAL + 1)], axis=-1)
    bond_props = jnp.stack([
        jax.random.randint(kk[7], (B, S), 0, 3),
        jax.random.randint(kk[8], (B, S), 0, 3),
        jax.random.randint(kk[9], (B, S), 0, N_STEREO + 1)], axis=-1)
    mol_desc = jax.random.normal(kk[10], (B, S), jnp.float32)
    target_values = jax.random.normal(kk[11], (B, S), jnp.float32)

    # glue: pos_embeds reshape like the PyTorch forward
    pshape = (B, int(pos_embeds_shape[0, 0]), int(pos_embeds_shape[0, 1]))
    pos = pos_embeds_flat.reshape(pshape)

    packed = pack_inputs(input_ids, token_type_ids, atom_props, bond_props,
                         mol_desc, target_values)
    pos_flat = pos.reshape(N, POS_DIM).astype(jnp.float32)
    merged_table = build_merged_table(params)

    out = molt_embeddings(packed, pos_flat, merged_table,
                          params['gamma'], params['beta'], tm_max=2048)
    out = out.reshape(B, S, HIDDEN_SIZE)
    jax.block_until_ready(out)

    ref = reference_forward(params, input_ids, token_type_ids, pos,
                            atom_props, bond_props, mol_desc, target_values)
    assert jnp.allclose(out, ref, atol=1e-4, rtol=1e-4), "mismatch vs reference"
    print("KERNEL_OK")
</pallas_src>

<mosaic_0001>
module attributes {stable_mosaic.version = 11 : i64} {
  func.func @molt_embeddings_kernel(%arg0: i32, %arg1: memref<520x16xi32, #tpu.memory_space<vmem>>, %arg2: memref<520x20xf32, #tpu.memory_space<vmem>>, %arg3: memref<128x128xf32, #tpu.memory_space<vmem>>, %arg4: memref<1x128xf32, #tpu.memory_space<vmem>>, %arg5: memref<1x128xf32, #tpu.memory_space<vmem>>, %arg6: memref<520x128xf32, #tpu.memory_space<vmem>>) attributes {dimension_semantics = [#tpu.dimension_semantics<parallel>], iteration_bounds = array<i64: 2>, scalar_prefetch = 0 : i64, scratch_operands = 0 : i64, tpu.core_type = #tpu.core_type<tc>, window_params = [{transform_indices = @transform_0, window_bounds = array<i64: 520, 16>}, {transform_indices = @transform_1, window_bounds = array<i64: 520, 20>}, {pipeline_mode = #tpu.pipeline_mode<synchronous>, transform_indices = @transform_2, window_bounds = array<i64: 128, 128>}, {pipeline_mode = #tpu.pipeline_mode<synchronous>, transform_indices = @transform_3, window_bounds = array<i64: 1, 128>}, {pipeline_mode = #tpu.pipeline_mode<synchronous>, transform_indices = @transform_4, window_bounds = array<i64: 1, 128>}, {transform_indices = @transform_5, window_bounds = array<i64: 520, 128>}]} {
    %c0 = arith.constant 0 : index
    %c0_0 = arith.constant 0 : index
    %0 = vector.load %arg1[%c0, %c0_0] : memref<520x16xi32, #tpu.memory_space<vmem>>, vector<520x16xi32>
    %1 = tpu.bitcast %0 : vector<520x16xi32> -> vector<520x16xf32>
    %2 = vector.extract_strided_slice %1 {offsets = [0, 9], sizes = [520, 1], strides = [1, 1]} : vector<520x16xf32> to vector<520x1xf32>
    %3 = vector.extract_strided_slice %1 {offsets = [0, 10], sizes = [520, 1], strides = [1, 1]} : vector<520x16xf32> to vector<520x1xf32>
    %4 = vector.extract_strided_slice %0 {offsets = [0, 1], sizes = [520, 1], strides = [1, 1]} : vector<520x16xi32> to vector<520x1xi32>
    %c57_i32 = arith.constant 57 : i32
    %5 = vector.broadcast %c57_i32 : i32 to vector<520x1xi32>
    %6 = arith.cmpi eq, %4, %5 : vector<520x1xi32>
    %cst = arith.constant 0.000000e+00 : f32
    %7 = vector.broadcast %cst : f32 to vector<520x1xf32>
    %8 = arith.select %6, %2, %7 : vector<520x1xi1>, vector<520x1xf32>
    %cst_1 = arith.constant 1.000000e+00 : f32
    %9 = vector.broadcast %cst_1 : f32 to vector<520x1xf32>
    %10 = arith.addf %9, %8 : vector<520x1xf32>
    %c58_i32 = arith.constant 58 : i32
    %11 = vector.broadcast %c58_i32 : i32 to vector<520x1xi32>
    %12 = arith.cmpi eq, %4, %11 : vector<520x1xi32>
    %cst_2 = arith.constant 0.000000e+00 : f32
    %13 = vector.broadcast %cst_2 : f32 to vector<520x1xf32>
    %14 = arith.select %12, %3, %13 : vector<520x1xi1>, vector<520x1xf32>
    %cst_3 = arith.constant 1.000000e+00 : f32
    %15 = vector.broadcast %cst_3 : f32 to vector<520x1xf32>
    %16 = arith.addf %15, %14 : vector<520x1xf32>
    %17 = arith.mulf %10, %16 : vector<520x1xf32>
    %18 = tpu.iota {dimensions = array<i32: 1>} : vector<520x128xi32>
    %c0_4 = arith.constant 0 : index
    %c0_5 = arith.constant 0 : index
    %19 = vector.load %arg2[%c0_4, %c0_5] : memref<520x20xf32, #tpu.memory_space<vmem>>, vector<520x20xf32>
    %cst_6 = arith.constant 0.000000e+00 : f32
    %20 = vector.broadcast %cst_6 : f32 to vector<520x108xf32>
    %21 = tpu.concatenate %19, %20 in 1 : vector<520x20xf32>, vector<520x108xf32> -> vector<520x128xf32>
    %22 = vector.extract_strided_slice %0 {offsets = [0, 0], sizes = [520, 1], strides = [1, 1]} : vector<520x16xi32> to vector<520x1xi32>
    %23 = vector.broadcast %22 : vector<520x1xi32> to vector<520x128xi32>
    %24 = arith.cmpi eq, %18, %23 : vector<520x128xi32>
    %25 = arith.extui %24 : vector<520x128xi1> to vector<520x128xi32>
    %26 = arith.sitofp %25 : vector<520x128xi32> to vector<520x128xf32>
    %27 = vector.broadcast %17 : vector<520x1xf32> to vector<520x128xf32>
    %28 = arith.mulf %26, %27 : vector<520x128xf32>
    %29 = arith.addf %21, %28 : vector<520x128xf32>
    %30 = vector.extract_strided_slice %0 {offsets = [0, 1], sizes = [520, 1], strides = [1, 1]} : vector<520x16xi32> to vector<520x1xi32>
    %31 = vector.broadcast %30 : vector<520x1xi32> to vector<520x128xi32>
    %32 = arith.cmpi eq, %18, %31 : vector<520x128xi32>
    %33 = arith.extui %32 : vector<520x128xi1> to vector<520x128xi32>
    %34 = arith.sitofp %33 : vector<520x128xi32> to vector<520x128xf32>
    %35 = arith.addf %29, %34 : vector<520x128xf32>
    %36 = vector.extract_strided_slice %0 {offsets = [0, 2], sizes = [520, 1], strides = [1, 1]} : vector<520x16xi32> to vector<520x1xi32>
    %37 = vector.broadcast %36 : vector<520x1xi32> to vector<520x128xi32>
    %38 = arith.cmpi eq, %18, %37 : vector<520x128xi32>
    %39 = arith.extui %38 : vector<520x128xi1> to vector<520x128xi32>
    %40 = arith.sitofp %39 : vector<520x128xi32> to vector<520x128xf32>
    %41 = arith.addf %35, %40 : vector<520x128xf32>
    %42 = vector.extract_strided_slice %0 {offsets = [0, 3], sizes = [520, 1], strides = [1, 1]} : vector<520x16xi32> to vector<520x1xi32>
    %43 = vector.broadcast %42 : vector<520x1xi32> to vector<520x128xi32>
    %44 = arith.cmpi eq, %18, %43 : vector<520x128xi32>
    %45 = arith.extui %44 : vector<520x128xi1> to vector<520x128xi32>
    %46 = arith.sitofp %45 : vector<520x128xi32> to vector<520x128xf32>
    %47 = arith.addf %41, %46 : vector<520x128xf32>
    %48 = vector.extract_strided_slice %0 {offsets = [0, 4], sizes = [520, 1], strides = [1, 1]} : vector<520x16xi32> to vector<520x1xi32>
    %49 = vector.broadcast %48 : vector<520x1xi32> to vector<520x128xi32>
    %50 = arith.cmpi eq, %18, %49 : vector<520x128xi32>
    %51 = arith.extui %50 : vector<520x128xi1> to vector<520x128xi32>
    %52 = arith.sitofp %51 : vector<520x128xi32> to vector<520x128xf32>
    %53 = arith.addf %47, %52 : vector<520x128xf32>
    %54 = vector.extract_strided_slice %0 {offsets = [0, 5], sizes = [520, 1], strides = [1, 1]} : vector<520x16xi32> to vector<520x1xi32>
    %55 = vector.broadcast %54 : vector<520x1xi32> to vector<520x128xi32>
    %56 = arith.cmpi eq, %18, %55 : vector<520x128xi32>
    %57 = arith.extui %56 : vector<520x128xi1> to vector<520x128xi32>
    %58 = arith.sitofp %57 : vector<520x128xi32> to vector<520x128xf32>
    %59 = arith.addf %53, %58 : vector<520x128xf32>
    %60 = vector.extract_strided_slice %0 {offsets = [0, 6], sizes = [520, 1], strides = [1, 1]} : vector<520x16xi32> to vector<520x1xi32>
    %61 = vector.broadcast %60 : vector<520x1xi32> to vector<520x128xi32>
    %62 = arith.cmpi eq, %18, %61 : vector<520x128xi32>
    %63 = arith.extui %62 : vector<520x128xi1> to vector<520x128xi32>
    %64 = arith.sitofp %63 : vector<520x128xi32> to vector<520x128xf32>
    %65 = arith.addf %59, %64 : vector<520x128xf32>
    %66 = vector.extract_strided_slice %0 {offsets = [0, 7], sizes = [520, 1], strides = [1, 1]} : vector<520x16xi32> to vector<520x1xi32>
    %67 = vector.broadcast %66 : vector<520x1xi32> to vector<520x128xi32>
    %68 = arith.cmpi eq, %18, %67 : vector<520x128xi32>
    %69 = arith.extui %68 : vector<520x128xi1> to vector<520x128xi32>
    %70 = arith.sitofp %69 : vector<520x128xi32> to vector<520x128xf32>
    %71 = arith.addf %65, %70 : vector<520x128xf32>
    %72 = vector.extract_strided_slice %0 {offsets = [0, 8], sizes = [520, 1], strides = [1, 1]} : vector<520x16xi32> to vector<520x1xi32>
    %73 = vector.broadcast %72 : vector<520x1xi32> to vector<520x128xi32>
    %74 = arith.cmpi eq, %18, %73 : vector<520x128xi32>
    %75 = arith.extui %74 : vector<520x128xi1> to vector<520x128xi32>
    %76 = arith.sitofp %75 : vector<520x128xi32> to vector<520x128xf32>
    %77 = arith.addf %71, %76 : vector<520x128xf32>
    %c0_7 = arith.constant 0 : index
    %c0_8 = arith.constant 0 : index
    %78 = vector.load %arg3[%c0_7, %c0_8] : memref<128x128xf32, #tpu.memory_space<vmem>>, vector<128x128xf32>
    %cst_9 = arith.constant dense<0.000000e+00> : vector<520x128xf32>
    %79 = tpu.matmul %77, %78, %cst_9 {dimension_numbers = #tpu.dot_dimension_numbers<[1], [0], [0], [1], [0, 0, 1, 1], [], []>} : vector<520x128xf32>, vector<128x128xf32>, vector<520x128xf32> -> vector<520x128xf32>
    %cst_10 = arith.constant dense<0.000000e+00> : vector<520xf32>
    %80 = vector.multi_reduction <add>, %79, %cst_10 [1] : vector<520x128xf32> to vector<520xf32>
    %81 = vector.shape_cast %80 : vector<520xf32> to vector<520x1xf32>
    %82 = arith.mulf %79, %79 : vector<520x128xf32>
    %cst_11 = arith.constant dense<0.000000e+00> : vector<520xf32>
    %83 = vector.multi_reduction <add>, %82, %cst_11 [1] : vector<520x128xf32> to vector<520xf32>
    %84 = vector.shape_cast %83 : vector<520xf32> to vector<520x1xf32>
    %cst_12 = arith.constant 7.812500e-03 : f32
    %85 = vector.broadcast %cst_12 : f32 to vector<520x1xf32>
    %86 = arith.mulf %81, %85 : vector<520x1xf32>
    %cst_13 = arith.constant 7.812500e-03 : f32
    %87 = vector.broadcast %cst_13 : f32 to vector<520x1xf32>
    %88 = arith.mulf %84, %87 : vector<520x1xf32>
    %89 = arith.mulf %86, %86 : vector<520x1xf32>
    %90 = arith.subf %88, %89 : vector<520x1xf32>
    %cst_14 = arith.constant 9.99999996E-13 : f32
    %91 = vector.broadcast %cst_14 : f32 to vector<520x1xf32>
    %92 = arith.addf %90, %91 : vector<520x1xf32>
    %93 = math.rsqrt %92 : vector<520x1xf32>
    %94 = vector.broadcast %86 : vector<520x1xf32> to vector<520x128xf32>
    %95 = arith.subf %79, %94 : vector<520x128xf32>
    %96 = vector.broadcast %93 : vector<520x1xf32> to vector<520x128xf32>
    %97 = arith.mulf %95, %96 : vector<520x128xf32>
    %c0_15 = arith.constant 0 : index
    %c0_16 = arith.constant 0 : index
    %98 = vector.load %arg4[%c0_15, %c0_16] : memref<1x128xf32, #tpu.memory_space<vmem>>, vector<1x128xf32>
    %99 = vector.broadcast %98 : vector<1x128xf32> to vector<520x128xf32>
    %100 = arith.mulf %97, %99 : vector<520x128xf32>
    %c0_17 = arith.constant 0 : index
    %c0_18 = arith.constant 0 : index
    %101 = vector.load %arg5[%c0_17, %c0_18] : memref<1x128xf32, #tpu.memory_space<vmem>>, vector<1x128xf32>
    %102 = vector.broadcast %101 : vector<1x128xf32> to vector<520x128xf32>
    %103 = arith.addf %100, %102 : vector<520x128xf32>
    %c0_19 = arith.constant 0 : index
    %c0_20 = arith.constant 0 : index
    %104 = vector.load %arg6[%c0_19, %c0_20] : memref<520x128xf32, #tpu.memory_space<vmem>>, vector<520x128xf32>
    tpu.vector_store %arg6[%c0_19, %c0_20], %103 {strides = array<i32>} : memref<520x128xf32, #tpu.memory_space<vmem>>, vector<520x128xf32>,
    return
  }
  func.func @transform_0(%arg0: i32) -> (i32, i32) {
    %c0_i32 = arith.constant 0 : i32
    %c0_i32_0 = arith.constant 0 : i32
    return %arg0, %c0_i32 : i32, i32
  }
  func.func @transform_1(%arg0: i32) -> (i32, i32) {
    %c0_i32 = arith.constant 0 : i32
    %c0_i32_0 = arith.constant 0 : i32
    return %arg0, %c0_i32 : i32, i32
  }
  func.func @transform_2(%arg0: i32) -> (i32, i32) {
    %c0_i32 = arith.constant 0 : i32
    %c0_i32_0 = arith.constant 0 : i32
    %c0_i32_1 = arith.constant 0 : i32
    return %c0_i32, %c0_i32_0 : i32, i32
  }
  func.func @transform_3(%arg0: i32) -> (i32, i32) {
    %c0_i32 = arith.constant 0 : i32
    %c0_i32_0 = arith.constant 0 : i32
    %c0_i32_1 = arith.constant 0 : i32
    return %c0_i32, %c0_i32_0 : i32, i32
  }
  func.func @transform_4(%arg0: i32) -> (i32, i32) {
    %c0_i32 = arith.constant 0 : i32
    %c0_i32_0 = arith.constant 0 : i32
    %c0_i32_1 = arith.constant 0 : i32
    return %c0_i32, %c0_i32_0 : i32, i32
  }
  func.func @transform_5(%arg0: i32) -> (i32, i32) {
    %c0_i32 = arith.constant 0 : i32
    %c0_i32_0 = arith.constant 0 : i32
    return %arg0, %c0_i32 : i32, i32
  }
}

</mosaic_0001>

<llo_original>
// kernel: tpu_custom_call.1
$region0: #{tpu_custom_call.1}
  #allocation0 [shape = 'u32[]', space=smem, size = 0x4, offset = 0x4, fixed_abs, tag = 'smem constant byte address 0x4 - core index']
  #allocation1 [shape = 'u32[144,128]{1,0:T(1,128)}', space=vmem, size = 0x12000, scoped, tag = 'internal scratch']
  %s0 = inlined_call_operand.vmem [shape: s32[1040,16], index: 0, kind: input, shape index: {}]
  %s1 = inlined_call_operand.vmem [shape: f32[1040,20], index: 1, kind: input, shape index: {}]
  %s2 = inlined_call_operand.vmem [shape: f32[128,128], index: 2, kind: input, shape index: {}]
  %s3 = inlined_call_operand.vmem [shape: f32[1,128], index: 3, kind: input, shape index: {}]
  %s4 = inlined_call_operand.vmem [shape: f32[1,128], index: 4, kind: input, shape index: {}]
  %s5 = inlined_call_operand.hbm [shape: f32[1040,128], index: 5, kind: output, shape index: {}]
  %s6 = sld [smem:[#allocation0]]
  $region53: #{tpu_custom_call.1} parent=0
    _
  %s8 = ssub.s32 1, %s6
  %s9 = scalar_select 0, %s8, %s6
  $region1: #{tpu_custom_call.1} parent=0
    #allocation2 [shape = 'u8[532480]{0}', space=vmem, size = 0x82000, scoped, tag = 'output window, operand 0']
    #allocation3 [shape = 's32[2]{0}', space=sflag, size = 0x8, scoped, tag = 'scoped memory for tpu_custom_call.1']
    %10 = vsyncpa [#allocation3], 0
    %s11 = scalar_lea.sflag [#allocation3], 1
    %12 = vsyncpa %s11, 0
    loop: start=0, step=1, limit=4
    $region2: #{tpu_custom_call.1} parent=1 // loop_pre_header
      _
    $region3: #{tpu_custom_call.1} parent=1 // loop_header
      %s14 = sphi 0, %s18
      %p15 = scmp.ge.s32.totalorder %s14, 4
      %s24 = sphi 0, %s26
      %s27 = sphi 0, %s24
      %s28 = sphi 0, %s27
      %s44 = sphi 0, %s28
      %s50 = sphi 0, %s52
      %s53 = sphi 0, %s50
      %s54 = sphi 0, %s53
      %s70 = sphi 0, %s54
      %s74 = sphi 0, %s74
      %s76 = sphi 0, %s74
      %s77 = sphi 0, %s76
      %s91 = sphi 0, %s77
      %s95 = sphi 0, %s95
      %s97 = sphi 0, %s95
      %s98 = sphi 0, %s97
      %s112 = sphi 0, %s98
      %s116 = sphi 0, %s116
      %s118 = sphi 0, %s116
      %s119 = sphi 0, %s118
      %s133 = sphi 0, %s119
      %s139 = sphi 0, %s141
      %s142 = sphi 0, %s139
      %s143 = sphi 0, %s142
      %s159 = sphi 0, %s143
    $region4: #{tpu_custom_call.1} parent=1 // loop_header_branch
      %17 = sbr.rel (%p15) target = $region8
    $region5: #{tpu_custom_call.1} parent=1 // loop_body
      %s19 = ssub.s32 %s14, 1
      %s20 = ssub.s32 %s14, 2
      %s21 = sadd.s32 %s14, 1
      %s22 = ssub.s32 %s14, %s21
      %p23 = scmp.eq.s32.totalorder %s22, 0
      %s25 = sadd.s32 %s24, 1
      %s26 = scalar_select %p23, %s24, %s25
      %p29 = pneg %p23
      %p30 = scmp.eq.s32.totalorder %s14, 1
      %p31 = por %p29, %p30
      %p32 = scmp.ne.s32.totalorder %s24, %s27
      %p33 = scmp.eq.s32.totalorder %s14, 0
      %p34 = por %p32, %p33
      %p35 = scmp.ne.s32.totalorder %s24, %s27
      %p36 = scmp.eq.s32.totalorder %s19, 1
      %p37 = por %p35, %p36
      %p38 = scmp.ne.s32.totalorder %s27, %s28
      %p39 = scmp.eq.s32.totalorder %s19, 0
      %p40 = por %p38, %p39
      %p41 = scmp.ne.s32.totalorder %s27, %s28
      %p42 = scmp.eq.s32.totalorder %s20, 1
      %p43 = por %p41, %p42
      %p45 = scmp.ne.s32.totalorder %s28, %s44
      %p46 = scmp.eq.s32.totalorder %s20, 0
      %p47 = por %p45, %p46
      %s48 = ssub.s32 %s14, %s21
      %p49 = scmp.eq.s32.totalorder %s48, 0
      %s51 = sadd.s32 %s50, 1
      %s52 = scalar_select %p49, %s50, %s51
      %p55 = pneg %p49
      %p56 = scmp.eq.s32.totalorder %s14, 1
      %p57 = por %p55, %p56
      %p58 = scmp.ne.s32.totalorder %s50, %s53
      %p59 = scmp.eq.s32.totalorder %s14, 0
      %p60 = por %p58, %p59
      %p61 = scmp.ne.s32.totalorder %s50, %s53
      %p62 = scmp.eq.s32.totalorder %s19, 1
      %p63 = por %p61, %p62
      %p64 = scmp.ne.s32.totalorder %s53, %s54
      %p65 = scmp.eq.s32.totalorder %s19, 0
      %p66 = por %p64, %p65
      %p67 = scmp.ne.s32.totalorder %s53, %s54
      %p68 = scmp.eq.s32.totalorder %s20, 1
      %p69 = por %p67, %p68
      %p71 = scmp.ne.s32.totalorder %s54, %s70
      %p72 = scmp.eq.s32.totalorder %s20, 0
      %p73 = por %p71, %p72
      %s75 = sadd.s32 %s74, 1
      %p78 = scmp.eq.s32.totalorder %s14, 1
      %p79 = scmp.ne.s32.totalorder %s74, %s76
      %p80 = scmp.eq.s32.totalorder %s14, 0
      %p81 = por %p79, %p80
      %p82 = scmp.ne.s32.totalorder %s74, %s76
      %p83 = scmp.eq.s32.totalorder %s19, 1
      %p84 = por %p82, %p83
      %p85 = scmp.ne.s32.totalorder %s76, %s77
      %p86 = scmp.eq.s32.totalorder %s19, 0
      %p87 = por %p85, %p86
      %p88 = scmp.ne.s32.totalorder %s76, %s77
      %p89 = scmp.eq.s32.totalorder %s20, 1
      %p90 = por %p88, %p89
      %p92 = scmp.ne.s32.totalorder %s77, %s91
      %p93 = scmp.eq.s32.totalorder %s20, 0
      %p94 = por %p92, %p93
      %s96 = sadd.s32 %s95, 1
      %p99 = scmp.eq.s32.totalorder %s14, 1
      %p100 = scmp.ne.s32.totalorder %s95, %s97
      %p101 = scmp.eq.s32.totalorder %s14, 0
      %p102 = por %p100, %p101
      %p103 = scmp.ne.s32.totalorder %s95, %s97
      %p104 = scmp.eq.s32.totalorder %s19, 1
      %p105 = por %p103, %p104
      %p106 = scmp.ne.s32.totalorder %s97, %s98
      %p107 = scmp.eq.s32.totalorder %s19, 0
      %p108 = por %p106, %p107
      %p109 = scmp.ne.s32.totalorder %s97, %s98
      %p110 = scmp.eq.s32.totalorder %s20, 1
      %p111 = por %p109, %p110
      %p113 = scmp.ne.s32.totalorder %s98, %s112
      %p114 = scmp.eq.s32.totalorder %s20, 0
      %p115 = por %p113, %p114
      %s117 = sadd.s32 %s116, 1
      %p120 = scmp.eq.s32.totalorder %s14, 1
      %p121 = scmp.ne.s32.totalorder %s116, %s118
      %p122 = scmp.eq.s32.totalorder %s14, 0
      %p123 = por %p121, %p122
      %p124 = scmp.ne.s32.totalorder %s116, %s118
      %p125 = scmp.eq.s32.totalorder %s19, 1
      %p126 = por %p124, %p125
      %p127 = scmp.ne.s32.totalorder %s118, %s119
      %p128 = scmp.eq.s32.totalorder %s19, 0
      %p129 = por %p127, %p128
      %p130 = scmp.ne.s32.totalorder %s118, %s119
      %p131 = scmp.eq.s32.totalorder %s20, 1
      %p132 = por %p130, %p131
      %p134 = scmp.ne.s32.totalorder %s119, %s133
      %p135 = scmp.eq.s32.totalorder %s20, 0
      %p136 = por %p134, %p135
      %s137 = ssub.s32 %s14, %s21
      %p138 = scmp.eq.s32.totalorder %s137, 0
      %s140 = sadd.s32 %s139, 1
      %s141 = scalar_select %p138, %s139, %s140
      %p144 = pneg %p138
      %p145 = scmp.eq.s32.totalorder %s14, 1
      %p146 = por %p144, %p145
      %p147 = scmp.ne.s32.totalorder %s139, %s142
      %p148 = scmp.eq.s32.totalorder %s14, 0
      %p149 = por %p147, %p148
      %p150 = scmp.ne.s32.totalorder %s139, %s142
      %p151 = scmp.eq.s32.totalorder %s19, 1
      %p152 = por %p150, %p151
      %p153 = scmp.ne.s32.totalorder %s142, %s143
      %p154 = scmp.eq.s32.totalorder %s19, 0
      %p155 = por %p153, %p154
      %p156 = scmp.ne.s32.totalorder %s142, %s143
      %p157 = scmp.eq.s32.totalorder %s20, 1
      %p158 = por %p156, %p157
      %p160 = scmp.ne.s32.totalorder %s143, %s159
      %p161 = scmp.eq.s32.totalorder %s20, 0
      %p162 = por %p160, %p161
      %p163 = scmp.le.s32.totalorder 1, %s14
      %p164 = scmp.lt.s32.totalorder %s14, 3
      %p165 = pnand %p163, %p164
      %p166 = pneg %p165
      // Predicated region
      $region9: #{tpu_custom_call.1} parent=5 // pred_check
        _
      $region10: #{tpu_custom_call.1} parent=5 // pred_check_branch
        %168 = sbr.rel (%p165) target = $region12
      $region11: #{tpu_custom_call.1} parent=5 // pred_region
        %s169 = ssub.s32 %s14, 1
        // Predicated region
        $region13: #{tpu_custom_call.1} parent=11 // pred_check
          %p170 = pneg %p87
        $region14: #{tpu_custom_call.1} parent=11 // pred_check_branch
          %172 = sbr.rel (%p170) target = $region16
        $region15: #{tpu_custom_call.1} parent=11 // pred_region
          _
        $region16: #{tpu_custom_call.1} parent=11 // pred_fallthru
          _
        // Predicated region
        $region17: #{tpu_custom_call.1} parent=11 // pred_check
          %p173 = pneg %p108
        $region18: #{tpu_custom_call.1} parent=11 // pred_check_branch
          %175 = sbr.rel (%p173) target = $region20
        $region19: #{tpu_custom_call.1} parent=11 // pred_region
          _
        $region20: #{tpu_custom_call.1} parent=11 // pred_fallthru
          _
        // Predicated region
        $region21: #{tpu_custom_call.1} parent=11 // pred_check
          %p176 = pneg %p129
        $region22: #{tpu_custom_call.1} parent=11 // pred_check_branch
          %178 = sbr.rel (%p176) target = $region24
        $region23: #{tpu_custom_call.1} parent=11 // pred_region
          _
        $region24: #{tpu_custom_call.1} parent=11 // pred_fallthru
          _
      $region12: #{tpu_custom_call.1} parent=5 // pred_fallthru
        _
      %p179 = scmp.lt.s32.totalorder %s14, 2
      // Predicated region
      $region25: #{tpu_custom_call.1} parent=5 // pred_check
        %p180 = pneg %p179
      $region26: #{tpu_custom_call.1} parent=5 // pred_check_branch
        %182 = sbr.rel (%p180) target = $region28
      $region27: #{tpu_custom_call.1} parent=5 // pred_region
        // Predicated region
        $region29: #{tpu_custom_call.1} parent=27 // pred_check
          %p183 = pneg %p34
        $region30: #{tpu_custom_call.1} parent=27 // pred_check_branch
          %185 = sbr.rel (%p183) target = $region32
        $region31: #{tpu_custom_call.1} parent=27 // pred_region
          %s186 = smul.u32 65, %s14
          %p187 = scmp.lt.s32.totalorder %s186, 129
          %s188 = scalar_select %p187, %s186, 129
          %s189 = smul.addr %s188, 8
          %s190 = scalar_lea.vmem %s0, %s189
          %s191 = smul.u32 65, %s14
        $region32: #{tpu_custom_call.1} parent=27 // pred_fallthru
          _
        // Predicated region
        $region33: #{tpu_custom_call.1} parent=27 // pred_check
          %p192 = pneg %p60
        $region34: #{tpu_custom_call.1} parent=27 // pred_check_branch
          %194 = sbr.rel (%p192) target = $region36
        $region35: #{tpu_custom_call.1} parent=27 // pred_region
          %s195 = smul.u32 65, %s14
          %p196 = scmp.lt.s32.totalorder %s195, 129
          %s197 = scalar_select %p196, %s195, 129
          %s198 = smul.addr %s197, 8
          %s199 = scalar_lea.vmem %s1, %s198
          %s200 = smul.u32 65, %s14
        $region36: #{tpu_custom_call.1} parent=27 // pred_fallthru
          _
      $region28: #{tpu_custom_call.1} parent=5 // pred_fallthru
        _
      %p201 = scmp.le.s32.totalorder 1, %s14
      %p202 = scmp.lt.s32.totalorder %s14, 3
      %p203 = pnand %p201, %p202
      %p204 = pneg %p203
      // Predicated region
      $region37: #{tpu_custom_call.1} parent=5 // pred_check
        _
      $region38: #{tpu_custom_call.1} parent=5 // pred_check_branch
        %206 = sbr.rel (%p203) target = $region40
      $region39: #{tpu_custom_call.1} parent=5 // pred_region
        %s207 = ssub.s32 %s14, 1
        %s208 = smul.u32 65, %s19
        %p209 = scmp.lt.s32.totalorder %s208, 129
        %s210 = scalar_select %p209, %s208, 129
        %s211 = smul.addr %s210, 8
        %s212 = scalar_lea.vmem %s0, %s211
        %p213 = pneg %p40
        %p214 = pneg %p37
        %s215 = smul.u32 65, %s19
        %p216 = scmp.lt.s32.totalorder %s215, 129
        %s217 = scalar_select %p216, %s215, 129
        %s218 = smul.addr %s217, 8
        %s219 = scalar_lea.vmem %s1, %s218
        %p220 = pneg %p66
        %p221 = pneg %p63
        %p222 = pneg %p87
        %p223 = pneg %p84
        %p224 = pneg %p108
        %p225 = pneg %p105
        %p226 = pneg %p129
        %p227 = pneg %p126
        %p228 = pneg %p155
        %p229 = pneg %p152
        %s230 = sand.u32 %s142, 1
        %s231 = scalar_lea.sflag [#allocation3], %s230
        %s232 = sand.u32 %s142, 1
        %s233 = smul.addr %s232, 520
        %s234 = scalar_lea.vmem [#allocation2], %s233
        %s235 = smul.u32 65, %s19
        %p236 = scmp.lt.s32.totalorder %s235, 129
        %s237 = scalar_select %p236, %s235, 129
        %s238 = smul.addr %s237, 8
        %s239 = scalar_lea.vmem %s0, %s238
        %s240 = smul.u32 65, %s19
        %s241 = smul.u32 65, %s19
        %p242 = scmp.lt.s32.totalorder %s241, 129
        %s243 = scalar_select %p242, %s241, 129
        %s244 = smul.addr %s243, 8
        %s245 = scalar_lea.vmem %s1, %s244
        %s246 = smul.u32 65, %s19
        %s247 = smul.u32 65, %s19
        %v248 = vld [vmem:[%s239] sm:$0xff]
        %v249 = vld [vmem:[%s239 + $0x8] sm:$0xff]
        %v250 = vld [vmem:[%s239 + $0x10] sm:$0xff]
        %v251 = vld [vmem:[%s239 + $0x18] sm:$0xff]
        %v252 = vld [vmem:[%s239 + $0x20] sm:$0xff]
        %v253 = vld [vmem:[%s239 + $0x28] sm:$0xff]
        %v254 = vld [vmem:[%s239 + $0x30] sm:$0xff]
        %v255 = vld [vmem:[%s239 + $0x38] sm:$0xff]
        %v256 = vld [vmem:[%s239 + $0x40] sm:$0xff]
        %v257 = vld [vmem:[%s239 + $0x48] sm:$0xff]
        %v258 = vld [vmem:[%s239 + $0x50] sm:$0xff]
        %v259 = vld [vmem:[%s239 + $0x58] sm:$0xff]
        %v260 = vld [vmem:[%s239 + $0x60] sm:$0xff]
        %v261 = vld [vmem:[%s239 + $0x68] sm:$0xff]
        %v262 = vld [vmem:[%s239 + $0x70] sm:$0xff]
        %v263 = vld [vmem:[%s239 + $0x78] sm:$0xff]
        %v264 = vld [vmem:[%s239 + $0x80] sm:$0xff]
        %v265 = vld [vmem:[%s239 + $0x88] sm:$0xff]
        %v266 = vld [vmem:[%s239 + $0x90] sm:$0xff]
        %v267 = vld [vmem:[%s239 + $0x98] sm:$0xff]
        %v268 = vld [vmem:[%s239 + $0xa0] sm:$0xff]
        %v269 = vld [vmem:[%s239 + $0xa8] sm:$0xff]
        %v270 = vld [vmem:[%s239 + $0xb0] sm:$0xff]
        %v271 = vld [vmem:[%s239 + $0xb8] sm:$0xff]
        %v272 = vld [vmem:[%s239 + $0xc0] sm:$0xff]
        %v273 = vld [vmem:[%s239 + $0xc8] sm:$0xff]
        %v274 = vld [vmem:[%s239 + $0xd0] sm:$0xff]
        %v275 = vld [vmem:[%s239 + $0xd8] sm:$0xff]
        %v276 = vld [vmem:[%s239 + $0xe0] sm:$0xff]
        %v277 = vld [vmem:[%s239 + $0xe8] sm:$0xff]
        %v278 = vld [vmem:[%s239 + $0xf0] sm:$0xff]
        %v279 = vld [vmem:[%s239 + $0xf8] sm:$0xff]
        %v280 = vld [vmem:[%s239 + $0x100] sm:$0xff]
        %v281 = vld [vmem:[%s239 + $0x108] sm:$0xff]
        %v282 = vld [vmem:[%s239 + $0x110] sm:$0xff]
        %v283 = vld [vmem:[%s239 + $0x118] sm:$0xff]
        %v284 = vld [vmem:[%s239 + $0x120] sm:$0xff]
        %v285 = vld [vmem:[%s239 + $0x128] sm:$0xff]
        %v286 = vld [vmem:[%s239 + $0x130] sm:$0xff]
        %v287 = vld [vmem:[%s239 + $0x138] sm:$0xff]
        %v288 = vld [vmem:[%s239 + $0x140] sm:$0xff]
        %v289 = vld [vmem:[%s239 + $0x148] sm:$0xff]
        %v290 = vld [vmem:[%s239 + $0x150] sm:$0xff]
        %v291 = vld [vmem:[%s239 + $0x158] sm:$0xff]
        %v292 = vld [vmem:[%s239 + $0x160] sm:$0xff]
        %v293 = vld [vmem:[%s239 + $0x168] sm:$0xff]
        %v294 = vld [vmem:[%s239 + $0x170] sm:$0xff]
        %v295 = vld [vmem:[%s239 + $0x178] sm:$0xff]
        %v296 = vld [vmem:[%s239 + $0x180] sm:$0xff]
        %v297 = vld [vmem:[%s239 + $0x188] sm:$0xff]
        %v298 = vld [vmem:[%s239 + $0x190] sm:$0xff]
        %v299 = vld [vmem:[%s239 + $0x198] sm:$0xff]
        %v300 = vld [vmem:[%s239 + $0x1a0] sm:$0xff]
        %v301 = vld [vmem:[%s239 + $0x1a8] sm:$0xff]
        %v302 = vld [vmem:[%s239 + $0x1b0] sm:$0xff]
        %v303 = vld [vmem:[%s239 + $0x1b8] sm:$0xff]
        %v304 = vld [vmem:[%s239 + $0x1c0] sm:$0xff]
        %v305 = vld [vmem:[%s239 + $0x1c8] sm:$0xff]
        %v306 = vld [vmem:[%s239 + $0x1d0] sm:$0xff]
        %v307 = vld [vmem:[%s239 + $0x1d8] sm:$0xff]
        %v308 = vld [vmem:[%s239 + $0x1e0] sm:$0xff]
        %v309 = vld [vmem:[%s239 + $0x1e8] sm:$0xff]
        %v310 = vld [vmem:[%s239 + $0x1f0] sm:$0xff]
        %v311 = vld [vmem:[%s239 + $0x1f8] sm:$0xff]
        %v312 = vld [vmem:[%s239 + $0x200] sm:$0xff]
        %vm313 = vcmp.eq.s32.totalorder %v248, 57
        %vm314 = vcmp.eq.s32.totalorder %v249, 57
        %vm315 = vcmp.eq.s32.totalorder %v250, 57
        %vm316 = vcmp.eq.s32.totalorder %v251, 57
        %vm317 = vcmp.eq.s32.totalorder %v252, 57
        %vm318 = vcmp.eq.s32.totalorder %v253, 57
        %vm319 = vcmp.eq.s32.totalorder %v254, 57
        %vm320 = vcmp.eq.s32.totalorder %v255, 57
        %vm321 = vcmp.eq.s32.totalorder %v256, 57
        %vm322 = vcmp.eq.s32.totalorder %v257, 57
        %vm323 = vcmp.eq.s32.totalorder %v258, 57
        %vm324 = vcmp.eq.s32.totalorder %v259, 57
        %vm325 = vcmp.eq.s32.totalorder %v260, 57
        %vm326 = vcmp.eq.s32.totalorder %v261, 57
        %vm327 = vcmp.eq.s32.totalorder %v262, 57
        %vm328 = vcmp.eq.s32.totalorder %v263, 57
        %vm329 = vcmp.eq.s32.totalorder %v264, 57
        %vm330 = vcmp.eq.s32.totalorder %v265, 57
        %vm331 = vcmp.eq.s32.totalorder %v266, 57
        %vm332 = vcmp.eq.s32.totalorder %v267, 57
        %vm333 = vcmp.eq.s32.totalorder %v268, 57
        %vm334 = vcmp.eq.s32.totalorder %v269, 57
        %vm335 = vcmp.eq.s32.totalorder %v270, 57
        %vm336 = vcmp.eq.s32.totalorder %v271, 57
        %vm337 = vcmp.eq.s32.totalorder %v272, 57
        %vm338 = vcmp.eq.s32.totalorder %v273, 57
        %vm339 = vcmp.eq.s32.totalorder %v274, 57
        %vm340 = vcmp.eq.s32.totalorder %v275, 57
        %vm341 = vcmp.eq.s32.totalorder %v276, 57
        %vm342 = vcmp.eq.s32.totalorder %v277, 57
        %vm343 = vcmp.eq.s32.totalorder %v278, 57
        %vm344 = vcmp.eq.s32.totalorder %v279, 57
        %vm345 = vcmp.eq.s32.totalorder %v280, 57
        %vm346 = vcmp.eq.s32.totalorder %v281, 57
        %vm347 = vcmp.eq.s32.totalorder %v282, 57
        %vm348 = vcmp.eq.s32.totalorder %v283, 57
        %vm349 = vcmp.eq.s32.totalorder %v284, 57
        %vm350 = vcmp.eq.s32.totalorder %v285, 57
        %vm351 = vcmp.eq.s32.totalorder %v286, 57
        %vm352 = vcmp.eq.s32.totalorder %v287, 57
        %vm353 = vcmp.eq.s32.totalorder %v288, 57
        %vm354 = vcmp.eq.s32.totalorder %v289, 57
        %vm355 = vcmp.eq.s32.totalorder %v290, 57
        %vm356 = vcmp.eq.s32.totalorder %v291, 57
        %vm357 = vcmp.eq.s32.totalorder %v292, 57
        %vm358 = vcmp.eq.s32.totalorder %v293, 57
        %vm359 = vcmp.eq.s32.totalorder %v294, 57
        %vm360 = vcmp.eq.s32.totalorder %v295, 57
        %vm361 = vcmp.eq.s32.totalorder %v296, 57
        %vm362 = vcmp.eq.s32.totalorder %v297, 57
        %vm363 = vcmp.eq.s32.totalorder %v298, 57
        %vm364 = vcmp.eq.s32.totalorder %v299, 57
        %vm365 = vcmp.eq.s32.totalorder %v300, 57
        %vm366 = vcmp.eq.s32.totalorder %v301, 57
        %vm367 = vcmp.eq.s32.totalorder %v302, 57
        %vm368 = vcmp.eq.s32.totalorder %v303, 57
        %vm369 = vcmp.eq.s32.totalorder %v304, 57
        %vm370 = vcmp.eq.s32.totalorder %v305, 57
        %vm371 = vcmp.eq.s32.totalorder %v306, 57
        %vm372 = vcmp.eq.s32.totalorder %v307, 57
        %vm373 = vcmp.eq.s32.totalorder %v308, 57
        %vm374 = vcmp.eq.s32.totalorder %v309, 57
        %vm375 = vcmp.eq.s32.totalorder %v310, 57
        %vm376 = vcmp.eq.s32.totalorder %v311, 57
        %vm377 = vcmp.eq.s32.totalorder %v312, 57
        %378 = vrot.lane.b32.xlu0 %v248, 120
        %v379 = vpop.permute.xlu0 %378
        %380 = vrot.lane.b32.xlu0 %v249, 120
        %v381 = vpop.permute.xlu0 %380
        %382 = vrot.lane.b32.xlu0 %v250, 120
        %v383 = vpop.permute.xlu0 %382
        %384 = vrot.lane.b32.xlu0 %v251, 120
        %v385 = vpop.permute.xlu0 %384
        %386 = vrot.lane.b32.xlu0 %v252, 120
        %v387 = vpop.permute.xlu0 %386
        %388 = vrot.lane.b32.xlu0 %v253, 120
        %v389 = vpop.permute.xlu0 %388
        %390 = vrot.lane.b32.xlu0 %v254, 120
        %v391 = vpop.permute.xlu0 %390
        %392 = vrot.lane.b32.xlu0 %v255, 120
        %v393 = vpop.permute.xlu0 %392
        %394 = vrot.lane.b32.xlu0 %v256, 120
        %v395 = vpop.permute.xlu0 %394
        %396 = vrot.lane.b32.xlu0 %v257, 120
        %v397 = vpop.permute.xlu0 %396
        %398 = vrot.lane.b32.xlu0 %v258, 120
        %v399 = vpop.permute.xlu0 %398
        %400 = vrot.lane.b32.xlu0 %v259, 120
        %v401 = vpop.permute.xlu0 %400
        %402 = vrot.lane.b32.xlu0 %v260, 120
        %v403 = vpop.permute.xlu0 %402
        %404 = vrot.lane.b32.xlu0 %v261, 120
        %v405 = vpop.permute.xlu0 %404
        %406 = vrot.lane.b32.xlu0 %v262, 120
        %v407 = vpop.permute.xlu0 %406
        %408 = vrot.lane.b32.xlu0 %v263, 120
        %v409 = vpop.permute.xlu0 %408
        %410 = vrot.lane.b32.xlu0 %v264, 120
        %v411 = vpop.permute.xlu0 %410
        %412 = vrot.lane.b32.xlu0 %v265, 120
        %v413 = vpop.permute.xlu0 %412
        %414 = vrot.lane.b32.xlu0 %v266, 120
        %v415 = vpop.permute.xlu0 %414
        %416 = vrot.lane.b32.xlu0 %v267, 120
        %v417 = vpop.permute.xlu0 %416
        %418 = vrot.lane.b32.xlu0 %v268, 120
        %v419 = vpop.permute.xlu0 %418
        %420 = vrot.lane.b32.xlu0 %v269, 120
        %v421 = vpop.permute.xlu0 %420
        %422 = vrot.lane.b32.xlu0 %v270, 120
        %v423 = vpop.permute.xlu0 %422
        %424 = vrot.lane.b32.xlu0 %v271, 120
        %v425 = vpop.permute.xlu0 %424
        %426 = vrot.lane.b32.xlu0 %v272, 120
        %v427 = vpop.permute.xlu0 %426
        %428 = vrot.lane.b32.xlu0 %v273, 120
        %v429 = vpop.permute.xlu0 %428
        %430 = vrot.lane.b32.xlu0 %v274, 120
        %v431 = vpop.permute.xlu0 %430
        %432 = vrot.lane.b32.xlu0 %v275, 120
        %v433 = vpop.permute.xlu0 %432
        %434 = vrot.lane.b32.xlu0 %v276, 120
        %v435 = vpop.permute.xlu0 %434
        %436 = vrot.lane.b32.xlu0 %v277, 120
        %v437 = vpop.permute.xlu0 %436
        %438 = vrot.lane.b32.xlu0 %v278, 120
        %v439 = vpop.permute.xlu0 %438
        %440 = vrot.lane.b32.xlu0 %v279, 120
        %v441 = vpop.permute.xlu0 %440
        %442 = vrot.lane.b32.xlu0 %v280, 120
        %v443 = vpop.permute.xlu0 %442
        %444 = vrot.lane.b32.xlu0 %v281, 120
        %v445 = vpop.permute.xlu0 %444
        %446 = vrot.lane.b32.xlu0 %v282, 120
        %v447 = vpop.permute.xlu0 %446
        %448 = vrot.lane.b32.xlu0 %v283, 120
        %v449 = vpop.permute.xlu0 %448
        %450 = vrot.lane.b32.xlu0 %v284, 120
        %v451 = vpop.permute.xlu0 %450
        %452 = vrot.lane.b32.xlu0 %v285, 120
        %v453 = vpop.permute.xlu0 %452
        %454 = vrot.lane.b32.xlu0 %v286, 120
        %v455 = vpop.permute.xlu0 %454
        %456 = vrot.lane.b32.xlu0 %v287, 120
        %v457 = vpop.permute.xlu0 %456
        %458 = vrot.lane.b32.xlu0 %v288, 120
        %v459 = vpop.permute.xlu0 %458
        %460 = vrot.lane.b32.xlu0 %v289, 120
        %v461 = vpop.permute.xlu0 %460
        %462 = vrot.lane.b32.xlu0 %v290, 120
        %v463 = vpop.permute.xlu0 %462
        %464 = vrot.lane.b32.xlu0 %v291, 120
        %v465 = vpop.permute.xlu0 %464
        %466 = vrot.lane.b32.xlu0 %v292, 120
        %v467 = vpop.permute.xlu0 %466
        %468 = vrot.lane.b32.xlu0 %v293, 120
        %v469 = vpop.permute.xlu0 %468
        %470 = vrot.lane.b32.xlu0 %v294, 120
        %v471 = vpop.permute.xlu0 %470
        %472 = vrot.lane.b32.xlu0 %v295, 120
        %v473 = vpop.permute.xlu0 %472
        %474 = vrot.lane.b32.xlu0 %v296, 120
        %v475 = vpop.permute.xlu0 %474
        %476 = vrot.lane.b32.xlu0 %v297, 120
        %v477 = vpop.permute.xlu0 %476
        %478 = vrot.lane.b32.xlu0 %v298, 120
        %v479 = vpop.permute.xlu0 %478
        %480 = vrot.lane.b32.xlu0 %v299, 120
        %v481 = vpop.permute.xlu0 %480
        %482 = vrot.lane.b32.xlu0 %v300, 120
        %v483 = vpop.permute.xlu0 %482
        %484 = vrot.lane.b32.xlu0 %v301, 120
        %v485 = vpop.permute.xlu0 %484
        %486 = vrot.lane.b32.xlu0 %v302, 120
        %v487 = vpop.permute.xlu0 %486
        %488 = vrot.lane.b32.xlu0 %v303, 120
        %v489 = vpop.permute.xlu0 %488
        %490 = vrot.lane.b32.xlu0 %v304, 120
        %v491 = vpop.permute.xlu0 %490
        %492 = vrot.lane.b32.xlu0 %v305, 120
        %v493 = vpop.permute.xlu0 %492
        %494 = vrot.lane.b32.xlu0 %v306, 120
        %v495 = vpop.permute.xlu0 %494
        %496 = vrot.lane.b32.xlu0 %v307, 120
        %v497 = vpop.permute.xlu0 %496
        %498 = vrot.lane.b32.xlu0 %v308, 120
        %v499 = vpop.permute.xlu0 %498
        %500 = vrot.lane.b32.xlu0 %v309, 120
        %v501 = vpop.permute.xlu0 %500
        %502 = vrot.lane.b32.xlu0 %v310, 120
        %v503 = vpop.permute.xlu0 %502
        %504 = vrot.lane.b32.xlu0 %v311, 120
        %v505 = vpop.permute.xlu0 %504
        %506 = vrot.lane.b32.xlu0 %v312, 120
        %v507 = vpop.permute.xlu0 %506
        %v573 = vsel %vm313, %v379, 0.0
        %v574 = vsel %vm314, %v381, 0.0
        %v575 = vsel %vm315, %v383, 0.0
        %v576 = vsel %vm316, %v385, 0.0
        %v577 = vsel %vm317, %v387, 0.0
        %v578 = vsel %vm318, %v389, 0.0
        %v579 = vsel %vm319, %v391, 0.0
        %v580 = vsel %vm320, %v393, 0.0
        %v581 = vsel %vm321, %v395, 0.0
        %v582 = vsel %vm322, %v397, 0.0
        %v583 = vsel %vm323, %v399, 0.0
        %v584 = vsel %vm324, %v401, 0.0
        %v585 = vsel %vm325, %v403, 0.0
        %v586 = vsel %vm326, %v405, 0.0
        %v587 = vsel %vm327, %v407, 0.0
        %v588 = vsel %vm328, %v409, 0.0
        %v589 = vsel %vm329, %v411, 0.0
        %v590 = vsel %vm330, %v413, 0.0
        %v591 = vsel %vm331, %v415, 0.0
        %v592 = vsel %vm332, %v417, 0.0
        %v593 = vsel %vm333, %v419, 0.0
        %v594 = vsel %vm334, %v421, 0.0
        %v595 = vsel %vm335, %v423, 0.0
        %v596 = vsel %vm336, %v425, 0.0
        %v597 = vsel %vm337, %v427, 0.0
        %v598 = vsel %vm338, %v429, 0.0
        %v599 = vsel %vm339, %v431, 0.0
        %v600 = vsel %vm340, %v433, 0.0
        %v601 = vsel %vm341, %v435, 0.0
        %v602 = vsel %vm342, %v437, 0.0
        %v603 = vsel %vm343, %v439, 0.0
        %v604 = vsel %vm344, %v441, 0.0
        %v605 = vsel %vm345, %v443, 0.0
        %v606 = vsel %vm346, %v445, 0.0
        %v607 = vsel %vm347, %v447, 0.0
        %v608 = vsel %vm348, %v449, 0.0
        %v609 = vsel %vm349, %v451, 0.0
        %v610 = vsel %vm350, %v453, 0.0
        %v611 = vsel %vm351, %v455, 0.0
        %v612 = vsel %vm352, %v457, 0.0
        %v613 = vsel %vm353, %v459, 0.0
        %v614 = vsel %vm354, %v461, 0.0
        %v615 = vsel %vm355, %v463, 0.0
        %v616 = vsel %vm356, %v465, 0.0
        %v617 = vsel %vm357, %v467, 0.0
        %v618 = vsel %vm358, %v469, 0.0
        %v619 = vsel %vm359, %v471, 0.0
        %v620 = vsel %vm360, %v473, 0.0
        %v621 = vsel %vm361, %v475, 0.0
        %v622 = vsel %vm362, %v477, 0.0
        %v623 = vsel %vm363, %v479, 0.0
        %v624 = vsel %vm364, %v481, 0.0
        %v625 = vsel %vm365, %v483, 0.0
        %v626 = vsel %vm366, %v485, 0.0
        %v627 = vsel %vm367, %v487, 0.0
        %v628 = vsel %vm368, %v489, 0.0
        %v629 = vsel %vm369, %v491, 0.0
        %v630 = vsel %vm370, %v493, 0.0
        %v631 = vsel %vm371, %v495, 0.0
        %v632 = vsel %vm372, %v497, 0.0
        %v633 = vsel %vm373, %v499, 0.0
        %v634 = vsel %vm374, %v501, 0.0
        %v635 = vsel %vm375, %v503, 0.0
        %v636 = vsel %vm376, %v505, 0.0
        %v637 = vsel %vm377, %v507, 0.0
        %v638 = vadd.f32 %v573, 1.0
        %v639 = vadd.f32 %v574, 1.0
        %v640 = vadd.f32 %v575, 1.0
        %v641 = vadd.f32 %v576, 1.0
        %v642 = vadd.f32 %v577, 1.0
        %v643 = vadd.f32 %v578, 1.0
        %v644 = vadd.f32 %v579, 1.0
        %v645 = vadd.f32 %v580, 1.0
        %v646 = vadd.f32 %v581, 1.0
        %v647 = vadd.f32 %v582, 1.0
        %v648 = vadd.f32 %v583, 1.0
        %v649 = vadd.f32 %v584, 1.0
        %v650 = vadd.f32 %v585, 1.0
        %v651 = vadd.f32 %v586, 1.0
        %v652 = vadd.f32 %v587, 1.0
        %v653 = vadd.f32 %v588, 1.0
        %v654 = vadd.f32 %v589, 1.0
        %v655 = vadd.f32 %v590, 1.0
        %v656 = vadd.f32 %v591, 1.0
        %v657 = vadd.f32 %v592, 1.0
        %v658 = vadd.f32 %v593, 1.0
        %v659 = vadd.f32 %v594, 1.0
        %v660 = vadd.f32 %v595, 1.0
        %v661 = vadd.f32 %v596, 1.0
        %v662 = vadd.f32 %v597, 1.0
        %v663 = vadd.f32 %v598, 1.0
        %v664 = vadd.f32 %v599, 1.0
        %v665 = vadd.f32 %v600, 1.0
        %v666 = vadd.f32 %v601, 1.0
        %v667 = vadd.f32 %v602, 1.0
        %v668 = vadd.f32 %v603, 1.0
        %v669 = vadd.f32 %v604, 1.0
        %v670 = vadd.f32 %v605, 1.0
        %v671 = vadd.f32 %v606, 1.0
        %v672 = vadd.f32 %v607, 1.0
        %v673 = vadd.f32 %v608, 1.0
        %v674 = vadd.f32 %v609, 1.0
        %v675 = vadd.f32 %v610, 1.0
        %v676 = vadd.f32 %v611, 1.0
        %v677 = vadd.f32 %v612, 1.0
        %v678 = vadd.f32 %v613, 1.0
        %v679 = vadd.f32 %v614, 1.0
        %v680 = vadd.f32 %v615, 1.0
        %v681 = vadd.f32 %v616, 1.0
        %v682 = vadd.f32 %v617, 1.0
        %v683 = vadd.f32 %v618, 1.0
        %v684 = vadd.f32 %v619, 1.0
        %v685 = vadd.f32 %v620, 1.0
        %v686 = vadd.f32 %v621, 1.0
        %v687 = vadd.f32 %v622, 1.0
        %v688 = vadd.f32 %v623, 1.0
        %v689 = vadd.f32 %v624, 1.0
        %v690 = vadd.f32 %v625, 1.0
        %v691 = vadd.f32 %v626, 1.0
        %v692 = vadd.f32 %v627, 1.0
        %v693 = vadd.f32 %v628, 1.0
        %v694 = vadd.f32 %v629, 1.0
        %v695 = vadd.f32 %v630, 1.0
        %v696 = vadd.f32 %v631, 1.0
        %v697 = vadd.f32 %v632, 1.0
        %v698 = vadd.f32 %v633, 1.0
        %v699 = vadd.f32 %v634, 1.0
        %v700 = vadd.f32 %v635, 1.0
        %v701 = vadd.f32 %v636, 1.0
        %v702 = vadd.f32 %v637, 1.0
        %vm703 = vcmp.eq.s32.totalorder %v248, 58
        %vm704 = vcmp.eq.s32.totalorder %v249, 58
        %vm705 = vcmp.eq.s32.totalorder %v250, 58
        %vm706 = vcmp.eq.s32.totalorder %v251, 58
        %vm707 = vcmp.eq.s32.totalorder %v252, 58
        %vm708 = vcmp.eq.s32.totalorder %v253, 58
        %vm709 = vcmp.eq.s32.totalorder %v254, 58
        %vm710 = vcmp.eq.s32.totalorder %v255, 58
        %vm711 = vcmp.eq.s32.totalorder %v256, 58
        %vm712 = vcmp.eq.s32.totalorder %v257, 58
        %vm713 = vcmp.eq.s32.totalorder %v258, 58
        %vm714 = vcmp.eq.s32.totalorder %v259, 58
        %vm715 = vcmp.eq.s32.totalorder %v260, 58
        %vm716 = vcmp.eq.s32.totalorder %v261, 58
        %vm717 = vcmp.eq.s32.totalorder %v262, 58
        %vm718 = vcmp.eq.s32.totalorder %v263, 58
        %vm719 = vcmp.eq.s32.totalorder %v264, 58
        %vm720 = vcmp.eq.s32.totalorder %v265, 58
        %vm721 = vcmp.eq.s32.totalorder %v266, 58
        %vm722 = vcmp.eq.s32.totalorder %v267, 58
        %vm723 = vcmp.eq.s32.totalorder %v268, 58
        %vm724 = vcmp.eq.s32.totalorder %v269, 58
        %vm725 = vcmp.eq.s32.totalorder %v270, 58
        %vm726 = vcmp.eq.s32.totalorder %v271, 58
        %vm727 = vcmp.eq.s32.totalorder %v272, 58
        %vm728 = vcmp.eq.s32.totalorder %v273, 58
        %vm729 = vcmp.eq.s32.totalorder %v274, 58
        %vm730 = vcmp.eq.s32.totalorder %v275, 58
        %vm731 = vcmp.eq.s32.totalorder %v276, 58
        %vm732 = vcmp.eq.s32.totalorder %v277, 58
        %vm733 = vcmp.eq.s32.totalorder %v278, 58
        %vm734 = vcmp.eq.s32.totalorder %v279, 58
        %vm735 = vcmp.eq.s32.totalorder %v280, 58
        %vm736 = vcmp.eq.s32.totalorder %v281, 58
        %vm737 = vcmp.eq.s32.totalorder %v282, 58
        %vm738 = vcmp.eq.s32.totalorder %v283, 58
        %vm739 = vcmp.eq.s32.totalorder %v284, 58
        %vm740 = vcmp.eq.s32.totalorder %v285, 58
        %vm741 = vcmp.eq.s32.totalorder %v286, 58
        %vm742 = vcmp.eq.s32.totalorder %v287, 58
        %vm743 = vcmp.eq.s32.totalorder %v288, 58
        %vm744 = vcmp.eq.s32.totalorder %v289, 58
        %vm745 = vcmp.eq.s32.totalorder %v290, 58
        %vm746 = vcmp.eq.s32.totalorder %v291, 58
        %vm747 = vcmp.eq.s32.totalorder %v292, 58
        %vm748 = vcmp.eq.s32.totalorder %v293, 58
        %vm749 = vcmp.eq.s32.totalorder %v294, 58
        %vm750 = vcmp.eq.s32.totalorder %v295, 58
        %vm751 = vcmp.eq.s32.totalorder %v296, 58
        %vm752 = vcmp.eq.s32.totalorder %v297, 58
        %vm753 = vcmp.eq.s32.totalorder %v298, 58
        %vm754 = vcmp.eq.s32.totalorder %v299, 58
        %vm755 = vcmp.eq.s32.totalorder %v300, 58
        %vm756 = vcmp.eq.s32.totalorder %v301, 58
        %vm757 = vcmp.eq.s32.totalorder %v302, 58
        %vm758 = vcmp.eq.s32.totalorder %v303, 58
        %vm759 = vcmp.eq.s32.totalorder %v304, 58
        %vm760 = vcmp.eq.s32.totalorder %v305, 58
        %vm761 = vcmp.eq.s32.totalorder %v306, 58
        %vm762 = vcmp.eq.s32.totalorder %v307, 58
        %vm763 = vcmp.eq.s32.totalorder %v308, 58
        %vm764 = vcmp.eq.s32.totalorder %v309, 58
        %vm765 = vcmp.eq.s32.totalorder %v310, 58
        %vm766 = vcmp.eq.s32.totalorder %v311, 58
        %vm767 = vcmp.eq.s32.totalorder %v312, 58
        %768 = vrot.lane.b32.xlu0 %v248, 119
        %v769 = vpop.permute.xlu0 %768
        %770 = vrot.lane.b32.xlu0 %v249, 119
        %v771 = vpop.permute.xlu0 %770
        %772 = vrot.lane.b32.xlu0 %v250, 119
        %v773 = vpop.permute.xlu0 %772
        %774 = vrot.lane.b32.xlu0 %v251, 119
        %v775 = vpop.permute.xlu0 %774
        %776 = vrot.lane.b32.xlu0 %v252, 119
        %v777 = vpop.permute.xlu0 %776
        %778 = vrot.lane.b32.xlu0 %v253, 119
        %v779 = vpop.permute.xlu0 %778
        %780 = vrot.lane.b32.xlu0 %v254, 119
        %v781 = vpop.permute.xlu0 %780
        %782 = vrot.lane.b32.xlu0 %v255, 119
        %v783 = vpop.permute.xlu0 %782
        %784 = vrot.lane.b32.xlu0 %v256, 119
        %v785 = vpop.permute.xlu0 %784
        %786 = vrot.lane.b32.xlu0 %v257, 119
        %v787 = vpop.permute.xlu0 %786
        %788 = vrot.lane.b32.xlu0 %v258, 119
        %v789 = vpop.permute.xlu0 %788
        %790 = vrot.lane.b32.xlu0 %v259, 119
        %v791 = vpop.permute.xlu0 %790
        %792 = vrot.lane.b32.xlu0 %v260, 119
        %v793 = vpop.permute.xlu0 %792
        %794 = vrot.lane.b32.xlu0 %v261, 119
        %v795 = vpop.permute.xlu0 %794
        %796 = vrot.lane.b32.xlu0 %v262, 119
        %v797 = vpop.permute.xlu0 %796
        %798 = vrot.lane.b32.xlu0 %v263, 119
        %v799 = vpop.permute.xlu0 %798
        %800 = vrot.lane.b32.xlu0 %v264, 119
        %v801 = vpop.permute.xlu0 %800
        %802 = vrot.lane.b32.xlu0 %v265, 119
        %v803 = vpop.permute.xlu0 %802
        %804 = vrot.lane.b32.xlu0 %v266, 119
        %v805 = vpop.permute.xlu0 %804
        %806 = vrot.lane.b32.xlu0 %v267, 119
        %v807 = vpop.permute.xlu0 %806
        %808 = vrot.lane.b32.xlu0 %v268, 119
        %v809 = vpop.permute.xlu0 %808
        %810 = vrot.lane.b32.xlu0 %v269, 119
        %v811 = vpop.permute.xlu0 %810
        %812 = vrot.lane.b32.xlu0 %v270, 119
        %v813 = vpop.permute.xlu0 %812
        %814 = vrot.lane.b32.xlu0 %v271, 119
        %v815 = vpop.permute.xlu0 %814
        %816 = vrot.lane.b32.xlu0 %v272, 119
        %v817 = vpop.permute.xlu0 %816
        %818 = vrot.lane.b32.xlu0 %v273, 119
        %v819 = vpop.permute.xlu0 %818
        %820 = vrot.lane.b32.xlu0 %v274, 119
        %v821 = vpop.permute.xlu0 %820
        %822 = vrot.lane.b32.xlu0 %v275, 119
        %v823 = vpop.permute.xlu0 %822
        %824 = vrot.lane.b32.xlu0 %v276, 119
        %v825 = vpop.permute.xlu0 %824
        %826 = vrot.lane.b32.xlu0 %v277, 119
        %v827 = vpop.permute.xlu0 %826
        %828 = vrot.lane.b32.xlu0 %v278, 119
        %v829 = vpop.permute.xlu0 %828
        %830 = vrot.lane.b32.xlu0 %v279, 119
        %v831 = vpop.permute.xlu0 %830
        %832 = vrot.lane.b32.xlu0 %v280, 119
        %v833 = vpop.permute.xlu0 %832
        %834 = vrot.lane.b32.xlu0 %v281, 119
        %v835 = vpop.permute.xlu0 %834
        %836 = vrot.lane.b32.xlu0 %v282, 119
        %v837 = vpop.permute.xlu0 %836
        %838 = vrot.lane.b32.xlu0 %v283, 119
        %v839 = vpop.permute.xlu0 %838
        %840 = vrot.lane.b32.xlu0 %v284, 119
        %v841 = vpop.permute.xlu0 %840
        %842 = vrot.lane.b32.xlu0 %v285, 119
        %v843 = vpop.permute.xlu0 %842
        %844 = vrot.lane.b32.xlu0 %v286, 119
        %v845 = vpop.permute.xlu0 %844
        %846 = vrot.lane.b32.xlu0 %v287, 119
        %v847 = vpop.permute.xlu0 %846
        %848 = vrot.lane.b32.xlu0 %v288, 119
        %v849 = vpop.permute.xlu0 %848
        %850 = vrot.lane.b32.xlu0 %v289, 119
        %v851 = vpop.permute.xlu0 %850
        %852 = vrot.lane.b32.xlu0 %v290, 119
        %v853 = vpop.permute.xlu0 %852
        %854 = vrot.lane.b32.xlu0 %v291, 119
        %v855 = vpop.permute.xlu0 %854
        %856 = vrot.lane.b32.xlu0 %v292, 119
        %v857 = vpop.permute.xlu0 %856
        %858 = vrot.lane.b32.xlu0 %v293, 119
        %v859 = vpop.permute.xlu0 %858
        %860 = vrot.lane.b32.xlu0 %v294, 119
        %v861 = vpop.permute.xlu0 %860
        %862 = vrot.lane.b32.xlu0 %v295, 119
        %v863 = vpop.permute.xlu0 %862
        %864 = vrot.lane.b32.xlu0 %v296, 119
        %v865 = vpop.permute.xlu0 %864
        %866 = vrot.lane.b32.xlu0 %v297, 119
        %v867 = vpop.permute.xlu0 %866
        %868 = vrot.lane.b32.xlu0 %v298, 119
        %v869 = vpop.permute.xlu0 %868
        %870 = vrot.lane.b32.xlu0 %v299, 119
        %v871 = vpop.permute.xlu0 %870
        %872 = vrot.lane.b32.xlu0 %v300, 119
        %v873 = vpop.permute.xlu0 %872
        %874 = vrot.lane.b32.xlu0 %v301, 119
        %v875 = vpop.permute.xlu0 %874
        %876 = vrot.lane.b32.xlu0 %v302, 119
        %v877 = vpop.permute.xlu0 %876
        %878 = vrot.lane.b32.xlu0 %v303, 119
        %v879 = vpop.permute.xlu0 %878
        %880 = vrot.lane.b32.xlu0 %v304, 119
        %v881 = vpop.permute.xlu0 %880
        %882 = vrot.lane.b32.xlu0 %v305, 119
        %v883 = vpop.permute.xlu0 %882
        %884 = vrot.lane.b32.xlu0 %v306, 119
        %v885 = vpop.permute.xlu0 %884
        %886 = vrot.lane.b32.xlu0 %v307, 119
        %v887 = vpop.permute.xlu0 %886
        %888 = vrot.lane.b32.xlu0 %v308, 119
        %v889 = vpop.permute.xlu0 %888
        %890 = vrot.lane.b32.xlu0 %v309, 119
        %v891 = vpop.permute.xlu0 %890
        %892 = vrot.lane.b32.xlu0 %v310, 119
        %v893 = vpop.permute.xlu0 %892
        %894 = vrot.lane.b32.xlu0 %v311, 119
        %v895 = vpop.permute.xlu0 %894
        %896 = vrot.lane.b32.xlu0 %v312, 119
        %v897 = vpop.permute.xlu0 %896
        %v963 = vsel %vm703, %v769, 0.0
        %v964 = vsel %vm704, %v771, 0.0
        %v965 = vsel %vm705, %v773, 0.0
        %v966 = vsel %vm706, %v775, 0.0
        %v967 = vsel %vm707, %v777, 0.0
        %v968 = vsel %vm708, %v779, 0.0
        %v969 = vsel %vm709, %v781, 0.0
        %v970 = vsel %vm710, %v783, 0.0
        %v971 = vsel %vm711, %v785, 0.0
        %v972 = vsel %vm712, %v787, 0.0
        %v973 = vsel %vm713, %v789, 0.0
        %v974 = vsel %vm714, %v791, 0.0
        %v975 = vsel %vm715, %v793, 0.0
        %v976 = vsel %vm716, %v795, 0.0
        %v977 = vsel %vm717, %v797, 0.0
        %v978 = vsel %vm718, %v799, 0.0
        %v979 = vsel %vm719, %v801, 0.0
        %v980 = vsel %vm720, %v803, 0.0
        %v981 = vsel %vm721, %v805, 0.0
        %v982 = vsel %vm722, %v807, 0.0
        %v983 = vsel %vm723, %v809, 0.0
        %v984 = vsel %vm724, %v811, 0.0
        %v985 = vsel %vm725, %v813, 0.0
        %v986 = vsel %vm726, %v815, 0.0
        %v987 = vsel %vm727, %v817, 0.0
        %v988 = vsel %vm728, %v819, 0.0
        %v989 = vsel %vm729, %v821, 0.0
        %v990 = vsel %vm730, %v823, 0.0
        %v991 = vsel %vm731, %v825, 0.0
        %v992 = vsel %vm732, %v827, 0.0
        %v993 = vsel %vm733, %v829, 0.0
        %v994 = vsel %vm734, %v831, 0.0
        %v995 = vsel %vm735, %v833, 0.0
        %v996 = vsel %vm736, %v835, 0.0
        %v997 = vsel %vm737, %v837, 0.0
        %v998 = vsel %vm738, %v839, 0.0
        %v999 = vsel %vm739, %v841, 0.0
        %v1000 = vsel %vm740, %v843, 0.0
        %v1001 = vsel %vm741, %v845, 0.0
        %v1002 = vsel %vm742, %v847, 0.0
        %v1003 = vsel %vm743, %v849, 0.0
        %v1004 = vsel %vm744, %v851, 0.0
        %v1005 = vsel %vm745, %v853, 0.0
        %v1006 = vsel %vm746, %v855, 0.0
        %v1007 = vsel %vm747, %v857, 0.0
        %v1008 = vsel %vm748, %v859, 0.0
        %v1009 = vsel %vm749, %v861, 0.0
        %v1010 = vsel %vm750, %v863, 0.0
        %v1011 = vsel %vm751, %v865, 0.0
        %v1012 = vsel %vm752, %v867, 0.0
        %v1013 = vsel %vm753, %v869, 0.0
        %v1014 = vsel %vm754, %v871, 0.0
        %v1015 = vsel %vm755, %v873, 0.0
        %v1016 = vsel %vm756, %v875, 0.0
        %v1017 = vsel %vm757, %v877, 0.0
        %v1018 = vsel %vm758, %v879, 0.0
        %v1019 = vsel %vm759, %v881, 0.0
        %v1020 = vsel %vm760, %v883, 0.0
        %v1021 = vsel %vm761, %v885, 0.0
        %v1022 = vsel %vm762, %v887, 0.0
        %v1023 = vsel %vm763, %v889, 0.0
        %v1024 = vsel %vm764, %v891, 0.0
        %v1025 = vsel %vm765, %v893, 0.0
        %v1026 = vsel %vm766, %v895, 0.0
        %v1027 = vsel %vm767, %v897, 0.0
        %v1028 = vadd.f32 %v963, 1.0
        %v1029 = vadd.f32 %v964, 1.0
        %v1030 = vadd.f32 %v965, 1.0
        %v1031 = vadd.f32 %v966, 1.0
        %v1032 = vadd.f32 %v967, 1.0
        %v1033 = vadd.f32 %v968, 1.0
        %v1034 = vadd.f32 %v969, 1.0
        %v1035 = vadd.f32 %v970, 1.0
        %v1036 = vadd.f32 %v971, 1.0
        %v1037 = vadd.f32 %v972, 1.0
        %v1038 = vadd.f32 %v973, 1.0
        %v1039 = vadd.f32 %v974, 1.0
        %v1040 = vadd.f32 %v975, 1.0
        %v1041 = vadd.f32 %v976, 1.0
        %v1042 = vadd.f32 %v977, 1.0
        %v1043 = vadd.f32 %v978, 1.0
        %v1044 = vadd.f32 %v979, 1.0
        %v1045 = vadd.f32 %v980, 1.0
        %v1046 = vadd.f32 %v981, 1.0
        %v1047 = vadd.f32 %v982, 1.0
        %v1048 = vadd.f32 %v983, 1.0
        %v1049 = vadd.f32 %v984, 1.0
        %v1050 = vadd.f32 %v985, 1.0
        %v1051 = vadd.f32 %v986, 1.0
        %v1052 = vadd.f32 %v987, 1.0
        %v1053 = vadd.f32 %v988, 1.0
        %v1054 = vadd.f32 %v989, 1.0
        %v1055 = vadd.f32 %v990, 1.0
        %v1056 = vadd.f32 %v991, 1.0
        %v1057 = vadd.f32 %v992, 1.0
        %v1058 = vadd.f32 %v993, 1.0
        %v1059 = vadd.f32 %v994, 1.0
        %v1060 = vadd.f32 %v995, 1.0
        %v1061 = vadd.f32 %v996, 1.0
        %v1062 = vadd.f32 %v997, 1.0
        %v1063 = vadd.f32 %v998, 1.0
        %v1064 = vadd.f32 %v999, 1.0
        %v1065 = vadd.f32 %v1000, 1.0
        %v1066 = vadd.f32 %v1001, 1.0
        %v1067 = vadd.f32 %v1002, 1.0
        %v1068 = vadd.f32 %v1003, 1.0
        %v1069 = vadd.f32 %v1004, 1.0
        %v1070 = vadd.f32 %v1005, 1.0
        %v1071 = vadd.f32 %v1006, 1.0
        %v1072 = vadd.f32 %v1007, 1.0
        %v1073 = vadd.f32 %v1008, 1.0
        %v1074 = vadd.f32 %v1009, 1.0
        %v1075 = vadd.f32 %v1010, 1.0
        %v1076 = vadd.f32 %v1011, 1.0
        %v1077 = vadd.f32 %v1012, 1.0
        %v1078 = vadd.f32 %v1013, 1.0
        %v1079 = vadd.f32 %v1014, 1.0
        %v1080 = vadd.f32 %v1015, 1.0
        %v1081 = vadd.f32 %v1016, 1.0
        %v1082 = vadd.f32 %v1017, 1.0
        %v1083 = vadd.f32 %v1018, 1.0
        %v1084 = vadd.f32 %v1019, 1.0
        %v1085 = vadd.f32 %v1020, 1.0
        %v1086 = vadd.f32 %v1021, 1.0
        %v1087 = vadd.f32 %v1022, 1.0
        %v1088 = vadd.f32 %v1023, 1.0
        %v1089 = vadd.f32 %v1024, 1.0
        %v1090 = vadd.f32 %v1025, 1.0
        %v1091 = vadd.f32 %v1026, 1.0
        %v1092 = vadd.f32 %v1027, 1.0
        %v1093 = vmul.f32 %v638, %v1028
        %v1094 = vmul.f32 %v639, %v1029
        %v1095 = vmul.f32 %v640, %v1030
        %v1096 = vmul.f32 %v641, %v1031
        %v1097 = vmul.f32 %v642, %v1032
        %v1098 = vmul.f32 %v643, %v1033
        %v1099 = vmul.f32 %v644, %v1034
        %v1100 = vmul.f32 %v645, %v1035
        %v1101 = vmul.f32 %v646, %v1036
        %v1102 = vmul.f32 %v647, %v1037
        %v1103 = vmul.f32 %v648, %v1038
        %v1104 = vmul.f32 %v649, %v1039
        %v1105 = vmul.f32 %v650, %v1040
        %v1106 = vmul.f32 %v651, %v1041
        %v1107 = vmul.f32 %v652, %v1042
        %v1108 = vmul.f32 %v653, %v1043
        %v1109 = vmul.f32 %v654, %v1044
        %v1110 = vmul.f32 %v655, %v1045
        %v1111 = vmul.f32 %v656, %v1046
        %v1112 = vmul.f32 %v657, %v1047
        %v1113 = vmul.f32 %v658, %v1048
        %v1114 = vmul.f32 %v659, %v1049
        %v1115 = vmul.f32 %v660, %v1050
        %v1116 = vmul.f32 %v661, %v1051
        %v1117 = vmul.f32 %v662, %v1052
        %v1118 = vmul.f32 %v663, %v1053
        %v1119 = vmul.f32 %v664, %v1054
        %v1120 = vmul.f32 %v665, %v1055
        %v1121 = vmul.f32 %v666, %v1056
        %v1122 = vmul.f32 %v667, %v1057
        %v1123 = vmul.f32 %v668, %v1058
        %v1124 = vmul.f32 %v669, %v1059
        %v1125 = vmul.f32 %v670, %v1060
        %v1126 = vmul.f32 %v671, %v1061
        %v1127 = vmul.f32 %v672, %v1062
        %v1128 = vmul.f32 %v673, %v1063
        %v1129 = vmul.f32 %v674, %v1064
        %v1130 = vmul.f32 %v675, %v1065
        %v1131 = vmul.f32 %v676, %v1066
        %v1132 = vmul.f32 %v677, %v1067
        %v1133 = vmul.f32 %v678, %v1068
        %v1134 = vmul.f32 %v679, %v1069
        %v1135 = vmul.f32 %v680, %v1070
        %v1136 = vmul.f32 %v681, %v1071
        %v1137 = vmul.f32 %v682, %v1072
        %v1138 = vmul.f32 %v683, %v1073
        %v1139 = vmul.f32 %v684, %v1074
        %v1140 = vmul.f32 %v685, %v1075
        %v1141 = vmul.f32 %v686, %v1076
        %v1142 = vmul.f32 %v687, %v1077
        %v1143 = vmul.f32 %v688, %v1078
        %v1144 = vmul.f32 %v689, %v1079
        %v1145 = vmul.f32 %v690, %v1080
        %v1146 = vmul.f32 %v691, %v1081
        %v1147 = vmul.f32 %v692, %v1082
        %v1148 = vmul.f32 %v693, %v1083
        %v1149 = vmul.f32 %v694, %v1084
        %v1150 = vmul.f32 %v695, %v1085
        %v1151 = vmul.f32 %v696, %v1086
        %v1152 = vmul.f32 %v697, %v1087
        %v1153 = vmul.f32 %v698, %v1088
        %v1154 = vmul.f32 %v699, %v1089
        %v1155 = vmul.f32 %v700, %v1090
        %v1156 = vmul.f32 %v701, %v1091
        %v1157 = vmul.f32 %v702, %v1092
        %v1158 = vlaneseq
        %v1159 = vand.u32 %v1158, 127
        %v1160 = vld [vmem:[%s245] sm:$0xff]
        %v1161 = vld [vmem:[%s245 + $0x8] sm:$0xff]
        %v1162 = vld [vmem:[%s245 + $0x10] sm:$0xff]
        %v1163 = vld [vmem:[%s245 + $0x18] sm:$0xff]
        %v1164 = vld [vmem:[%s245 + $0x20] sm:$0xff]
        %v1165 = vld [vmem:[%s245 + $0x28] sm:$0xff]
        %v1166 = vld [vmem:[%s245 + $0x30] sm:$0xff]
        %v1167 = vld [vmem:[%s245 + $0x38] sm:$0xff]
        %v1168 = vld [vmem:[%s245 + $0x40] sm:$0xff]
        %v1169 = vld [vmem:[%s245 + $0x48] sm:$0xff]
        %v1170 = vld [vmem:[%s245 + $0x50] sm:$0xff]
        %v1171 = vld [vmem:[%s245 + $0x58] sm:$0xff]
        %v1172 = vld [vmem:[%s245 + $0x60] sm:$0xff]
        %v1173 = vld [vmem:[%s245 + $0x68] sm:$0xff]
        %v1174 = vld [vmem:[%s245 + $0x70] sm:$0xff]
        %v1175 = vld [vmem:[%s245 + $0x78] sm:$0xff]
        %v1176 = vld [vmem:[%s245 + $0x80] sm:$0xff]
        %v1177 = vld [vmem:[%s245 + $0x88] sm:$0xff]
        %v1178 = vld [vmem:[%s245 + $0x90] sm:$0xff]
        %v1179 = vld [vmem:[%s245 + $0x98] sm:$0xff]
        %v1180 = vld [vmem:[%s245 + $0xa0] sm:$0xff]
        %v1181 = vld [vmem:[%s245 + $0xa8] sm:$0xff]
        %v1182 = vld [vmem:[%s245 + $0xb0] sm:$0xff]
        %v1183 = vld [vmem:[%s245 + $0xb8] sm:$0xff]
        %v1184 = vld [vmem:[%s245 + $0xc0] sm:$0xff]
        %v1185 = vld [vmem:[%s245 + $0xc8] sm:$0xff]
        %v1186 = vld [vmem:[%s245 + $0xd0] sm:$0xff]
        %v1187 = vld [vmem:[%s245 + $0xd8] sm:$0xff]
        %v1188 = vld [vmem:[%s245 + $0xe0] sm:$0xff]
        %v1189 = vld [vmem:[%s245 + $0xe8] sm:$0xff]
        %v1190 = vld [vmem:[%s245 + $0xf0] sm:$0xff]
        %v1191 = vld [vmem:[%s245 + $0xf8] sm:$0xff]
        %v1192 = vld [vmem:[%s245 + $0x100] sm:$0xff]
        %v1193 = vld [vmem:[%s245 + $0x108] sm:$0xff]
        %v1194 = vld [vmem:[%s245 + $0x110] sm:$0xff]
        %v1195 = vld [vmem:[%s245 + $0x118] sm:$0xff]
        %v1196 = vld [vmem:[%s245 + $0x120] sm:$0xff]
        %v1197 = vld [vmem:[%s245 + $0x128] sm:$0xff]
        %v1198 = vld [vmem:[%s245 + $0x130] sm:$0xff]
        %v1199 = vld [vmem:[%s245 + $0x138] sm:$0xff]
        %v1200 = vld [vmem:[%s245 + $0x140] sm:$0xff]
        %v1201 = vld [vmem:[%s245 + $0x148] sm:$0xff]
        %v1202 = vld [vmem:[%s245 + $0x150] sm:$0xff]
        %v1203 = vld [vmem:[%s245 + $0x158] sm:$0xff]
        %v1204 = vld [vmem:[%s245 + $0x160] sm:$0xff]
        %v1205 = vld [vmem:[%s245 + $0x168] sm:$0xff]
        %v1206 = vld [vmem:[%s245 + $0x170] sm:$0xff]
        %v1207 = vld [vmem:[%s245 + $0x178] sm:$0xff]
        %v1208 = vld [vmem:[%s245 + $0x180] sm:$0xff]
        %v1209 = vld [vmem:[%s245 + $0x188] sm:$0xff]
        %v1210 = vld [vmem:[%s245 + $0x190] sm:$0xff]
        %v1211 = vld [vmem:[%s245 + $0x198] sm:$0xff]
        %v1212 = vld [vmem:[%s245 + $0x1a0] sm:$0xff]
        %v1213 = vld [vmem:[%s245 + $0x1a8] sm:$0xff]
        %v1214 = vld [vmem:[%s245 + $0x1b0] sm:$0xff]
        %v1215 = vld [vmem:[%s245 + $0x1b8] sm:$0xff]
        %v1216 = vld [vmem:[%s245 + $0x1c0] sm:$0xff]
        %v1217 = vld [vmem:[%s245 + $0x1c8] sm:$0xff]
        %v1218 = vld [vmem:[%s245 + $0x1d0] sm:$0xff]
        %v1219 = vld [vmem:[%s245 + $0x1d8] sm:$0xff]
        %v1220 = vld [vmem:[%s245 + $0x1e0] sm:$0xff]
        %v1221 = vld [vmem:[%s245 + $0x1e8] sm:$0xff]
        %v1222 = vld [vmem:[%s245 + $0x1f0] sm:$0xff]
        %v1223 = vld [vmem:[%s245 + $0x1f8] sm:$0xff]
        %v1224 = vld [vmem:[%s245 + $0x200] sm:$0xff]
        %vm1225 = vcmask 162816
        %v1226 = vsel %vm1225, %v1160, 0.0
        %v1227 = vsel %vm1225, %v1161, 0.0
        %v1228 = vsel %vm1225, %v1162, 0.0
        %v1229 = vsel %vm1225, %v1163, 0.0
        %v1230 = vsel %vm1225, %v1164, 0.0
        %v1231 = vsel %vm1225, %v1165, 0.0
        %v1232 = vsel %vm1225, %v1166, 0.0
        %v1233 = vsel %vm1225, %v1167, 0.0
        %v1234 = vsel %vm1225, %v1168, 0.0
        %v1235 = vsel %vm1225, %v1169, 0.0
        %v1236 = vsel %vm1225, %v1170, 0.0
        %v1237 = vsel %vm1225, %v1171, 0.0
        %v1238 = vsel %vm1225, %v1172, 0.0
        %v1239 = vsel %vm1225, %v1173, 0.0
        %v1240 = vsel %vm1225, %v1174, 0.0
        %v1241 = vsel %vm1225, %v1175, 0.0
        %v1242 = vsel %vm1225, %v1176, 0.0
        %v1243 = vsel %vm1225, %v1177, 0.0
        %v1244 = vsel %vm1225, %v1178, 0.0
        %v1245 = vsel %vm1225, %v1179, 0.0
        %v1246 = vsel %vm1225, %v1180, 0.0
        %v1247 = vsel %vm1225, %v1181, 0.0
        %v1248 = vsel %vm1225, %v1182, 0.0
        %v1249 = vsel %vm1225, %v1183, 0.0
        %v1250 = vsel %vm1225, %v1184, 0.0
        %v1251 = vsel %vm1225, %v1185, 0.0
        %v1252 = vsel %vm1225, %v1186, 0.0
        %v1253 = vsel %vm1225, %v1187, 0.0
        %v1254 = vsel %vm1225, %v1188, 0.0
        %v1255 = vsel %vm1225, %v1189, 0.0
        %v1256 = vsel %vm1225, %v1190, 0.0
        %v1257 = vsel %vm1225, %v1191, 0.0
        %v1258 = vsel %vm1225, %v1192, 0.0
        %v1259 = vsel %vm1225, %v1193, 0.0
        %v1260 = vsel %vm1225, %v1194, 0.0
        %v1261 = vsel %vm1225, %v1195, 0.0
        %v1262 = vsel %vm1225, %v1196, 0.0
        %v1263 = vsel %vm1225, %v1197, 0.0
        %v1264 = vsel %vm1225, %v1198, 0.0
        %v1265 = vsel %vm1225, %v1199, 0.0
        %v1266 = vsel %vm1225, %v1200, 0.0
        %v1267 = vsel %vm1225, %v1201, 0.0
        %v1268 = vsel %vm1225, %v1202, 0.0
        %v1269 = vsel %vm1225, %v1203, 0.0
        %v1270 = vsel %vm1225, %v1204, 0.0
        %v1271 = vsel %vm1225, %v1205, 0.0
        %v1272 = vsel %vm1225, %v1206, 0.0
        %v1273 = vsel %vm1225, %v1207, 0.0
        %v1274 = vsel %vm1225, %v1208, 0.0
        %v1275 = vsel %vm1225, %v1209, 0.0
        %v1276 = vsel %vm1225, %v1210, 0.0
        %v1277 = vsel %vm1225, %v1211, 0.0
        %v1278 = vsel %vm1225, %v1212, 0.0
        %v1279 = vsel %vm1225, %v1213, 0.0
        %v1280 = vsel %vm1225, %v1214, 0.0
        %v1281 = vsel %vm1225, %v1215, 0.0
        %v1282 = vsel %vm1225, %v1216, 0.0
        %v1283 = vsel %vm1225, %v1217, 0.0
        %v1284 = vsel %vm1225, %v1218, 0.0
        %v1285 = vsel %vm1225, %v1219, 0.0
        %v1286 = vsel %vm1225, %v1220, 0.0
        %v1287 = vsel %vm1225, %v1221, 0.0
        %v1288 = vsel %vm1225, %v1222, 0.0
        %v1289 = vsel %vm1225, %v1223, 0.0
        %v1290 = vsel %vm1225, %v1224, 0.0
        %1291 = vset.pattern.permute.xlu0 0
        %1292 = vperm.xlu0 %1291, %v248
        %v1293 = vpop.permute.xlu0 %1292
        %1294 = vset.pattern.permute.xlu0 0
        %1295 = vperm.xlu0 %1294, %v249
        %v1296 = vpop.permute.xlu0 %1295
        %1297 = vset.pattern.permute.xlu0 0
        %1298 = vperm.xlu0 %1297, %v250
        %v1299 = vpop.permute.xlu0 %1298
        %1300 = vset.pattern.permute.xlu0 0
        %1301 = vperm.xlu0 %1300, %v251
        %v1302 = vpop.permute.xlu0 %1301
        %1303 = vset.pattern.permute.xlu0 0
        %1304 = vperm.xlu0 %1303, %v252
        %v1305 = vpop.permute.xlu0 %1304
        %1306 = vset.pattern.permute.xlu0 0
        %1307 = vperm.xlu0 %1306, %v253
        %v1308 = vpop.permute.xlu0 %1307
        %1309 = vset.pattern.permute.xlu0 0
        %1310 = vperm.xlu0 %1309, %v254
        %v1311 = vpop.permute.xlu0 %1310
        %1312 = vset.pattern.permute.xlu0 0
        %1313 = vperm.xlu0 %1312, %v255
        %v1314 = vpop.permute.xlu0 %1313
        %1315 = vset.pattern.permute.xlu0 0
        %1316 = vperm.xlu0 %1315, %v256
        %v1317 = vpop.permute.xlu0 %1316
        %1318 = vset.pattern.permute.xlu0 0
        %1319 = vperm.xlu0 %1318, %v257
        %v1320 = vpop.permute.xlu0 %1319
        %1321 = vset.pattern.permute.xlu0 0
        %1322 = vperm.xlu0 %1321, %v258
        %v1323 = vpop.permute.xlu0 %1322
        %1324 = vset.pattern.permute.xlu0 0
        %1325 = vperm.xlu0 %1324, %v259
        %v1326 = vpop.permute.xlu0 %1325
        %1327 = vset.pattern.permute.xlu0 0
        %1328 = vperm.xlu0 %1327, %v260
        %v1329 = vpop.permute.xlu0 %1328
        %1330 = vset.pattern.permute.xlu0 0
        %1331 = vperm.xlu0 %1330, %v261
        %v1332 = vpop.permute.xlu0 %1331
        %1333 = vset.pattern.permute.xlu0 0
        %1334 = vperm.xlu0 %1333, %v262
        %v1335 = vpop.permute.xlu0 %1334
        %1336 = vset.pattern.permute.xlu0 0
        %1337 = vperm.xlu0 %1336, %v263
        %v1338 = vpop.permute.xlu0 %1337
        %1339 = vset.pattern.permute.xlu0 0
        %1340 = vperm.xlu0 %1339, %v264
        %v1341 = vpop.permute.xlu0 %1340
        %1342 = vset.pattern.permute.xlu0 0
        %1343 = vperm.xlu0 %1342, %v265
        %v1344 = vpop.permute.xlu0 %1343
        %1345 = vset.pattern.permute.xlu0 0
        %1346 = vperm.xlu0 %1345, %v266
        %v1347 = vpop.permute.xlu0 %1346
        %1348 = vset.pattern.permute.xlu0 0
        %1349 = vperm.xlu0 %1348, %v267
        %v1350 = vpop.permute.xlu0 %1349
        %1351 = vset.pattern.permute.xlu0 0
        %1352 = vperm.xlu0 %1351, %v268
        %v1353 = vpop.permute.xlu0 %1352
        %1354 = vset.pattern.permute.xlu0 0
        %1355 = vperm.xlu0 %1354, %v269
        %v1356 = vpop.permute.xlu0 %1355
        %1357 = vset.pattern.permute.xlu0 0
        %1358 = vperm.xlu0 %1357, %v270
        %v1359 = vpop.permute.xlu0 %1358
        %1360 = vset.pattern.permute.xlu0 0
        %1361 = vperm.xlu0 %1360, %v271
        %v1362 = vpop.permute.xlu0 %1361
        %1363 = vset.pattern.permute.xlu0 0
        %1364 = vperm.xlu0 %1363, %v272
        %v1365 = vpop.permute.xlu0 %1364
        %1366 = vset.pattern.permute.xlu0 0
        %1367 = vperm.xlu0 %1366, %v273
        %v1368 = vpop.permute.xlu0 %1367
        %1369 = vset.pattern.permute.xlu0 0
        %1370 = vperm.xlu0 %1369, %v274
        %v1371 = vpop.permute.xlu0 %1370
        %1372 = vset.pattern.permute.xlu0 0
        %1373 = vperm.xlu0 %1372, %v275
        %v1374 = vpop.permute.xlu0 %1373
        %1375 = vset.pattern.permute.xlu0 0
        %1376 = vperm.xlu0 %1375, %v276
        %v1377 = vpop.permute.xlu0 %1376
        %1378 = vset.pattern.permute.xlu0 0
        %1379 = vperm.xlu0 %1378, %v277
        %v1380 = vpop.permute.xlu0 %1379
        %1381 = vset.pattern.permute.xlu0 0
        %1382 = vperm.xlu0 %1381, %v278
        %v1383 = vpop.permute.xlu0 %1382
        %1384 = vset.pattern.permute.xlu0 0
        %1385 = vperm.xlu0 %1384, %v279
        %v1386 = vpop.permute.xlu0 %1385
        %1387 = vset.pattern.permute.xlu0 0
        %1388 = vperm.xlu0 %1387, %v280
        %v1389 = vpop.permute.xlu0 %1388
        %1390 = vset.pattern.permute.xlu0 0
        %1391 = vperm.xlu0 %1390, %v281
        %v1392 = vpop.permute.xlu0 %1391
        %1393 = vset.pattern.permute.xlu0 0
        %1394 = vperm.xlu0 %1393, %v282
        %v1395 = vpop.permute.xlu0 %1394
        %1396 = vset.pattern.permute.xlu0 0
        %1397 = vperm.xlu0 %1396, %v283
        %v1398 = vpop.permute.xlu0 %1397
        %1399 = vset.pattern.permute.xlu0 0
        %1400 = vperm.xlu0 %1399, %v284
        %v1401 = vpop.permute.xlu0 %1400
        %1402 = vset.pattern.permute.xlu0 0
        %1403 = vperm.xlu0 %1402, %v285
        %v1404 = vpop.permute.xlu0 %1403
        %1405 = vset.pattern.permute.xlu0 0
        %1406 = vperm.xlu0 %1405, %v286
        %v1407 = vpop.permute.xlu0 %1406
        %1408 = vset.pattern.permute.xlu0 0
        %1409 = vperm.xlu0 %1408, %v287
        %v1410 = vpop.permute.xlu0 %1409
        %1411 = vset.pattern.permute.xlu0 0
        %1412 = vperm.xlu0 %1411, %v288
        %v1413 = vpop.permute.xlu0 %1412
        %1414 = vset.pattern.permute.xlu0 0
        %1415 = vperm.xlu0 %1414, %v289
        %v1416 = vpop.permute.xlu0 %1415
        %1417 = vset.pattern.permute.xlu0 0
        %1418 = vperm.xlu0 %1417, %v290
        %v1419 = vpop.permute.xlu0 %1418
        %1420 = vset.pattern.permute.xlu0 0
        %1421 = vperm.xlu0 %1420, %v291
        %v1422 = vpop.permute.xlu0 %1421
        %1423 = vset.pattern.permute.xlu0 0
        %1424 = vperm.xlu0 %1423, %v292
        %v1425 = vpop.permute.xlu0 %1424
        %1426 = vset.pattern.permute.xlu0 0
        %1427 = vperm.xlu0 %1426, %v293
        %v1428 = vpop.permute.xlu0 %1427
        %1429 = vset.pattern.permute.xlu0 0
        %1430 = vperm.xlu0 %1429, %v294
        %v1431 = vpop.permute.xlu0 %1430
        %1432 = vset.pattern.permute.xlu0 0
        %1433 = vperm.xlu0 %1432, %v295
        %v1434 = vpop.permute.xlu0 %1433
        %1435 = vset.pattern.permute.xlu0 0
        %1436 = vperm.xlu0 %1435, %v296
        %v1437 = vpop.permute.xlu0 %1436
        %1438 = vset.pattern.permute.xlu0 0
        %1439 = vperm.xlu0 %1438, %v297
        %v1440 = vpop.permute.xlu0 %1439
        %1441 = vset.pattern.permute.xlu0 0
        %1442 = vperm.xlu0 %1441, %v298
        %v1443 = vpop.permute.xlu0 %1442
        %1444 = vset.pattern.permute.xlu0 0
        %1445 = vperm.xlu0 %1444, %v299
        %v1446 = vpop.permute.xlu0 %1445
        %1447 = vset.pattern.permute.xlu0 0
        %1448 = vperm.xlu0 %1447, %v300
        %v1449 = vpop.permute.xlu0 %1448
        %1450 = vset.pattern.permute.xlu0 0
        %1451 = vperm.xlu0 %1450, %v301
        %v1452 = vpop.permute.xlu0 %1451
        %1453 = vset.pattern.permute.xlu0 0
        %1454 = vperm.xlu0 %1453, %v302
        %v1455 = vpop.permute.xlu0 %1454
        %1456 = vset.pattern.permute.xlu0 0
        %1457 = vperm.xlu0 %1456, %v303
        %v1458 = vpop.permute.xlu0 %1457
        %1459 = vset.pattern.permute.xlu0 0
        %1460 = vperm.xlu0 %1459, %v304
        %v1461 = vpop.permute.xlu0 %1460
        %1462 = vset.pattern.permute.xlu0 0
        %1463 = vperm.xlu0 %1462, %v305
        %v1464 = vpop.permute.xlu0 %1463
        %1465 = vset.pattern.permute.xlu0 0
        %1466 = vperm.xlu0 %1465, %v306
        %v1467 = vpop.permute.xlu0 %1466
        %1468 = vset.pattern.permute.xlu0 0
        %1469 = vperm.xlu0 %1468, %v307
        %v1470 = vpop.permute.xlu0 %1469
        %1471 = vset.pattern.permute.xlu0 0
        %1472 = vperm.xlu0 %1471, %v308
        %v1473 = vpop.permute.xlu0 %1472
        %1474 = vset.pattern.permute.xlu0 0
        %1475 = vperm.xlu0 %1474, %v309
        %v1476 = vpop.permute.xlu0 %1475
        %1477 = vset.pattern.permute.xlu0 0
        %1478 = vperm.xlu0 %1477, %v310
        %v1479 = vpop.permute.xlu0 %1478
        %1480 = vset.pattern.permute.xlu0 0
        %1481 = vperm.xlu0 %1480, %v311
        %v1482 = vpop.permute.xlu0 %1481
        %1483 = vset.pattern.permute.xlu0 0
        %1484 = vperm.xlu0 %1483, %v312
        %v1485 = vpop.permute.xlu0 %1484
        %vm1486 = vcmp.eq.s32.totalorder %v1159, %v1293
        %vm1487 = vcmp.eq.s32.totalorder %v1159, %v1296
        %vm1488 = vcmp.eq.s32.totalorder %v1159, %v1299
        %vm1489 = vcmp.eq.s32.totalorder %v1159, %v1302
        %vm1490 = vcmp.eq.s32.totalorder %v1159, %v1305
        %vm1491 = vcmp.eq.s32.totalorder %v1159, %v1308
        %vm1492 = vcmp.eq.s32.totalorder %v1159, %v1311
        %vm1493 = vcmp.eq.s32.totalorder %v1159, %v1314
        %vm1494 = vcmp.eq.s32.totalorder %v1159, %v1317
        %vm1495 = vcmp.eq.s32.totalorder %v1159, %v1320
        %vm1496 = vcmp.eq.s32.totalorder %v1159, %v1323
        %vm1497 = vcmp.eq.s32.totalorder %v1159, %v1326
        %vm1498 = vcmp.eq.s32.totalorder %v1159, %v1329
        %vm1499 = vcmp.eq.s32.totalorder %v1159, %v1332
        %vm1500 = vcmp.eq.s32.totalorder %v1159, %v1335
        %vm1501 = vcmp.eq.s32.totalorder %v1159, %v1338
        %vm1502 = vcmp.eq.s32.totalorder %v1159, %v1341
        %vm1503 = vcmp.eq.s32.totalorder %v1159, %v1344
        %vm1504 = vcmp.eq.s32.totalorder %v1159, %v1347
        %vm1505 = vcmp.eq.s32.totalorder %v1159, %v1350
        %vm1506 = vcmp.eq.s32.totalorder %v1159, %v1353
        %vm1507 = vcmp.eq.s32.totalorder %v1159, %v1356
        %vm1508 = vcmp.eq.s32.totalorder %v1159, %v1359
        %vm1509 = vcmp.eq.s32.totalorder %v1159, %v1362
        %vm1510 = vcmp.eq.s32.totalorder %v1159, %v1365
        %vm1511 = vcmp.eq.s32.totalorder %v1159, %v1368
        %vm1512 = vcmp.eq.s32.totalorder %v1159, %v1371
        %vm1513 = vcmp.eq.s32.totalorder %v1159, %v1374
        %vm1514 = vcmp.eq.s32.totalorder %v1159, %v1377
        %vm1515 = vcmp.eq.s32.totalorder %v1159, %v1380
        %vm1516 = vcmp.eq.s32.totalorder %v1159, %v1383
        %vm1517 = vcmp.eq.s32.totalorder %v1159, %v1386
        %vm1518 = vcmp.eq.s32.totalorder %v1159, %v1389
        %vm1519 = vcmp.eq.s32.totalorder %v1159, %v1392
        %vm1520 = vcmp.eq.s32.totalorder %v1159, %v1395
        %vm1521 = vcmp.eq.s32.totalorder %v1159, %v1398
        %vm1522 = vcmp.eq.s32.totalorder %v1159, %v1401
        %vm1523 = vcmp.eq.s32.totalorder %v1159, %v1404
        %vm1524 = vcmp.eq.s32.totalorder %v1159, %v1407
        %vm1525 = vcmp.eq.s32.totalorder %v1159, %v1410
        %vm1526 = vcmp.eq.s32.totalorder %v1159, %v1413
        %vm1527 = vcmp.eq.s32.totalorder %v1159, %v1416
        %vm1528 = vcmp.eq.s32.totalorder %v1159, %v1419
        %vm1529 = vcmp.eq.s32.totalorder %v1159, %v1422
        %vm1530 = vcmp.eq.s32.totalorder %v1159, %v1425
        %vm1531 = vcmp.eq.s32.totalorder %v1159, %v1428
        %vm1532 = vcmp.eq.s32.totalorder %v1159, %v1431
        %vm1533 = vcmp.eq.s32.totalorder %v1159, %v1434
        %vm1534 = vcmp.eq.s32.totalorder %v1159, %v1437
        %vm1535 = vcmp.eq.s32.totalorder %v1159, %v1440
        %vm1536 = vcmp.eq.s32.totalorder %v1159, %v1443
        %vm1537 = vcmp.eq.s32.totalorder %v1159, %v1446
        %vm1538 = vcmp.eq.s32.totalorder %v1159, %v1449
        %vm1539 = vcmp.eq.s32.totalorder %v1159, %v1452
        %vm1540 = vcmp.eq.s32.totalorder %v1159, %v1455
        %vm1541 = vcmp.eq.s32.totalorder %v1159, %v1458
        %vm1542 = vcmp.eq.s32.totalorder %v1159, %v1461
        %vm1543 = vcmp.eq.s32.totalorder %v1159, %v1464
        %vm1544 = vcmp.eq.s32.totalorder %v1159, %v1467
        %vm1545 = vcmp.eq.s32.totalorder %v1159, %v1470
        %vm1546 = vcmp.eq.s32.totalorder %v1159, %v1473
        %vm1547 = vcmp.eq.s32.totalorder %v1159, %v1476
        %vm1548 = vcmp.eq.s32.totalorder %v1159, %v1479
        %vm1549 = vcmp.eq.s32.totalorder %v1159, %v1482
        %vm1550 = vcmp.eq.s32.totalorder %v1159, %v1485
        %v1551 = vsel %vm1486, 1, 0
        %v1552 = vsel %vm1487, 1, 0
        %v1553 = vsel %vm1488, 1, 0
        %v1554 = vsel %vm1489, 1, 0
        %v1555 = vsel %vm1490, 1, 0
        %v1556 = vsel %vm1491, 1, 0
        %v1557 = vsel %vm1492, 1, 0
        %v1558 = vsel %vm1493, 1, 0
        %v1559 = vsel %vm1494, 1, 0
        %v1560 = vsel %vm1495, 1, 0
        %v1561 = vsel %vm1496, 1, 0
        %v1562 = vsel %vm1497, 1, 0
        %v1563 = vsel %vm1498, 1, 0
        %v1564 = vsel %vm1499, 1, 0
        %v1565 = vsel %vm1500, 1, 0
        %v1566 = vsel %vm1501, 1, 0
        %v1567 = vsel %vm1502, 1, 0
        %v1568 = vsel %vm1503, 1, 0
        %v1569 = vsel %vm1504, 1, 0
        %v1570 = vsel %vm1505, 1, 0
        %v1571 = vsel %vm1506, 1, 0
        %v1572 = vsel %vm1507, 1, 0
        %v1573 = vsel %vm1508, 1, 0
        %v1574 = vsel %vm1509, 1, 0
        %v1575 = vsel %vm1510, 1, 0
        %v1576 = vsel %vm1511, 1, 0
        %v1577 = vsel %vm1512, 1, 0
        %v1578 = vsel %vm1513, 1, 0
        %v1579 = vsel %vm1514, 1, 0
        %v1580 = vsel %vm1515, 1, 0
        %v1581 = vsel %vm1516, 1, 0
        %v1582 = vsel %vm1517, 1, 0
        %v1583 = vsel %vm1518, 1, 0
        %v1584 = vsel %vm1519, 1, 0
        %v1585 = vsel %vm1520, 1, 0
        %v1586 = vsel %vm1521, 1, 0
        %v1587 = vsel %vm1522, 1, 0
        %v1588 = vsel %vm1523, 1, 0
        %v1589 = vsel %vm1524, 1, 0
        %v1590 = vsel %vm1525, 1, 0
        %v1591 = vsel %vm1526, 1, 0
        %v1592 = vsel %vm1527, 1, 0
        %v1593 = vsel %vm1528, 1, 0
        %v1594 = vsel %vm1529, 1, 0
        %v1595 = vsel %vm1530, 1, 0
        %v1596 = vsel %vm1531, 1, 0
        %v1597 = vsel %vm1532, 1, 0
        %v1598 = vsel %vm1533, 1, 0
        %v1599 = vsel %vm1534, 1, 0
        %v1600 = vsel %vm1535, 1, 0
        %v1601 = vsel %vm1536, 1, 0
        %v1602 = vsel %vm1537, 1, 0
        %v1603 = vsel %vm1538, 1, 0
        %v1604 = vsel %vm1539, 1, 0
        %v1605 = vsel %vm1540, 1, 0
        %v1606 = vsel %vm1541, 1, 0
        %v1607 = vsel %vm1542, 1, 0
        %v1608 = vsel %vm1543, 1, 0
        %v1609 = vsel %vm1544, 1, 0
        %v1610 = vsel %vm1545, 1, 0
        %v1611 = vsel %vm1546, 1, 0
        %v1612 = vsel %vm1547, 1, 0
        %v1613 = vsel %vm1548, 1, 0
        %v1614 = vsel %vm1549, 1, 0
        %v1615 = vsel %vm1550, 1, 0
        %v1616 = vcvt.s32.f32 %v1551
        %v1617 = vcvt.s32.f32 %v1552
        %v1618 = vcvt.s32.f32 %v1553
        %v1619 = vcvt.s32.f32 %v1554
        %v1620 = vcvt.s32.f32 %v1555
        %v1621 = vcvt.s32.f32 %v1556
        %v1622 = vcvt.s32.f32 %v1557
        %v1623 = vcvt.s32.f32 %v1558
        %v1624 = vcvt.s32.f32 %v1559
        %v1625 = vcvt.s32.f32 %v1560
        %v1626 = vcvt.s32.f32 %v1561
        %v1627 = vcvt.s32.f32 %v1562
        %v1628 = vcvt.s32.f32 %v1563
        %v1629 = vcvt.s32.f32 %v1564
        %v1630 = vcvt.s32.f32 %v1565
        %v1631 = vcvt.s32.f32 %v1566
        %v1632 = vcvt.s32.f32 %v1567
        %v1633 = vcvt.s32.f32 %v1568
        %v1634 = vcvt.s32.f32 %v1569
        %v1635 = vcvt.s32.f32 %v1570
        %v1636 = vcvt.s32.f32 %v1571
        %v1637 = vcvt.s32.f32 %v1572
        %v1638 = vcvt.s32.f32 %v1573
        %v1639 = vcvt.s32.f32 %v1574
        %v1640 = vcvt.s32.f32 %v1575
        %v1641 = vcvt.s32.f32 %v1576
        %v1642 = vcvt.s32.f32 %v1577
        %v1643 = vcvt.s32.f32 %v1578
        %v1644 = vcvt.s32.f32 %v1579
        %v1645 = vcvt.s32.f32 %v1580
        %v1646 = vcvt.s32.f32 %v1581
        %v1647 = vcvt.s32.f32 %v1582
        %v1648 = vcvt.s32.f32 %v1583
        %v1649 = vcvt.s32.f32 %v1584
        %v1650 = vcvt.s32.f32 %v1585
        %v1651 = vcvt.s32.f32 %v1586
        %v1652 = vcvt.s32.f32 %v1587
        %v1653 = vcvt.s32.f32 %v1588
        %v1654 = vcvt.s32.f32 %v1589
        %v1655 = vcvt.s32.f32 %v1590
        %v1656 = vcvt.s32.f32 %v1591
        %v1657 = vcvt.s32.f32 %v1592
        %v1658 = vcvt.s32.f32 %v1593
        %v1659 = vcvt.s32.f32 %v1594
        %v1660 = vcvt.s32.f32 %v1595
        %v1661 = vcvt.s32.f32 %v1596
        %v1662 = vcvt.s32.f32 %v1597
        %v1663 = vcvt.s32.f32 %v1598
        %v1664 = vcvt.s32.f32 %v1599
        %v1665 = vcvt.s32.f32 %v1600
        %v1666 = vcvt.s32.f32 %v1601
        %v1667 = vcvt.s32.f32 %v1602
        %v1668 = vcvt.s32.f32 %v1603
        %v1669 = vcvt.s32.f32 %v1604
        %v1670 = vcvt.s32.f32 %v1605
        %v1671 = vcvt.s32.f32 %v1606
        %v1672 = vcvt.s32.f32 %v1607
        %v1673 = vcvt.s32.f32 %v1608
        %v1674 = vcvt.s32.f32 %v1609
        %v1675 = vcvt.s32.f32 %v1610
        %v1676 = vcvt.s32.f32 %v1611
        %v1677 = vcvt.s32.f32 %v1612
        %v1678 = vcvt.s32.f32 %v1613
        %v1679 = vcvt.s32.f32 %v1614
        %v1680 = vcvt.s32.f32 %v1615
        %1682 = vset.pattern.permute.xlu0 1
        %1683 = vperm.xlu0 %1682, %v1093
        %v1684 = vpop.permute.xlu0 %1683
        %1687 = vset.pattern.permute.xlu0 1
        %1688 = vperm.xlu0 %1687, %v1094
        %v1689 = vpop.permute.xlu0 %1688
        %1692 = vset.pattern.permute.xlu0 1
        %1693 = vperm.xlu0 %1692, %v1095
        %v1694 = vpop.permute.xlu0 %1693
        %1697 = vset.pattern.permute.xlu0 1
        %1698 = vperm.xlu0 %1697, %v1096
        %v1699 = vpop.permute.xlu0 %1698
        %1702 = vset.pattern.permute.xlu0 1
        %1703 = vperm.xlu0 %1702, %v1097
        %v1704 = vpop.permute.xlu0 %1703
        %1707 = vset.pattern.permute.xlu0 1
        %1708 = vperm.xlu0 %1707, %v1098
        %v1709 = vpop.permute.xlu0 %1708
        %1712 = vset.pattern.permute.xlu0 1
        %1713 = vperm.xlu0 %1712, %v1099
        %v1714 = vpop.permute.xlu0 %1713
        %1717 = vset.pattern.permute.xlu0 1
        %1718 = vperm.xlu0 %1717, %v1100
        %v1719 = vpop.permute.xlu0 %1718
        %1722 = vset.pattern.permute.xlu0 1
        %1723 = vperm.xlu0 %1722, %v1101
        %v1724 = vpop.permute.xlu0 %1723
        %1727 = vset.pattern.permute.xlu0 1
        %1728 = vperm.xlu0 %1727, %v1102
        %v1729 = vpop.permute.xlu0 %1728
        %1732 = vset.pattern.permute.xlu0 1
        %1733 = vperm.xlu0 %1732, %v1103
        %v1734 = vpop.permute.xlu0 %1733
        %1737 = vset.pattern.permute.xlu0 1
        %1738 = vperm.xlu0 %1737, %v1104
        %v1739 = vpop.permute.xlu0 %1738
        %1742 = vset.pattern.permute.xlu0 1
        %1743 = vperm.xlu0 %1742, %v1105
        %v1744 = vpop.permute.xlu0 %1743
        %1747 = vset.pattern.permute.xlu0 1
        %1748 = vperm.xlu0 %1747, %v1106
        %v1749 = vpop.permute.xlu0 %1748
        %1752 = vset.pattern.permute.xlu0 1
        %1753 = vperm.xlu0 %1752, %v1107
        %v1754 = vpop.permute.xlu0 %1753
        %1757 = vset.pattern.permute.xlu0 1
        %1758 = vperm.xlu0 %1757, %v1108
        %v1759 = vpop.permute.xlu0 %1758
        %1762 = vset.pattern.permute.xlu0 1
        %1763 = vperm.xlu0 %1762, %v1109
        %v1764 = vpop.permute.xlu0 %1763
        %1767 = vset.pattern.permute.xlu0 1
        %1768 = vperm.xlu0 %1767, %v1110
        %v1769 = vpop.permute.xlu0 %1768
        %1772 = vset.pattern.permute.xlu0 1
        %1773 = vperm.xlu0 %1772, %v1111
        %v1774 = vpop.permute.xlu0 %1773
        %1777 = vset.pattern.permute.xlu0 1
        %1778 = vperm.xlu0 %1777, %v1112
        %v1779 = vpop.permute.xlu0 %1778
        %1782 = vset.pattern.permute.xlu0 1
        %1783 = vperm.xlu0 %1782, %v1113
        %v1784 = vpop.permute.xlu0 %1783
        %1787 = vset.pattern.permute.xlu0 1
        %1788 = vperm.xlu0 %1787, %v1114
        %v1789 = vpop.permute.xlu0 %1788
        %1792 = vset.pattern.permute.xlu0 1
        %1793 = vperm.xlu0 %1792, %v1115
        %v1794 = vpop.permute.xlu0 %1793
        %1797 = vset.pattern.permute.xlu0 1
        %1798 = vperm.xlu0 %1797, %v1116
        %v1799 = vpop.permute.xlu0 %1798
        %1802 = vset.pattern.permute.xlu0 1
        %1803 = vperm.xlu0 %1802, %v1117
        %v1804 = vpop.permute.xlu0 %1803
        %1807 = vset.pattern.permute.xlu0 1
        %1808 = vperm.xlu0 %1807, %v1118
        %v1809 = vpop.permute.xlu0 %1808
        %1812 = vset.pattern.permute.xlu0 1
        %1813 = vperm.xlu0 %1812, %v1119
        %v1814 = vpop.permute.xlu0 %1813
        %1817 = vset.pattern.permute.xlu0 1
        %1818 = vperm.xlu0 %1817, %v1120
        %v1819 = vpop.permute.xlu0 %1818
        %1822 = vset.pattern.permute.xlu0 1
        %1823 = vperm.xlu0 %1822, %v1121
        %v1824 = vpop.permute.xlu0 %1823
        %1827 = vset.pattern.permute.xlu0 1
        %1828 = vperm.xlu0 %1827, %v1122
        %v1829 = vpop.permute.xlu0 %1828
        %1832 = vset.pattern.permute.xlu0 1
        %1833 = vperm.xlu0 %1832, %v1123
        %v1834 = vpop.permute.xlu0 %1833
        %1837 = vset.pattern.permute.xlu0 1
        %1838 = vperm.xlu0 %1837, %v1124
        %v1839 = vpop.permute.xlu0 %1838
        %1842 = vset.pattern.permute.xlu0 1
        %1843 = vperm.xlu0 %1842, %v1125
        %v1844 = vpop.permute.xlu0 %1843
        %1847 = vset.pattern.permute.xlu0 1
        %1848 = vperm.xlu0 %1847, %v1126
        %v1849 = vpop.permute.xlu0 %1848
        %1852 = vset.pattern.permute.xlu0 1
        %1853 = vperm.xlu0 %1852, %v1127
        %v1854 = vpop.permute.xlu0 %1853
        %1857 = vset.pattern.permute.xlu0 1
        %1858 = vperm.xlu0 %1857, %v1128
        %v1859 = vpop.permute.xlu0 %1858
        %1862 = vset.pattern.permute.xlu0 1
        %1863 = vperm.xlu0 %1862, %v1129
        %v1864 = vpop.permute.xlu0 %1863
        %1867 = vset.pattern.permute.xlu0 1
        %1868 = vperm.xlu0 %1867, %v1130
        %v1869 = vpop.permute.xlu0 %1868
        %1872 = vset.pattern.permute.xlu0 1
        %1873 = vperm.xlu0 %1872, %v1131
        %v1874 = vpop.permute.xlu0 %1873
        %1877 = vset.pattern.permute.xlu0 1
        %1878 = vperm.xlu0 %1877, %v1132
        %v1879 = vpop.permute.xlu0 %1878
        %1882 = vset.pattern.permute.xlu0 1
        %1883 = vperm.xlu0 %1882, %v1133
        %v1884 = vpop.permute.xlu0 %1883
        %1887 = vset.pattern.permute.xlu0 1
        %1888 = vperm.xlu0 %1887, %v1134
        %v1889 = vpop.permute.xlu0 %1888
        %1892 = vset.pattern.permute.xlu0 1
        %1893 = vperm.xlu0 %1892, %v1135
        %v1894 = vpop.permute.xlu0 %1893
        %1897 = vset.pattern.permute.xlu0 1
        %1898 = vperm.xlu0 %1897, %v1136
        %v1899 = vpop.permute.xlu0 %1898
        %1902 = vset.pattern.permute.xlu0 1
        %1903 = vperm.xlu0 %1902, %v1137
        %v1904 = vpop.permute.xlu0 %1903
        %1907 = vset.pattern.permute.xlu0 1
        %1908 = vperm.xlu0 %1907, %v1138
        %v1909 = vpop.permute.xlu0 %1908
        %1912 = vset.pattern.permute.xlu0 1
        %1913 = vperm.xlu0 %1912, %v1139
        %v1914 = vpop.permute.xlu0 %1913
        %1917 = vset.pattern.permute.xlu0 1
        %1918 = vperm.xlu0 %1917, %v1140
        %v1919 = vpop.permute.xlu0 %1918
        %1922 = vset.pattern.permute.xlu0 1
        %1923 = vperm.xlu0 %1922, %v1141
        %v1924 = vpop.permute.xlu0 %1923
        %1927 = vset.pattern.permute.xlu0 1
        %1928 = vperm.xlu0 %1927, %v1142
        %v1929 = vpop.permute.xlu0 %1928
        %1932 = vset.pattern.permute.xlu0 1
        %1933 = vperm.xlu0 %1932, %v1143
        %v1934 = vpop.permute.xlu0 %1933
        %1937 = vset.pattern.permute.xlu0 1
        %1938 = vperm.xlu0 %1937, %v1144
        %v1939 = vpop.permute.xlu0 %1938
        %1942 = vset.pattern.permute.xlu0 1
        %1943 = vperm.xlu0 %1942, %v1145
        %v1944 = vpop.permute.xlu0 %1943
        %1947 = vset.pattern.permute.xlu0 1
        %1948 = vperm.xlu0 %1947, %v1146
        %v1949 = vpop.permute.xlu0 %1948
        %1952 = vset.pattern.permute.xlu0 1
        %1953 = vperm.xlu0 %1952, %v1147
        %v1954 = vpop.permute.xlu0 %1953
        %1957 = vset.pattern.permute.xlu0 1
        %1958 = vperm.xlu0 %1957, %v1148
        %v1959 = vpop.permute.xlu0 %1958
        %1962 = vset.pattern.permute.xlu0 1
        %1963 = vperm.xlu0 %1962, %v1149
        %v1964 = vpop.permute.xlu0 %1963
        %1967 = vset.pattern.permute.xlu0 1
        %1968 = vperm.xlu0 %1967, %v1150
        %v1969 = vpop.permute.xlu0 %1968
        %1972 = vset.pattern.permute.xlu0 1
        %1973 = vperm.xlu0 %1972, %v1151
        %v1974 = vpop.permute.xlu0 %1973
        %1977 = vset.pattern.permute.xlu0 1
        %1978 = vperm.xlu0 %1977, %v1152
        %v1979 = vpop.permute.xlu0 %1978
        %1982 = vset.pattern.permute.xlu0 1
        %1983 = vperm.xlu0 %1982, %v1153
        %v1984 = vpop.permute.xlu0 %1983
        %1987 = vset.pattern.permute.xlu0 1
        %1988 = vperm.xlu0 %1987, %v1154
        %v1989 = vpop.permute.xlu0 %1988
        %1992 = vset.pattern.permute.xlu0 1
        %1993 = vperm.xlu0 %1992, %v1155
        %v1994 = vpop.permute.xlu0 %1993
        %1997 = vset.pattern.permute.xlu0 1
        %1998 = vperm.xlu0 %1997, %v1156
        %v1999 = vpop.permute.xlu0 %1998
        %2002 = vset.pattern.permute.xlu0 1
        %2003 = vperm.xlu0 %2002, %v1157
        %v2004 = vpop.permute.xlu0 %2003
        %v2006 = vmul.f32 %v1616, %v1684
        %v2007 = vmul.f32 %v1617, %v1689
        %v2008 = vmul.f32 %v1618, %v1694
        %v2009 = vmul.f32 %v1619, %v1699
        %v2010 = vmul.f32 %v1620, %v1704
        %v2011 = vmul.f32 %v1621, %v1709
        %v2012 = vmul.f32 %v1622, %v1714
        %v2013 = vmul.f32 %v1623, %v1719
        %v2014 = vmul.f32 %v1624, %v1724
        %v2015 = vmul.f32 %v1625, %v1729
        %v2016 = vmul.f32 %v1626, %v1734
        %v2017 = vmul.f32 %v1627, %v1739
        %v2018 = vmul.f32 %v1628, %v1744
        %v2019 = vmul.f32 %v1629, %v1749
        %v2020 = vmul.f32 %v1630, %v1754
        %v2021 = vmul.f32 %v1631, %v1759
        %v2022 = vmul.f32 %v1632, %v1764
        %v2023 = vmul.f32 %v1633, %v1769
        %v2024 = vmul.f32 %v1634, %v1774
        %v2025 = vmul.f32 %v1635, %v1779
        %v2026 = vmul.f32 %v1636, %v1784
        %v2027 = vmul.f32 %v1637, %v1789
        %v2028 = vmul.f32 %v1638, %v1794
        %v2029 = vmul.f32 %v1639, %v1799
        %v2030 = vmul.f32 %v1640, %v1804
        %v2031 = vmul.f32 %v1641, %v1809
        %v2032 = vmul.f32 %v1642, %v1814
        %v2033 = vmul.f32 %v1643, %v1819
        %v2034 = vmul.f32 %v1644, %v1824
        %v2035 = vmul.f32 %v1645, %v1829
        %v2036 = vmul.f32 %v1646, %v1834
        %v2037 = vmul.f32 %v1647, %v1839
        %v2038 = vmul.f32 %v1648, %v1844
        %v2039 = vmul.f32 %v1649, %v1849
        %v2040 = vmul.f32 %v1650, %v1854
        %v2041 = vmul.f32 %v1651, %v1859
        %v2042 = vmul.f32 %v1652, %v1864
        %v2043 = vmul.f32 %v1653, %v1869
        %v2044 = vmul.f32 %v1654, %v1874
        %v2045 = vmul.f32 %v1655, %v1879
        %v2046 = vmul.f32 %v1656, %v1884
        %v2047 = vmul.f32 %v1657, %v1889
        %v2048 = vmul.f32 %v1658, %v1894
        %v2049 = vmul.f32 %v1659, %v1899
        %v2050 = vmul.f32 %v1660, %v1904
        %v2051 = vmul.f32 %v1661, %v1909
        %v2052 = vmul.f32 %v1662, %v1914
        %v2053 = vmul.f32 %v1663, %v1919
        %v2054 = vmul.f32 %v1664, %v1924
        %v2055 = vmul.f32 %v1665, %v1929
        %v2056 = vmul.f32 %v1666, %v1934
        %v2057 = vmul.f32 %v1667, %v1939
        %v2058 = vmul.f32 %v1668, %v1944
        %v2059 = vmul.f32 %v1669, %v1949
        %v2060 = vmul.f32 %v1670, %v1954
        %v2061 = vmul.f32 %v1671, %v1959
        %v2062 = vmul.f32 %v1672, %v1964
        %v2063 = vmul.f32 %v1673, %v1969
        %v2064 = vmul.f32 %v1674, %v1974
        %v2065 = vmul.f32 %v1675, %v1979
        %v2066 = vmul.f32 %v1676, %v1984
        %v2067 = vmul.f32 %v1677, %v1989
        %v2068 = vmul.f32 %v1678, %v1994
        %v2069 = vmul.f32 %v1679, %v1999
        %v2070 = vmul.f32 %v1680, %v2004
        %v2071 = vadd.f32 %v1226, %v2006
        %v2072 = vadd.f32 %v1227, %v2007
        %v2073 = vadd.f32 %v1228, %v2008
        %v2074 = vadd.f32 %v1229, %v2009
        %v2075 = vadd.f32 %v1230, %v2010
        %v2076 = vadd.f32 %v1231, %v2011
        %v2077 = vadd.f32 %v1232, %v2012
        %v2078 = vadd.f32 %v1233, %v2013
        %v2079 = vadd.f32 %v1234, %v2014
        %v2080 = vadd.f32 %v1235, %v2015
        %v2081 = vadd.f32 %v1236, %v2016
        %v2082 = vadd.f32 %v1237, %v2017
        %v2083 = vadd.f32 %v1238, %v2018
        %v2084 = vadd.f32 %v1239, %v2019
        %v2085 = vadd.f32 %v1240, %v2020
        %v2086 = vadd.f32 %v1241, %v2021
        %v2087 = vadd.f32 %v1242, %v2022
        %v2088 = vadd.f32 %v1243, %v2023
        %v2089 = vadd.f32 %v1244, %v2024
        %v2090 = vadd.f32 %v1245, %v2025
        %v2091 = vadd.f32 %v1246, %v2026
        %v2092 = vadd.f32 %v1247, %v2027
        %v2093 = vadd.f32 %v1248, %v2028
        %v2094 = vadd.f32 %v1249, %v2029
        %v2095 = vadd.f32 %v1250, %v2030
        %v2096 = vadd.f32 %v1251, %v2031
        %v2097 = vadd.f32 %v1252, %v2032
        %v2098 = vadd.f32 %v1253, %v2033
        %v2099 = vadd.f32 %v1254, %v2034
        %v2100 = vadd.f32 %v1255, %v2035
        %v2101 = vadd.f32 %v1256, %v2036
        %v2102 = vadd.f32 %v1257, %v2037
        %v2103 = vadd.f32 %v1258, %v2038
        %v2104 = vadd.f32 %v1259, %v2039
        %v2105 = vadd.f32 %v1260, %v2040
        %v2106 = vadd.f32 %v1261, %v2041
        %v2107 = vadd.f32 %v1262, %v2042
        %v2108 = vadd.f32 %v1263, %v2043
        %v2109 = vadd.f32 %v1264, %v2044
        %v2110 = vadd.f32 %v1265, %v2045
        %v2111 = vadd.f32 %v1266, %v2046
        %v2112 = vadd.f32 %v1267, %v2047
        %v2113 = vadd.f32 %v1268, %v2048
        %v2114 = vadd.f32 %v1269, %v2049
        %v2115 = vadd.f32 %v1270, %v2050
        %v2116 = vadd.f32 %v1271, %v2051
        %v2117 = vadd.f32 %v1272, %v2052
        %v2118 = vadd.f32 %v1273, %v2053
        %v2119 = vadd.f32 %v1274, %v2054
        %v2120 = vadd.f32 %v1275, %v2055
        %v2121 = vadd.f32 %v1276, %v2056
        %v2122 = vadd.f32 %v1277, %v2057
        %v2123 = vadd.f32 %v1278, %v2058
        %v2124 = vadd.f32 %v1279, %v2059
        %v2125 = vadd.f32 %v1280, %v2060
        %v2126 = vadd.f32 %v1281, %v2061
        %v2127 = vadd.f32 %v1282, %v2062
        %v2128 = vadd.f32 %v1283, %v2063
        %v2129 = vadd.f32 %v1284, %v2064
        %v2130 = vadd.f32 %v1285, %v2065
        %v2131 = vadd.f32 %v1286, %v2066
        %v2132 = vadd.f32 %v1287, %v2067
        %v2133 = vadd.f32 %v1288, %v2068
        %v2134 = vadd.f32 %v1289, %v2069
        %v2135 = vadd.f32 %v1290, %v2070
        %2136 = vset.pattern.permute.xlu0 1
        %2137 = vperm.xlu0 %2136, %v248
        %v2138 = vpop.permute.xlu0 %2137
        %2139 = vset.pattern.permute.xlu0 1
        %2140 = vperm.xlu0 %2139, %v249
        %v2141 = vpop.permute.xlu0 %2140
        %2142 = vset.pattern.permute.xlu0 1
        %2143 = vperm.xlu0 %2142, %v250
        %v2144 = vpop.permute.xlu0 %2143
        %2145 = vset.pattern.permute.xlu0 1
        %2146 = vperm.xlu0 %2145, %v251
        %v2147 = vpop.permute.xlu0 %2146
        %2148 = vset.pattern.permute.xlu0 1
        %2149 = vperm.xlu0 %2148, %v252
        %v2150 = vpop.permute.xlu0 %2149
        %2151 = vset.pattern.permute.xlu0 1
        %2152 = vperm.xlu0 %2151, %v253
        %v2153 = vpop.permute.xlu0 %2152
        %2154 = vset.pattern.permute.xlu0 1
        %2155 = vperm.xlu0 %2154, %v254
        %v2156 = vpop.permute.xlu0 %2155
        %2157 = vset.pattern.permute.xlu0 1
        %2158 = vperm.xlu0 %2157, %v255
        %v2159 = vpop.permute.xlu0 %2158
        %2160 = vset.pattern.permute.xlu0 1
        %2161 = vperm.xlu0 %2160, %v256
        %v2162 = vpop.permute.xlu0 %2161
        %2163 = vset.pattern.permute.xlu0 1
        %2164 = vperm.xlu0 %2163, %v257
        %v2165 = vpop.permute.xlu0 %2164
        %2166 = vset.pattern.permute.xlu0 1
        %2167 = vperm.xlu0 %2166, %v258
        %v2168 = vpop.permute.xlu0 %2167
        %2169 = vset.pattern.permute.xlu0 1
        %2170 = vperm.xlu0 %2169, %v259
        %v2171 = vpop.permute.xlu0 %2170
        %2172 = vset.pattern.permute.xlu0 1
        %2173 = vperm.xlu0 %2172, %v260
        %v2174 = vpop.permute.xlu0 %2173
        %2175 = vset.pattern.permute.xlu0 1
        %2176 = vperm.xlu0 %2175, %v261
        %v2177 = vpop.permute.xlu0 %2176
        %2178 = vset.pattern.permute.xlu0 1
        %2179 = vperm.xlu0 %2178, %v262
        %v2180 = vpop.permute.xlu0 %2179
        %2181 = vset.pattern.permute.xlu0 1
        %2182 = vperm.xlu0 %2181, %v263
        %v2183 = vpop.permute.xlu0 %2182
        %2184 = vset.pattern.permute.xlu0 1
        %2185 = vperm.xlu0 %2184, %v264
        %v2186 = vpop.permute.xlu0 %2185
        %2187 = vset.pattern.permute.xlu0 1
        %2188 = vperm.xlu0 %2187, %v265
        %v2189 = vpop.permute.xlu0 %2188
        %2190 = vset.pattern.permute.xlu0 1
        %2191 = vperm.xlu0 %2190, %v266
        %v2192 = vpop.permute.xlu0 %2191
        %2193 = vset.pattern.permute.xlu0 1
        %2194 = vperm.xlu0 %2193, %v267
        %v2195 = vpop.permute.xlu0 %2194
        %2196 = vset.pattern.permute.xlu0 1
        %2197 = vperm.xlu0 %2196, %v268
        %v2198 = vpop.permute.xlu0 %2197
        %2199 = vset.pattern.permute.xlu0 1
        %2200 = vperm.xlu0 %2199, %v269
        %v2201 = vpop.permute.xlu0 %2200
        %2202 = vset.pattern.permute.xlu0 1
        %2203 = vperm.xlu0 %2202, %v270
        %v2204 = vpop.permute.xlu0 %2203
        %2205 = vset.pattern.permute.xlu0 1
        %2206 = vperm.xlu0 %2205, %v271
        %v2207 = vpop.permute.xlu0 %2206
        %2208 = vset.pattern.permute.xlu0 1
        %2209 = vperm.xlu0 %2208, %v272
        %v2210 = vpop.permute.xlu0 %2209
        %2211 = vset.pattern.permute.xlu0 1
        %2212 = vperm.xlu0 %2211, %v273
        %v2213 = vpop.permute.xlu0 %2212
        %2214 = vset.pattern.permute.xlu0 1
        %2215 = vperm.xlu0 %2214, %v274
        %v2216 = vpop.permute.xlu0 %2215
        %2217 = vset.pattern.permute.xlu0 1
        %2218 = vperm.xlu0 %2217, %v275
        %v2219 = vpop.permute.xlu0 %2218
        %2220 = vset.pattern.permute.xlu0 1
        %2221 = vperm.xlu0 %2220, %v276
        %v2222 = vpop.permute.xlu0 %2221
        %2223 = vset.pattern.permute.xlu0 1
        %2224 = vperm.xlu0 %2223, %v277
        %v2225 = vpop.permute.xlu0 %2224
        %2226 = vset.pattern.permute.xlu0 1
        %2227 = vperm.xlu0 %2226, %v278
        %v2228 = vpop.permute.xlu0 %2227
        %2229 = vset.pattern.permute.xlu0 1
        %2230 = vperm.xlu0 %2229, %v279
        %v2231 = vpop.permute.xlu0 %2230
        %2232 = vset.pattern.permute.xlu0 1
        %2233 = vperm.xlu0 %2232, %v280
        %v2234 = vpop.permute.xlu0 %2233
        %2235 = vset.pattern.permute.xlu0 1
        %2236 = vperm.xlu0 %2235, %v281
        %v2237 = vpop.permute.xlu0 %2236
        %2238 = vset.pattern.permute.xlu0 1
        %2239 = vperm.xlu0 %2238, %v282
        %v2240 = vpop.permute.xlu0 %2239
        %2241 = vset.pattern.permute.xlu0 1
        %2242 = vperm.xlu0 %2241, %v283
        %v2243 = vpop.permute.xlu0 %2242
        %2244 = vset.pattern.permute.xlu0 1
        %2245 = vperm.xlu0 %2244, %v284
        %v2246 = vpop.permute.xlu0 %2245
        %2247 = vset.pattern.permute.xlu0 1
        %2248 = vperm.xlu0 %2247, %v285
        %v2249 = vpop.permute.xlu0 %2248
        %2250 = vset.pattern.permute.xlu0 1
        %2251 = vperm.xlu0 %2250, %v286
        %v2252 = vpop.permute.xlu0 %2251
        %2253 = vset.pattern.permute.xlu0 1
        %2254 = vperm.xlu0 %2253, %v287
        %v2255 = vpop.permute.xlu0 %2254
        %2256 = vset.pattern.permute.xlu0 1
        %2257 = vperm.xlu0 %2256, %v288
        %v2258 = vpop.permute.xlu0 %2257
        %2259 = vset.pattern.permute.xlu0 1
        %2260 = vperm.xlu0 %2259, %v289
        %v2261 = vpop.permute.xlu0 %2260
        %2262 = vset.pattern.permute.xlu0 1
        %2263 = vperm.xlu0 %2262, %v290
        %v2264 = vpop.permute.xlu0 %2263
        %2265 = vset.pattern.permute.xlu0 1
        %2266 = vperm.xlu0 %2265, %v291
        %v2267 = vpop.permute.xlu0 %2266
        %2268 = vset.pattern.permute.xlu0 1
        %2269 = vperm.xlu0 %2268, %v292
        %v2270 = vpop.permute.xlu0 %2269
        %2271 = vset.pattern.permute.xlu0 1
        %2272 = vperm.xlu0 %2271, %v293
        %v2273 = vpop.permute.xlu0 %2272
        %2274 = vset.pattern.permute.xlu0 1
        %2275 = vperm.xlu0 %2274, %v294
        %v2276 = vpop.permute.xlu0 %2275
        %2277 = vset.pattern.permute.xlu0 1
        %2278 = vperm.xlu0 %2277, %v295
        %v2279 = vpop.permute.xlu0 %2278
        %2280 = vset.pattern.permute.xlu0 1
        %2281 = vperm.xlu0 %2280, %v296
        %v2282 = vpop.permute.xlu0 %2281
        %2283 = vset.pattern.permute.xlu0 1
        %2284 = vperm.xlu0 %2283, %v297
        %v2285 = vpop.permute.xlu0 %2284
        %2286 = vset.pattern.permute.xlu0 1
        %2287 = vperm.xlu0 %2286, %v298
        %v2288 = vpop.permute.xlu0 %2287
        %2289 = vset.pattern.permute.xlu0 1
        %2290 = vperm.xlu0 %2289, %v299
        %v2291 = vpop.permute.xlu0 %2290
        %2292 = vset.pattern.permute.xlu0 1
        %2293 = vperm.xlu0 %2292, %v300
        %v2294 = vpop.permute.xlu0 %2293
        %2295 = vset.pattern.permute.xlu0 1
        %2296 = vperm.xlu0 %2295, %v301
        %v2297 = vpop.permute.xlu0 %2296
        %2298 = vset.pattern.permute.xlu0 1
        %2299 = vperm.xlu0 %2298, %v302
        %v2300 = vpop.permute.xlu0 %2299
        %2301 = vset.pattern.permute.xlu0 1
        %2302 = vperm.xlu0 %2301, %v303
        %v2303 = vpop.permute.xlu0 %2302
        %2304 = vset.pattern.permute.xlu0 1
        %2305 = vperm.xlu0 %2304, %v304
        %v2306 = vpop.permute.xlu0 %2305
        %2307 = vset.pattern.permute.xlu0 1
        %2308 = vperm.xlu0 %2307, %v305
        %v2309 = vpop.permute.xlu0 %2308
        %2310 = vset.pattern.permute.xlu0 1
        %2311 = vperm.xlu0 %2310, %v306
        %v2312 = vpop.permute.xlu0 %2311
        %2313 = vset.pattern.permute.xlu0 1
        %2314 = vperm.xlu0 %2313, %v307
        %v2315 = vpop.permute.xlu0 %2314
        %2316 = vset.pattern.permute.xlu0 1
        %2317 = vperm.xlu0 %2316, %v308
        %v2318 = vpop.permute.xlu0 %2317
        %2319 = vset.pattern.permute.xlu0 1
        %2320 = vperm.xlu0 %2319, %v309
        %v2321 = vpop.permute.xlu0 %2320
        %2322 = vset.pattern.permute.xlu0 1
        %2323 = vperm.xlu0 %2322, %v310
        %v2324 = vpop.permute.xlu0 %2323
        %2325 = vset.pattern.permute.xlu0 1
        %2326 = vperm.xlu0 %2325, %v311
        %v2327 = vpop.permute.xlu0 %2326
        %2328 = vset.pattern.permute.xlu0 1
        %2329 = vperm.xlu0 %2328, %v312
        %v2330 = vpop.permute.xlu0 %2329
        %vm2331 = vcmp.eq.s32.totalorder %v1159, %v2138
        %vm2332 = vcmp.eq.s32.totalorder %v1159, %v2141
        %vm2333 = vcmp.eq.s32.totalorder %v1159, %v2144
        %vm2334 = vcmp.eq.s32.totalorder %v1159, %v2147
        %vm2335 = vcmp.eq.s32.totalorder %v1159, %v2150
        %vm2336 = vcmp.eq.s32.totalorder %v1159, %v2153
        %vm2337 = vcmp.eq.s32.totalorder %v1159, %v2156
        %vm2338 = vcmp.eq.s32.totalorder %v1159, %v2159
        %vm2339 = vcmp.eq.s32.totalorder %v1159, %v2162
        %vm2340 = vcmp.eq.s32.totalorder %v1159, %v2165
        %vm2341 = vcmp.eq.s32.totalorder %v1159, %v2168
        %vm2342 = vcmp.eq.s32.totalorder %v1159, %v2171
        %vm2343 = vcmp.eq.s32.totalorder %v1159, %v2174
        %vm2344 = vcmp.eq.s32.totalorder %v1159, %v2177
        %vm2345 = vcmp.eq.s32.totalorder %v1159, %v2180
        %vm2346 = vcmp.eq.s32.totalorder %v1159, %v2183
        %vm2347 = vcmp.eq.s32.totalorder %v1159, %v2186
        %vm2348 = vcmp.eq.s32.totalorder %v1159, %v2189
        %vm2349 = vcmp.eq.s32.totalorder %v1159, %v2192
        %vm2350 = vcmp.eq.s32.totalorder %v1159, %v2195
        %vm2351 = vcmp.eq.s32.totalorder %v1159, %v2198
        %vm2352 = vcmp.eq.s32.totalorder %v1159, %v2201
        %vm2353 = vcmp.eq.s32.totalorder %v1159, %v2204
        %vm2354 = vcmp.eq.s32.totalorder %v1159, %v2207
        %vm2355 = vcmp.eq.s32.totalorder %v1159, %v2210
        %vm2356 = vcmp.eq.s32.totalorder %v1159, %v2213
        %vm2357 = vcmp.eq.s32.totalorder %v1159, %v2216
        %vm2358 = vcmp.eq.s32.totalorder %v1159, %v2219
        %vm2359 = vcmp.eq.s32.totalorder %v1159, %v2222
        %vm2360 = vcmp.eq.s32.totalorder %v1159, %v2225
        %vm2361 = vcmp.eq.s32.totalorder %v1159, %v2228
        %vm2362 = vcmp.eq.s32.totalorder %v1159, %v2231
        %vm2363 = vcmp.eq.s32.totalorder %v1159, %v2234
        %vm2364 = vcmp.eq.s32.totalorder %v1159, %v2237
        %vm2365 = vcmp.eq.s32.totalorder %v1159, %v2240
        %vm2366 = vcmp.eq.s32.totalorder %v1159, %v2243
        %vm2367 = vcmp.eq.s32.totalorder %v1159, %v2246
        %vm2368 = vcmp.eq.s32.totalorder %v1159, %v2249
        %vm2369 = vcmp.eq.s32.totalorder %v1159, %v2252
        %vm2370 = vcmp.eq.s32.totalorder %v1159, %v2255
        %vm2371 = vcmp.eq.s32.totalorder %v1159, %v2258
        %vm2372 = vcmp.eq.s32.totalorder %v1159, %v2261
        %vm2373 = vcmp.eq.s32.totalorder %v1159, %v2264
        %vm2374 = vcmp.eq.s32.totalorder %v1159, %v2267
        %vm2375 = vcmp.eq.s32.totalorder %v1159, %v2270
        %vm2376 = vcmp.eq.s32.totalorder %v1159, %v2273
        %vm2377 = vcmp.eq.s32.totalorder %v1159, %v2276
        %vm2378 = vcmp.eq.s32.totalorder %v1159, %v2279
        %vm2379 = vcmp.eq.s32.totalorder %v1159, %v2282
        %vm2380 = vcmp.eq.s32.totalorder %v1159, %v2285
        %vm2381 = vcmp.eq.s32.totalorder %v1159, %v2288
        %vm2382 = vcmp.eq.s32.totalorder %v1159, %v2291
        %vm2383 = vcmp.eq.s32.totalorder %v1159, %v2294
        %vm2384 = vcmp.eq.s32.totalorder %v1159, %v2297
        %vm2385 = vcmp.eq.s32.totalorder %v1159, %v2300
        %vm2386 = vcmp.eq.s32.totalorder %v1159, %v2303
        %vm2387 = vcmp.eq.s32.totalorder %v1159, %v2306
        %vm2388 = vcmp.eq.s32.totalorder %v1159, %v2309
        %vm2389 = vcmp.eq.s32.totalorder %v1159, %v2312
        %vm2390 = vcmp.eq.s32.totalorder %v1159, %v2315
        %vm2391 = vcmp.eq.s32.totalorder %v1159, %v2318
        %vm2392 = vcmp.eq.s32.totalorder %v1159, %v2321
        %vm2393 = vcmp.eq.s32.totalorder %v1159, %v2324
        %vm2394 = vcmp.eq.s32.totalorder %v1159, %v2327
        %vm2395 = vcmp.eq.s32.totalorder %v1159, %v2330
        %v2396 = vsel %vm2331, 1, 0
        %v2397 = vsel %vm2332, 1, 0
        %v2398 = vsel %vm2333, 1, 0
        %v2399 = vsel %vm2334, 1, 0
        %v2400 = vsel %vm2335, 1, 0
        %v2401 = vsel %vm2336, 1, 0
        %v2402 = vsel %vm2337, 1, 0
        %v2403 = vsel %vm2338, 1, 0
        %v2404 = vsel %vm2339, 1, 0
        %v2405 = vsel %vm2340, 1, 0
        %v2406 = vsel %vm2341, 1, 0
        %v2407 = vsel %vm2342, 1, 0
        %v2408 = vsel %vm2343, 1, 0
        %v2409 = vsel %vm2344, 1, 0
        %v2410 = vsel %vm2345, 1, 0
        %v2411 = vsel %vm2346, 1, 0
        %v2412 = vsel %vm2347, 1, 0
        %v2413 = vsel %vm2348, 1, 0
        %v2414 = vsel %vm2349, 1, 0
        %v2415 = vsel %vm2350, 1, 0
        %v2416 = vsel %vm2351, 1, 0
        %v2417 = vsel %vm2352, 1, 0
        %v2418 = vsel %vm2353, 1, 0
        %v2419 = vsel %vm2354, 1, 0
        %v2420 = vsel %vm2355, 1, 0
        %v2421 = vsel %vm2356, 1, 0
        %v2422 = vsel %vm2357, 1, 0
        %v2423 = vsel %vm2358, 1, 0
        %v2424 = vsel %vm2359, 1, 0
        %v2425 = vsel %vm2360, 1, 0
        %v2426 = vsel %vm2361, 1, 0
        %v2427 = vsel %vm2362, 1, 0
        %v2428 = vsel %vm2363, 1, 0
        %v2429 = vsel %vm2364, 1, 0
        %v2430 = vsel %vm2365, 1, 0
        %v2431 = vsel %vm2366, 1, 0
        %v2432 = vsel %vm2367, 1, 0
        %v2433 = vsel %vm2368, 1, 0
        %v2434 = vsel %vm2369, 1, 0
        %v2435 = vsel %vm2370, 1, 0
        %v2436 = vsel %vm2371, 1, 0
        %v2437 = vsel %vm2372, 1, 0
        %v2438 = vsel %vm2373, 1, 0
        %v2439 = vsel %vm2374, 1, 0
        %v2440 = vsel %vm2375, 1, 0
        %v2441 = vsel %vm2376, 1, 0
        %v2442 = vsel %vm2377, 1, 0
        %v2443 = vsel %vm2378, 1, 0
        %v2444 = vsel %vm2379, 1, 0
        %v2445 = vsel %vm2380, 1, 0
        %v2446 = vsel %vm2381, 1, 0
        %v2447 = vsel %vm2382, 1, 0
        %v2448 = vsel %vm2383, 1, 0
        %v2449 = vsel %vm2384, 1, 0
        %v2450 = vsel %vm2385, 1, 0
        %v2451 = vsel %vm2386, 1, 0
        %v2452 = vsel %vm2387, 1, 0
        %v2453 = vsel %vm2388, 1, 0
        %v2454 = vsel %vm2389, 1, 0
        %v2455 = vsel %vm2390, 1, 0
        %v2456 = vsel %vm2391, 1, 0
        %v2457 = vsel %vm2392, 1, 0
        %v2458 = vsel %vm2393, 1, 0
        %v2459 = vsel %vm2394, 1, 0
        %v2460 = vsel %vm2395, 1, 0
        %v2461 = vcvt.s32.f32 %v2396
        %v2462 = vcvt.s32.f32 %v2397
        %v2463 = vcvt.s32.f32 %v2398
        %v2464 = vcvt.s32.f32 %v2399
        %v2465 = vcvt.s32.f32 %v2400
        %v2466 = vcvt.s32.f32 %v2401
        %v2467 = vcvt.s32.f32 %v2402
        %v2468 = vcvt.s32.f32 %v2403
        %v2469 = vcvt.s32.f32 %v2404
        %v2470 = vcvt.s32.f32 %v2405
        %v2471 = vcvt.s32.f32 %v2406
        %v2472 = vcvt.s32.f32 %v2407
        %v2473 = vcvt.s32.f32 %v2408
        %v2474 = vcvt.s32.f32 %v2409
        %v2475 = vcvt.s32.f32 %v2410
        %v2476 = vcvt.s32.f32 %v2411
        %v2477 = vcvt.s32.f32 %v2412
        %v2478 = vcvt.s32.f32 %v2413
        %v2479 = vcvt.s32.f32 %v2414
        %v2480 = vcvt.s32.f32 %v2415
        %v2481 = vcvt.s32.f32 %v2416
        %v2482 = vcvt.s32.f32 %v2417
        %v2483 = vcvt.s32.f32 %v2418
        %v2484 = vcvt.s32.f32 %v2419
        %v2485 = vcvt.s32.f32 %v2420
        %v2486 = vcvt.s32.f32 %v2421
        %v2487 = vcvt.s32.f32 %v2422
        %v2488 = vcvt.s32.f32 %v2423
        %v2489 = vcvt.s32.f32 %v2424
        %v2490 = vcvt.s32.f32 %v2425
        %v2491 = vcvt.s32.f32 %v2426
        %v2492 = vcvt.s32.f32 %v2427
        %v2493 = vcvt.s32.f32 %v2428
        %v2494 = vcvt.s32.f32 %v2429
        %v2495 = vcvt.s32.f32 %v2430
        %v2496 = vcvt.s32.f32 %v2431
        %v2497 = vcvt.s32.f32 %v2432
        %v2498 = vcvt.s32.f32 %v2433
        %v2499 = vcvt.s32.f32 %v2434
        %v2500 = vcvt.s32.f32 %v2435
        %v2501 = vcvt.s32.f32 %v2436
        %v2502 = vcvt.s32.f32 %v2437
        %v2503 = vcvt.s32.f32 %v2438
        %v2504 = vcvt.s32.f32 %v2439
        %v2505 = vcvt.s32.f32 %v2440
        %v2506 = vcvt.s32.f32 %v2441
        %v2507 = vcvt.s32.f32 %v2442
        %v2508 = vcvt.s32.f32 %v2443
        %v2509 = vcvt.s32.f32 %v2444
        %v2510 = vcvt.s32.f32 %v2445
        %v2511 = vcvt.s32.f32 %v2446
        %v2512 = vcvt.s32.f32 %v2447
        %v2513 = vcvt.s32.f32 %v2448
        %v2514 = vcvt.s32.f32 %v2449
        %v2515 = vcvt.s32.f32 %v2450
        %v2516 = vcvt.s32.f32 %v2451
        %v2517 = vcvt.s32.f32 %v2452
        %v2518 = vcvt.s32.f32 %v2453
        %v2519 = vcvt.s32.f32 %v2454
        %v2520 = vcvt.s32.f32 %v2455
        %v2521 = vcvt.s32.f32 %v2456
        %v2522 = vcvt.s32.f32 %v2457
        %v2523 = vcvt.s32.f32 %v2458
        %v2524 = vcvt.s32.f32 %v2459
        %v2525 = vcvt.s32.f32 %v2460
        %v2526 = vadd.f32 %v2071, %v2461
        %v2527 = vadd.f32 %v2072, %v2462
        %v2528 = vadd.f32 %v2073, %v2463
        %v2529 = vadd.f32 %v2074, %v2464
        %v2530 = vadd.f32 %v2075, %v2465
        %v2531 = vadd.f32 %v2076, %v2466
        %v2532 = vadd.f32 %v2077, %v2467
        %v2533 = vadd.f32 %v2078, %v2468
        %v2534 = vadd.f32 %v2079, %v2469
        %v2535 = vadd.f32 %v2080, %v2470
        %v2536 = vadd.f32 %v2081, %v2471
        %v2537 = vadd.f32 %v2082, %v2472
        %v2538 = vadd.f32 %v2083, %v2473
        %v2539 = vadd.f32 %v2084, %v2474
        %v2540 = vadd.f32 %v2085, %v2475
        %v2541 = vadd.f32 %v2086, %v2476
        %v2542 = vadd.f32 %v2087, %v2477
        %v2543 = vadd.f32 %v2088, %v2478
        %v2544 = vadd.f32 %v2089, %v2479
        %v2545 = vadd.f32 %v2090, %v2480
        %v2546 = vadd.f32 %v2091, %v2481
        %v2547 = vadd.f32 %v2092, %v2482
        %v2548 = vadd.f32 %v2093, %v2483
        %v2549 = vadd.f32 %v2094, %v2484
        %v2550 = vadd.f32 %v2095, %v2485
        %v2551 = vadd.f32 %v2096, %v2486
        %v2552 = vadd.f32 %v2097, %v2487
        %v2553 = vadd.f32 %v2098, %v2488
        %v2554 = vadd.f32 %v2099, %v2489
        %v2555 = vadd.f32 %v2100, %v2490
        %v2556 = vadd.f32 %v2101, %v2491
        %v2557 = vadd.f32 %v2102, %v2492
        %v2558 = vadd.f32 %v2103, %v2493
        %v2559 = vadd.f32 %v2104, %v2494
        %v2560 = vadd.f32 %v2105, %v2495
        %v2561 = vadd.f32 %v2106, %v2496
        %v2562 = vadd.f32 %v2107, %v2497
        %v2563 = vadd.f32 %v2108, %v2498
        %v2564 = vadd.f32 %v2109, %v2499
        %v2565 = vadd.f32 %v2110, %v2500
        %v2566 = vadd.f32 %v2111, %v2501
        %v2567 = vadd.f32 %v2112, %v2502
        %v2568 = vadd.f32 %v2113, %v2503
        %v2569 = vadd.f32 %v2114, %v2504
        %v2570 = vadd.f32 %v2115, %v2505
        %v2571 = vadd.f32 %v2116, %v2506
        %v2572 = vadd.f32 %v2117, %v2507
        %v2573 = vadd.f32 %v2118, %v2508
        %v2574 = vadd.f32 %v2119, %v2509
        %v2575 = vadd.f32 %v2120, %v2510
        %v2576 = vadd.f32 %v2121, %v2511
        %v2577 = vadd.f32 %v2122, %v2512
        %v2578 = vadd.f32 %v2123, %v2513
        %v2579 = vadd.f32 %v2124, %v2514
        %v2580 = vadd.f32 %v2125, %v2515
        %v2581 = vadd.f32 %v2126, %v2516
        %v2582 = vadd.f32 %v2127, %v2517
        %v2583 = vadd.f32 %v2128, %v2518
        %v2584 = vadd.f32 %v2129, %v2519
        %v2585 = vadd.f32 %v2130, %v2520
        %v2586 = vadd.f32 %v2131, %v2521
        %v2587 = vadd.f32 %v2132, %v2522
        %v2588 = vadd.f32 %v2133, %v2523
        %v2589 = vadd.f32 %v2134, %v2524
        %v2590 = vadd.f32 %v2135, %v2525
        %2591 = vset.pattern.permute.xlu0 2
        %2592 = vperm.xlu0 %2591, %v248
        %v2593 = vpop.permute.xlu0 %2592
        %2594 = vset.pattern.permute.xlu0 2
        %2595 = vperm.xlu0 %2594, %v249
        %v2596 = vpop.permute.xlu0 %2595
        %2597 = vset.pattern.permute.xlu0 2
        %2598 = vperm.xlu0 %2597, %v250
        %v2599 = vpop.permute.xlu0 %2598
        %2600 = vset.pattern.permute.xlu0 2
        %2601 = vperm.xlu0 %2600, %v251
        %v2602 = vpop.permute.xlu0 %2601
        %2603 = vset.pattern.permute.xlu0 2
        %2604 = vperm.xlu0 %2603, %v252
        %v2605 = vpop.permute.xlu0 %2604
        %2606 = vset.pattern.permute.xlu0 2
        %2607 = vperm.xlu0 %2606, %v253
        %v2608 = vpop.permute.xlu0 %2607
        %2609 = vset.pattern.permute.xlu0 2
        %2610 = vperm.xlu0 %2609, %v254
        %v2611 = vpop.permute.xlu0 %2610
        %2612 = vset.pattern.permute.xlu0 2
        %2613 = vperm.xlu0 %2612, %v255
        %v2614 = vpop.permute.xlu0 %2613
        %2615 = vset.pattern.permute.xlu0 2
        %2616 = vperm.xlu0 %2615, %v256
        %v2617 = vpop.permute.xlu0 %2616
        %2618 = vset.pattern.permute.xlu0 2
        %2619 = vperm.xlu0 %2618, %v257
        %v2620 = vpop.permute.xlu0 %2619
        %2621 = vset.pattern.permute.xlu0 2
        %2622 = vperm.xlu0 %2621, %v258
        %v2623 = vpop.permute.xlu0 %2622
        %2624 = vset.pattern.permute.xlu0 2
        %2625 = vperm.xlu0 %2624, %v259
        %v2626 = vpop.permute.xlu0 %2625
        %2627 = vset.pattern.permute.xlu0 2
        %2628 = vperm.xlu0 %2627, %v260
        %v2629 = vpop.permute.xlu0 %2628
        %2630 = vset.pattern.permute.xlu0 2
        %2631 = vperm.xlu0 %2630, %v261
        %v2632 = vpop.permute.xlu0 %2631
        %2633 = vset.pattern.permute.xlu0 2
        %2634 = vperm.xlu0 %2633, %v262
        %v2635 = vpop.permute.xlu0 %2634
        %2636 = vset.pattern.permute.xlu0 2
        %2637 = vperm.xlu0 %2636, %v263
        %v2638 = vpop.permute.xlu0 %2637
        %2639 = vset.pattern.permute.xlu0 2
        %2640 = vperm.xlu0 %2639, %v264
        %v2641 = vpop.permute.xlu0 %2640
        %2642 = vset.pattern.permute.xlu0 2
        %2643 = vperm.xlu0 %2642, %v265
        %v2644 = vpop.permute.xlu0 %2643
        %2645 = vset.pattern.permute.xlu0 2
        %2646 = vperm.xlu0 %2645, %v266
        %v2647 = vpop.permute.xlu0 %2646
        %2648 = vset.pattern.permute.xlu0 2
        %2649 = vperm.xlu0 %2648, %v267
        %v2650 = vpop.permute.xlu0 %2649
        %2651 = vset.pattern.permute.xlu0 2
        %2652 = vperm.xlu0 %2651, %v268
        %v2653 = vpop.permute.xlu0 %2652
        %2654 = vset.pattern.permute.xlu0 2
        %2655 = vperm.xlu0 %2654, %v269
        %v2656 = vpop.permute.xlu0 %2655
        %2657 = vset.pattern.permute.xlu0 2
        %2658 = vperm.xlu0 %2657, %v270
        %v2659 = vpop.permute.xlu0 %2658
        %2660 = vset.pattern.permute.xlu0 2
        %2661 = vperm.xlu0 %2660, %v271
        %v2662 = vpop.permute.xlu0 %2661
        %2663 = vset.pattern.permute.xlu0 2
        %2664 = vperm.xlu0 %2663, %v272
        %v2665 = vpop.permute.xlu0 %2664
        %2666 = vset.pattern.permute.xlu0 2
        %2667 = vperm.xlu0 %2666, %v273
        %v2668 = vpop.permute.xlu0 %2667
        %2669 = vset.pattern.permute.xlu0 2
        %2670 = vperm.xlu0 %2669, %v274
        %v2671 = vpop.permute.xlu0 %2670
        %2672 = vset.pattern.permute.xlu0 2
        %2673 = vperm.xlu0 %2672, %v275
        %v2674 = vpop.permute.xlu0 %2673
        %2675 = vset.pattern.permute.xlu0 2
        %2676 = vperm.xlu0 %2675, %v276
        %v2677 = vpop.permute.xlu0 %2676
        %2678 = vset.pattern.permute.xlu0 2
        %2679 = vperm.xlu0 %2678, %v277
        %v2680 = vpop.permute.xlu0 %2679
        %2681 = vset.pattern.permute.xlu0 2
        %2682 = vperm.xlu0 %2681, %v278
        %v2683 = vpop.permute.xlu0 %2682
        %2684 = vset.pattern.permute.xlu0 2
        %2685 = vperm.xlu0 %2684, %v279
        %v2686 = vpop.permute.xlu0 %2685
        %2687 = vset.pattern.permute.xlu0 2
        %2688 = vperm.xlu0 %2687, %v280
        %v2689 = vpop.permute.xlu0 %2688
        %2690 = vset.pattern.permute.xlu0 2
        %2691 = vperm.xlu0 %2690, %v281
        %v2692 = vpop.permute.xlu0 %2691
        %2693 = vset.pattern.permute.xlu0 2
        %2694 = vperm.xlu0 %2693, %v282
        %v2695 = vpop.permute.xlu0 %2694
        %2696 = vset.pattern.permute.xlu0 2
        %2697 = vperm.xlu0 %2696, %v283
        %v2698 = vpop.permute.xlu0 %2697
        %2699 = vset.pattern.permute.xlu0 2
        %2700 = vperm.xlu0 %2699, %v284
        %v2701 = vpop.permute.xlu0 %2700
        %2702 = vset.pattern.permute.xlu0 2
        %2703 = vperm.xlu0 %2702, %v285
        %v2704 = vpop.permute.xlu0 %2703
        %2705 = vset.pattern.permute.xlu0 2
        %2706 = vperm.xlu0 %2705, %v286
        %v2707 = vpop.permute.xlu0 %2706
        %2708 = vset.pattern.permute.xlu0 2
        %2709 = vperm.xlu0 %2708, %v287
        %v2710 = vpop.permute.xlu0 %2709
        %2711 = vset.pattern.permute.xlu0 2
        %2712 = vperm.xlu0 %2711, %v288
        %v2713 = vpop.permute.xlu0 %2712
        %2714 = vset.pattern.permute.xlu0 2
        %2715 = vperm.xlu0 %2714, %v289
        %v2716 = vpop.permute.xlu0 %2715
        %2717 = vset.pattern.permute.xlu0 2
        %2718 = vperm.xlu0 %2717, %v290
        %v2719 = vpop.permute.xlu0 %2718
        %2720 = vset.pattern.permute.xlu0 2
        %2721 = vperm.xlu0 %2720, %v291
        %v2722 = vpop.permute.xlu0 %2721
        %2723 = vset.pattern.permute.xlu0 2
        %2724 = vperm.xlu0 %2723, %v292
        %v2725 = vpop.permute.xlu0 %2724
        %2726 = vset.pattern.permute.xlu0 2
        %2727 = vperm.xlu0 %2726, %v293
        %v2728 = vpop.permute.xlu0 %2727
        %2729 = vset.pattern.permute.xlu0 2
        %2730 = vperm.xlu0 %2729, %v294
        %v2731 = vpop.permute.xlu0 %2730
        %2732 = vset.pattern.permute.xlu0 2
        %2733 = vperm.xlu0 %2732, %v295
        %v2734 = vpop.permute.xlu0 %2733
        %2735 = vset.pattern.permute.xlu0 2
        %2736 = vperm.xlu0 %2735, %v296
        %v2737 = vpop.permute.xlu0 %2736
        %2738 = vset.pattern.permute.xlu0 2
        %2739 = vperm.xlu0 %2738, %v297
        %v2740 = vpop.permute.xlu0 %2739
        %2741 = vset.pattern.permute.xlu0 2
        %2742 = vperm.xlu0 %2741, %v298
        %v2743 = vpop.permute.xlu0 %2742
        %2744 = vset.pattern.permute.xlu0 2
        %2745 = vperm.xlu0 %2744, %v299
        %v2746 = vpop.permute.xlu0 %2745
        %2747 = vset.pattern.permute.xlu0 2
        %2748 = vperm.xlu0 %2747, %v300
        %v2749 = vpop.permute.xlu0 %2748
        %2750 = vset.pattern.permute.xlu0 2
        %2751 = vperm.xlu0 %2750, %v301
        %v2752 = vpop.permute.xlu0 %2751
        %2753 = vset.pattern.permute.xlu0 2
        %2754 = vperm.xlu0 %2753, %v302
        %v2755 = vpop.permute.xlu0 %2754
        %2756 = vset.pattern.permute.xlu0 2
        %2757 = vperm.xlu0 %2756, %v303
        %v2758 = vpop.permute.xlu0 %2757
        %2759 = vset.pattern.permute.xlu0 2
        %2760 = vperm.xlu0 %2759, %v304
        %v2761 = vpop.permute.xlu0 %2760
        %2762 = vset.pattern.permute.xlu0 2
        %2763 = vperm.xlu0 %2762, %v305
        %v2764 = vpop.permute.xlu0 %2763
        %2765 = vset.pattern.permute.xlu0 2
        %2766 = vperm.xlu0 %2765, %v306
        %v2767 = vpop.permute.xlu0 %2766
        %2768 = vset.pattern.permute.xlu0 2
        %2769 = vperm.xlu0 %2768, %v307
        %v2770 = vpop.permute.xlu0 %2769
        %2771 = vset.pattern.permute.xlu0 2
        %2772 = vperm.xlu0 %2771, %v308
        %v2773 = vpop.permute.xlu0 %2772
        %2774 = vset.pattern.permute.xlu0 2
        %2775 = vperm.xlu0 %2774, %v309
        %v2776 = vpop.permute.xlu0 %2775
        %2777 = vset.pattern.permute.xlu0 2
        %2778 = vperm.xlu0 %2777, %v310
        %v2779 = vpop.permute.xlu0 %2778
        %2780 = vset.pattern.permute.xlu0 2
        %2781 = vperm.xlu0 %2780, %v311
        %v2782 = vpop.permute.xlu0 %2781
        %2783 = vset.pattern.permute.xlu0 2
        %2784 = vperm.xlu0 %2783, %v312
        %v2785 = vpop.permute.xlu0 %2784
        %vm2786 = vcmp.eq.s32.totalorder %v1159, %v2593
        %vm2787 = vcmp.eq.s32.totalorder %v1159, %v2596
        %vm2788 = vcmp.eq.s32.totalorder %v1159, %v2599
        %vm2789 = vcmp.eq.s32.totalorder %v1159, %v2602
        %vm2790 = vcmp.eq.s32.totalorder %v1159, %v2605
        %vm2791 = vcmp.eq.s32.totalorder %v1159, %v2608
        %vm2792 = vcmp.eq.s32.totalorder %v1159, %v2611
        %vm2793 = vcmp.eq.s32.totalorder %v1159, %v2614
        %vm2794 = vcmp.eq.s32.totalorder %v1159, %v2617
        %vm2795 = vcmp.eq.s32.totalorder %v1159, %v2620
        %vm2796 = vcmp.eq.s32.totalorder %v1159, %v2623
        %vm2797 = vcmp.eq.s32.totalorder %v1159, %v2626
        %vm2798 = vcmp.eq.s32.totalorder %v1159, %v2629
        %vm2799 = vcmp.eq.s32.totalorder %v1159, %v2632
        %vm2800 = vcmp.eq.s32.totalorder %v1159, %v2635
        %vm2801 = vcmp.eq.s32.totalorder %v1159, %v2638
        %vm2802 = vcmp.eq.s32.totalorder %v1159, %v2641
        %vm2803 = vcmp.eq.s32.totalorder %v1159, %v2644
        %vm2804 = vcmp.eq.s32.totalorder %v1159, %v2647
        %vm2805 = vcmp.eq.s32.totalorder %v1159, %v2650
        %vm2806 = vcmp.eq.s32.totalorder %v1159, %v2653
        %vm2807 = vcmp.eq.s32.totalorder %v1159, %v2656
        %vm2808 = vcmp.eq.s32.totalorder %v1159, %v2659
        %vm2809 = vcmp.eq.s32.totalorder %v1159, %v2662
        %vm2810 = vcmp.eq.s32.totalorder %v1159, %v2665
        %vm2811 = vcmp.eq.s32.totalorder %v1159, %v2668
        %vm2812 = vcmp.eq.s32.totalorder %v1159, %v2671
        %vm2813 = vcmp.eq.s32.totalorder %v1159, %v2674
        %vm2814 = vcmp.eq.s32.totalorder %v1159, %v2677
        %vm2815 = vcmp.eq.s32.totalorder %v1159, %v2680
        %vm2816 = vcmp.eq.s32.totalorder %v1159, %v2683
        %vm2817 = vcmp.eq.s32.totalorder %v1159, %v2686
        %vm2818 = vcmp.eq.s32.totalorder %v1159, %v2689
        %vm2819 = vcmp.eq.s32.totalorder %v1159, %v2692
        %vm2820 = vcmp.eq.s32.totalorder %v1159, %v2695
        %vm2821 = vcmp.eq.s32.totalorder %v1159, %v2698
        %vm2822 = vcmp.eq.s32.totalorder %v1159, %v2701
        %vm2823 = vcmp.eq.s32.totalorder %v1159, %v2704
        %vm2824 = vcmp.eq.s32.totalorder %v1159, %v2707
        %vm2825 = vcmp.eq.s32.totalorder %v1159, %v2710
        %vm2826 = vcmp.eq.s32.totalorder %v1159, %v2713
        %vm2827 = vcmp.eq.s32.totalorder %v1159, %v2716
        %vm2828 = vcmp.eq.s32.totalorder %v1159, %v2719
        %vm2829 = vcmp.eq.s32.totalorder %v1159, %v2722
        %vm2830 = vcmp.eq.s32.totalorder %v1159, %v2725
        %vm2831 = vcmp.eq.s32.totalorder %v1159, %v2728
        %vm2832 = vcmp.eq.s32.totalorder %v1159, %v2731
        %vm2833 = vcmp.eq.s32.totalorder %v1159, %v2734
        %vm2834 = vcmp.eq.s32.totalorder %v1159, %v2737
        %vm2835 = vcmp.eq.s32.totalorder %v1159, %v2740
        %vm2836 = vcmp.eq.s32.totalorder %v1159, %v2743
        %vm2837 = vcmp.eq.s32.totalorder %v1159, %v2746
        %vm2838 = vcmp.eq.s32.totalorder %v1159, %v2749
        %vm2839 = vcmp.eq.s32.totalorder %v1159, %v2752
        %vm2840 = vcmp.eq.s32.totalorder %v1159, %v2755
        %vm2841 = vcmp.eq.s32.totalorder %v1159, %v2758
        %vm2842 = vcmp.eq.s32.totalorder %v1159, %v2761
        %vm2843 = vcmp.eq.s32.totalorder %v1159, %v2764
        %vm2844 = vcmp.eq.s32.totalorder %v1159, %v2767
        %vm2845 = vcmp.eq.s32.totalorder %v1159, %v2770
        %vm2846 = vcmp.eq.s32.totalorder %v1159, %v2773
        %vm2847 = vcmp.eq.s32.totalorder %v1159, %v2776
        %vm2848 = vcmp.eq.s32.totalorder %v1159, %v2779
        %vm2849 = vcmp.eq.s32.totalorder %v1159, %v2782
        %vm2850 = vcmp.eq.s32.totalorder %v1159, %v2785
        %v2851 = vsel %vm2786, 1, 0
        %v2852 = vsel %vm2787, 1, 0
        %v2853 = vsel %vm2788, 1, 0
        %v2854 = vsel %vm2789, 1, 0
        %v2855 = vsel %vm2790, 1, 0
        %v2856 = vsel %vm2791, 1, 0
        %v2857 = vsel %vm2792, 1, 0
        %v2858 = vsel %vm2793, 1, 0
        %v2859 = vsel %vm2794, 1, 0
        %v2860 = vsel %vm2795, 1, 0
        %v2861 = vsel %vm2796, 1, 0
        %v2862 = vsel %vm2797, 1, 0
        %v2863 = vsel %vm2798, 1, 0
        %v2864 = vsel %vm2799, 1, 0
        %v2865 = vsel %vm2800, 1, 0
        %v2866 = vsel %vm2801, 1, 0
        %v2867 = vsel %vm2802, 1, 0
        %v2868 = vsel %vm2803, 1, 0
        %v2869 = vsel %vm2804, 1, 0
        %v2870 = vsel %vm2805, 1, 0
        %v2871 = vsel %vm2806, 1, 0
        %v2872 = vsel %vm2807, 1, 0
        %v2873 = vsel %vm2808, 1, 0
        %v2874 = vsel %vm2809, 1, 0
        %v2875 = vsel %vm2810, 1, 0
        %v2876 = vsel %vm2811, 1, 0
        %v2877 = vsel %vm2812, 1, 0
        %v2878 = vsel %vm2813, 1, 0
        %v2879 = vsel %vm2814, 1, 0
        %v2880 = vsel %vm2815, 1, 0
        %v2881 = vsel %vm2816, 1, 0
        %v2882 = vsel %vm2817, 1, 0
        %v2883 = vsel %vm2818, 1, 0
        %v2884 = vsel %vm2819, 1, 0
        %v2885 = vsel %vm2820, 1, 0
        %v2886 = vsel %vm2821, 1, 0
        %v2887 = vsel %vm2822, 1, 0
        %v2888 = vsel %vm2823, 1, 0
        %v2889 = vsel %vm2824, 1, 0
        %v2890 = vsel %vm2825, 1, 0
        %v2891 = vsel %vm2826, 1, 0
        %v2892 = vsel %vm2827, 1, 0
        %v2893 = vsel %vm2828, 1, 0
        %v2894 = vsel %vm2829, 1, 0
        %v2895 = vsel %vm2830, 1, 0
        %v2896 = vsel %vm2831, 1, 0
        %v2897 = vsel %vm2832, 1, 0
        %v2898 = vsel %vm2833, 1, 0
        %v2899 = vsel %vm2834, 1, 0
        %v2900 = vsel %vm2835, 1, 0
        %v2901 = vsel %vm2836, 1, 0
        %v2902 = vsel %vm2837, 1, 0
        %v2903 = vsel %vm2838, 1, 0
        %v2904 = vsel %vm2839, 1, 0
        %v2905 = vsel %vm2840, 1, 0
        %v2906 = vsel %vm2841, 1, 0
        %v2907 = vsel %vm2842, 1, 0
        %v2908 = vsel %vm2843, 1, 0
        %v2909 = vsel %vm2844, 1, 0
        %v2910 = vsel %vm2845, 1, 0
        %v2911 = vsel %vm2846, 1, 0
        %v2912 = vsel %vm2847, 1, 0
        %v2913 = vsel %vm2848, 1, 0
        %v2914 = vsel %vm2849, 1, 0
        %v2915 = vsel %vm2850, 1, 0
        %v2916 = vcvt.s32.f32 %v2851
        %v2917 = vcvt.s32.f32 %v2852
        %v2918 = vcvt.s32.f32 %v2853
        %v2919 = vcvt.s32.f32 %v2854
        %v2920 = vcvt.s32.f32 %v2855
        %v2921 = vcvt.s32.f32 %v2856
        %v2922 = vcvt.s32.f32 %v2857
        %v2923 = vcvt.s32.f32 %v2858
        %v2924 = vcvt.s32.f32 %v2859
        %v2925 = vcvt.s32.f32 %v2860
        %v2926 = vcvt.s32.f32 %v2861
        %v2927 = vcvt.s32.f32 %v2862
        %v2928 = vcvt.s32.f32 %v2863
        %v2929 = vcvt.s32.f32 %v2864
        %v2930 = vcvt.s32.f32 %v2865
        %v2931 = vcvt.s32.f32 %v2866
        %v2932 = vcvt.s32.f32 %v2867
        %v2933 = vcvt.s32.f32 %v2868
        %v2934 = vcvt.s32.f32 %v2869
        %v2935 = vcvt.s32.f32 %v2870
        %v2936 = vcvt.s32.f32 %v2871
        %v2937 = vcvt.s32.f32 %v2872
        %v2938 = vcvt.s32.f32 %v2873
        %v2939 = vcvt.s32.f32 %v2874
        %v2940 = vcvt.s32.f32 %v2875
        %v2941 = vcvt.s32.f32 %v2876
        %v2942 = vcvt.s32.f32 %v2877
        %v2943 = vcvt.s32.f32 %v2878
        %v2944 = vcvt.s32.f32 %v2879
        %v2945 = vcvt.s32.f32 %v2880
        %v2946 = vcvt.s32.f32 %v2881
        %v2947 = vcvt.s32.f32 %v2882
        %v2948 = vcvt.s32.f32 %v2883
        %v2949 = vcvt.s32.f32 %v2884
        %v2950 = vcvt.s32.f32 %v2885
        %v2951 = vcvt.s32.f32 %v2886
        %v2952 = vcvt.s32.f32 %v2887
        %v2953 = vcvt.s32.f32 %v2888
        %v2954 = vcvt.s32.f32 %v2889
        %v2955 = vcvt.s32.f32 %v2890
        %v2956 = vcvt.s32.f32 %v2891
        %v2957 = vcvt.s32.f32 %v2892
        %v2958 = vcvt.s32.f32 %v2893
        %v2959 = vcvt.s32.f32 %v2894
        %v2960 = vcvt.s32.f32 %v2895
        %v2961 = vcvt.s32.f32 %v2896
        %v2962 = vcvt.s32.f32 %v2897
        %v2963 = vcvt.s32.f32 %v2898
        %v2964 = vcvt.s32.f32 %v2899
        %v2965 = vcvt.s32.f32 %v2900
        %v2966 = vcvt.s32.f32 %v2901
        %v2967 = vcvt.s32.f32 %v2902
        %v2968 = vcvt.s32.f32 %v2903
        %v2969 = vcvt.s32.f32 %v2904
        %v2970 = vcvt.s32.f32 %v2905
        %v2971 = vcvt.s32.f32 %v2906
        %v2972 = vcvt.s32.f32 %v2907
        %v2973 = vcvt.s32.f32 %v2908
        %v2974 = vcvt.s32.f32 %v2909
        %v2975 = vcvt.s32.f32 %v2910
        %v2976 = vcvt.s32.f32 %v2911
        %v2977 = vcvt.s32.f32 %v2912
        %v2978 = vcvt.s32.f32 %v2913
        %v2979 = vcvt.s32.f32 %v2914
        %v2980 = vcvt.s32.f32 %v2915
        %v2981 = vadd.f32 %v2526, %v2916
        %v2982 = vadd.f32 %v2527, %v2917
        %v2983 = vadd.f32 %v2528, %v2918
        %v2984 = vadd.f32 %v2529, %v2919
        %v2985 = vadd.f32 %v2530, %v2920
        %v2986 = vadd.f32 %v2531, %v2921
        %v2987 = vadd.f32 %v2532, %v2922
        %v2988 = vadd.f32 %v2533, %v2923
        %v2989 = vadd.f32 %v2534, %v2924
        %v2990 = vadd.f32 %v2535, %v2925
        %v2991 = vadd.f32 %v2536, %v2926
        %v2992 = vadd.f32 %v2537, %v2927
        %v2993 = vadd.f32 %v2538, %v2928
        %v2994 = vadd.f32 %v2539, %v2929
        %v2995 = vadd.f32 %v2540, %v2930
        %v2996 = vadd.f32 %v2541, %v2931
        %v2997 = vadd.f32 %v2542, %v2932
        %v2998 = vadd.f32 %v2543, %v2933
        %v2999 = vadd.f32 %v2544, %v2934
        %v3000 = vadd.f32 %v2545, %v2935
        %v3001 = vadd.f32 %v2546, %v2936
        %v3002 = vadd.f32 %v2547, %v2937
        %v3003 = vadd.f32 %v2548, %v2938
        %v3004 = vadd.f32 %v2549, %v2939
        %v3005 = vadd.f32 %v2550, %v2940
        %v3006 = vadd.f32 %v2551, %v2941
        %v3007 = vadd.f32 %v2552, %v2942
        %v3008 = vadd.f32 %v2553, %v2943
        %v3009 = vadd.f32 %v2554, %v2944
        %v3010 = vadd.f32 %v2555, %v2945
        %v3011 = vadd.f32 %v2556, %v2946
        %v3012 = vadd.f32 %v2557, %v2947
        %v3013 = vadd.f32 %v2558, %v2948
        %v3014 = vadd.f32 %v2559, %v2949
        %v3015 = vadd.f32 %v2560, %v2950
        %v3016 = vadd.f32 %v2561, %v2951
        %v3017 = vadd.f32 %v2562, %v2952
        %v3018 = vadd.f32 %v2563, %v2953
        %v3019 = vadd.f32 %v2564, %v2954
        %v3020 = vadd.f32 %v2565, %v2955
        %v3021 = vadd.f32 %v2566, %v2956
        %v3022 = vadd.f32 %v2567, %v2957
        %v3023 = vadd.f32 %v2568, %v2958
        %v3024 = vadd.f32 %v2569, %v2959
        %v3025 = vadd.f32 %v2570, %v2960
        %v3026 = vadd.f32 %v2571, %v2961
        %v3027 = vadd.f32 %v2572, %v2962
        %v3028 = vadd.f32 %v2573, %v2963
        %v3029 = vadd.f32 %v2574, %v2964
        %v3030 = vadd.f32 %v2575, %v2965
        %v3031 = vadd.f32 %v2576, %v2966
        %v3032 = vadd.f32 %v2577, %v2967
        %v3033 = vadd.f32 %v2578, %v2968
        %v3034 = vadd.f32 %v2579, %v2969
        %v3035 = vadd.f32 %v2580, %v2970
        %v3036 = vadd.f32 %v2581, %v2971
        %v3037 = vadd.f32 %v2582, %v2972
        %v3038 = vadd.f32 %v2583, %v2973
        %v3039 = vadd.f32 %v2584, %v2974
        %v3040 = vadd.f32 %v2585, %v2975
        %v3041 = vadd.f32 %v2586, %v2976
        %v3042 = vadd.f32 %v2587, %v2977
        %v3043 = vadd.f32 %v2588, %v2978
        %v3044 = vadd.f32 %v2589, %v2979
        %v3045 = vadd.f32 %v2590, %v2980
        %3046 = vset.pattern.permute.xlu0 3
        %3047 = vperm.xlu0 %3046, %v248
        %v3048 = vpop.permute.xlu0 %3047
        %3049 = vset.pattern.permute.xlu0 3
        %3050 = vperm.xlu0 %3049, %v249
        %v3051 = vpop.permute.xlu0 %3050
        %3052 = vset.pattern.permute.xlu0 3
        %3053 = vperm.xlu0 %3052, %v250
        %v3054 = vpop.permute.xlu0 %3053
        %3055 = vset.pattern.permute.xlu0 3
        %3056 = vperm.xlu0 %3055, %v251
        %v3057 = vpop.permute.xlu0 %3056
        %3058 = vset.pattern.permute.xlu0 3
        %3059 = vperm.xlu0 %3058, %v252
        %v3060 = vpop.permute.xlu0 %3059
        %3061 = vset.pattern.permute.xlu0 3
        %3062 = vperm.xlu0 %3061, %v253
        %v3063 = vpop.permute.xlu0 %3062
        %3064 = vset.pattern.permute.xlu0 3
        %3065 = vperm.xlu0 %3064, %v254
        %v3066 = vpop.permute.xlu0 %3065
        %3067 = vset.pattern.permute.xlu0 3
        %3068 = vperm.xlu0 %3067, %v255
        %v3069 = vpop.permute.xlu0 %3068
        %3070 = vset.pattern.permute.xlu0 3
        %3071 = vperm.xlu0 %3070, %v256
        %v3072 = vpop.permute.xlu0 %3071
        %3073 = vset.pattern.permute.xlu0 3
        %3074 = vperm.xlu0 %3073, %v257
        %v3075 = vpop.permute.xlu0 %3074
        %3076 = vset.pattern.permute.xlu0 3
        %3077 = vperm.xlu0 %3076, %v258
        %v3078 = vpop.permute.xlu0 %3077
        %3079 = vset.pattern.permute.xlu0 3
        %3080 = vperm.xlu0 %3079, %v259
        %v3081 = vpop.permute.xlu0 %3080
        %3082 = vset.pattern.permute.xlu0 3
        %3083 = vperm.xlu0 %3082, %v260
        %v3084 = vpop.permute.xlu0 %3083
        %3085 = vset.pattern.permute.xlu0 3
        %3086 = vperm.xlu0 %3085, %v261
        %v3087 = vpop.permute.xlu0 %3086
        %3088 = vset.pattern.permute.xlu0 3
        %3089 = vperm.xlu0 %3088, %v262
        %v3090 = vpop.permute.xlu0 %3089
        %3091 = vset.pattern.permute.xlu0 3
        %3092 = vperm.xlu0 %3091, %v263
        %v3093 = vpop.permute.xlu0 %3092
        %3094 = vset.pattern.permute.xlu0 3
        %3095 = vperm.xlu0 %3094, %v264
        %v3096 = vpop.permute.xlu0 %3095
        %3097 = vset.pattern.permute.xlu0 3
        %3098 = vperm.xlu0 %3097, %v265
        %v3099 = vpop.permute.xlu0 %3098
        %3100 = vset.pattern.permute.xlu0 3
        %3101 = vperm.xlu0 %3100, %v266
        %v3102 = vpop.permute.xlu0 %3101
        %3103 = vset.pattern.permute.xlu0 3
        %3104 = vperm.xlu0 %3103, %v267
        %v3105 = vpop.permute.xlu0 %3104
        %3106 = vset.pattern.permute.xlu0 3
        %3107 = vperm.xlu0 %3106, %v268
        %v3108 = vpop.permute.xlu0 %3107
        %3109 = vset.pattern.permute.xlu0 3
        %3110 = vperm.xlu0 %3109, %v269
        %v3111 = vpop.permute.xlu0 %3110
        %3112 = vset.pattern.permute.xlu0 3
        %3113 = vperm.xlu0 %3112, %v270
        %v3114 = vpop.permute.xlu0 %3113
        %3115 = vset.pattern.permute.xlu0 3
        %3116 = vperm.xlu0 %3115, %v271
        %v3117 = vpop.permute.xlu0 %3116
        %3118 = vset.pattern.permute.xlu0 3
        %3119 = vperm.xlu0 %3118, %v272
        %v3120 = vpop.permute.xlu0 %3119
        %3121 = vset.pattern.permute.xlu0 3
        %3122 = vperm.xlu0 %3121, %v273
        %v3123 = vpop.permute.xlu0 %3122
        %3124 = vset.pattern.permute.xlu0 3
        %3125 = vperm.xlu0 %3124, %v274
        %v3126 = vpop.permute.xlu0 %3125
        %3127 = vset.pattern.permute.xlu0 3
        %3128 = vperm.xlu0 %3127, %v275
        %v3129 = vpop.permute.xlu0 %3128
        %3130 = vset.pattern.permute.xlu0 3
        %3131 = vperm.xlu0 %3130, %v276
        %v3132 = vpop.permute.xlu0 %3131
        %3133 = vset.pattern.permute.xlu0 3
        %3134 = vperm.xlu0 %3133, %v277
        %v3135 = vpop.permute.xlu0 %3134
        %3136 = vset.pattern.permute.xlu0 3
        %3137 = vperm.xlu0 %3136, %v278
        %v3138 = vpop.permute.xlu0 %3137
        %3139 = vset.pattern.permute.xlu0 3
        %3140 = vperm.xlu0 %3139, %v279
        %v3141 = vpop.permute.xlu0 %3140
        %3142 = vset.pattern.permute.xlu0 3
        %3143 = vperm.xlu0 %3142, %v280
        %v3144 = vpop.permute.xlu0 %3143
        %3145 = vset.pattern.permute.xlu0 3
        %3146 = vperm.xlu0 %3145, %v281
        %v3147 = vpop.permute.xlu0 %3146
        %3148 = vset.pattern.permute.xlu0 3
        %3149 = vperm.xlu0 %3148, %v282
        %v3150 = vpop.permute.xlu0 %3149
        %3151 = vset.pattern.permute.xlu0 3
        %3152 = vperm.xlu0 %3151, %v283
        %v3153 = vpop.permute.xlu0 %3152
        %3154 = vset.pattern.permute.xlu0 3
        %3155 = vperm.xlu0 %3154, %v284
        %v3156 = vpop.permute.xlu0 %3155
        %3157 = vset.pattern.permute.xlu0 3
        %3158 = vperm.xlu0 %3157, %v285
        %v3159 = vpop.permute.xlu0 %3158
        %3160 = vset.pattern.permute.xlu0 3
        %3161 = vperm.xlu0 %3160, %v286
        %v3162 = vpop.permute.xlu0 %3161
        %3163 = vset.pattern.permute.xlu0 3
        %3164 = vperm.xlu0 %3163, %v287
        %v3165 = vpop.permute.xlu0 %3164
        %3166 = vset.pattern.permute.xlu0 3
        %3167 = vperm.xlu0 %3166, %v288
        %v3168 = vpop.permute.xlu0 %3167
        %3169 = vset.pattern.permute.xlu0 3
        %3170 = vperm.xlu0 %3169, %v289
        %v3171 = vpop.permute.xlu0 %3170
        %3172 = vset.pattern.permute.xlu0 3
        %3173 = vperm.xlu0 %3172, %v290
        %v3174 = vpop.permute.xlu0 %3173
        %3175 = vset.pattern.permute.xlu0 3
        %3176 = vperm.xlu0 %3175, %v291
        %v3177 = vpop.permute.xlu0 %3176
        %3178 = vset.pattern.permute.xlu0 3
        %3179 = vperm.xlu0 %3178, %v292
        %v3180 = vpop.permute.xlu0 %3179
        %3181 = vset.pattern.permute.xlu0 3
        %3182 = vperm.xlu0 %3181, %v293
        %v3183 = vpop.permute.xlu0 %3182
        %3184 = vset.pattern.permute.xlu0 3
        %3185 = vperm.xlu0 %3184, %v294
        %v3186 = vpop.permute.xlu0 %3185
        %3187 = vset.pattern.permute.xlu0 3
        %3188 = vperm.xlu0 %3187, %v295
        %v3189 = vpop.permute.xlu0 %3188
        %3190 = vset.pattern.permute.xlu0 3
        %3191 = vperm.xlu0 %3190, %v296
        %v3192 = vpop.permute.xlu0 %3191
        %3193 = vset.pattern.permute.xlu0 3
        %3194 = vperm.xlu0 %3193, %v297
        %v3195 = vpop.permute.xlu0 %3194
        %3196 = vset.pattern.permute.xlu0 3
        %3197 = vperm.xlu0 %3196, %v298
        %v3198 = vpop.permute.xlu0 %3197
        %3199 = vset.pattern.permute.xlu0 3
        %3200 = vperm.xlu0 %3199, %v299
        %v3201 = vpop.permute.xlu0 %3200
        %3202 = vset.pattern.permute.xlu0 3
        %3203 = vperm.xlu0 %3202, %v300
        %v3204 = vpop.permute.xlu0 %3203
        %3205 = vset.pattern.permute.xlu0 3
        %3206 = vperm.xlu0 %3205, %v301
        %v3207 = vpop.permute.xlu0 %3206
        %3208 = vset.pattern.permute.xlu0 3
        %3209 = vperm.xlu0 %3208, %v302
        %v3210 = vpop.permute.xlu0 %3209
        %3211 = vset.pattern.permute.xlu0 3
        %3212 = vperm.xlu0 %3211, %v303
        %v3213 = vpop.permute.xlu0 %3212
        %3214 = vset.pattern.permute.xlu0 3
        %3215 = vperm.xlu0 %3214, %v304
        %v3216 = vpop.permute.xlu0 %3215
        %3217 = vset.pattern.permute.xlu0 3
        %3218 = vperm.xlu0 %3217, %v305
        %v3219 = vpop.permute.xlu0 %3218
        %3220 = vset.pattern.permute.xlu0 3
        %3221 = vperm.xlu0 %3220, %v306
        %v3222 = vpop.permute.xlu0 %3221
        %3223 = vset.pattern.permute.xlu0 3
        %3224 = vperm.xlu0 %3223, %v307
        %v3225 = vpop.permute.xlu0 %3224
        %3226 = vset.pattern.permute.xlu0 3
        %3227 = vperm.xlu0 %3226, %v308
        %v3228 = vpop.permute.xlu0 %3227
        %3229 = vset.pattern.permute.xlu0 3
        %3230 = vperm.xlu0 %3229, %v309
        %v3231 = vpop.permute.xlu0 %3230
        %3232 = vset.pattern.permute.xlu0 3
        %3233 = vperm.xlu0 %3232, %v310
        %v3234 = vpop.permute.xlu0 %3233
        %3235 = vset.pattern.permute.xlu0 3
        %3236 = vperm.xlu0 %3235, %v311
        %v3237 = vpop.permute.xlu0 %3236
        %3238 = vset.pattern.permute.xlu0 3
        %3239 = vperm.xlu0 %3238, %v312
        %v3240 = vpop.permute.xlu0 %3239
        %vm3241 = vcmp.eq.s32.totalorder %v1159, %v3048
        %vm3242 = vcmp.eq.s32.totalorder %v1159, %v3051
        %vm3243 = vcmp.eq.s32.totalorder %v1159, %v3054
        %vm3244 = vcmp.eq.s32.totalorder %v1159, %v3057
        %vm3245 = vcmp.eq.s32.totalorder %v1159, %v3060
        %vm3246 = vcmp.eq.s32.totalorder %v1159, %v3063
        %vm3247 = vcmp.eq.s32.totalorder %v1159, %v3066
        %vm3248 = vcmp.eq.s32.totalorder %v1159, %v3069
        %vm3249 = vcmp.eq.s32.totalorder %v1159, %v3072
        %vm3250 = vcmp.eq.s32.totalorder %v1159, %v3075
        %vm3251 = vcmp.eq.s32.totalorder %v1159, %v3078
        %vm3252 = vcmp.eq.s32.totalorder %v1159, %v3081
        %vm3253 = vcmp.eq.s32.totalorder %v1159, %v3084
        %vm3254 = vcmp.eq.s32.totalorder %v1159, %v3087
        %vm3255 = vcmp.eq.s32.totalorder %v1159, %v3090
        %vm3256 = vcmp.eq.s32.totalorder %v1159, %v3093
        %vm3257 = vcmp.eq.s32.totalorder %v1159, %v3096
        %vm3258 = vcmp.eq.s32.totalorder %v1159, %v3099
        %vm3259 = vcmp.eq.s32.totalorder %v1159, %v3102
        %vm3260 = vcmp.eq.s32.totalorder %v1159, %v3105
        %vm3261 = vcmp.eq.s32.totalorder %v1159, %v3108
        %vm3262 = vcmp.eq.s32.totalorder %v1159, %v3111
        %vm3263 = vcmp.eq.s32.totalorder %v1159, %v3114
        %vm3264 = vcmp.eq.s32.totalorder %v1159, %v3117
        %vm3265 = vcmp.eq.s32.totalorder %v1159, %v3120
        %vm3266 = vcmp.eq.s32.totalorder %v1159, %v3123
        %vm3267 = vcmp.eq.s32.totalorder %v1159, %v3126
        %vm3268 = vcmp.eq.s32.totalorder %v1159, %v3129
        %vm3269 = vcmp.eq.s32.totalorder %v1159, %v3132
        %vm3270 = vcmp.eq.s32.totalorder %v1159, %v3135
        %vm3271 = vcmp.eq.s32.totalorder %v1159, %v3138
        %vm3272 = vcmp.eq.s32.totalorder %v1159, %v3141
        %vm3273 = vcmp.eq.s32.totalorder %v1159, %v3144
        %vm3274 = vcmp.eq.s32.totalorder %v1159, %v3147
        %vm3275 = vcmp.eq.s32.totalorder %v1159, %v3150
        %vm3276 = vcmp.eq.s32.totalorder %v1159, %v3153
        %vm3277 = vcmp.eq.s32.totalorder %v1159, %v3156
        %vm3278 = vcmp.eq.s32.totalorder %v1159, %v3159
        %vm3279 = vcmp.eq.s32.totalorder %v1159, %v3162
        %vm3280 = vcmp.eq.s32.totalorder %v1159, %v3165
        %vm3281 = vcmp.eq.s32.totalorder %v1159, %v3168
        %vm3282 = vcmp.eq.s32.totalorder %v1159, %v3171
        %vm3283 = vcmp.eq.s32.totalorder %v1159, %v3174
        %vm3284 = vcmp.eq.s32.totalorder %v1159, %v3177
        %vm3285 = vcmp.eq.s32.totalorder %v1159, %v3180
        %vm3286 = vcmp.eq.s32.totalorder %v1159, %v3183
        %vm3287 = vcmp.eq.s32.totalorder %v1159, %v3186
        %vm3288 = vcmp.eq.s32.totalorder %v1159, %v3189
        %vm3289 = vcmp.eq.s32.totalorder %v1159, %v3192
        %vm3290 = vcmp.eq.s32.totalorder %v1159, %v3195
        %vm3291 = vcmp.eq.s32.totalorder %v1159, %v3198
        %vm3292 = vcmp.eq.s32.totalorder %v1159, %v3201
        %vm3293 = vcmp.eq.s32.totalorder %v1159, %v3204
        %vm3294 = vcmp.eq.s32.totalorder %v1159, %v3207
        %vm3295 = vcmp.eq.s32.totalorder %v1159, %v3210
        %vm3296 = vcmp.eq.s32.totalorder %v1159, %v3213
        %vm3297 = vcmp.eq.s32.totalorder %v1159, %v3216
        %vm3298 = vcmp.eq.s32.totalorder %v1159, %v3219
        %vm3299 = vcmp.eq.s32.totalorder %v1159, %v3222
        %vm3300 = vcmp.eq.s32.totalorder %v1159, %v3225
        %vm3301 = vcmp.eq.s32.totalorder %v1159, %v3228
        %vm3302 = vcmp.eq.s32.totalorder %v1159, %v3231
        %vm3303 = vcmp.eq.s32.totalorder %v1159, %v3234
        %vm3304 = vcmp.eq.s32.totalorder %v1159, %v3237
        %vm3305 = vcmp.eq.s32.totalorder %v1159, %v3240
        %v3306 = vsel %vm3241, 1, 0
        %v3307 = vsel %vm3242, 1, 0
        %v3308 = vsel %vm3243, 1, 0
        %v3309 = vsel %vm3244, 1, 0
        %v3310 = vsel %vm3245, 1, 0
        %v3311 = vsel %vm3246, 1, 0
        %v3312 = vsel %vm3247, 1, 0
        %v3313 = vsel %vm3248, 1, 0
        %v3314 = vsel %vm3249, 1, 0
        %v3315 = vsel %vm3250, 1, 0
        %v3316 = vsel %vm3251, 1, 0
        %v3317 = vsel %vm3252, 1, 0
        %v3318 = vsel %vm3253, 1, 0
        %v3319 = vsel %vm3254, 1, 0
        %v3320 = vsel %vm3255, 1, 0
        %v3321 = vsel %vm3256, 1, 0
        %v3322 = vsel %vm3257, 1, 0
        %v3323 = vsel %vm3258, 1, 0
        %v3324 = vsel %vm3259, 1, 0
        %v3325 = vsel %vm3260, 1, 0
        %v3326 = vsel %vm3261, 1, 0
        %v3327 = vsel %vm3262, 1, 0
        %v3328 = vsel %vm3263, 1, 0
        %v3329 = vsel %vm3264, 1, 0
        %v3330 = vsel %vm3265, 1, 0
        %v3331 = vsel %vm3266, 1, 0
        %v3332 = vsel %vm3267, 1, 0
        %v3333 = vsel %vm3268, 1, 0
        %v3334 = vsel %vm3269, 1, 0
        %v3335 = vsel %vm3270, 1, 0
        %v3336 = vsel %vm3271, 1, 0
        %v3337 = vsel %vm3272, 1, 0
        %v3338 = vsel %vm3273, 1, 0
        %v3339 = vsel %vm3274, 1, 0
        %v3340 = vsel %vm3275, 1, 0
        %v3341 = vsel %vm3276, 1, 0
        %v3342 = vsel %vm3277, 1, 0
        %v3343 = vsel %vm3278, 1, 0
        %v3344 = vsel %vm3279, 1, 0
        %v3345 = vsel %vm3280, 1, 0
        %v3346 = vsel %vm3281, 1, 0
        %v3347 = vsel %vm3282, 1, 0
        %v3348 = vsel %vm3283, 1, 0
        %v3349 = vsel %vm3284, 1, 0
        %v3350 = vsel %vm3285, 1, 0
        %v3351 = vsel %vm3286, 1, 0
        %v3352 = vsel %vm3287, 1, 0
        %v3353 = vsel %vm3288, 1, 0
        %v3354 = vsel %vm3289, 1, 0
        %v3355 = vsel %vm3290, 1, 0
        %v3356 = vsel %vm3291, 1, 0
        %v3357 = vsel %vm3292, 1, 0
        %v3358 = vsel %vm3293, 1, 0
        %v3359 = vsel %vm3294, 1, 0
        %v3360 = vsel %vm3295, 1, 0
        %v3361 = vsel %vm3296, 1, 0
        %v3362 = vsel %vm3297, 1, 0
        %v3363 = vsel %vm3298, 1, 0
        %v3364 = vsel %vm3299, 1, 0
        %v3365 = vsel %vm3300, 1, 0
        %v3366 = vsel %vm3301, 1, 0
        %v3367 = vsel %vm3302, 1, 0
        %v3368 = vsel %vm3303, 1, 0
        %v3369 = vsel %vm3304, 1, 0
        %v3370 = vsel %vm3305, 1, 0
        %v3371 = vcvt.s32.f32 %v3306
        %v3372 = vcvt.s32.f32 %v3307
        %v3373 = vcvt.s32.f32 %v3308
        %v3374 = vcvt.s32.f32 %v3309
        %v3375 = vcvt.s32.f32 %v3310
        %v3376 = vcvt.s32.f32 %v3311
        %v3377 = vcvt.s32.f32 %v3312
        %v3378 = vcvt.s32.f32 %v3313
        %v3379 = vcvt.s32.f32 %v3314
        %v3380 = vcvt.s32.f32 %v3315
        %v3381 = vcvt.s32.f32 %v3316
        %v3382 = vcvt.s32.f32 %v3317
        %v3383 = vcvt.s32.f32 %v3318
        %v3384 = vcvt.s32.f32 %v3319
        %v3385 = vcvt.s32.f32 %v3320
        %v3386 = vcvt.s32.f32 %v3321
        %v3387 = vcvt.s32.f32 %v3322
        %v3388 = vcvt.s32.f32 %v3323
        %v3389 = vcvt.s32.f32 %v3324
        %v3390 = vcvt.s32.f32 %v3325
        %v3391 = vcvt.s32.f32 %v3326
        %v3392 = vcvt.s32.f32 %v3327
        %v3393 = vcvt.s32.f32 %v3328
        %v3394 = vcvt.s32.f32 %v3329
        %v3395 = vcvt.s32.f32 %v3330
        %v3396 = vcvt.s32.f32 %v3331
        %v3397 = vcvt.s32.f32 %v3332
        %v3398 = vcvt.s32.f32 %v3333
        %v3399 = vcvt.s32.f32 %v3334
        %v3400 = vcvt.s32.f32 %v3335
        %v3401 = vcvt.s32.f32 %v3336
        %v3402 = vcvt.s32.f32 %v3337
        %v3403 = vcvt.s32.f32 %v3338
        %v3404 = vcvt.s32.f32 %v3339
        %v3405 = vcvt.s32.f32 %v3340
        %v3406 = vcvt.s32.f32 %v3341
        %v3407 = vcvt.s32.f32 %v3342
        %v3408 = vcvt.s32.f32 %v3343
        %v3409 = vcvt.s32.f32 %v3344
        %v3410 = vcvt.s32.f32 %v3345
        %v3411 = vcvt.s32.f32 %v3346
        %v3412 = vcvt.s32.f32 %v3347
        %v3413 = vcvt.s32.f32 %v3348
        %v3414 = vcvt.s32.f32 %v3349
        %v3415 = vcvt.s32.f32 %v3350
        %v3416 = vcvt.s32.f32 %v3351
        %v3417 = vcvt.s32.f32 %v3352
        %v3418 = vcvt.s32.f32 %v3353
        %v3419 = vcvt.s32.f32 %v3354
        %v3420 = vcvt.s32.f32 %v3355
        %v3421 = vcvt.s32.f32 %v3356
        %v3422 = vcvt.s32.f32 %v3357
        %v3423 = vcvt.s32.f32 %v3358
        %v3424 = vcvt.s32.f32 %v3359
        %v3425 = vcvt.s32.f32 %v3360
        %v3426 = vcvt.s32.f32 %v3361
        %v3427 = vcvt.s32.f32 %v3362
        %v3428 = vcvt.s32.f32 %v3363
        %v3429 = vcvt.s32.f32 %v3364
        %v3430 = vcvt.s32.f32 %v3365
        %v3431 = vcvt.s32.f32 %v3366
        %v3432 = vcvt.s32.f32 %v3367
        %v3433 = vcvt.s32.f32 %v3368
        %v3434 = vcvt.s32.f32 %v3369
        %v3435 = vcvt.s32.f32 %v3370
        %v3436 = vadd.f32 %v2981, %v3371
        %v3437 = vadd.f32 %v2982, %v3372
        %v3438 = vadd.f32 %v2983, %v3373
        %v3439 = vadd.f32 %v2984, %v3374
        %v3440 = vadd.f32 %v2985, %v3375
        %v3441 = vadd.f32 %v2986, %v3376
        %v3442 = vadd.f32 %v2987, %v3377
        %v3443 = vadd.f32 %v2988, %v3378
        %v3444 = vadd.f32 %v2989, %v3379
        %v3445 = vadd.f32 %v2990, %v3380
        %v3446 = vadd.f32 %v2991, %v3381
        %v3447 = vadd.f32 %v2992, %v3382
        %v3448 = vadd.f32 %v2993, %v3383
        %v3449 = vadd.f32 %v2994, %v3384
        %v3450 = vadd.f32 %v2995, %v3385
        %v3451 = vadd.f32 %v2996, %v3386
        %v3452 = vadd.f32 %v2997, %v3387
        %v3453 = vadd.f32 %v2998, %v3388
        %v3454 = vadd.f32 %v2999, %v3389
        %v3455 = vadd.f32 %v3000, %v3390
        %v3456 = vadd.f32 %v3001, %v3391
        %v3457 = vadd.f32 %v3002, %v3392
        %v3458 = vadd.f32 %v3003, %v3393
        %v3459 = vadd.f32 %v3004, %v3394
        %v3460 = vadd.f32 %v3005, %v3395
        %v3461 = vadd.f32 %v3006, %v3396
        %v3462 = vadd.f32 %v3007, %v3397
        %v3463 = vadd.f32 %v3008, %v3398
        %v3464 = vadd.f32 %v3009, %v3399
        %v3465 = vadd.f32 %v3010, %v3400
        %v3466 = vadd.f32 %v3011, %v3401
        %v3467 = vadd.f32 %v3012, %v3402
        %v3468 = vadd.f32 %v3013, %v3403
        %v3469 = vadd.f32 %v3014, %v3404
        %v3470 = vadd.f32 %v3015, %v3405
        %v3471 = vadd.f32 %v3016, %v3406
        %v3472 = vadd.f32 %v3017, %v3407
        %v3473 = vadd.f32 %v3018, %v3408
        %v3474 = vadd.f32 %v3019, %v3409
        %v3475 = vadd.f32 %v3020, %v3410
        %v3476 = vadd.f32 %v3021, %v3411
        %v3477 = vadd.f32 %v3022, %v3412
        %v3478 = vadd.f32 %v3023, %v3413
        %v3479 = vadd.f32 %v3024, %v3414
        %v3480 = vadd.f32 %v3025, %v3415
        %v3481 = vadd.f32 %v3026, %v3416
        %v3482 = vadd.f32 %v3027, %v3417
        %v3483 = vadd.f32 %v3028, %v3418
        %v3484 = vadd.f32 %v3029, %v3419
        %v3485 = vadd.f32 %v3030, %v3420
        %v3486 = vadd.f32 %v3031, %v3421
        %v3487 = vadd.f32 %v3032, %v3422
        %v3488 = vadd.f32 %v3033, %v3423
        %v3489 = vadd.f32 %v3034, %v3424
        %v3490 = vadd.f32 %v3035, %v3425
        %v3491 = vadd.f32 %v3036, %v3426
        %v3492 = vadd.f32 %v3037, %v3427
        %v3493 = vadd.f32 %v3038, %v3428
        %v3494 = vadd.f32 %v3039, %v3429
        %v3495 = vadd.f32 %v3040, %v3430
        %v3496 = vadd.f32 %v3041, %v3431
        %v3497 = vadd.f32 %v3042, %v3432
        %v3498 = vadd.f32 %v3043, %v3433
        %v3499 = vadd.f32 %v3044, %v3434
        %v3500 = vadd.f32 %v3045, %v3435
        %3501 = vset.pattern.permute.xlu0 4
        %3502 = vperm.xlu0 %3501, %v248
        %v3503 = vpop.permute.xlu0 %3502
        %3504 = vset.pattern.permute.xlu0 4
        %3505 = vperm.xlu0 %3504, %v249
        %v3506 = vpop.permute.xlu0 %3505
        %3507 = vset.pattern.permute.xlu0 4
        %3508 = vperm.xlu0 %3507, %v250
        %v3509 = vpop.permute.xlu0 %3508
        %3510 = vset.pattern.permute.xlu0 4
        %3511 = vperm.xlu0 %3510, %v251
        %v3512 = vpop.permute.xlu0 %3511
        %3513 = vset.pattern.permute.xlu0 4
        %3514 = vperm.xlu0 %3513, %v252
        %v3515 = vpop.permute.xlu0 %3514
        %3516 = vset.pattern.permute.xlu0 4
        %3517 = vperm.xlu0 %3516, %v253
        %v3518 = vpop.permute.xlu0 %3517
        %3519 = vset.pattern.permute.xlu0 4
        %3520 = vperm.xlu0 %3519, %v254
        %v3521 = vpop.permute.xlu0 %3520
        %3522 = vset.pattern.permute.xlu0 4
        %3523 = vperm.xlu0 %3522, %v255
        %v3524 = vpop.permute.xlu0 %3523
        %3525 = vset.pattern.permute.xlu0 4
        %3526 = vperm.xlu0 %3525, %v256
        %v3527 = vpop.permute.xlu0 %3526
        %3528 = vset.pattern.permute.xlu0 4
        %3529 = vperm.xlu0 %3528, %v257
        %v3530 = vpop.permute.xlu0 %3529
        %3531 = vset.pattern.permute.xlu0 4
        %3532 = vperm.xlu0 %3531, %v258
        %v3533 = vpop.permute.xlu0 %3532
        %3534 = vset.pattern.permute.xlu0 4
        %3535 = vperm.xlu0 %3534, %v259
        %v3536 = vpop.permute.xlu0 %3535
        %3537 = vset.pattern.permute.xlu0 4
        %3538 = vperm.xlu0 %3537, %v260
        %v3539 = vpop.permute.xlu0 %3538
        %3540 = vset.pattern.permute.xlu0 4
        %3541 = vperm.xlu0 %3540, %v261
        %v3542 = vpop.permute.xlu0 %3541
        %3543 = vset.pattern.permute.xlu0 4
        %3544 = vperm.xlu0 %3543, %v262
        %v3545 = vpop.permute.xlu0 %3544
        %3546 = vset.pattern.permute.xlu0 4
        %3547 = vperm.xlu0 %3546, %v263
        %v3548 = vpop.permute.xlu0 %3547
        %3549 = vset.pattern.permute.xlu0 4
        %3550 = vperm.xlu0 %3549, %v264
        %v3551 = vpop.permute.xlu0 %3550
        %3552 = vset.pattern.permute.xlu0 4
        %3553 = vperm.xlu0 %3552, %v265
        %v3554 = vpop.permute.xlu0 %3553
        %3555 = vset.pattern.permute.xlu0 4
        %3556 = vperm.xlu0 %3555, %v266
        %v3557 = vpop.permute.xlu0 %3556
        %3558 = vset.pattern.permute.xlu0 4
        %3559 = vperm.xlu0 %3558, %v267
        %v3560 = vpop.permute.xlu0 %3559
        %3561 = vset.pattern.permute.xlu0 4
        %3562 = vperm.xlu0 %3561, %v268
        %v3563 = vpop.permute.xlu0 %3562
        %3564 = vset.pattern.permute.xlu0 4
        %3565 = vperm.xlu0 %3564, %v269
        %v3566 = vpop.permute.xlu0 %3565
        %3567 = vset.pattern.permute.xlu0 4
        %3568 = vperm.xlu0 %3567, %v270
        %v3569 = vpop.permute.xlu0 %3568
        %3570 = vset.pattern.permute.xlu0 4
        %3571 = vperm.xlu0 %3570, %v271
        %v3572 = vpop.permute.xlu0 %3571
        %3573 = vset.pattern.permute.xlu0 4
        %3574 = vperm.xlu0 %3573, %v272
        %v3575 = vpop.permute.xlu0 %3574
        %3576 = vset.pattern.permute.xlu0 4
        %3577 = vperm.xlu0 %3576, %v273
        %v3578 = vpop.permute.xlu0 %3577
        %3579 = vset.pattern.permute.xlu0 4
        %3580 = vperm.xlu0 %3579, %v274
        %v3581 = vpop.permute.xlu0 %3580
        %3582 = vset.pattern.permute.xlu0 4
        %3583 = vperm.xlu0 %3582, %v275
        %v3584 = vpop.permute.xlu0 %3583
        %3585 = vset.pattern.permute.xlu0 4
        %3586 = vperm.xlu0 %3585, %v276
        %v3587 = vpop.permute.xlu0 %3586
        %3588 = vset.pattern.permute.xlu0 4
        %3589 = vperm.xlu0 %3588, %v277
        %v3590 = vpop.permute.xlu0 %3589
        %3591 = vset.pattern.permute.xlu0 4
        %3592 = vperm.xlu0 %3591, %v278
        %v3593 = vpop.permute.xlu0 %3592
        %3594 = vset.pattern.permute.xlu0 4
        %3595 = vperm.xlu0 %3594, %v279
        %v3596 = vpop.permute.xlu0 %3595
        %3597 = vset.pattern.permute.xlu0 4
        %3598 = vperm.xlu0 %3597, %v280
        %v3599 = vpop.permute.xlu0 %3598
        %3600 = vset.pattern.permute.xlu0 4
        %3601 = vperm.xlu0 %3600, %v281
        %v3602 = vpop.permute.xlu0 %3601
        %3603 = vset.pattern.permute.xlu0 4
        %3604 = vperm.xlu0 %3603, %v282
        %v3605 = vpop.permute.xlu0 %3604
        %3606 = vset.pattern.permute.xlu0 4
        %3607 = vperm.xlu0 %3606, %v283
        %v3608 = vpop.permute.xlu0 %3607
        %3609 = vset.pattern.permute.xlu0 4
        %3610 = vperm.xlu0 %3609, %v284
        %v3611 = vpop.permute.xlu0 %3610
        %3612 = vset.pattern.permute.xlu0 4
        %3613 = vperm.xlu0 %3612, %v285
        %v3614 = vpop.permute.xlu0 %3613
        %3615 = vset.pattern.permute.xlu0 4
        %3616 = vperm.xlu0 %3615, %v286
        %v3617 = vpop.permute.xlu0 %3616
        %3618 = vset.pattern.permute.xlu0 4
        %3619 = vperm.xlu0 %3618, %v287
        %v3620 = vpop.permute.xlu0 %3619
        %3621 = vset.pattern.permute.xlu0 4
        %3622 = vperm.xlu0 %3621, %v288
        %v3623 = vpop.permute.xlu0 %3622
        %3624 = vset.pattern.permute.xlu0 4
        %3625 = vperm.xlu0 %3624, %v289
        %v3626 = vpop.permute.xlu0 %3625
        %3627 = vset.pattern.permute.xlu0 4
        %3628 = vperm.xlu0 %3627, %v290
        %v3629 = vpop.permute.xlu0 %3628
        %3630 = vset.pattern.permute.xlu0 4
        %3631 = vperm.xlu0 %3630, %v291
        %v3632 = vpop.permute.xlu0 %3631
        %3633 = vset.pattern.permute.xlu0 4
        %3634 = vperm.xlu0 %3633, %v292
        %v3635 = vpop.permute.xlu0 %3634
        %3636 = vset.pattern.permute.xlu0 4
        %3637 = vperm.xlu0 %3636, %v293
        %v3638 = vpop.permute.xlu0 %3637
        %3639 = vset.pattern.permute.xlu0 4
        %3640 = vperm.xlu0 %3639, %v294
        %v3641 = vpop.permute.xlu0 %3640
        %3642 = vset.pattern.permute.xlu0 4
        %3643 = vperm.xlu0 %3642, %v295
        %v3644 = vpop.permute.xlu0 %3643
        %3645 = vset.pattern.permute.xlu0 4
        %3646 = vperm.xlu0 %3645, %v296
        %v3647 = vpop.permute.xlu0 %3646
        %3648 = vset.pattern.permute.xlu0 4
        %3649 = vperm.xlu0 %3648, %v297
        %v3650 = vpop.permute.xlu0 %3649
        %3651 = vset.pattern.permute.xlu0 4
        %3652 = vperm.xlu0 %3651, %v298
        %v3653 = vpop.permute.xlu0 %3652
        %3654 = vset.pattern.permute.xlu0 4
        %3655 = vperm.xlu0 %3654, %v299
        %v3656 = vpop.permute.xlu0 %3655
        %3657 = vset.pattern.permute.xlu0 4
        %3658 = vperm.xlu0 %3657, %v300
        %v3659 = vpop.permute.xlu0 %3658
        %3660 = vset.pattern.permute.xlu0 4
        %3661 = vperm.xlu0 %3660, %v301
        %v3662 = vpop.permute.xlu0 %3661
        %3663 = vset.pattern.permute.xlu0 4
        %3664 = vperm.xlu0 %3663, %v302
        %v3665 = vpop.permute.xlu0 %3664
        %3666 = vset.pattern.permute.xlu0 4
        %3667 = vperm.xlu0 %3666, %v303
        %v3668 = vpop.permute.xlu0 %3667
        %3669 = vset.pattern.permute.xlu0 4
        %3670 = vperm.xlu0 %3669, %v304
        %v3671 = vpop.permute.xlu0 %3670
        %3672 = vset.pattern.permute.xlu0 4
        %3673 = vperm.xlu0 %3672, %v305
        %v3674 = vpop.permute.xlu0 %3673
        %3675 = vset.pattern.permute.xlu0 4
        %3676 = vperm.xlu0 %3675, %v306
        %v3677 = vpop.permute.xlu0 %3676
        %3678 = vset.pattern.permute.xlu0 4
        %3679 = vperm.xlu0 %3678, %v307
        %v3680 = vpop.permute.xlu0 %3679
        %3681 = vset.pattern.permute.xlu0 4
        %3682 = vperm.xlu0 %3681, %v308
        %v3683 = vpop.permute.xlu0 %3682
        %3684 = vset.pattern.permute.xlu0 4
        %3685 = vperm.xlu0 %3684, %v309
        %v3686 = vpop.permute.xlu0 %3685
        %3687 = vset.pattern.permute.xlu0 4
        %3688 = vperm.xlu0 %3687, %v310
        %v3689 = vpop.permute.xlu0 %3688
        %3690 = vset.pattern.permute.xlu0 4
        %3691 = vperm.xlu0 %3690, %v311
        %v3692 = vpop.permute.xlu0 %3691
        %3693 = vset.pattern.permute.xlu0 4
        %3694 = vperm.xlu0 %3693, %v312
        %v3695 = vpop.permute.xlu0 %3694
        %vm3696 = vcmp.eq.s32.totalorder %v1159, %v3503
        %vm3697 = vcmp.eq.s32.totalorder %v1159, %v3506
        %vm3698 = vcmp.eq.s32.totalorder %v1159, %v3509
        %vm3699 = vcmp.eq.s32.totalorder %v1159, %v3512
        %vm3700 = vcmp.eq.s32.totalorder %v1159, %v3515
        %vm3701 = vcmp.eq.s32.totalorder %v1159, %v3518
        %vm3702 = vcmp.eq.s32.totalorder %v1159, %v3521
        %vm3703 = vcmp.eq.s32.totalorder %v1159, %v3524
        %vm3704 = vcmp.eq.s32.totalorder %v1159, %v3527
        %vm3705 = vcmp.eq.s32.totalorder %v1159, %v3530
        %vm3706 = vcmp.eq.s32.totalorder %v1159, %v3533
        %vm3707 = vcmp.eq.s32.totalorder %v1159, %v3536
        %vm3708 = vcmp.eq.s32.totalorder %v1159, %v3539
        %vm3709 = vcmp.eq.s32.totalorder %v1159, %v3542
        %vm3710 = vcmp.eq.s32.totalorder %v1159, %v3545
        %vm3711 = vcmp.eq.s32.totalorder %v1159, %v3548
        %vm3712 = vcmp.eq.s32.totalorder %v1159, %v3551
        %vm3713 = vcmp.eq.s32.totalorder %v1159, %v3554
        %vm3714 = vcmp.eq.s32.totalorder %v1159, %v3557
        %vm3715 = vcmp.eq.s32.totalorder %v1159, %v3560
        %vm3716 = vcmp.eq.s32.totalorder %v1159, %v3563
        %vm3717 = vcmp.eq.s32.totalorder %v1159, %v3566
        %vm3718 = vcmp.eq.s32.totalorder %v1159, %v3569
        %vm3719 = vcmp.eq.s32.totalorder %v1159, %v3572
        %vm3720 = vcmp.eq.s32.totalorder %v1159, %v3575
        %vm3721 = vcmp.eq.s32.totalorder %v1159, %v3578
        %vm3722 = vcmp.eq.s32.totalorder %v1159, %v3581
        %vm3723 = vcmp.eq.s32.totalorder %v1159, %v3584
        %vm3724 = vcmp.eq.s32.totalorder %v1159, %v3587
        %vm3725 = vcmp.eq.s32.totalorder %v1159, %v3590
        %vm3726 = vcmp.eq.s32.totalorder %v1159, %v3593
        %vm3727 = vcmp.eq.s32.totalorder %v1159, %v3596
        %vm3728 = vcmp.eq.s32.totalorder %v1159, %v3599
        %vm3729 = vcmp.eq.s32.totalorder %v1159, %v3602
        %vm3730 = vcmp.eq.s32.totalorder %v1159, %v3605
        %vm3731 = vcmp.eq.s32.totalorder %v1159, %v3608
        %vm3732 = vcmp.eq.s32.totalorder %v1159, %v3611
        %vm3733 = vcmp.eq.s32.totalorder %v1159, %v3614
        %vm3734 = vcmp.eq.s32.totalorder %v1159, %v3617
        %vm3735 = vcmp.eq.s32.totalorder %v1159, %v3620
        %vm3736 = vcmp.eq.s32.totalorder %v1159, %v3623
        %vm3737 = vcmp.eq.s32.totalorder %v1159, %v3626
        %vm3738 = vcmp.eq.s32.totalorder %v1159, %v3629
        %vm3739 = vcmp.eq.s32.totalorder %v1159, %v3632
        %vm3740 = vcmp.eq.s32.totalorder %v1159, %v3635
        %vm3741 = vcmp.eq.s32.totalorder %v1159, %v3638
        %vm3742 = vcmp.eq.s32.totalorder %v1159, %v3641
        %vm3743 = vcmp.eq.s32.totalorder %v1159, %v3644
        %vm3744 = vcmp.eq.s32.totalorder %v1159, %v3647
        %vm3745 = vcmp.eq.s32.totalorder %v1159, %v3650
        %vm3746 = vcmp.eq.s32.totalorder %v1159, %v3653
        %vm3747 = vcmp.eq.s32.totalorder %v1159, %v3656
        %vm3748 = vcmp.eq.s32.totalorder %v1159, %v3659
        %vm3749 = vcmp.eq.s32.totalorder %v1159, %v3662
        %vm3750 = vcmp.eq.s32.totalorder %v1159, %v3665
        %vm3751 = vcmp.eq.s32.totalorder %v1159, %v3668
        %vm3752 = vcmp.eq.s32.totalorder %v1159, %v3671
        %vm3753 = vcmp.eq.s32.totalorder %v1159, %v3674
        %vm3754 = vcmp.eq.s32.totalorder %v1159, %v3677
        %vm3755 = vcmp.eq.s32.totalorder %v1159, %v3680
        %vm3756 = vcmp.eq.s32.totalorder %v1159, %v3683
        %vm3757 = vcmp.eq.s32.totalorder %v1159, %v3686
        %vm3758 = vcmp.eq.s32.totalorder %v1159, %v3689
        %vm3759 = vcmp.eq.s32.totalorder %v1159, %v3692
        %vm3760 = vcmp.eq.s32.totalorder %v1159, %v3695
        %v3761 = vsel %vm3696, 1, 0
        %v3762 = vsel %vm3697, 1, 0
        %v3763 = vsel %vm3698, 1, 0
        %v3764 = vsel %vm3699, 1, 0
        %v3765 = vsel %vm3700, 1, 0
        %v3766 = vsel %vm3701, 1, 0
        %v3767 = vsel %vm3702, 1, 0
        %v3768 = vsel %vm3703, 1, 0
        %v3769 = vsel %vm3704, 1, 0
        %v3770 = vsel %vm3705, 1, 0
        %v3771 = vsel %vm3706, 1, 0
        %v3772 = vsel %vm3707, 1, 0
        %v3773 = vsel %vm3708, 1, 0
        %v3774 = vsel %vm3709, 1, 0
        %v3775 = vsel %vm3710, 1, 0
        %v3776 = vsel %vm3711, 1, 0
        %v3777 = vsel %vm3712, 1, 0
        %v3778 = vsel %vm3713, 1, 0
        %v3779 = vsel %vm3714, 1, 0
        %v3780 = vsel %vm3715, 1, 0
        %v3781 = vsel %vm3716, 1, 0
        %v3782 = vsel %vm3717, 1, 0
        %v3783 = vsel %vm3718, 1, 0
        %v3784 = vsel %vm3719, 1, 0
        %v3785 = vsel %vm3720, 1, 0
        %v3786 = vsel %vm3721, 1, 0
        %v3787 = vsel %vm3722, 1, 0
        %v3788 = vsel %vm3723, 1, 0
        %v3789 = vsel %vm3724, 1, 0
        %v3790 = vsel %vm3725, 1, 0
        %v3791 = vsel %vm3726, 1, 0
        %v3792 = vsel %vm3727, 1, 0
        %v3793 = vsel %vm3728, 1, 0
        %v3794 = vsel %vm3729, 1, 0
        %v3795 = vsel %vm3730, 1, 0
        %v3796 = vsel %vm3731, 1, 0
        %v3797 = vsel %vm3732, 1, 0
        %v3798 = vsel %vm3733, 1, 0
        %v3799 = vsel %vm3734, 1, 0
        %v3800 = vsel %vm3735, 1, 0
        %v3801 = vsel %vm3736, 1, 0
        %v3802 = vsel %vm3737, 1, 0
        %v3803 = vsel %vm3738, 1, 0
        %v3804 = vsel %vm3739, 1, 0
        %v3805 = vsel %vm3740, 1, 0
        %v3806 = vsel %vm3741, 1, 0
        %v3807 = vsel %vm3742, 1, 0
        %v3808 = vsel %vm3743, 1, 0
        %v3809 = vsel %vm3744, 1, 0
        %v3810 = vsel %vm3745, 1, 0
        %v3811 = vsel %vm3746, 1, 0
        %v3812 = vsel %vm3747, 1, 0
        %v3813 = vsel %vm3748, 1, 0
        %v3814 = vsel %vm3749, 1, 0
        %v3815 = vsel %vm3750, 1, 0
        %v3816 = vsel %vm3751, 1, 0
        %v3817 = vsel %vm3752, 1, 0
        %v3818 = vsel %vm3753, 1, 0
        %v3819 = vsel %vm3754, 1, 0
        %v3820 = vsel %vm3755, 1, 0
        %v3821 = vsel %vm3756, 1, 0
        %v3822 = vsel %vm3757, 1, 0
        %v3823 = vsel %vm3758, 1, 0
        %v3824 = vsel %vm3759, 1, 0
        %v3825 = vsel %vm3760, 1, 0
        %v3826 = vcvt.s32.f32 %v3761
        %v3827 = vcvt.s32.f32 %v3762
        %v3828 = vcvt.s32.f32 %v3763
        %v3829 = vcvt.s32.f32 %v3764
        %v3830 = vcvt.s32.f32 %v3765
        %v3831 = vcvt.s32.f32 %v3766
        %v3832 = vcvt.s32.f32 %v3767
        %v3833 = vcvt.s32.f32 %v3768
        %v3834 = vcvt.s32.f32 %v3769
        %v3835 = vcvt.s32.f32 %v3770
        %v3836 = vcvt.s32.f32 %v3771
        %v3837 = vcvt.s32.f32 %v3772
        %v3838 = vcvt.s32.f32 %v3773
        %v3839 = vcvt.s32.f32 %v3774
        %v3840 = vcvt.s32.f32 %v3775
        %v3841 = vcvt.s32.f32 %v3776
        %v3842 = vcvt.s32.f32 %v3777
        %v3843 = vcvt.s32.f32 %v3778
        %v3844 = vcvt.s32.f32 %v3779
        %v3845 = vcvt.s32.f32 %v3780
        %v3846 = vcvt.s32.f32 %v3781
        %v3847 = vcvt.s32.f32 %v3782
        %v3848 = vcvt.s32.f32 %v3783
        %v3849 = vcvt.s32.f32 %v3784
        %v3850 = vcvt.s32.f32 %v3785
        %v3851 = vcvt.s32.f32 %v3786
        %v3852 = vcvt.s32.f32 %v3787
        %v3853 = vcvt.s32.f32 %v3788
        %v3854 = vcvt.s32.f32 %v3789
        %v3855 = vcvt.s32.f32 %v3790
        %v3856 = vcvt.s32.f32 %v3791
        %v3857 = vcvt.s32.f32 %v3792
        %v3858 = vcvt.s32.f32 %v3793
        %v3859 = vcvt.s32.f32 %v3794
        %v3860 = vcvt.s32.f32 %v3795
        %v3861 = vcvt.s32.f32 %v3796
        %v3862 = vcvt.s32.f32 %v3797
        %v3863 = vcvt.s32.f32 %v3798
        %v3864 = vcvt.s32.f32 %v3799
        %v3865 = vcvt.s32.f32 %v3800
        %v3866 = vcvt.s32.f32 %v3801
        %v3867 = vcvt.s32.f32 %v3802
        %v3868 = vcvt.s32.f32 %v3803
        %v3869 = vcvt.s32.f32 %v3804
        %v3870 = vcvt.s32.f32 %v3805
        %v3871 = vcvt.s32.f32 %v3806
        %v3872 = vcvt.s32.f32 %v3807
        %v3873 = vcvt.s32.f32 %v3808
        %v3874 = vcvt.s32.f32 %v3809
        %v3875 = vcvt.s32.f32 %v3810
        %v3876 = vcvt.s32.f32 %v3811
        %v3877 = vcvt.s32.f32 %v3812
        %v3878 = vcvt.s32.f32 %v3813
        %v3879 = vcvt.s32.f32 %v3814
        %v3880 = vcvt.s32.f32 %v3815
        %v3881 = vcvt.s32.f32 %v3816
        %v3882 = vcvt.s32.f32 %v3817
        %v3883 = vcvt.s32.f32 %v3818
        %v3884 = vcvt.s32.f32 %v3819
        %v3885 = vcvt.s32.f32 %v3820
        %v3886 = vcvt.s32.f32 %v3821
        %v3887 = vcvt.s32.f32 %v3822
        %v3888 = vcvt.s32.f32 %v3823
        %v3889 = vcvt.s32.f32 %v3824
        %v3890 = vcvt.s32.f32 %v3825
        %v3891 = vadd.f32 %v3436, %v3826
        %v3892 = vadd.f32 %v3437, %v3827
        %v3893 = vadd.f32 %v3438, %v3828
        %v3894 = vadd.f32 %v3439, %v3829
        %v3895 = vadd.f32 %v3440, %v3830
        %v3896 = vadd.f32 %v3441, %v3831
        %v3897 = vadd.f32 %v3442, %v3832
        %v3898 = vadd.f32 %v3443, %v3833
        %v3899 = vadd.f32 %v3444, %v3834
        %v3900 = vadd.f32 %v3445, %v3835
        %v3901 = vadd.f32 %v3446, %v3836
        %v3902 = vadd.f32 %v3447, %v3837
        %v3903 = vadd.f32 %v3448, %v3838
        %v3904 = vadd.f32 %v3449, %v3839
        %v3905 = vadd.f32 %v3450, %v3840
        %v3906 = vadd.f32 %v3451, %v3841
        %v3907 = vadd.f32 %v3452, %v3842
        %v3908 = vadd.f32 %v3453, %v3843
        %v3909 = vadd.f32 %v3454, %v3844
        %v3910 = vadd.f32 %v3455, %v3845
        %v3911 = vadd.f32 %v3456, %v3846
        %v3912 = vadd.f32 %v3457, %v3847
        %v3913 = vadd.f32 %v3458, %v3848
        %v3914 = vadd.f32 %v3459, %v3849
        %v3915 = vadd.f32 %v3460, %v3850
        %v3916 = vadd.f32 %v3461, %v3851
        %v3917 = vadd.f32 %v3462, %v3852
        %v3918 = vadd.f32 %v3463, %v3853
        %v3919 = vadd.f32 %v3464, %v3854
        %v3920 = vadd.f32 %v3465, %v3855
        %v3921 = vadd.f32 %v3466, %v3856
        %v3922 = vadd.f32 %v3467, %v3857
        %v3923 = vadd.f32 %v3468, %v3858
        %v3924 = vadd.f32 %v3469, %v3859
        %v3925 = vadd.f32 %v3470, %v3860
        %v3926 = vadd.f32 %v3471, %v3861
        %v3927 = vadd.f32 %v3472, %v3862
        %v3928 = vadd.f32 %v3473, %v3863
        %v3929 = vadd.f32 %v3474, %v3864
        %v3930 = vadd.f32 %v3475, %v3865
        %v3931 = vadd.f32 %v3476, %v3866
        %v3932 = vadd.f32 %v3477, %v3867
        %v3933 = vadd.f32 %v3478, %v3868
        %v3934 = vadd.f32 %v3479, %v3869
        %v3935 = vadd.f32 %v3480, %v3870
        %v3936 = vadd.f32 %v3481, %v3871
        %v3937 = vadd.f32 %v3482, %v3872
        %v3938 = vadd.f32 %v3483, %v3873
        %v3939 = vadd.f32 %v3484, %v3874
        %v3940 = vadd.f32 %v3485, %v3875
        %v3941 = vadd.f32 %v3486, %v3876
        %v3942 = vadd.f32 %v3487, %v3877
        %v3943 = vadd.f32 %v3488, %v3878
        %v3944 = vadd.f32 %v3489, %v3879
        %v3945 = vadd.f32 %v3490, %v3880
        %v3946 = vadd.f32 %v3491, %v3881
        %v3947 = vadd.f32 %v3492, %v3882
        %v3948 = vadd.f32 %v3493, %v3883
        %v3949 = vadd.f32 %v3494, %v3884
        %v3950 = vadd.f32 %v3495, %v3885
        %v3951 = vadd.f32 %v3496, %v3886
        %v3952 = vadd.f32 %v3497, %v3887
        %v3953 = vadd.f32 %v3498, %v3888
        %v3954 = vadd.f32 %v3499, %v3889
        %v3955 = vadd.f32 %v3500, %v3890
        %3956 = vset.pattern.permute.xlu0 5
        %3957 = vperm.xlu0 %3956, %v248
        %v3958 = vpop.permute.xlu0 %3957
        %3959 = vset.pattern.permute.xlu0 5
        %3960 = vperm.xlu0 %3959, %v249
        %v3961 = vpop.permute.xlu0 %3960
        %3962 = vset.pattern.permute.xlu0 5
        %3963 = vperm.xlu0 %3962, %v250
        %v3964 = vpop.permute.xlu0 %3963
        %3965 = vset.pattern.permute.xlu0 5
        %3966 = vperm.xlu0 %3965, %v251
        %v3967 = vpop.permute.xlu0 %3966
        %3968 = vset.pattern.permute.xlu0 5
        %3969 = vperm.xlu0 %3968, %v252
        %v3970 = vpop.permute.xlu0 %3969
        %3971 = vset.pattern.permute.xlu0 5
        %3972 = vperm.xlu0 %3971, %v253
        %v3973 = vpop.permute.xlu0 %3972
        %3974 = vset.pattern.permute.xlu0 5
        %3975 = vperm.xlu0 %3974, %v254
        %v3976 = vpop.permute.xlu0 %3975
        %3977 = vset.pattern.permute.xlu0 5
        %3978 = vperm.xlu0 %3977, %v255
        %v3979 = vpop.permute.xlu0 %3978
        %3980 = vset.pattern.permute.xlu0 5
        %3981 = vperm.xlu0 %3980, %v256
        %v3982 = vpop.permute.xlu0 %3981
        %3983 = vset.pattern.permute.xlu0 5
        %3984 = vperm.xlu0 %3983, %v257
        %v3985 = vpop.permute.xlu0 %3984
        %3986 = vset.pattern.permute.xlu0 5
        %3987 = vperm.xlu0 %3986, %v258
        %v3988 = vpop.permute.xlu0 %3987
        %3989 = vset.pattern.permute.xlu0 5
        %3990 = vperm.xlu0 %3989, %v259
        %v3991 = vpop.permute.xlu0 %3990
        %3992 = vset.pattern.permute.xlu0 5
        %3993 = vperm.xlu0 %3992, %v260
        %v3994 = vpop.permute.xlu0 %3993
        %3995 = vset.pattern.permute.xlu0 5
        %3996 = vperm.xlu0 %3995, %v261
        %v3997 = vpop.permute.xlu0 %3996
        %3998 = vset.pattern.permute.xlu0 5
        %3999 = vperm.xlu0 %3998, %v262
        %v4000 = vpop.permute.xlu0 %3999
        %4001 = vset.pattern.permute.xlu0 5
        %4002 = vperm.xlu0 %4001, %v263
        %v4003 = vpop.permute.xlu0 %4002
        %4004 = vset.pattern.permute.xlu0 5
        %4005 = vperm.xlu0 %4004, %v264
        %v4006 = vpop.permute.xlu0 %4005
        %4007 = vset.pattern.permute.xlu0 5
        %4008 = vperm.xlu0 %4007, %v265
        %v4009 = vpop.permute.xlu0 %4008
        %4010 = vset.pattern.permute.xlu0 5
        %4011 = vperm.xlu0 %4010, %v266
        %v4012 = vpop.permute.xlu0 %4011
        %4013 = vset.pattern.permute.xlu0 5
        %4014 = vperm.xlu0 %4013, %v267
        %v4015 = vpop.permute.xlu0 %4014
        %4016 = vset.pattern.permute.xlu0 5
        %4017 = vperm.xlu0 %4016, %v268
        %v4018 = vpop.permute.xlu0 %4017
        %4019 = vset.pattern.permute.xlu0 5
        %4020 = vperm.xlu0 %4019, %v269
        %v4021 = vpop.permute.xlu0 %4020
        %4022 = vset.pattern.permute.xlu0 5
        %4023 = vperm.xlu0 %4022, %v270
        %v4024 = vpop.permute.xlu0 %4023
        %4025 = vset.pattern.permute.xlu0 5
        %4026 = vperm.xlu0 %4025, %v271
        %v4027 = vpop.permute.xlu0 %4026
        %4028 = vset.pattern.permute.xlu0 5
        %4029 = vperm.xlu0 %4028, %v272
        %v4030 = vpop.permute.xlu0 %4029
        %4031 = vset.pattern.permute.xlu0 5
        %4032 = vperm.xlu0 %4031, %v273
        %v4033 = vpop.permute.xlu0 %4032
        %4034 = vset.pattern.permute.xlu0 5
        %4035 = vperm.xlu0 %4034, %v274
        %v4036 = vpop.permute.xlu0 %4035
        %4037 = vset.pattern.permute.xlu0 5
        %4038 = vperm.xlu0 %4037, %v275
        %v4039 = vpop.permute.xlu0 %4038
        %4040 = vset.pattern.permute.xlu0 5
        %4041 = vperm.xlu0 %4040, %v276
        %v4042 = vpop.permute.xlu0 %4041
        %4043 = vset.pattern.permute.xlu0 5
        %4044 = vperm.xlu0 %4043, %v277
        %v4045 = vpop.permute.xlu0 %4044
        %4046 = vset.pattern.permute.xlu0 5
        %4047 = vperm.xlu0 %4046, %v278
        %v4048 = vpop.permute.xlu0 %4047
        %4049 = vset.pattern.permute.xlu0 5
        %4050 = vperm.xlu0 %4049, %v279
        %v4051 = vpop.permute.xlu0 %4050
        %4052 = vset.pattern.permute.xlu0 5
        %4053 = vperm.xlu0 %4052, %v280
        %v4054 = vpop.permute.xlu0 %4053
        %4055 = vset.pattern.permute.xlu0 5
        %4056 = vperm.xlu0 %4055, %v281
        %v4057 = vpop.permute.xlu0 %4056
        %4058 = vset.pattern.permute.xlu0 5
        %4059 = vperm.xlu0 %4058, %v282
        %v4060 = vpop.permute.xlu0 %4059
        %4061 = vset.pattern.permute.xlu0 5
        %4062 = vperm.xlu0 %4061, %v283
        %v4063 = vpop.permute.xlu0 %4062
        %4064 = vset.pattern.permute.xlu0 5
        %4065 = vperm.xlu0 %4064, %v284
        %v4066 = vpop.permute.xlu0 %4065
        %4067 = vset.pattern.permute.xlu0 5
        %4068 = vperm.xlu0 %4067, %v285
        %v4069 = vpop.permute.xlu0 %4068
        %4070 = vset.pattern.permute.xlu0 5
        %4071 = vperm.xlu0 %4070, %v286
        %v4072 = vpop.permute.xlu0 %4071
        %4073 = vset.pattern.permute.xlu0 5
        %4074 = vperm.xlu0 %4073, %v287
        %v4075 = vpop.permute.xlu0 %4074
        %4076 = vset.pattern.permute.xlu0 5
        %4077 = vperm.xlu0 %4076, %v288
        %v4078 = vpop.permute.xlu0 %4077
        %4079 = vset.pattern.permute.xlu0 5
        %4080 = vperm.xlu0 %4079, %v289
        %v4081 = vpop.permute.xlu0 %4080
        %4082 = vset.pattern.permute.xlu0 5
        %4083 = vperm.xlu0 %4082, %v290
        %v4084 = vpop.permute.xlu0 %4083
        %4085 = vset.pattern.permute.xlu0 5
        %4086 = vperm.xlu0 %4085, %v291
        %v4087 = vpop.permute.xlu0 %4086
        %4088 = vset.pattern.permute.xlu0 5
        %4089 = vperm.xlu0 %4088, %v292
        %v4090 = vpop.permute.xlu0 %4089
        %4091 = vset.pattern.permute.xlu0 5
        %4092 = vperm.xlu0 %4091, %v293
        %v4093 = vpop.permute.xlu0 %4092
        %4094 = vset.pattern.permute.xlu0 5
        %4095 = vperm.xlu0 %4094, %v294
        %v4096 = vpop.permute.xlu0 %4095
        %4097 = vset.pattern.permute.xlu0 5
        %4098 = vperm.xlu0 %4097, %v295
        %v4099 = vpop.permute.xlu0 %4098
        %4100 = vset.pattern.permute.xlu0 5
        %4101 = vperm.xlu0 %4100, %v296
        %v4102 = vpop.permute.xlu0 %4101
        %4103 = vset.pattern.permute.xlu0 5
        %4104 = vperm.xlu0 %4103, %v297
        %v4105 = vpop.permute.xlu0 %4104
        %4106 = vset.pattern.permute.xlu0 5
        %4107 = vperm.xlu0 %4106, %v298
        %v4108 = vpop.permute.xlu0 %4107
        %4109 = vset.pattern.permute.xlu0 5
        %4110 = vperm.xlu0 %4109, %v299
        %v4111 = vpop.permute.xlu0 %4110
        %4112 = vset.pattern.permute.xlu0 5
        %4113 = vperm.xlu0 %4112, %v300
        %v4114 = vpop.permute.xlu0 %4113
        %4115 = vset.pattern.permute.xlu0 5
        %4116 = vperm.xlu0 %4115, %v301
        %v4117 = vpop.permute.xlu0 %4116
        %4118 = vset.pattern.permute.xlu0 5
        %4119 = vperm.xlu0 %4118, %v302
        %v4120 = vpop.permute.xlu0 %4119
        %4121 = vset.pattern.permute.xlu0 5
        %4122 = vperm.xlu0 %4121, %v303
        %v4123 = vpop.permute.xlu0 %4122
        %4124 = vset.pattern.permute.xlu0 5
        %4125 = vperm.xlu0 %4124, %v304
        %v4126 = vpop.permute.xlu0 %4125
        %4127 = vset.pattern.permute.xlu0 5
        %4128 = vperm.xlu0 %4127, %v305
        %v4129 = vpop.permute.xlu0 %4128
        %4130 = vset.pattern.permute.xlu0 5
        %4131 = vperm.xlu0 %4130, %v306
        %v4132 = vpop.permute.xlu0 %4131
        %4133 = vset.pattern.permute.xlu0 5
        %4134 = vperm.xlu0 %4133, %v307
        %v4135 = vpop.permute.xlu0 %4134
        %4136 = vset.pattern.permute.xlu0 5
        %4137 = vperm.xlu0 %4136, %v308
        %v4138 = vpop.permute.xlu0 %4137
        %4139 = vset.pattern.permute.xlu0 5
        %4140 = vperm.xlu0 %4139, %v309
        %v4141 = vpop.permute.xlu0 %4140
        %4142 = vset.pattern.permute.xlu0 5
        %4143 = vperm.xlu0 %4142, %v310
        %v4144 = vpop.permute.xlu0 %4143
        %4145 = vset.pattern.permute.xlu0 5
        %4146 = vperm.xlu0 %4145, %v311
        %v4147 = vpop.permute.xlu0 %4146
        %4148 = vset.pattern.permute.xlu0 5
        %4149 = vperm.xlu0 %4148, %v312
        %v4150 = vpop.permute.xlu0 %4149
        %vm4151 = vcmp.eq.s32.totalorder %v1159, %v3958
        %vm4152 = vcmp.eq.s32.totalorder %v1159, %v3961
        %vm4153 = vcmp.eq.s32.totalorder %v1159, %v3964
        %vm4154 = vcmp.eq.s32.totalorder %v1159, %v3967
        %vm4155 = vcmp.eq.s32.totalorder %v1159, %v3970
        %vm4156 = vcmp.eq.s32.totalorder %v1159, %v3973
        %vm4157 = vcmp.eq.s32.totalorder %v1159, %v3976
        %vm4158 = vcmp.eq.s32.totalorder %v1159, %v3979
        %vm4159 = vcmp.eq.s32.totalorder %v1159, %v3982
        %vm4160 = vcmp.eq.s32.totalorder %v1159, %v3985
        %vm4161 = vcmp.eq.s32.totalorder %v1159, %v3988
        %vm4162 = vcmp.eq.s32.totalorder %v1159, %v3991
        %vm4163 = vcmp.eq.s32.totalorder %v1159, %v3994
        %vm4164 = vcmp.eq.s32.totalorder %v1159, %v3997
        %vm4165 = vcmp.eq.s32.totalorder %v1159, %v4000
        %vm4166 = vcmp.eq.s32.totalorder %v1159, %v4003
        %vm4167 = vcmp.eq.s32.totalorder %v1159, %v4006
        %vm4168 = vcmp.eq.s32.totalorder %v1159, %v4009
        %vm4169 = vcmp.eq.s32.totalorder %v1159, %v4012
        %vm4170 = vcmp.eq.s32.totalorder %v1159, %v4015
        %vm4171 = vcmp.eq.s32.totalorder %v1159, %v4018
        %vm4172 = vcmp.eq.s32.totalorder %v1159, %v4021
        %vm4173 = vcmp.eq.s32.totalorder %v1159, %v4024
        %vm4174 = vcmp.eq.s32.totalorder %v1159, %v4027
        %vm4175 = vcmp.eq.s32.totalorder %v1159, %v4030
        %vm4176 = vcmp.eq.s32.totalorder %v1159, %v4033
        %vm4177 = vcmp.eq.s32.totalorder %v1159, %v4036
        %vm4178 = vcmp.eq.s32.totalorder %v1159, %v4039
        %vm4179 = vcmp.eq.s32.totalorder %v1159, %v4042
        %vm4180 = vcmp.eq.s32.totalorder %v1159, %v4045
        %vm4181 = vcmp.eq.s32.totalorder %v1159, %v4048
        %vm4182 = vcmp.eq.s32.totalorder %v1159, %v4051
        %vm4183 = vcmp.eq.s32.totalorder %v1159, %v4054
        %vm4184 = vcmp.eq.s32.totalorder %v1159, %v4057
        %vm4185 = vcmp.eq.s32.totalorder %v1159, %v4060
        %vm4186 = vcmp.eq.s32.totalorder %v1159, %v4063
        %vm4187 = vcmp.eq.s32.totalorder %v1159, %v4066
        %vm4188 = vcmp.eq.s32.totalorder %v1159, %v4069
        %vm4189 = vcmp.eq.s32.totalorder %v1159, %v4072
        %vm4190 = vcmp.eq.s32.totalorder %v1159, %v4075
        %vm4191 = vcmp.eq.s32.totalorder %v1159, %v4078
        %vm4192 = vcmp.eq.s32.totalorder %v1159, %v4081
        %vm4193 = vcmp.eq.s32.totalorder %v1159, %v4084
        %vm4194 = vcmp.eq.s32.totalorder %v1159, %v4087
        %vm4195 = vcmp.eq.s32.totalorder %v1159, %v4090
        %vm4196 = vcmp.eq.s32.totalorder %v1159, %v4093
        %vm4197 = vcmp.eq.s32.totalorder %v1159, %v4096
        %vm4198 = vcmp.eq.s32.totalorder %v1159, %v4099
        %vm4199 = vcmp.eq.s32.totalorder %v1159, %v4102
        %vm4200 = vcmp.eq.s32.totalorder %v1159, %v4105
        %vm4201 = vcmp.eq.s32.totalorder %v1159, %v4108
        %vm4202 = vcmp.eq.s32.totalorder %v1159, %v4111
        %vm4203 = vcmp.eq.s32.totalorder %v1159, %v4114
        %vm4204 = vcmp.eq.s32.totalorder %v1159, %v4117
        %vm4205 = vcmp.eq.s32.totalorder %v1159, %v4120
        %vm4206 = vcmp.eq.s32.totalorder %v1159, %v4123
        %vm4207 = vcmp.eq.s32.totalorder %v1159, %v4126
        %vm4208 = vcmp.eq.s32.totalorder %v1159, %v4129
        %vm4209 = vcmp.eq.s32.totalorder %v1159, %v4132
        %vm4210 = vcmp.eq.s32.totalorder %v1159, %v4135
        %vm4211 = vcmp.eq.s32.totalorder %v1159, %v4138
        %vm4212 = vcmp.eq.s32.totalorder %v1159, %v4141
        %vm4213 = vcmp.eq.s32.totalorder %v1159, %v4144
        %vm4214 = vcmp.eq.s32.totalorder %v1159, %v4147
        %vm4215 = vcmp.eq.s32.totalorder %v1159, %v4150
        %v4216 = vsel %vm4151, 1, 0
        %v4217 = vsel %vm4152, 1, 0
        %v4218 = vsel %vm4153, 1, 0
        %v4219 = vsel %vm4154, 1, 0
        %v4220 = vsel %vm4155, 1, 0
        %v4221 = vsel %vm4156, 1, 0
        %v4222 = vsel %vm4157, 1, 0
        %v4223 = vsel %vm4158, 1, 0
        %v4224 = vsel %vm4159, 1, 0
        %v4225 = vsel %vm4160, 1, 0
        %v4226 = vsel %vm4161, 1, 0
        %v4227 = vsel %vm4162, 1, 0
        %v4228 = vsel %vm4163, 1, 0
        %v4229 = vsel %vm4164, 1, 0
        %v4230 = vsel %vm4165, 1, 0
        %v4231 = vsel %vm4166, 1, 0
        %v4232 = vsel %vm4167, 1, 0
        %v4233 = vsel %vm4168, 1, 0
        %v4234 = vsel %vm4169, 1, 0
        %v4235 = vsel %vm4170, 1, 0
        %v4236 = vsel %vm4171, 1, 0
        %v4237 = vsel %vm4172, 1, 0
        %v4238 = vsel %vm4173, 1, 0
        %v4239 = vsel %vm4174, 1, 0
        %v4240 = vsel %vm4175, 1, 0
        %v4241 = vsel %vm4176, 1, 0
        %v4242 = vsel %vm4177, 1, 0
        %v4243 = vsel %vm4178, 1, 0
        %v4244 = vsel %vm4179, 1, 0
        %v4245 = vsel %vm4180, 1, 0
        %v4246 = vsel %vm4181, 1, 0
        %v4247 = vsel %vm4182, 1, 0
        %v4248 = vsel %vm4183, 1, 0
        %v4249 = vsel %vm4184, 1, 0
        %v4250 = vsel %vm4185, 1, 0
        %v4251 = vsel %vm4186, 1, 0
        %v4252 = vsel %vm4187, 1, 0
        %v4253 = vsel %vm4188, 1, 0
        %v4254 = vsel %vm4189, 1, 0
        %v4255 = vsel %vm4190, 1, 0
        %v4256 = vsel %vm4191, 1, 0
        %v4257 = vsel %vm4192, 1, 0
        %v4258 = vsel %vm4193, 1, 0
        %v4259 = vsel %vm4194, 1, 0
        %v4260 = vsel %vm4195, 1, 0
        %v4261 = vsel %vm4196, 1, 0
        %v4262 = vsel %vm4197, 1, 0
        %v4263 = vsel %vm4198, 1, 0
        %v4264 = vsel %vm4199, 1, 0
        %v4265 = vsel %vm4200, 1, 0
        %v4266 = vsel %vm4201, 1, 0
        %v4267 = vsel %vm4202, 1, 0
        %v4268 = vsel %vm4203, 1, 0
        %v4269 = vsel %vm4204, 1, 0
        %v4270 = vsel %vm4205, 1, 0
        %v4271 = vsel %vm4206, 1, 0
        %v4272 = vsel %vm4207, 1, 0
        %v4273 = vsel %vm4208, 1, 0
        %v4274 = vsel %vm4209, 1, 0
        %v4275 = vsel %vm4210, 1, 0
        %v4276 = vsel %vm4211, 1, 0
        %v4277 = vsel %vm4212, 1, 0
        %v4278 = vsel %vm4213, 1, 0
        %v4279 = vsel %vm4214, 1, 0
        %v4280 = vsel %vm4215, 1, 0
        %v4281 = vcvt.s32.f32 %v4216
        %v4282 = vcvt.s32.f32 %v4217
        %v4283 = vcvt.s32.f32 %v4218
        %v4284 = vcvt.s32.f32 %v4219
        %v4285 = vcvt.s32.f32 %v4220
        %v4286 = vcvt.s32.f32 %v4221
        %v4287 = vcvt.s32.f32 %v4222
        %v4288 = vcvt.s32.f32 %v4223
        %v4289 = vcvt.s32.f32 %v4224
        %v4290 = vcvt.s32.f32 %v4225
        %v4291 = vcvt.s32.f32 %v4226
        %v4292 = vcvt.s32.f32 %v4227
        %v4293 = vcvt.s32.f32 %v4228
        %v4294 = vcvt.s32.f32 %v4229
        %v4295 = vcvt.s32.f32 %v4230
        %v4296 = vcvt.s32.f32 %v4231
        %v4297 = vcvt.s32.f32 %v4232
        %v4298 = vcvt.s32.f32 %v4233
        %v4299 = vcvt.s32.f32 %v4234
        %v4300 = vcvt.s32.f32 %v4235
        %v4301 = vcvt.s32.f32 %v4236
        %v4302 = vcvt.s32.f32 %v4237
        %v4303 = vcvt.s32.f32 %v4238
        %v4304 = vcvt.s32.f32 %v4239
        %v4305 = vcvt.s32.f32 %v4240
        %v4306 = vcvt.s32.f32 %v4241
        %v4307 = vcvt.s32.f32 %v4242
        %v4308 = vcvt.s32.f32 %v4243
        %v4309 = vcvt.s32.f32 %v4244
        %v4310 = vcvt.s32.f32 %v4245
        %v4311 = vcvt.s32.f32 %v4246
        %v4312 = vcvt.s32.f32 %v4247
        %v4313 = vcvt.s32.f32 %v4248
        %v4314 = vcvt.s32.f32 %v4249
        %v4315 = vcvt.s32.f32 %v4250
        %v4316 = vcvt.s32.f32 %v4251
        %v4317 = vcvt.s32.f32 %v4252
        %v4318 = vcvt.s32.f32 %v4253
        %v4319 = vcvt.s32.f32 %v4254
        %v4320 = vcvt.s32.f32 %v4255
        %v4321 = vcvt.s32.f32 %v4256
        %v4322 = vcvt.s32.f32 %v4257
        %v4323 = vcvt.s32.f32 %v4258
        %v4324 = vcvt.s32.f32 %v4259
        %v4325 = vcvt.s32.f32 %v4260
        %v4326 = vcvt.s32.f32 %v4261
        %v4327 = vcvt.s32.f32 %v4262
        %v4328 = vcvt.s32.f32 %v4263
        %v4329 = vcvt.s32.f32 %v4264
        %v4330 = vcvt.s32.f32 %v4265
        %v4331 = vcvt.s32.f32 %v4266
        %v4332 = vcvt.s32.f32 %v4267
        %v4333 = vcvt.s32.f32 %v4268
        %v4334 = vcvt.s32.f32 %v4269
        %v4335 = vcvt.s32.f32 %v4270
        %v4336 = vcvt.s32.f32 %v4271
        %v4337 = vcvt.s32.f32 %v4272
        %v4338 = vcvt.s32.f32 %v4273
        %v4339 = vcvt.s32.f32 %v4274
        %v4340 = vcvt.s32.f32 %v4275
        %v4341 = vcvt.s32.f32 %v4276
        %v4342 = vcvt.s32.f32 %v4277
        %v4343 = vcvt.s32.f32 %v4278
        %v4344 = vcvt.s32.f32 %v4279
        %v4345 = vcvt.s32.f32 %v4280
        %v4346 = vadd.f32 %v3891, %v4281
        %v4347 = vadd.f32 %v3892, %v4282
        %v4348 = vadd.f32 %v3893, %v4283
        %v4349 = vadd.f32 %v3894, %v4284
        %v4350 = vadd.f32 %v3895, %v4285
        %v4351 = vadd.f32 %v3896, %v4286
        %v4352 = vadd.f32 %v3897, %v4287
        %v4353 = vadd.f32 %v3898, %v4288
        %v4354 = vadd.f32 %v3899, %v4289
        %v4355 = vadd.f32 %v3900, %v4290
        %v4356 = vadd.f32 %v3901, %v4291
        %v4357 = vadd.f32 %v3902, %v4292
        %v4358 = vadd.f32 %v3903, %v4293
        %v4359 = vadd.f32 %v3904, %v4294
        %v4360 = vadd.f32 %v3905, %v4295
        %v4361 = vadd.f32 %v3906, %v4296
        %v4362 = vadd.f32 %v3907, %v4297
        %v4363 = vadd.f32 %v3908, %v4298
        %v4364 = vadd.f32 %v3909, %v4299
        %v4365 = vadd.f32 %v3910, %v4300
        %v4366 = vadd.f32 %v3911, %v4301
        %v4367 = vadd.f32 %v3912, %v4302
        %v4368 = vadd.f32 %v3913, %v4303
        %v4369 = vadd.f32 %v3914, %v4304
        %v4370 = vadd.f32 %v3915, %v4305
        %v4371 = vadd.f32 %v3916, %v4306
        %v4372 = vadd.f32 %v3917, %v4307
        %v4373 = vadd.f32 %v3918, %v4308
        %v4374 = vadd.f32 %v3919, %v4309
        %v4375 = vadd.f32 %v3920, %v4310
        %v4376 = vadd.f32 %v3921, %v4311
        %v4377 = vadd.f32 %v3922, %v4312
        %v4378 = vadd.f32 %v3923, %v4313
        %v4379 = vadd.f32 %v3924, %v4314
        %v4380 = vadd.f32 %v3925, %v4315
        %v4381 = vadd.f32 %v3926, %v4316
        %v4382 = vadd.f32 %v3927, %v4317
        %v4383 = vadd.f32 %v3928, %v4318
        %v4384 = vadd.f32 %v3929, %v4319
        %v4385 = vadd.f32 %v3930, %v4320
        %v4386 = vadd.f32 %v3931, %v4321
        %v4387 = vadd.f32 %v3932, %v4322
        %v4388 = vadd.f32 %v3933, %v4323
        %v4389 = vadd.f32 %v3934, %v4324
        %v4390 = vadd.f32 %v3935, %v4325
        %v4391 = vadd.f32 %v3936, %v4326
        %v4392 = vadd.f32 %v3937, %v4327
        %v4393 = vadd.f32 %v3938, %v4328
        %v4394 = vadd.f32 %v3939, %v4329
        %v4395 = vadd.f32 %v3940, %v4330
        %v4396 = vadd.f32 %v3941, %v4331
        %v4397 = vadd.f32 %v3942, %v4332
        %v4398 = vadd.f32 %v3943, %v4333
        %v4399 = vadd.f32 %v3944, %v4334
        %v4400 = vadd.f32 %v3945, %v4335
        %v4401 = vadd.f32 %v3946, %v4336
        %v4402 = vadd.f32 %v3947, %v4337
        %v4403 = vadd.f32 %v3948, %v4338
        %v4404 = vadd.f32 %v3949, %v4339
        %v4405 = vadd.f32 %v3950, %v4340
        %v4406 = vadd.f32 %v3951, %v4341
        %v4407 = vadd.f32 %v3952, %v4342
        %v4408 = vadd.f32 %v3953, %v4343
        %v4409 = vadd.f32 %v3954, %v4344
        %v4410 = vadd.f32 %v3955, %v4345
        %4411 = vset.pattern.permute.xlu0 6
        %4412 = vperm.xlu0 %4411, %v248
        %v4413 = vpop.permute.xlu0 %4412
        %4414 = vset.pattern.permute.xlu0 6
        %4415 = vperm.xlu0 %4414, %v249
        %v4416 = vpop.permute.xlu0 %4415
        %4417 = vset.pattern.permute.xlu0 6
        %4418 = vperm.xlu0 %4417, %v250
        %v4419 = vpop.permute.xlu0 %4418
        %4420 = vset.pattern.permute.xlu0 6
        %4421 = vperm.xlu0 %4420, %v251
        %v4422 = vpop.permute.xlu0 %4421
        %4423 = vset.pattern.permute.xlu0 6
        %4424 = vperm.xlu0 %4423, %v252
        %v4425 = vpop.permute.xlu0 %4424
        %4426 = vset.pattern.permute.xlu0 6
        %4427 = vperm.xlu0 %4426, %v253
        %v4428 = vpop.permute.xlu0 %4427
        %4429 = vset.pattern.permute.xlu0 6
        %4430 = vperm.xlu0 %4429, %v254
        %v4431 = vpop.permute.xlu0 %4430
        %4432 = vset.pattern.permute.xlu0 6
        %4433 = vperm.xlu0 %4432, %v255
        %v4434 = vpop.permute.xlu0 %4433
        %4435 = vset.pattern.permute.xlu0 6
        %4436 = vperm.xlu0 %4435, %v256
        %v4437 = vpop.permute.xlu0 %4436
        %4438 = vset.pattern.permute.xlu0 6
        %4439 = vperm.xlu0 %4438, %v257
        %v4440 = vpop.permute.xlu0 %4439
        %4441 = vset.pattern.permute.xlu0 6
        %4442 = vperm.xlu0 %4441, %v258
        %v4443 = vpop.permute.xlu0 %4442
        %4444 = vset.pattern.permute.xlu0 6
        %4445 = vperm.xlu0 %4444, %v259
        %v4446 = vpop.permute.xlu0 %4445
        %4447 = vset.pattern.permute.xlu0 6
        %4448 = vperm.xlu0 %4447, %v260
        %v4449 = vpop.permute.xlu0 %4448
        %4450 = vset.pattern.permute.xlu0 6
        %4451 = vperm.xlu0 %4450, %v261
        %v4452 = vpop.permute.xlu0 %4451
        %4453 = vset.pattern.permute.xlu0 6
        %4454 = vperm.xlu0 %4453, %v262
        %v4455 = vpop.permute.xlu0 %4454
        %4456 = vset.pattern.permute.xlu0 6
        %4457 = vperm.xlu0 %4456, %v263
        %v4458 = vpop.permute.xlu0 %4457
        %4459 = vset.pattern.permute.xlu0 6
        %4460 = vperm.xlu0 %4459, %v264
        %v4461 = vpop.permute.xlu0 %4460
        %4462 = vset.pattern.permute.xlu0 6
        %4463 = vperm.xlu0 %4462, %v265
        %v4464 = vpop.permute.xlu0 %4463
        %4465 = vset.pattern.permute.xlu0 6
        %4466 = vperm.xlu0 %4465, %v266
        %v4467 = vpop.permute.xlu0 %4466
        %4468 = vset.pattern.permute.xlu0 6
        %4469 = vperm.xlu0 %4468, %v267
        %v4470 = vpop.permute.xlu0 %4469
        %4471 = vset.pattern.permute.xlu0 6
        %4472 = vperm.xlu0 %4471, %v268
        %v4473 = vpop.permute.xlu0 %4472
        %4474 = vset.pattern.permute.xlu0 6
        %4475 = vperm.xlu0 %4474, %v269
        %v4476 = vpop.permute.xlu0 %4475
        %4477 = vset.pattern.permute.xlu0 6
        %4478 = vperm.xlu0 %4477, %v270
        %v4479 = vpop.permute.xlu0 %4478
        %4480 = vset.pattern.permute.xlu0 6
        %4481 = vperm.xlu0 %4480, %v271
        %v4482 = vpop.permute.xlu0 %4481
        %4483 = vset.pattern.permute.xlu0 6
        %4484 = vperm.xlu0 %4483, %v272
        %v4485 = vpop.permute.xlu0 %4484
        %4486 = vset.pattern.permute.xlu0 6
        %4487 = vperm.xlu0 %4486, %v273
        %v4488 = vpop.permute.xlu0 %4487
        %4489 = vset.pattern.permute.xlu0 6
        %4490 = vperm.xlu0 %4489, %v274
        %v4491 = vpop.permute.xlu0 %4490
        %4492 = vset.pattern.permute.xlu0 6
        %4493 = vperm.xlu0 %4492, %v275
        %v4494 = vpop.permute.xlu0 %4493
        %4495 = vset.pattern.permute.xlu0 6
        %4496 = vperm.xlu0 %4495, %v276
        %v4497 = vpop.permute.xlu0 %4496
        %4498 = vset.pattern.permute.xlu0 6
        %4499 = vperm.xlu0 %4498, %v277
        %v4500 = vpop.permute.xlu0 %4499
        %4501 = vset.pattern.permute.xlu0 6
        %4502 = vperm.xlu0 %4501, %v278
        %v4503 = vpop.permute.xlu0 %4502
        %4504 = vset.pattern.permute.xlu0 6
        %4505 = vperm.xlu0 %4504, %v279
        %v4506 = vpop.permute.xlu0 %4505
        %4507 = vset.pattern.permute.xlu0 6
        %4508 = vperm.xlu0 %4507, %v280
        %v4509 = vpop.permute.xlu0 %4508
        %4510 = vset.pattern.permute.xlu0 6
        %4511 = vperm.xlu0 %4510, %v281
        %v4512 = vpop.permute.xlu0 %4511
        %4513 = vset.pattern.permute.xlu0 6
        %4514 = vperm.xlu0 %4513, %v282
        %v4515 = vpop.permute.xlu0 %4514
        %4516 = vset.pattern.permute.xlu0 6
        %4517 = vperm.xlu0 %4516, %v283
        %v4518 = vpop.permute.xlu0 %4517
        %4519 = vset.pattern.permute.xlu0 6
        %4520 = vperm.xlu0 %4519, %v284
        %v4521 = vpop.permute.xlu0 %4520
        %4522 = vset.pattern.permute.xlu0 6
        %4523 = vperm.xlu0 %4522, %v285
        %v4524 = vpop.permute.xlu0 %4523
        %4525 = vset.pattern.permute.xlu0 6
        %4526 = vperm.xlu0 %4525, %v286
        %v4527 = vpop.permute.xlu0 %4526
        %4528 = vset.pattern.permute.xlu0 6
        %4529 = vperm.xlu0 %4528, %v287
        %v4530 = vpop.permute.xlu0 %4529
        %4531 = vset.pattern.permute.xlu0 6
        %4532 = vperm.xlu0 %4531, %v288
        %v4533 = vpop.permute.xlu0 %4532
        %4534 = vset.pattern.permute.xlu0 6
        %4535 = vperm.xlu0 %4534, %v289
        %v4536 = vpop.permute.xlu0 %4535
        %4537 = vset.pattern.permute.xlu0 6
        %4538 = vperm.xlu0 %4537, %v290
        %v4539 = vpop.permute.xlu0 %4538
        %4540 = vset.pattern.permute.xlu0 6
        %4541 = vperm.xlu0 %4540, %v291
        %v4542 = vpop.permute.xlu0 %4541
        %4543 = vset.pattern.permute.xlu0 6
        %4544 = vperm.xlu0 %4543, %v292
        %v4545 = vpop.permute.xlu0 %4544
        %4546 = vset.pattern.permute.xlu0 6
        %4547 = vperm.xlu0 %4546, %v293
        %v4548 = vpop.permute.xlu0 %4547
        %4549 = vset.pattern.permute.xlu0 6
        %4550 = vperm.xlu0 %4549, %v294
        %v4551 = vpop.permute.xlu0 %4550
        %4552 = vset.pattern.permute.xlu0 6
        %4553 = vperm.xlu0 %4552, %v295
        %v4554 = vpop.permute.xlu0 %4553
        %4555 = vset.pattern.permute.xlu0 6
        %4556 = vperm.xlu0 %4555, %v296
        %v4557 = vpop.permute.xlu0 %4556
        %4558 = vset.pattern.permute.xlu0 6
        %4559 = vperm.xlu0 %4558, %v297
        %v4560 = vpop.permute.xlu0 %4559
        %4561 = vset.pattern.permute.xlu0 6
        %4562 = vperm.xlu0 %4561, %v298
        %v4563 = vpop.permute.xlu0 %4562
        %4564 = vset.pattern.permute.xlu0 6
        %4565 = vperm.xlu0 %4564, %v299
        %v4566 = vpop.permute.xlu0 %4565
        %4567 = vset.pattern.permute.xlu0 6
        %4568 = vperm.xlu0 %4567, %v300
        %v4569 = vpop.permute.xlu0 %4568
        %4570 = vset.pattern.permute.xlu0 6
        %4571 = vperm.xlu0 %4570, %v301
        %v4572 = vpop.permute.xlu0 %4571
        %4573 = vset.pattern.permute.xlu0 6
        %4574 = vperm.xlu0 %4573, %v302
        %v4575 = vpop.permute.xlu0 %4574
        %4576 = vset.pattern.permute.xlu0 6
        %4577 = vperm.xlu0 %4576, %v303
        %v4578 = vpop.permute.xlu0 %4577
        %4579 = vset.pattern.permute.xlu0 6
        %4580 = vperm.xlu0 %4579, %v304
        %v4581 = vpop.permute.xlu0 %4580
        %4582 = vset.pattern.permute.xlu0 6
        %4583 = vperm.xlu0 %4582, %v305
        %v4584 = vpop.permute.xlu0 %4583
        %4585 = vset.pattern.permute.xlu0 6
        %4586 = vperm.xlu0 %4585, %v306
        %v4587 = vpop.permute.xlu0 %4586
        %4588 = vset.pattern.permute.xlu0 6
        %4589 = vperm.xlu0 %4588, %v307
        %v4590 = vpop.permute.xlu0 %4589
        %4591 = vset.pattern.permute.xlu0 6
        %4592 = vperm.xlu0 %4591, %v308
        %v4593 = vpop.permute.xlu0 %4592
        %4594 = vset.pattern.permute.xlu0 6
        %4595 = vperm.xlu0 %4594, %v309
        %v4596 = vpop.permute.xlu0 %4595
        %4597 = vset.pattern.permute.xlu0 6
        %4598 = vperm.xlu0 %4597, %v310
        %v4599 = vpop.permute.xlu0 %4598
        %4600 = vset.pattern.permute.xlu0 6
        %4601 = vperm.xlu0 %4600, %v311
        %v4602 = vpop.permute.xlu0 %4601
        %4603 = vset.pattern.permute.xlu0 6
        %4604 = vperm.xlu0 %4603, %v312
        %v4605 = vpop.permute.xlu0 %4604
        %vm4606 = vcmp.eq.s32.totalorder %v1159, %v4413
        %vm4607 = vcmp.eq.s32.totalorder %v1159, %v4416
        %vm4608 = vcmp.eq.s32.totalorder %v1159, %v4419
        %vm4609 = vcmp.eq.s32.totalorder %v1159, %v4422
        %vm4610 = vcmp.eq.s32.totalorder %v1159, %v4425
        %vm4611 = vcmp.eq.s32.totalorder %v1159, %v4428
        %vm4612 = vcmp.eq.s32.totalorder %v1159, %v4431
        %vm4613 = vcmp.eq.s32.totalorder %v1159, %v4434
        %vm4614 = vcmp.eq.s32.totalorder %v1159, %v4437
        %vm4615 = vcmp.eq.s32.totalorder %v1159, %v4440
        %vm4616 = vcmp.eq.s32.totalorder %v1159, %v4443
        %vm4617 = vcmp.eq.s32.totalorder %v1159, %v4446
        %vm4618 = vcmp.eq.s32.totalorder %v1159, %v4449
        %vm4619 = vcmp.eq.s32.totalorder %v1159, %v4452
        %vm4620 = vcmp.eq.s32.totalorder %v1159, %v4455
        %vm4621 = vcmp.eq.s32.totalorder %v1159, %v4458
        %vm4622 = vcmp.eq.s32.totalorder %v1159, %v4461
        %vm4623 = vcmp.eq.s32.totalorder %v1159, %v4464
        %vm4624 = vcmp.eq.s32.totalorder %v1159, %v4467
        %vm4625 = vcmp.eq.s32.totalorder %v1159, %v4470
        %vm4626 = vcmp.eq.s32.totalorder %v1159, %v4473
        %vm4627 = vcmp.eq.s32.totalorder %v1159, %v4476
        %vm4628 = vcmp.eq.s32.totalorder %v1159, %v4479
        %vm4629 = vcmp.eq.s32.totalorder %v1159, %v4482
        %vm4630 = vcmp.eq.s32.totalorder %v1159, %v4485
        %vm4631 = vcmp.eq.s32.totalorder %v1159, %v4488
        %vm4632 = vcmp.eq.s32.totalorder %v1159, %v4491
        %vm4633 = vcmp.eq.s32.totalorder %v1159, %v4494
        %vm4634 = vcmp.eq.s32.totalorder %v1159, %v4497
        %vm4635 = vcmp.eq.s32.totalorder %v1159, %v4500
        %vm4636 = vcmp.eq.s32.totalorder %v1159, %v4503
        %vm4637 = vcmp.eq.s32.totalorder %v1159, %v4506
        %vm4638 = vcmp.eq.s32.totalorder %v1159, %v4509
        %vm4639 = vcmp.eq.s32.totalorder %v1159, %v4512
        %vm4640 = vcmp.eq.s32.totalorder %v1159, %v4515
        %vm4641 = vcmp.eq.s32.totalorder %v1159, %v4518
        %vm4642 = vcmp.eq.s32.totalorder %v1159, %v4521
        %vm4643 = vcmp.eq.s32.totalorder %v1159, %v4524
        %vm4644 = vcmp.eq.s32.totalorder %v1159, %v4527
        %vm4645 = vcmp.eq.s32.totalorder %v1159, %v4530
        %vm4646 = vcmp.eq.s32.totalorder %v1159, %v4533
        %vm4647 = vcmp.eq.s32.totalorder %v1159, %v4536
        %vm4648 = vcmp.eq.s32.totalorder %v1159, %v4539
        %vm4649 = vcmp.eq.s32.totalorder %v1159, %v4542
        %vm4650 = vcmp.eq.s32.totalorder %v1159, %v4545
        %vm4651 = vcmp.eq.s32.totalorder %v1159, %v4548
        %vm4652 = vcmp.eq.s32.totalorder %v1159, %v4551
        %vm4653 = vcmp.eq.s32.totalorder %v1159, %v4554
        %vm4654 = vcmp.eq.s32.totalorder %v1159, %v4557
        %vm4655 = vcmp.eq.s32.totalorder %v1159, %v4560
        %vm4656 = vcmp.eq.s32.totalorder %v1159, %v4563
        %vm4657 = vcmp.eq.s32.totalorder %v1159, %v4566
        %vm4658 = vcmp.eq.s32.totalorder %v1159, %v4569
        %vm4659 = vcmp.eq.s32.totalorder %v1159, %v4572
        %vm4660 = vcmp.eq.s32.totalorder %v1159, %v4575
        %vm4661 = vcmp.eq.s32.totalorder %v1159, %v4578
        %vm4662 = vcmp.eq.s32.totalorder %v1159, %v4581
        %vm4663 = vcmp.eq.s32.totalorder %v1159, %v4584
        %vm4664 = vcmp.eq.s32.totalorder %v1159, %v4587
        %vm4665 = vcmp.eq.s32.totalorder %v1159, %v4590
        %vm4666 = vcmp.eq.s32.totalorder %v1159, %v4593
        %vm4667 = vcmp.eq.s32.totalorder %v1159, %v4596
        %vm4668 = vcmp.eq.s32.totalorder %v1159, %v4599
        %vm4669 = vcmp.eq.s32.totalorder %v1159, %v4602
        %vm4670 = vcmp.eq.s32.totalorder %v1159, %v4605
        %v4671 = vsel %vm4606, 1, 0
        %v4672 = vsel %vm4607, 1, 0
        %v4673 = vsel %vm4608, 1, 0
        %v4674 = vsel %vm4609, 1, 0
        %v4675 = vsel %vm4610, 1, 0
        %v4676 = vsel %vm4611, 1, 0
        %v4677 = vsel %vm4612, 1, 0
        %v4678 = vsel %vm4613, 1, 0
        %v4679 = vsel %vm4614, 1, 0
        %v4680 = vsel %vm4615, 1, 0
        %v4681 = vsel %vm4616, 1, 0
        %v4682 = vsel %vm4617, 1, 0
        %v4683 = vsel %vm4618, 1, 0
        %v4684 = vsel %vm4619, 1, 0
        %v4685 = vsel %vm4620, 1, 0
        %v4686 = vsel %vm4621, 1, 0
        %v4687 = vsel %vm4622, 1, 0
        %v4688 = vsel %vm4623, 1, 0
        %v4689 = vsel %vm4624, 1, 0
        %v4690 = vsel %vm4625, 1, 0
        %v4691 = vsel %vm4626, 1, 0
        %v4692 = vsel %vm4627, 1, 0
        %v4693 = vsel %vm4628, 1, 0
        %v4694 = vsel %vm4629, 1, 0
        %v4695 = vsel %vm4630, 1, 0
        %v4696 = vsel %vm4631, 1, 0
        %v4697 = vsel %vm4632, 1, 0
        %v4698 = vsel %vm4633, 1, 0
        %v4699 = vsel %vm4634, 1, 0
        %v4700 = vsel %vm4635, 1, 0
        %v4701 = vsel %vm4636, 1, 0
        %v4702 = vsel %vm4637, 1, 0
        %v4703 = vsel %vm4638, 1, 0
        %v4704 = vsel %vm4639, 1, 0
        %v4705 = vsel %vm4640, 1, 0
        %v4706 = vsel %vm4641, 1, 0
        %v4707 = vsel %vm4642, 1, 0
        %v4708 = vsel %vm4643, 1, 0
        %v4709 = vsel %vm4644, 1, 0
        %v4710 = vsel %vm4645, 1, 0
        %v4711 = vsel %vm4646, 1, 0
        %v4712 = vsel %vm4647, 1, 0
        %v4713 = vsel %vm4648, 1, 0
        %v4714 = vsel %vm4649, 1, 0
        %v4715 = vsel %vm4650, 1, 0
        %v4716 = vsel %vm4651, 1, 0
        %v4717 = vsel %vm4652, 1, 0
        %v4718 = vsel %vm4653, 1, 0
        %v4719 = vsel %vm4654, 1, 0
        %v4720 = vsel %vm4655, 1, 0
        %v4721 = vsel %vm4656, 1, 0
        %v4722 = vsel %vm4657, 1, 0
        %v4723 = vsel %vm4658, 1, 0
        %v4724 = vsel %vm4659, 1, 0
        %v4725 = vsel %vm4660, 1, 0
        %v4726 = vsel %vm4661, 1, 0
        %v4727 = vsel %vm4662, 1, 0
        %v4728 = vsel %vm4663, 1, 0
        %v4729 = vsel %vm4664, 1, 0
        %v4730 = vsel %vm4665, 1, 0
        %v4731 = vsel %vm4666, 1, 0
        %v4732 = vsel %vm4667, 1, 0
        %v4733 = vsel %vm4668, 1, 0
        %v4734 = vsel %vm4669, 1, 0
        %v4735 = vsel %vm4670, 1, 0
        %v4736 = vcvt.s32.f32 %v4671
        %v4737 = vcvt.s32.f32 %v4672
        %v4738 = vcvt.s32.f32 %v4673
        %v4739 = vcvt.s32.f32 %v4674
        %v4740 = vcvt.s32.f32 %v4675
        %v4741 = vcvt.s32.f32 %v4676
        %v4742 = vcvt.s32.f32 %v4677
        %v4743 = vcvt.s32.f32 %v4678
        %v4744 = vcvt.s32.f32 %v4679
        %v4745 = vcvt.s32.f32 %v4680
        %v4746 = vcvt.s32.f32 %v4681
        %v4747 = vcvt.s32.f32 %v4682
        %v4748 = vcvt.s32.f32 %v4683
        %v4749 = vcvt.s32.f32 %v4684
        %v4750 = vcvt.s32.f32 %v4685
        %v4751 = vcvt.s32.f32 %v4686
        %v4752 = vcvt.s32.f32 %v4687
        %v4753 = vcvt.s32.f32 %v4688
        %v4754 = vcvt.s32.f32 %v4689
        %v4755 = vcvt.s32.f32 %v4690
        %v4756 = vcvt.s32.f32 %v4691
        %v4757 = vcvt.s32.f32 %v4692
        %v4758 = vcvt.s32.f32 %v4693
        %v4759 = vcvt.s32.f32 %v4694
        %v4760 = vcvt.s32.f32 %v4695
        %v4761 = vcvt.s32.f32 %v4696
        %v4762 = vcvt.s32.f32 %v4697
        %v4763 = vcvt.s32.f32 %v4698
        %v4764 = vcvt.s32.f32 %v4699
        %v4765 = vcvt.s32.f32 %v4700
        %v4766 = vcvt.s32.f32 %v4701
        %v4767 = vcvt.s32.f32 %v4702
        %v4768 = vcvt.s32.f32 %v4703
        %v4769 = vcvt.s32.f32 %v4704
        %v4770 = vcvt.s32.f32 %v4705
        %v4771 = vcvt.s32.f32 %v4706
        %v4772 = vcvt.s32.f32 %v4707
        %v4773 = vcvt.s32.f32 %v4708
        %v4774 = vcvt.s32.f32 %v4709
        %v4775 = vcvt.s32.f32 %v4710
        %v4776 = vcvt.s32.f32 %v4711
        %v4777 = vcvt.s32.f32 %v4712
        %v4778 = vcvt.s32.f32 %v4713
        %v4779 = vcvt.s32.f32 %v4714
        %v4780 = vcvt.s32.f32 %v4715
        %v4781 = vcvt.s32.f32 %v4716
        %v4782 = vcvt.s32.f32 %v4717
        %v4783 = vcvt.s32.f32 %v4718
        %v4784 = vcvt.s32.f32 %v4719
        %v4785 = vcvt.s32.f32 %v4720
        %v4786 = vcvt.s32.f32 %v4721
        %v4787 = vcvt.s32.f32 %v4722
        %v4788 = vcvt.s32.f32 %v4723
        %v4789 = vcvt.s32.f32 %v4724
        %v4790 = vcvt.s32.f32 %v4725
        %v4791 = vcvt.s32.f32 %v4726
        %v4792 = vcvt.s32.f32 %v4727
        %v4793 = vcvt.s32.f32 %v4728
        %v4794 = vcvt.s32.f32 %v4729
        %v4795 = vcvt.s32.f32 %v4730
        %v4796 = vcvt.s32.f32 %v4731
        %v4797 = vcvt.s32.f32 %v4732
        %v4798 = vcvt.s32.f32 %v4733
        %v4799 = vcvt.s32.f32 %v4734
        %v4800 = vcvt.s32.f32 %v4735
        %v4801 = vadd.f32 %v4346, %v4736
        %v4802 = vadd.f32 %v4347, %v4737
        %v4803 = vadd.f32 %v4348, %v4738
        %v4804 = vadd.f32 %v4349, %v4739
        %v4805 = vadd.f32 %v4350, %v4740
        %v4806 = vadd.f32 %v4351, %v4741
        %v4807 = vadd.f32 %v4352, %v4742
        %v4808 = vadd.f32 %v4353, %v4743
        %v4809 = vadd.f32 %v4354, %v4744
        %v4810 = vadd.f32 %v4355, %v4745
        %v4811 = vadd.f32 %v4356, %v4746
        %v4812 = vadd.f32 %v4357, %v4747
        %v4813 = vadd.f32 %v4358, %v4748
        %v4814 = vadd.f32 %v4359, %v4749
        %v4815 = vadd.f32 %v4360, %v4750
        %v4816 = vadd.f32 %v4361, %v4751
        %v4817 = vadd.f32 %v4362, %v4752
        %v4818 = vadd.f32 %v4363, %v4753
        %v4819 = vadd.f32 %v4364, %v4754
        %v4820 = vadd.f32 %v4365, %v4755
        %v4821 = vadd.f32 %v4366, %v4756
        %v4822 = vadd.f32 %v4367, %v4757
        %v4823 = vadd.f32 %v4368, %v4758
        %v4824 = vadd.f32 %v4369, %v4759
        %v4825 = vadd.f32 %v4370, %v4760
        %v4826 = vadd.f32 %v4371, %v4761
        %v4827 = vadd.f32 %v4372, %v4762
        %v4828 = vadd.f32 %v4373, %v4763
        %v4829 = vadd.f32 %v4374, %v4764
        %v4830 = vadd.f32 %v4375, %v4765
        %v4831 = vadd.f32 %v4376, %v4766
        %v4832 = vadd.f32 %v4377, %v4767
        %v4833 = vadd.f32 %v4378, %v4768
        %v4834 = vadd.f32 %v4379, %v4769
        %v4835 = vadd.f32 %v4380, %v4770
        %v4836 = vadd.f32 %v4381, %v4771
        %v4837 = vadd.f32 %v4382, %v4772
        %v4838 = vadd.f32 %v4383, %v4773
        %v4839 = vadd.f32 %v4384, %v4774
        %v4840 = vadd.f32 %v4385, %v4775
        %v4841 = vadd.f32 %v4386, %v4776
        %v4842 = vadd.f32 %v4387, %v4777
        %v4843 = vadd.f32 %v4388, %v4778
        %v4844 = vadd.f32 %v4389, %v4779
        %v4845 = vadd.f32 %v4390, %v4780
        %v4846 = vadd.f32 %v4391, %v4781
        %v4847 = vadd.f32 %v4392, %v4782
        %v4848 = vadd.f32 %v4393, %v4783
        %v4849 = vadd.f32 %v4394, %v4784
        %v4850 = vadd.f32 %v4395, %v4785
        %v4851 = vadd.f32 %v4396, %v4786
        %v4852 = vadd.f32 %v4397, %v4787
        %v4853 = vadd.f32 %v4398, %v4788
        %v4854 = vadd.f32 %v4399, %v4789
        %v4855 = vadd.f32 %v4400, %v4790
        %v4856 = vadd.f32 %v4401, %v4791
        %v4857 = vadd.f32 %v4402, %v4792
        %v4858 = vadd.f32 %v4403, %v4793
        %v4859 = vadd.f32 %v4404, %v4794
        %v4860 = vadd.f32 %v4405, %v4795
        %v4861 = vadd.f32 %v4406, %v4796
        %v4862 = vadd.f32 %v4407, %v4797
        %v4863 = vadd.f32 %v4408, %v4798
        %v4864 = vadd.f32 %v4409, %v4799
        %v4865 = vadd.f32 %v4410, %v4800
        %4866 = vset.pattern.permute.xlu0 7
        %4867 = vperm.xlu0 %4866, %v248
        %v4868 = vpop.permute.xlu0 %4867
        %4869 = vset.pattern.permute.xlu0 7
        %4870 = vperm.xlu0 %4869, %v249
        %v4871 = vpop.permute.xlu0 %4870
        %4872 = vset.pattern.permute.xlu0 7
        %4873 = vperm.xlu0 %4872, %v250
        %v4874 = vpop.permute.xlu0 %4873
        %4875 = vset.pattern.permute.xlu0 7
        %4876 = vperm.xlu0 %4875, %v251
        %v4877 = vpop.permute.xlu0 %4876
        %4878 = vset.pattern.permute.xlu0 7
        %4879 = vperm.xlu0 %4878, %v252
        %v4880 = vpop.permute.xlu0 %4879
        %4881 = vset.pattern.permute.xlu0 7
        %4882 = vperm.xlu0 %4881, %v253
        %v4883 = vpop.permute.xlu0 %4882
        %4884 = vset.pattern.permute.xlu0 7
        %4885 = vperm.xlu0 %4884, %v254
        %v4886 = vpop.permute.xlu0 %4885
        %4887 = vset.pattern.permute.xlu0 7
        %4888 = vperm.xlu0 %4887, %v255
        %v4889 = vpop.permute.xlu0 %4888
        %4890 = vset.pattern.permute.xlu0 7
        %4891 = vperm.xlu0 %4890, %v256
        %v4892 = vpop.permute.xlu0 %4891
        %4893 = vset.pattern.permute.xlu0 7
        %4894 = vperm.xlu0 %4893, %v257
        %v4895 = vpop.permute.xlu0 %4894
        %4896 = vset.pattern.permute.xlu0 7
        %4897 = vperm.xlu0 %4896, %v258
        %v4898 = vpop.permute.xlu0 %4897
        %4899 = vset.pattern.permute.xlu0 7
        %4900 = vperm.xlu0 %4899, %v259
        %v4901 = vpop.permute.xlu0 %4900
        %4902 = vset.pattern.permute.xlu0 7
        %4903 = vperm.xlu0 %4902, %v260
        %v4904 = vpop.permute.xlu0 %4903
        %4905 = vset.pattern.permute.xlu0 7
        %4906 = vperm.xlu0 %4905, %v261
        %v4907 = vpop.permute.xlu0 %4906
        %4908 = vset.pattern.permute.xlu0 7
        %4909 = vperm.xlu0 %4908, %v262
        %v4910 = vpop.permute.xlu0 %4909
        %4911 = vset.pattern.permute.xlu0 7
        %4912 = vperm.xlu0 %4911, %v263
        %v4913 = vpop.permute.xlu0 %4912
        %4914 = vset.pattern.permute.xlu0 7
        %4915 = vperm.xlu0 %4914, %v264
        %v4916 = vpop.permute.xlu0 %4915
        %4917 = vset.pattern.permute.xlu0 7
        %4918 = vperm.xlu0 %4917, %v265
        %v4919 = vpop.permute.xlu0 %4918
        %4920 = vset.pattern.permute.xlu0 7
        %4921 = vperm.xlu0 %4920, %v266
        %v4922 = vpop.permute.xlu0 %4921
        %4923 = vset.pattern.permute.xlu0 7
        %4924 = vperm.xlu0 %4923, %v267
        %v4925 = vpop.permute.xlu0 %4924
        %4926 = vset.pattern.permute.xlu0 7
        %4927 = vperm.xlu0 %4926, %v268
        %v4928 = vpop.permute.xlu0 %4927
        %4929 = vset.pattern.permute.xlu0 7
        %4930 = vperm.xlu0 %4929, %v269
        %v4931 = vpop.permute.xlu0 %4930
        %4932 = vset.pattern.permute.xlu0 7
        %4933 = vperm.xlu0 %4932, %v270
        %v4934 = vpop.permute.xlu0 %4933
        %4935 = vset.pattern.permute.xlu0 7
        %4936 = vperm.xlu0 %4935, %v271
        %v4937 = vpop.permute.xlu0 %4936
        %4938 = vset.pattern.permute.xlu0 7
        %4939 = vperm.xlu0 %4938, %v272
        %v4940 = vpop.permute.xlu0 %4939
        %4941 = vset.pattern.permute.xlu0 7
        %4942 = vperm.xlu0 %4941, %v273
        %v4943 = vpop.permute.xlu0 %4942
        %4944 = vset.pattern.permute.xlu0 7
        %4945 = vperm.xlu0 %4944, %v274
        %v4946 = vpop.permute.xlu0 %4945
        %4947 = vset.pattern.permute.xlu0 7
        %4948 = vperm.xlu0 %4947, %v275
        %v4949 = vpop.permute.xlu0 %4948
        %4950 = vset.pattern.permute.xlu0 7
        %4951 = vperm.xlu0 %4950, %v276
        %v4952 = vpop.permute.xlu0 %4951
        %4953 = vset.pattern.permute.xlu0 7
        %4954 = vperm.xlu0 %4953, %v277
        %v4955 = vpop.permute.xlu0 %4954
        %4956 = vset.pattern.permute.xlu0 7
        %4957 = vperm.xlu0 %4956, %v278
        %v4958 = vpop.permute.xlu0 %4957
        %4959 = vset.pattern.permute.xlu0 7
        %4960 = vperm.xlu0 %4959, %v279
        %v4961 = vpop.permute.xlu0 %4960
        %4962 = vset.pattern.permute.xlu0 7
        %4963 = vperm.xlu0 %4962, %v280
        %v4964 = vpop.permute.xlu0 %4963
        %4965 = vset.pattern.permute.xlu0 7
        %4966 = vperm.xlu0 %4965, %v281
        %v4967 = vpop.permute.xlu0 %4966
        %4968 = vset.pattern.permute.xlu0 7
        %4969 = vperm.xlu0 %4968, %v282
        %v4970 = vpop.permute.xlu0 %4969
        %4971 = vset.pattern.permute.xlu0 7
        %4972 = vperm.xlu0 %4971, %v283
        %v4973 = vpop.permute.xlu0 %4972
        %4974 = vset.pattern.permute.xlu0 7
        %4975 = vperm.xlu0 %4974, %v284
        %v4976 = vpop.permute.xlu0 %4975
        %4977 = vset.pattern.permute.xlu0 7
        %4978 = vperm.xlu0 %4977, %v285
        %v4979 = vpop.permute.xlu0 %4978
        %4980 = vset.pattern.permute.xlu0 7
        %4981 = vperm.xlu0 %4980, %v286
        %v4982 = vpop.permute.xlu0 %4981
        %4983 = vset.pattern.permute.xlu0 7
        %4984 = vperm.xlu0 %4983, %v287
        %v4985 = vpop.permute.xlu0 %4984
        %4986 = vset.pattern.permute.xlu0 7
        %4987 = vperm.xlu0 %4986, %v288
        %v4988 = vpop.permute.xlu0 %4987
        %4989 = vset.pattern.permute.xlu0 7
        %4990 = vperm.xlu0 %4989, %v289
        %v4991 = vpop.permute.xlu0 %4990
        %4992 = vset.pattern.permute.xlu0 7
        %4993 = vperm.xlu0 %4992, %v290
        %v4994 = vpop.permute.xlu0 %4993
        %4995 = vset.pattern.permute.xlu0 7
        %4996 = vperm.xlu0 %4995, %v291
        %v4997 = vpop.permute.xlu0 %4996
        %4998 = vset.pattern.permute.xlu0 7
        %4999 = vperm.xlu0 %4998, %v292
        %v5000 = vpop.permute.xlu0 %4999
        %5001 = vset.pattern.permute.xlu0 7
        %5002 = vperm.xlu0 %5001, %v293
        %v5003 = vpop.permute.xlu0 %5002
        %5004 = vset.pattern.permute.xlu0 7
        %5005 = vperm.xlu0 %5004, %v294
        %v5006 = vpop.permute.xlu0 %5005
        %5007 = vset.pattern.permute.xlu0 7
        %5008 = vperm.xlu0 %5007, %v295
        %v5009 = vpop.permute.xlu0 %5008
        %5010 = vset.pattern.permute.xlu0 7
        %5011 = vperm.xlu0 %5010, %v296
        %v5012 = vpop.permute.xlu0 %5011
        %5013 = vset.pattern.permute.xlu0 7
        %5014 = vperm.xlu0 %5013, %v297
        %v5015 = vpop.permute.xlu0 %5014
        %5016 = vset.pattern.permute.xlu0 7
        %5017 = vperm.xlu0 %5016, %v298
        %v5018 = vpop.permute.xlu0 %5017
        %5019 = vset.pattern.permute.xlu0 7
        %5020 = vperm.xlu0 %5019, %v299
        %v5021 = vpop.permute.xlu0 %5020
        %5022 = vset.pattern.permute.xlu0 7
        %5023 = vperm.xlu0 %5022, %v300
        %v5024 = vpop.permute.xlu0 %5023
        %5025 = vset.pattern.permute.xlu0 7
        %5026 = vperm.xlu0 %5025, %v301
        %v5027 = vpop.permute.xlu0 %5026
        %5028 = vset.pattern.permute.xlu0 7
        %5029 = vperm.xlu0 %5028, %v302
        %v5030 = vpop.permute.xlu0 %5029
        %5031 = vset.pattern.permute.xlu0 7
        %5032 = vperm.xlu0 %5031, %v303
        %v5033 = vpop.permute.xlu0 %5032
        %5034 = vset.pattern.permute.xlu0 7
        %5035 = vperm.xlu0 %5034, %v304
        %v5036 = vpop.permute.xlu0 %5035
        %5037 = vset.pattern.permute.xlu0 7
        %5038 = vperm.xlu0 %5037, %v305
        %v5039 = vpop.permute.xlu0 %5038
        %5040 = vset.pattern.permute.xlu0 7
        %5041 = vperm.xlu0 %5040, %v306
        %v5042 = vpop.permute.xlu0 %5041
        %5043 = vset.pattern.permute.xlu0 7
        %5044 = vperm.xlu0 %5043, %v307
        %v5045 = vpop.permute.xlu0 %5044
        %5046 = vset.pattern.permute.xlu0 7
        %5047 = vperm.xlu0 %5046, %v308
        %v5048 = vpop.permute.xlu0 %5047
        %5049 = vset.pattern.permute.xlu0 7
        %5050 = vperm.xlu0 %5049, %v309
        %v5051 = vpop.permute.xlu0 %5050
        %5052 = vset.pattern.permute.xlu0 7
        %5053 = vperm.xlu0 %5052, %v310
        %v5054 = vpop.permute.xlu0 %5053
        %5055 = vset.pattern.permute.xlu0 7
        %5056 = vperm.xlu0 %5055, %v311
        %v5057 = vpop.permute.xlu0 %5056
        %5058 = vset.pattern.permute.xlu0 7
        %5059 = vperm.xlu0 %5058, %v312
        %v5060 = vpop.permute.xlu0 %5059
        %vm5061 = vcmp.eq.s32.totalorder %v1159, %v4868
        %vm5062 = vcmp.eq.s32.totalorder %v1159, %v4871
        %vm5063 = vcmp.eq.s32.totalorder %v1159, %v4874
        %vm5064 = vcmp.eq.s32.totalorder %v1159, %v4877
        %vm5065 = vcmp.eq.s32.totalorder %v1159, %v4880
        %vm5066 = vcmp.eq.s32.totalorder %v1159, %v4883
        %vm5067 = vcmp.eq.s32.totalorder %v1159, %v4886
        %vm5068 = vcmp.eq.s32.totalorder %v1159, %v4889
        %vm5069 = vcmp.eq.s32.totalorder %v1159, %v4892
        %vm5070 = vcmp.eq.s32.totalorder %v1159, %v4895
        %vm5071 = vcmp.eq.s32.totalorder %v1159, %v4898
        %vm5072 = vcmp.eq.s32.totalorder %v1159, %v4901
        %vm5073 = vcmp.eq.s32.totalorder %v1159, %v4904
        %vm5074 = vcmp.eq.s32.totalorder %v1159, %v4907
        %vm5075 = vcmp.eq.s32.totalorder %v1159, %v4910
        %vm5076 = vcmp.eq.s32.totalorder %v1159, %v4913
        %vm5077 = vcmp.eq.s32.totalorder %v1159, %v4916
        %vm5078 = vcmp.eq.s32.totalorder %v1159, %v4919
        %vm5079 = vcmp.eq.s32.totalorder %v1159, %v4922
        %vm5080 = vcmp.eq.s32.totalorder %v1159, %v4925
        %vm5081 = vcmp.eq.s32.totalorder %v1159, %v4928
        %vm5082 = vcmp.eq.s32.totalorder %v1159, %v4931
        %vm5083 = vcmp.eq.s32.totalorder %v1159, %v4934
        %vm5084 = vcmp.eq.s32.totalorder %v1159, %v4937
        %vm5085 = vcmp.eq.s32.totalorder %v1159, %v4940
        %vm5086 = vcmp.eq.s32.totalorder %v1159, %v4943
        %vm5087 = vcmp.eq.s32.totalorder %v1159, %v4946
        %vm5088 = vcmp.eq.s32.totalorder %v1159, %v4949
        %vm5089 = vcmp.eq.s32.totalorder %v1159, %v4952
        %vm5090 = vcmp.eq.s32.totalorder %v1159, %v4955
        %vm5091 = vcmp.eq.s32.totalorder %v1159, %v4958
        %vm5092 = vcmp.eq.s32.totalorder %v1159, %v4961
        %vm5093 = vcmp.eq.s32.totalorder %v1159, %v4964
        %vm5094 = vcmp.eq.s32.totalorder %v1159, %v4967
        %vm5095 = vcmp.eq.s32.totalorder %v1159, %v4970
        %vm5096 = vcmp.eq.s32.totalorder %v1159, %v4973
        %vm5097 = vcmp.eq.s32.totalorder %v1159, %v4976
        %vm5098 = vcmp.eq.s32.totalorder %v1159, %v4979
        %vm5099 = vcmp.eq.s32.totalorder %v1159, %v4982
        %vm5100 = vcmp.eq.s32.totalorder %v1159, %v4985
        %vm5101 = vcmp.eq.s32.totalorder %v1159, %v4988
        %vm5102 = vcmp.eq.s32.totalorder %v1159, %v4991
        %vm5103 = vcmp.eq.s32.totalorder %v1159, %v4994
        %vm5104 = vcmp.eq.s32.totalorder %v1159, %v4997
        %vm5105 = vcmp.eq.s32.totalorder %v1159, %v5000
        %vm5106 = vcmp.eq.s32.totalorder %v1159, %v5003
        %vm5107 = vcmp.eq.s32.totalorder %v1159, %v5006
        %vm5108 = vcmp.eq.s32.totalorder %v1159, %v5009
        %vm5109 = vcmp.eq.s32.totalorder %v1159, %v5012
        %vm5110 = vcmp.eq.s32.totalorder %v1159, %v5015
        %vm5111 = vcmp.eq.s32.totalorder %v1159, %v5018
        %vm5112 = vcmp.eq.s32.totalorder %v1159, %v5021
        %vm5113 = vcmp.eq.s32.totalorder %v1159, %v5024
        %vm5114 = vcmp.eq.s32.totalorder %v1159, %v5027
        %vm5115 = vcmp.eq.s32.totalorder %v1159, %v5030
        %vm5116 = vcmp.eq.s32.totalorder %v1159, %v5033
        %vm5117 = vcmp.eq.s32.totalorder %v1159, %v5036
        %vm5118 = vcmp.eq.s32.totalorder %v1159, %v5039
        %vm5119 = vcmp.eq.s32.totalorder %v1159, %v5042
        %vm5120 = vcmp.eq.s32.totalorder %v1159, %v5045
        %vm5121 = vcmp.eq.s32.totalorder %v1159, %v5048
        %vm5122 = vcmp.eq.s32.totalorder %v1159, %v5051
        %vm5123 = vcmp.eq.s32.totalorder %v1159, %v5054
        %vm5124 = vcmp.eq.s32.totalorder %v1159, %v5057
        %vm5125 = vcmp.eq.s32.totalorder %v1159, %v5060
        %v5126 = vsel %vm5061, 1, 0
        %v5127 = vsel %vm5062, 1, 0
        %v5128 = vsel %vm5063, 1, 0
        %v5129 = vsel %vm5064, 1, 0
        %v5130 = vsel %vm5065, 1, 0
        %v5131 = vsel %vm5066, 1, 0
        %v5132 = vsel %vm5067, 1, 0
        %v5133 = vsel %vm5068, 1, 0
        %v5134 = vsel %vm5069, 1, 0
        %v5135 = vsel %vm5070, 1, 0
        %v5136 = vsel %vm5071, 1, 0
        %v5137 = vsel %vm5072, 1, 0
        %v5138 = vsel %vm5073, 1, 0
        %v5139 = vsel %vm5074, 1, 0
        %v5140 = vsel %vm5075, 1, 0
        %v5141 = vsel %vm5076, 1, 0
        %v5142 = vsel %vm5077, 1, 0
        %v5143 = vsel %vm5078, 1, 0
        %v5144 = vsel %vm5079, 1, 0
        %v5145 = vsel %vm5080, 1, 0
        %v5146 = vsel %vm5081, 1, 0
        %v5147 = vsel %vm5082, 1, 0
        %v5148 = vsel %vm5083, 1, 0
        %v5149 = vsel %vm5084, 1, 0
        %v5150 = vsel %vm5085, 1, 0
        %v5151 = vsel %vm5086, 1, 0
        %v5152 = vsel %vm5087, 1, 0
        %v5153 = vsel %vm5088, 1, 0
        %v5154 = vsel %vm5089, 1, 0
        %v5155 = vsel %vm5090, 1, 0
        %v5156 = vsel %vm5091, 1, 0
        %v5157 = vsel %vm5092, 1, 0
        %v5158 = vsel %vm5093, 1, 0
        %v5159 = vsel %vm5094, 1, 0
        %v5160 = vsel %vm5095, 1, 0
        %v5161 = vsel %vm5096, 1, 0
        %v5162 = vsel %vm5097, 1, 0
        %v5163 = vsel %vm5098, 1, 0
        %v5164 = vsel %vm5099, 1, 0
        %v5165 = vsel %vm5100, 1, 0
        %v5166 = vsel %vm5101, 1, 0
        %v5167 = vsel %vm5102, 1, 0
        %v5168 = vsel %vm5103, 1, 0
        %v5169 = vsel %vm5104, 1, 0
        %v5170 = vsel %vm5105, 1, 0
        %v5171 = vsel %vm5106, 1, 0
        %v5172 = vsel %vm5107, 1, 0
        %v5173 = vsel %vm5108, 1, 0
        %v5174 = vsel %vm5109, 1, 0
        %v5175 = vsel %vm5110, 1, 0
        %v5176 = vsel %vm5111, 1, 0
        %v5177 = vsel %vm5112, 1, 0
        %v5178 = vsel %vm5113, 1, 0
        %v5179 = vsel %vm5114, 1, 0
        %v5180 = vsel %vm5115, 1, 0
        %v5181 = vsel %vm5116, 1, 0
        %v5182 = vsel %vm5117, 1, 0
        %v5183 = vsel %vm5118, 1, 0
        %v5184 = vsel %vm5119, 1, 0
        %v5185 = vsel %vm5120, 1, 0
        %v5186 = vsel %vm5121, 1, 0
        %v5187 = vsel %vm5122, 1, 0
        %v5188 = vsel %vm5123, 1, 0
        %v5189 = vsel %vm5124, 1, 0
        %v5190 = vsel %vm5125, 1, 0
        %v5191 = vcvt.s32.f32 %v5126
        %v5192 = vcvt.s32.f32 %v5127
        %v5193 = vcvt.s32.f32 %v5128
        %v5194 = vcvt.s32.f32 %v5129
        %v5195 = vcvt.s32.f32 %v5130
        %v5196 = vcvt.s32.f32 %v5131
        %v5197 = vcvt.s32.f32 %v5132
        %v5198 = vcvt.s32.f32 %v5133
        %v5199 = vcvt.s32.f32 %v5134
        %v5200 = vcvt.s32.f32 %v5135
        %v5201 = vcvt.s32.f32 %v5136
        %v5202 = vcvt.s32.f32 %v5137
        %v5203 = vcvt.s32.f32 %v5138
        %v5204 = vcvt.s32.f32 %v5139
        %v5205 = vcvt.s32.f32 %v5140
        %v5206 = vcvt.s32.f32 %v5141
        %v5207 = vcvt.s32.f32 %v5142
        %v5208 = vcvt.s32.f32 %v5143
        %v5209 = vcvt.s32.f32 %v5144
        %v5210 = vcvt.s32.f32 %v5145
        %v5211 = vcvt.s32.f32 %v5146
        %v5212 = vcvt.s32.f32 %v5147
        %v5213 = vcvt.s32.f32 %v5148
        %v5214 = vcvt.s32.f32 %v5149
        %v5215 = vcvt.s32.f32 %v5150
        %v5216 = vcvt.s32.f32 %v5151
        %v5217 = vcvt.s32.f32 %v5152
        %v5218 = vcvt.s32.f32 %v5153
        %v5219 = vcvt.s32.f32 %v5154
        %v5220 = vcvt.s32.f32 %v5155
        %v5221 = vcvt.s32.f32 %v5156
        %v5222 = vcvt.s32.f32 %v5157
        %v5223 = vcvt.s32.f32 %v5158
        %v5224 = vcvt.s32.f32 %v5159
        %v5225 = vcvt.s32.f32 %v5160
        %v5226 = vcvt.s32.f32 %v5161
        %v5227 = vcvt.s32.f32 %v5162
        %v5228 = vcvt.s32.f32 %v5163
        %v5229 = vcvt.s32.f32 %v5164
        %v5230 = vcvt.s32.f32 %v5165
        %v5231 = vcvt.s32.f32 %v5166
        %v5232 = vcvt.s32.f32 %v5167
        %v5233 = vcvt.s32.f32 %v5168
        %v5234 = vcvt.s32.f32 %v5169
        %v5235 = vcvt.s32.f32 %v5170
        %v5236 = vcvt.s32.f32 %v5171
        %v5237 = vcvt.s32.f32 %v5172
        %v5238 = vcvt.s32.f32 %v5173
        %v5239 = vcvt.s32.f32 %v5174
        %v5240 = vcvt.s32.f32 %v5175
        %v5241 = vcvt.s32.f32 %v5176
        %v5242 = vcvt.s32.f32 %v5177
        %v5243 = vcvt.s32.f32 %v5178
        %v5244 = vcvt.s32.f32 %v5179
        %v5245 = vcvt.s32.f32 %v5180
        %v5246 = vcvt.s32.f32 %v5181
        %v5247 = vcvt.s32.f32 %v5182
        %v5248 = vcvt.s32.f32 %v5183
        %v5249 = vcvt.s32.f32 %v5184
        %v5250 = vcvt.s32.f32 %v5185
        %v5251 = vcvt.s32.f32 %v5186
        %v5252 = vcvt.s32.f32 %v5187
        %v5253 = vcvt.s32.f32 %v5188
        %v5254 = vcvt.s32.f32 %v5189
        %v5255 = vcvt.s32.f32 %v5190
        %v5256 = vadd.f32 %v4801, %v5191
        %v5257 = vadd.f32 %v4802, %v5192
        %v5258 = vadd.f32 %v4803, %v5193
        %v5259 = vadd.f32 %v4804, %v5194
        %v5260 = vadd.f32 %v4805, %v5195
        %v5261 = vadd.f32 %v4806, %v5196
        %v5262 = vadd.f32 %v4807, %v5197
        %v5263 = vadd.f32 %v4808, %v5198
        %v5264 = vadd.f32 %v4809, %v5199
        %v5265 = vadd.f32 %v4810, %v5200
        %v5266 = vadd.f32 %v4811, %v5201
        %v5267 = vadd.f32 %v4812, %v5202
        %v5268 = vadd.f32 %v4813, %v5203
        %v5269 = vadd.f32 %v4814, %v5204
        %v5270 = vadd.f32 %v4815, %v5205
        %v5271 = vadd.f32 %v4816, %v5206
        %v5272 = vadd.f32 %v4817, %v5207
        %v5273 = vadd.f32 %v4818, %v5208
        %v5274 = vadd.f32 %v4819, %v5209
        %v5275 = vadd.f32 %v4820, %v5210
        %v5276 = vadd.f32 %v4821, %v5211
        %v5277 = vadd.f32 %v4822, %v5212
        %v5278 = vadd.f32 %v4823, %v5213
        %v5279 = vadd.f32 %v4824, %v5214
        %v5280 = vadd.f32 %v4825, %v5215
        %v5281 = vadd.f32 %v4826, %v5216
        %v5282 = vadd.f32 %v4827, %v5217
        %v5283 = vadd.f32 %v4828, %v5218
        %v5284 = vadd.f32 %v4829, %v5219
        %v5285 = vadd.f32 %v4830, %v5220
        %v5286 = vadd.f32 %v4831, %v5221
        %v5287 = vadd.f32 %v4832, %v5222
        %v5288 = vadd.f32 %v4833, %v5223
        %v5289 = vadd.f32 %v4834, %v5224
        %v5290 = vadd.f32 %v4835, %v5225
        %v5291 = vadd.f32 %v4836, %v5226
        %v5292 = vadd.f32 %v4837, %v5227
        %v5293 = vadd.f32 %v4838, %v5228
        %v5294 = vadd.f32 %v4839, %v5229
        %v5295 = vadd.f32 %v4840, %v5230
        %v5296 = vadd.f32 %v4841, %v5231
        %v5297 = vadd.f32 %v4842, %v5232
        %v5298 = vadd.f32 %v4843, %v5233
        %v5299 = vadd.f32 %v4844, %v5234
        %v5300 = vadd.f32 %v4845, %v5235
        %v5301 = vadd.f32 %v4846, %v5236
        %v5302 = vadd.f32 %v4847, %v5237
        %v5303 = vadd.f32 %v4848, %v5238
        %v5304 = vadd.f32 %v4849, %v5239
        %v5305 = vadd.f32 %v4850, %v5240
        %v5306 = vadd.f32 %v4851, %v5241
        %v5307 = vadd.f32 %v4852, %v5242
        %v5308 = vadd.f32 %v4853, %v5243
        %v5309 = vadd.f32 %v4854, %v5244
        %v5310 = vadd.f32 %v4855, %v5245
        %v5311 = vadd.f32 %v4856, %v5246
        %v5312 = vadd.f32 %v4857, %v5247
        %v5313 = vadd.f32 %v4858, %v5248
        %v5314 = vadd.f32 %v4859, %v5249
        %v5315 = vadd.f32 %v4860, %v5250
        %v5316 = vadd.f32 %v4861, %v5251
        %v5317 = vadd.f32 %v4862, %v5252
        %v5318 = vadd.f32 %v4863, %v5253
        %v5319 = vadd.f32 %v4864, %v5254
        %v5320 = vadd.f32 %v4865, %v5255
        %5321 = vset.pattern.permute.xlu0 8
        %5322 = vperm.xlu0 %5321, %v248
        %v5323 = vpop.permute.xlu0 %5322
        %5324 = vset.pattern.permute.xlu0 8
        %5325 = vperm.xlu0 %5324, %v249
        %v5326 = vpop.permute.xlu0 %5325
        %5327 = vset.pattern.permute.xlu0 8
        %5328 = vperm.xlu0 %5327, %v250
        %v5329 = vpop.permute.xlu0 %5328
        %5330 = vset.pattern.permute.xlu0 8
        %5331 = vperm.xlu0 %5330, %v251
        %v5332 = vpop.permute.xlu0 %5331
        %5333 = vset.pattern.permute.xlu0 8
        %5334 = vperm.xlu0 %5333, %v252
        %v5335 = vpop.permute.xlu0 %5334
        %5336 = vset.pattern.permute.xlu0 8
        %5337 = vperm.xlu0 %5336, %v253
        %v5338 = vpop.permute.xlu0 %5337
        %5339 = vset.pattern.permute.xlu0 8
        %5340 = vperm.xlu0 %5339, %v254
        %v5341 = vpop.permute.xlu0 %5340
        %5342 = vset.pattern.permute.xlu0 8
        %5343 = vperm.xlu0 %5342, %v255
        %v5344 = vpop.permute.xlu0 %5343
        %5345 = vset.pattern.permute.xlu0 8
        %5346 = vperm.xlu0 %5345, %v256
        %v5347 = vpop.permute.xlu0 %5346
        %5348 = vset.pattern.permute.xlu0 8
        %5349 = vperm.xlu0 %5348, %v257
        %v5350 = vpop.permute.xlu0 %5349
        %5351 = vset.pattern.permute.xlu0 8
        %5352 = vperm.xlu0 %5351, %v258
        %v5353 = vpop.permute.xlu0 %5352
        %5354 = vset.pattern.permute.xlu0 8
        %5355 = vperm.xlu0 %5354, %v259
        %v5356 = vpop.permute.xlu0 %5355
        %5357 = vset.pattern.permute.xlu0 8
        %5358 = vperm.xlu0 %5357, %v260
        %v5359 = vpop.permute.xlu0 %5358
        %5360 = vset.pattern.permute.xlu0 8
        %5361 = vperm.xlu0 %5360, %v261
        %v5362 = vpop.permute.xlu0 %5361
        %5363 = vset.pattern.permute.xlu0 8
        %5364 = vperm.xlu0 %5363, %v262
        %v5365 = vpop.permute.xlu0 %5364
        %5366 = vset.pattern.permute.xlu0 8
        %5367 = vperm.xlu0 %5366, %v263
        %v5368 = vpop.permute.xlu0 %5367
        %5369 = vset.pattern.permute.xlu0 8
        %5370 = vperm.xlu0 %5369, %v264
        %v5371 = vpop.permute.xlu0 %5370
        %5372 = vset.pattern.permute.xlu0 8
        %5373 = vperm.xlu0 %5372, %v265
        %v5374 = vpop.permute.xlu0 %5373
        %5375 = vset.pattern.permute.xlu0 8
        %5376 = vperm.xlu0 %5375, %v266
        %v5377 = vpop.permute.xlu0 %5376
        %5378 = vset.pattern.permute.xlu0 8
        %5379 = vperm.xlu0 %5378, %v267
        %v5380 = vpop.permute.xlu0 %5379
        %5381 = vset.pattern.permute.xlu0 8
        %5382 = vperm.xlu0 %5381, %v268
        %v5383 = vpop.permute.xlu0 %5382
        %5384 = vset.pattern.permute.xlu0 8
        %5385 = vperm.xlu0 %5384, %v269
        %v5386 = vpop.permute.xlu0 %5385
        %5387 = vset.pattern.permute.xlu0 8
        %5388 = vperm.xlu0 %5387, %v270
        %v5389 = vpop.permute.xlu0 %5388
        %5390 = vset.pattern.permute.xlu0 8
        %5391 = vperm.xlu0 %5390, %v271
        %v5392 = vpop.permute.xlu0 %5391
        %5393 = vset.pattern.permute.xlu0 8
        %5394 = vperm.xlu0 %5393, %v272
        %v5395 = vpop.permute.xlu0 %5394
        %5396 = vset.pattern.permute.xlu0 8
        %5397 = vperm.xlu0 %5396, %v273
        %v5398 = vpop.permute.xlu0 %5397
        %5399 = vset.pattern.permute.xlu0 8
        %5400 = vperm.xlu0 %5399, %v274
        %v5401 = vpop.permute.xlu0 %5400
        %5402 = vset.pattern.permute.xlu0 8
        %5403 = vperm.xlu0 %5402, %v275
        %v5404 = vpop.permute.xlu0 %5403
        %5405 = vset.pattern.permute.xlu0 8
        %5406 = vperm.xlu0 %5405, %v276
        %v5407 = vpop.permute.xlu0 %5406
        %5408 = vset.pattern.permute.xlu0 8
        %5409 = vperm.xlu0 %5408, %v277
        %v5410 = vpop.permute.xlu0 %5409
        %5411 = vset.pattern.permute.xlu0 8
        %5412 = vperm.xlu0 %5411, %v278
        %v5413 = vpop.permute.xlu0 %5412
        %5414 = vset.pattern.permute.xlu0 8
        %5415 = vperm.xlu0 %5414, %v279
        %v5416 = vpop.permute.xlu0 %5415
        %5417 = vset.pattern.permute.xlu0 8
        %5418 = vperm.xlu0 %5417, %v280
        %v5419 = vpop.permute.xlu0 %5418
        %5420 = vset.pattern.permute.xlu0 8
        %5421 = vperm.xlu0 %5420, %v281
        %v5422 = vpop.permute.xlu0 %5421
        %5423 = vset.pattern.permute.xlu0 8
        %5424 = vperm.xlu0 %5423, %v282
        %v5425 = vpop.permute.xlu0 %5424
        %5426 = vset.pattern.permute.xlu0 8
        %5427 = vperm.xlu0 %5426, %v283
        %v5428 = vpop.permute.xlu0 %5427
        %5429 = vset.pattern.permute.xlu0 8
        %5430 = vperm.xlu0 %5429, %v284
        %v5431 = vpop.permute.xlu0 %5430
        %5432 = vset.pattern.permute.xlu0 8
        %5433 = vperm.xlu0 %5432, %v285
        %v5434 = vpop.permute.xlu0 %5433
        %5435 = vset.pattern.permute.xlu0 8
        %5436 = vperm.xlu0 %5435, %v286
        %v5437 = vpop.permute.xlu0 %5436
        %5438 = vset.pattern.permute.xlu0 8
        %5439 = vperm.xlu0 %5438, %v287
        %v5440 = vpop.permute.xlu0 %5439
        %5441 = vset.pattern.permute.xlu0 8
        %5442 = vperm.xlu0 %5441, %v288
        %v5443 = vpop.permute.xlu0 %5442
        %5444 = vset.pattern.permute.xlu0 8
        %5445 = vperm.xlu0 %5444, %v289
        %v5446 = vpop.permute.xlu0 %5445
        %5447 = vset.pattern.permute.xlu0 8
        %5448 = vperm.xlu0 %5447, %v290
        %v5449 = vpop.permute.xlu0 %5448
        %5450 = vset.pattern.permute.xlu0 8
        %5451 = vperm.xlu0 %5450, %v291
        %v5452 = vpop.permute.xlu0 %5451
        %5453 = vset.pattern.permute.xlu0 8
        %5454 = vperm.xlu0 %5453, %v292
        %v5455 = vpop.permute.xlu0 %5454
        %5456 = vset.pattern.permute.xlu0 8
        %5457 = vperm.xlu0 %5456, %v293
        %v5458 = vpop.permute.xlu0 %5457
        %5459 = vset.pattern.permute.xlu0 8
        %5460 = vperm.xlu0 %5459, %v294
        %v5461 = vpop.permute.xlu0 %5460
        %5462 = vset.pattern.permute.xlu0 8
        %5463 = vperm.xlu0 %5462, %v295
        %v5464 = vpop.permute.xlu0 %5463
        %5465 = vset.pattern.permute.xlu0 8
        %5466 = vperm.xlu0 %5465, %v296
        %v5467 = vpop.permute.xlu0 %5466
        %5468 = vset.pattern.permute.xlu0 8
        %5469 = vperm.xlu0 %5468, %v297
        %v5470 = vpop.permute.xlu0 %5469
        %5471 = vset.pattern.permute.xlu0 8
        %5472 = vperm.xlu0 %5471, %v298
        %v5473 = vpop.permute.xlu0 %5472
        %5474 = vset.pattern.permute.xlu0 8
        %5475 = vperm.xlu0 %5474, %v299
        %v5476 = vpop.permute.xlu0 %5475
        %5477 = vset.pattern.permute.xlu0 8
        %5478 = vperm.xlu0 %5477, %v300
        %v5479 = vpop.permute.xlu0 %5478
        %5480 = vset.pattern.permute.xlu0 8
        %5481 = vperm.xlu0 %5480, %v301
        %v5482 = vpop.permute.xlu0 %5481
        %5483 = vset.pattern.permute.xlu0 8
        %5484 = vperm.xlu0 %5483, %v302
        %v5485 = vpop.permute.xlu0 %5484
        %5486 = vset.pattern.permute.xlu0 8
        %5487 = vperm.xlu0 %5486, %v303
        %v5488 = vpop.permute.xlu0 %5487
        %5489 = vset.pattern.permute.xlu0 8
        %5490 = vperm.xlu0 %5489, %v304
        %v5491 = vpop.permute.xlu0 %5490
        %5492 = vset.pattern.permute.xlu0 8
        %5493 = vperm.xlu0 %5492, %v305
        %v5494 = vpop.permute.xlu0 %5493
        %5495 = vset.pattern.permute.xlu0 8
        %5496 = vperm.xlu0 %5495, %v306
        %v5497 = vpop.permute.xlu0 %5496
        %5498 = vset.pattern.permute.xlu0 8
        %5499 = vperm.xlu0 %5498, %v307
        %v5500 = vpop.permute.xlu0 %5499
        %5501 = vset.pattern.permute.xlu0 8
        %5502 = vperm.xlu0 %5501, %v308
        %v5503 = vpop.permute.xlu0 %5502
        %5504 = vset.pattern.permute.xlu0 8
        %5505 = vperm.xlu0 %5504, %v309
        %v5506 = vpop.permute.xlu0 %5505
        %5507 = vset.pattern.permute.xlu0 8
        %5508 = vperm.xlu0 %5507, %v310
        %v5509 = vpop.permute.xlu0 %5508
        %5510 = vset.pattern.permute.xlu0 8
        %5511 = vperm.xlu0 %5510, %v311
        %v5512 = vpop.permute.xlu0 %5511
        %5513 = vset.pattern.permute.xlu0 8
        %5514 = vperm.xlu0 %5513, %v312
        %v5515 = vpop.permute.xlu0 %5514
        %vm5516 = vcmp.eq.s32.totalorder %v1159, %v5323
        %vm5517 = vcmp.eq.s32.totalorder %v1159, %v5326
        %vm5518 = vcmp.eq.s32.totalorder %v1159, %v5329
        %vm5519 = vcmp.eq.s32.totalorder %v1159, %v5332
        %vm5520 = vcmp.eq.s32.totalorder %v1159, %v5335
        %vm5521 = vcmp.eq.s32.totalorder %v1159, %v5338
        %vm5522 = vcmp.eq.s32.totalorder %v1159, %v5341
        %vm5523 = vcmp.eq.s32.totalorder %v1159, %v5344
        %vm5524 = vcmp.eq.s32.totalorder %v1159, %v5347
        %vm5525 = vcmp.eq.s32.totalorder %v1159, %v5350
        %vm5526 = vcmp.eq.s32.totalorder %v1159, %v5353
        %vm5527 = vcmp.eq.s32.totalorder %v1159, %v5356
        %vm5528 = vcmp.eq.s32.totalorder %v1159, %v5359
        %vm5529 = vcmp.eq.s32.totalorder %v1159, %v5362
        %vm5530 = vcmp.eq.s32.totalorder %v1159, %v5365
        %vm5531 = vcmp.eq.s32.totalorder %v1159, %v5368
        %vm5532 = vcmp.eq.s32.totalorder %v1159, %v5371
        %vm5533 = vcmp.eq.s32.totalorder %v1159, %v5374
        %vm5534 = vcmp.eq.s32.totalorder %v1159, %v5377
        %vm5535 = vcmp.eq.s32.totalorder %v1159, %v5380
        %vm5536 = vcmp.eq.s32.totalorder %v1159, %v5383
        %vm5537 = vcmp.eq.s32.totalorder %v1159, %v5386
        %vm5538 = vcmp.eq.s32.totalorder %v1159, %v5389
        %vm5539 = vcmp.eq.s32.totalorder %v1159, %v5392
        %vm5540 = vcmp.eq.s32.totalorder %v1159, %v5395
        %vm5541 = vcmp.eq.s32.totalorder %v1159, %v5398
        %vm5542 = vcmp.eq.s32.totalorder %v1159, %v5401
        %vm5543 = vcmp.eq.s32.totalorder %v1159, %v5404
        %vm5544 = vcmp.eq.s32.totalorder %v1159, %v5407
        %vm5545 = vcmp.eq.s32.totalorder %v1159, %v5410
        %vm5546 = vcmp.eq.s32.totalorder %v1159, %v5413
        %vm5547 = vcmp.eq.s32.totalorder %v1159, %v5416
        %vm5548 = vcmp.eq.s32.totalorder %v1159, %v5419
        %vm5549 = vcmp.eq.s32.totalorder %v1159, %v5422
        %vm5550 = vcmp.eq.s32.totalorder %v1159, %v5425
        %vm5551 = vcmp.eq.s32.totalorder %v1159, %v5428
        %vm5552 = vcmp.eq.s32.totalorder %v1159, %v5431
        %vm5553 = vcmp.eq.s32.totalorder %v1159, %v5434
        %vm5554 = vcmp.eq.s32.totalorder %v1159, %v5437
        %vm5555 = vcmp.eq.s32.totalorder %v1159, %v5440
        %vm5556 = vcmp.eq.s32.totalorder %v1159, %v5443
        %vm5557 = vcmp.eq.s32.totalorder %v1159, %v5446
        %vm5558 = vcmp.eq.s32.totalorder %v1159, %v5449
        %vm5559 = vcmp.eq.s32.totalorder %v1159, %v5452
        %vm5560 = vcmp.eq.s32.totalorder %v1159, %v5455
        %vm5561 = vcmp.eq.s32.totalorder %v1159, %v5458
        %vm5562 = vcmp.eq.s32.totalorder %v1159, %v5461
        %vm5563 = vcmp.eq.s32.totalorder %v1159, %v5464
        %vm5564 = vcmp.eq.s32.totalorder %v1159, %v5467
        %vm5565 = vcmp.eq.s32.totalorder %v1159, %v5470
        %vm5566 = vcmp.eq.s32.totalorder %v1159, %v5473
        %vm5567 = vcmp.eq.s32.totalorder %v1159, %v5476
        %vm5568 = vcmp.eq.s32.totalorder %v1159, %v5479
        %vm5569 = vcmp.eq.s32.totalorder %v1159, %v5482
        %vm5570 = vcmp.eq.s32.totalorder %v1159, %v5485
        %vm5571 = vcmp.eq.s32.totalorder %v1159, %v5488
        %vm5572 = vcmp.eq.s32.totalorder %v1159, %v5491
        %vm5573 = vcmp.eq.s32.totalorder %v1159, %v5494
        %vm5574 = vcmp.eq.s32.totalorder %v1159, %v5497
        %vm5575 = vcmp.eq.s32.totalorder %v1159, %v5500
        %vm5576 = vcmp.eq.s32.totalorder %v1159, %v5503
        %vm5577 = vcmp.eq.s32.totalorder %v1159, %v5506
        %vm5578 = vcmp.eq.s32.totalorder %v1159, %v5509
        %vm5579 = vcmp.eq.s32.totalorder %v1159, %v5512
        %vm5580 = vcmp.eq.s32.totalorder %v1159, %v5515
        %v5581 = vsel %vm5516, 1, 0
        %v5582 = vsel %vm5517, 1, 0
        %v5583 = vsel %vm5518, 1, 0
        %v5584 = vsel %vm5519, 1, 0
        %v5585 = vsel %vm5520, 1, 0
        %v5586 = vsel %vm5521, 1, 0
        %v5587 = vsel %vm5522, 1, 0
        %v5588 = vsel %vm5523, 1, 0
        %v5589 = vsel %vm5524, 1, 0
        %v5590 = vsel %vm5525, 1, 0
        %v5591 = vsel %vm5526, 1, 0
        %v5592 = vsel %vm5527, 1, 0
        %v5593 = vsel %vm5528, 1, 0
        %v5594 = vsel %vm5529, 1, 0
        %v5595 = vsel %vm5530, 1, 0
        %v5596 = vsel %vm5531, 1, 0
        %v5597 = vsel %vm5532, 1, 0
        %v5598 = vsel %vm5533, 1, 0
        %v5599 = vsel %vm5534, 1, 0
        %v5600 = vsel %vm5535, 1, 0
        %v5601 = vsel %vm5536, 1, 0
        %v5602 = vsel %vm5537, 1, 0
        %v5603 = vsel %vm5538, 1, 0
        %v5604 = vsel %vm5539, 1, 0
        %v5605 = vsel %vm5540, 1, 0
        %v5606 = vsel %vm5541, 1, 0
        %v5607 = vsel %vm5542, 1, 0
        %v5608 = vsel %vm5543, 1, 0
        %v5609 = vsel %vm5544, 1, 0
        %v5610 = vsel %vm5545, 1, 0
        %v5611 = vsel %vm5546, 1, 0
        %v5612 = vsel %vm5547, 1, 0
        %v5613 = vsel %vm5548, 1, 0
        %v5614 = vsel %vm5549, 1, 0
        %v5615 = vsel %vm5550, 1, 0
        %v5616 = vsel %vm5551, 1, 0
        %v5617 = vsel %vm5552, 1, 0
        %v5618 = vsel %vm5553, 1, 0
        %v5619 = vsel %vm5554, 1, 0
        %v5620 = vsel %vm5555, 1, 0
        %v5621 = vsel %vm5556, 1, 0
        %v5622 = vsel %vm5557, 1, 0
        %v5623 = vsel %vm5558, 1, 0
        %v5624 = vsel %vm5559, 1, 0
        %v5625 = vsel %vm5560, 1, 0
        %v5626 = vsel %vm5561, 1, 0
        %v5627 = vsel %vm5562, 1, 0
        %v5628 = vsel %vm5563, 1, 0
        %v5629 = vsel %vm5564, 1, 0
        %v5630 = vsel %vm5565, 1, 0
        %v5631 = vsel %vm5566, 1, 0
        %v5632 = vsel %vm5567, 1, 0
        %v5633 = vsel %vm5568, 1, 0
        %v5634 = vsel %vm5569, 1, 0
        %v5635 = vsel %vm5570, 1, 0
        %v5636 = vsel %vm5571, 1, 0
        %v5637 = vsel %vm5572, 1, 0
        %v5638 = vsel %vm5573, 1, 0
        %v5639 = vsel %vm5574, 1, 0
        %v5640 = vsel %vm5575, 1, 0
        %v5641 = vsel %vm5576, 1, 0
        %v5642 = vsel %vm5577, 1, 0
        %v5643 = vsel %vm5578, 1, 0
        %v5644 = vsel %vm5579, 1, 0
        %v5645 = vsel %vm5580, 1, 0
        %v5646 = vcvt.s32.f32 %v5581
        %v5647 = vcvt.s32.f32 %v5582
        %v5648 = vcvt.s32.f32 %v5583
        %v5649 = vcvt.s32.f32 %v5584
        %v5650 = vcvt.s32.f32 %v5585
        %v5651 = vcvt.s32.f32 %v5586
        %v5652 = vcvt.s32.f32 %v5587
        %v5653 = vcvt.s32.f32 %v5588
        %v5654 = vcvt.s32.f32 %v5589
        %v5655 = vcvt.s32.f32 %v5590
        %v5656 = vcvt.s32.f32 %v5591
        %v5657 = vcvt.s32.f32 %v5592
        %v5658 = vcvt.s32.f32 %v5593
        %v5659 = vcvt.s32.f32 %v5594
        %v5660 = vcvt.s32.f32 %v5595
        %v5661 = vcvt.s32.f32 %v5596
        %v5662 = vcvt.s32.f32 %v5597
        %v5663 = vcvt.s32.f32 %v5598
        %v5664 = vcvt.s32.f32 %v5599
        %v5665 = vcvt.s32.f32 %v5600
        %v5666 = vcvt.s32.f32 %v5601
        %v5667 = vcvt.s32.f32 %v5602
        %v5668 = vcvt.s32.f32 %v5603
        %v5669 = vcvt.s32.f32 %v5604
        %v5670 = vcvt.s32.f32 %v5605
        %v5671 = vcvt.s32.f32 %v5606
        %v5672 = vcvt.s32.f32 %v5607
        %v5673 = vcvt.s32.f32 %v5608
        %v5674 = vcvt.s32.f32 %v5609
        %v5675 = vcvt.s32.f32 %v5610
        %v5676 = vcvt.s32.f32 %v5611
        %v5677 = vcvt.s32.f32 %v5612
        %v5678 = vcvt.s32.f32 %v5613
        %v5679 = vcvt.s32.f32 %v5614
        %v5680 = vcvt.s32.f32 %v5615
        %v5681 = vcvt.s32.f32 %v5616
        %v5682 = vcvt.s32.f32 %v5617
        %v5683 = vcvt.s32.f32 %v5618
        %v5684 = vcvt.s32.f32 %v5619
        %v5685 = vcvt.s32.f32 %v5620
        %v5686 = vcvt.s32.f32 %v5621
        %v5687 = vcvt.s32.f32 %v5622
        %v5688 = vcvt.s32.f32 %v5623
        %v5689 = vcvt.s32.f32 %v5624
        %v5690 = vcvt.s32.f32 %v5625
        %v5691 = vcvt.s32.f32 %v5626
        %v5692 = vcvt.s32.f32 %v5627
        %v5693 = vcvt.s32.f32 %v5628
        %v5694 = vcvt.s32.f32 %v5629
        %v5695 = vcvt.s32.f32 %v5630
        %v5696 = vcvt.s32.f32 %v5631
        %v5697 = vcvt.s32.f32 %v5632
        %v5698 = vcvt.s32.f32 %v5633
        %v5699 = vcvt.s32.f32 %v5634
        %v5700 = vcvt.s32.f32 %v5635
        %v5701 = vcvt.s32.f32 %v5636
        %v5702 = vcvt.s32.f32 %v5637
        %v5703 = vcvt.s32.f32 %v5638
        %v5704 = vcvt.s32.f32 %v5639
        %v5705 = vcvt.s32.f32 %v5640
        %v5706 = vcvt.s32.f32 %v5641
        %v5707 = vcvt.s32.f32 %v5642
        %v5708 = vcvt.s32.f32 %v5643
        %v5709 = vcvt.s32.f32 %v5644
        %v5710 = vcvt.s32.f32 %v5645
        %v5711 = vadd.f32 %v5256, %v5646
        %v5712 = vadd.f32 %v5257, %v5647
        %v5713 = vadd.f32 %v5258, %v5648
        %v5714 = vadd.f32 %v5259, %v5649
        %v5715 = vadd.f32 %v5260, %v5650
        %v5716 = vadd.f32 %v5261, %v5651
        %v5717 = vadd.f32 %v5262, %v5652
        %v5718 = vadd.f32 %v5263, %v5653
        %v5719 = vadd.f32 %v5264, %v5654
        %v5720 = vadd.f32 %v5265, %v5655
        %v5721 = vadd.f32 %v5266, %v5656
        %v5722 = vadd.f32 %v5267, %v5657
        %v5723 = vadd.f32 %v5268, %v5658
        %v5724 = vadd.f32 %v5269, %v5659
        %v5725 = vadd.f32 %v5270, %v5660
        %v5726 = vadd.f32 %v5271, %v5661
        %v5727 = vadd.f32 %v5272, %v5662
        %v5728 = vadd.f32 %v5273, %v5663
        %v5729 = vadd.f32 %v5274, %v5664
        %v5730 = vadd.f32 %v5275, %v5665
        %v5731 = vadd.f32 %v5276, %v5666
        %v5732 = vadd.f32 %v5277, %v5667
        %v5733 = vadd.f32 %v5278, %v5668
        %v5734 = vadd.f32 %v5279, %v5669
        %v5735 = vadd.f32 %v5280, %v5670
        %v5736 = vadd.f32 %v5281, %v5671
        %v5737 = vadd.f32 %v5282, %v5672
        %v5738 = vadd.f32 %v5283, %v5673
        %v5739 = vadd.f32 %v5284, %v5674
        %v5740 = vadd.f32 %v5285, %v5675
        %v5741 = vadd.f32 %v5286, %v5676
        %v5742 = vadd.f32 %v5287, %v5677
        %v5743 = vadd.f32 %v5288, %v5678
        %v5744 = vadd.f32 %v5289, %v5679
        %v5745 = vadd.f32 %v5290, %v5680
        %v5746 = vadd.f32 %v5291, %v5681
        %v5747 = vadd.f32 %v5292, %v5682
        %v5748 = vadd.f32 %v5293, %v5683
        %v5749 = vadd.f32 %v5294, %v5684
        %v5750 = vadd.f32 %v5295, %v5685
        %v5751 = vadd.f32 %v5296, %v5686
        %v5752 = vadd.f32 %v5297, %v5687
        %v5753 = vadd.f32 %v5298, %v5688
        %v5754 = vadd.f32 %v5299, %v5689
        %v5755 = vadd.f32 %v5300, %v5690
        %v5756 = vadd.f32 %v5301, %v5691
        %v5757 = vadd.f32 %v5302, %v5692
        %v5758 = vadd.f32 %v5303, %v5693
        %v5759 = vadd.f32 %v5304, %v5694
        %v5760 = vadd.f32 %v5305, %v5695
        %v5761 = vadd.f32 %v5306, %v5696
        %v5762 = vadd.f32 %v5307, %v5697
        %v5763 = vadd.f32 %v5308, %v5698
        %v5764 = vadd.f32 %v5309, %v5699
        %v5765 = vadd.f32 %v5310, %v5700
        %v5766 = vadd.f32 %v5311, %v5701
        %v5767 = vadd.f32 %v5312, %v5702
        %v5768 = vadd.f32 %v5313, %v5703
        %v5769 = vadd.f32 %v5314, %v5704
        %v5770 = vadd.f32 %v5315, %v5705
        %v5771 = vadd.f32 %v5316, %v5706
        %v5772 = vadd.f32 %v5317, %v5707
        %v5773 = vadd.f32 %v5318, %v5708
        %v5774 = vadd.f32 %v5319, %v5709
        %v5775 = vadd.f32 %v5320, %v5710
        %v5776 = vld [vmem:[%s2] sm:$0xff]
        %v5777 = vld [vmem:[%s2 + $0x8] sm:$0xff]
        %v5778 = vld [vmem:[%s2 + $0x10] sm:$0xff]
        %v5779 = vld [vmem:[%s2 + $0x18] sm:$0xff]
        %v5780 = vld [vmem:[%s2 + $0x20] sm:$0xff]
        %v5781 = vld [vmem:[%s2 + $0x28] sm:$0xff]
        %v5782 = vld [vmem:[%s2 + $0x30] sm:$0xff]
        %v5783 = vld [vmem:[%s2 + $0x38] sm:$0xff]
        %v5784 = vld [vmem:[%s2 + $0x40] sm:$0xff]
        %v5785 = vld [vmem:[%s2 + $0x48] sm:$0xff]
        %v5786 = vld [vmem:[%s2 + $0x50] sm:$0xff]
        %v5787 = vld [vmem:[%s2 + $0x58] sm:$0xff]
        %v5788 = vld [vmem:[%s2 + $0x60] sm:$0xff]
        %v5789 = vld [vmem:[%s2 + $0x68] sm:$0xff]
        %v5790 = vld [vmem:[%s2 + $0x70] sm:$0xff]
        %v5791 = vld [vmem:[%s2 + $0x78] sm:$0xff]
        %5792 = vmatprep.subr.mxu0 0.0
        %5793 = vmatpush1.msra.mxu0 %v5791
        %5794 = vmatprep.subr.mxu0 0.0
        %5795 = vmatpush1.msra.mxu0 %v5790
        %5796 = vmatprep.subr.mxu0 0.0
        %5797 = vmatpush1.msra.mxu0 %v5789
        %5798 = vmatprep.subr.mxu0 0.0
        %5799 = vmatpush1.msra.mxu0 %v5788
        %5800 = vmatprep.subr.mxu0 0.0
        %5801 = vmatpush1.msra.mxu0 %v5787
        %5802 = vmatprep.subr.mxu0 0.0
        %5803 = vmatpush1.msra.mxu0 %v5786
        %5804 = vmatprep.subr.mxu0 0.0
        %5805 = vmatpush1.msra.mxu0 %v5785
        %5806 = vmatprep.subr.mxu0 0.0
        %5807 = vmatpush1.msra.mxu0 %v5784
        %5808 = vmatprep.subr.mxu0 0.0
        %5809 = vmatpush1.msra.mxu0 %v5783
        %5810 = vmatprep.subr.mxu0 0.0
        %5811 = vmatpush1.msra.mxu0 %v5782
        %5812 = vmatprep.subr.mxu0 0.0
        %5813 = vmatpush1.msra.mxu0 %v5781
        %5814 = vmatprep.subr.mxu0 0.0
        %5815 = vmatpush1.msra.mxu0 %v5780
        %5816 = vmatprep.subr.mxu0 0.0
        %5817 = vmatpush1.msra.mxu0 %v5779
        %5818 = vmatprep.subr.mxu0 0.0
        %5819 = vmatpush1.msra.mxu0 %v5778
        %5820 = vmatprep.subr.mxu0 0.0
        %5821 = vmatpush1.msra.mxu0 %v5777
        %5822 = vmatprep.subr.mxu0 0.0
        %5823 = vmatpush1.msra.mxu0 %v5776
        %5824 = vmatprep.subr.mxu0 0.0
        %5825 = vmatpush2.msra.mxu0 0.0
        %5826 = vmatprep.subr.mxu0 0.0
        %5827 = vmatpush2.msra.mxu0 0.0
        %5828 = vmatprep.subr.mxu0 0.0
        %5829 = vmatpush2.msra.mxu0 0.0
        %5830 = vmatprep.subr.mxu0 0.0
        %5831 = vmatpush2.msra.mxu0 0.0
        %5832 = vmatprep.subr.mxu0 0.0
        %5833 = vmatpush2.msra.mxu0 0.0
        %5834 = vmatprep.subr.mxu0 0.0
        %5835 = vmatpush2.msra.mxu0 0.0
        %5836 = vmatprep.subr.mxu0 0.0
        %5837 = vmatpush2.msra.mxu0 0.0
        %5838 = vmatprep.subr.mxu0 0.0
        %5839 = vmatpush2.msra.mxu0 0.0
        %5840 = vmatprep.subr.mxu0 0.0
        %5841 = vmatpush2.msra.mxu0 0.0
        %5842 = vmatprep.subr.mxu0 0.0
        %5843 = vmatpush2.msra.mxu0 0.0
        %5844 = vmatprep.subr.mxu0 0.0
        %5845 = vmatpush2.msra.mxu0 0.0
        %5846 = vmatprep.subr.mxu0 0.0
        %5847 = vmatpush2.msra.mxu0 0.0
        %5848 = vmatprep.subr.mxu0 0.0
        %5849 = vmatpush2.msra.mxu0 0.0
        %5850 = vmatprep.subr.mxu0 0.0
        %5851 = vmatpush2.msra.mxu0 0.0
        %5852 = vmatprep.subr.mxu0 0.0
        %5853 = vmatpush2.msra.mxu0 0.0
        %5854 = vmatprep.subr.mxu0 0.0
        %5855 = vmatpush2.msra.mxu0 0.0
        %5856 = vmatprep.mubr.f32.mxu0 0.0
        %5857 = vmatmul.mubr.f32.gmra.mxu0 %v5711
        %v5858 = vpop.f32.mrf.mxu0
        %v5859 = vadd.f32 0.0, %v5858
        %v5860 = vpop.f32.mrf.mxu0
        %5861 = vmatprep.mubr.f32.mxu0 0.0
        %5862 = vmatmul.mubr.f32.gmra.mxu0 %v5712
        %v5863 = vpop.f32.mrf.mxu0
        %v5864 = vadd.f32 0.0, %v5863
        %v5865 = vpop.f32.mrf.mxu0
        %5866 = vmatprep.mubr.f32.mxu0 0.0
        %5867 = vmatmul.mubr.f32.gmra.mxu0 %v5713
        %v5868 = vpop.f32.mrf.mxu0
        %v5869 = vadd.f32 0.0, %v5868
        %v5870 = vpop.f32.mrf.mxu0
        %5871 = vmatprep.mubr.f32.mxu0 0.0
        %5872 = vmatmul.mubr.f32.gmra.mxu0 %v5714
        %v5873 = vpop.f32.mrf.mxu0
        %v5874 = vadd.f32 0.0, %v5873
        %v5875 = vpop.f32.mrf.mxu0
        %5876 = vmatprep.mubr.f32.mxu0 0.0
        %5877 = vmatmul.mubr.f32.gmra.mxu0 %v5715
        %v5878 = vpop.f32.mrf.mxu0
        %v5879 = vadd.f32 0.0, %v5878
        %v5880 = vpop.f32.mrf.mxu0
        %5881 = vmatprep.mubr.f32.mxu0 0.0
        %5882 = vmatmul.mubr.f32.gmra.mxu0 %v5716
        %v5883 = vpop.f32.mrf.mxu0
        %v5884 = vadd.f32 0.0, %v5883
        %v5885 = vpop.f32.mrf.mxu0
        %5886 = vmatprep.mubr.f32.mxu0 0.0
        %5887 = vmatmul.mubr.f32.gmra.mxu0 %v5717
        %v5888 = vpop.f32.mrf.mxu0
        %v5889 = vadd.f32 0.0, %v5888
        %v5890 = vpop.f32.mrf.mxu0
        %5891 = vmatprep.mubr.f32.mxu0 0.0
        %5892 = vmatmul.mubr.f32.gmra.mxu0 %v5718
        %v5893 = vpop.f32.mrf.mxu0
        %v5894 = vadd.f32 0.0, %v5893
        %v5895 = vpop.f32.mrf.mxu0
        %5896 = vmatprep.mubr.f32.mxu0 0.0
        %5897 = vmatmul.mubr.f32.gmra.mxu0 %v5719
        %v5898 = vpop.f32.mrf.mxu0
        %v5899 = vadd.f32 0.0, %v5898
        %v5900 = vpop.f32.mrf.mxu0
        %5901 = vmatprep.mubr.f32.mxu0 0.0
        %5902 = vmatmul.mubr.f32.gmra.mxu0 %v5720
        %v5903 = vpop.f32.mrf.mxu0
        %v5904 = vadd.f32 0.0, %v5903
        %v5905 = vpop.f32.mrf.mxu0
        %5906 = vmatprep.mubr.f32.mxu0 0.0
        %5907 = vmatmul.mubr.f32.gmra.mxu0 %v5721
        %v5908 = vpop.f32.mrf.mxu0
        %v5909 = vadd.f32 0.0, %v5908
        %v5910 = vpop.f32.mrf.mxu0
        %5911 = vmatprep.mubr.f32.mxu0 0.0
        %5912 = vmatmul.mubr.f32.gmra.mxu0 %v5722
        %v5913 = vpop.f32.mrf.mxu0
        %v5914 = vadd.f32 0.0, %v5913
        %v5915 = vpop.f32.mrf.mxu0
        %5916 = vmatprep.mubr.f32.mxu0 0.0
        %5917 = vmatmul.mubr.f32.gmra.mxu0 %v5723
        %v5918 = vpop.f32.mrf.mxu0
        %v5919 = vadd.f32 0.0, %v5918
        %v5920 = vpop.f32.mrf.mxu0
        %5921 = vmatprep.mubr.f32.mxu0 0.0
        %5922 = vmatmul.mubr.f32.gmra.mxu0 %v5724
        %v5923 = vpop.f32.mrf.mxu0
        %v5924 = vadd.f32 0.0, %v5923
        %v5925 = vpop.f32.mrf.mxu0
        %5926 = vmatprep.mubr.f32.mxu0 0.0
        %5927 = vmatmul.mubr.f32.gmra.mxu0 %v5725
        %v5928 = vpop.f32.mrf.mxu0
        %v5929 = vadd.f32 0.0, %v5928
        %v5930 = vpop.f32.mrf.mxu0
        %5931 = vmatprep.mubr.f32.mxu0 0.0
        %5932 = vmatmul.mubr.f32.gmra.mxu0 %v5726
        %v5933 = vpop.f32.mrf.mxu0
        %v5934 = vadd.f32 0.0, %v5933
        %v5935 = vpop.f32.mrf.mxu0
        %5936 = vmatprep.mubr.f32.mxu0 0.0
        %5937 = vmatmul.mubr.f32.gmra.mxu0 %v5727
        %v5938 = vpop.f32.mrf.mxu0
        %v5939 = vadd.f32 0.0, %v5938
        %v5940 = vpop.f32.mrf.mxu0
        %5941 = vmatprep.mubr.f32.mxu0 0.0
        %5942 = vmatmul.mubr.f32.gmra.mxu0 %v5728
        %v5943 = vpop.f32.mrf.mxu0
        %v5944 = vadd.f32 0.0, %v5943
        %v5945 = vpop.f32.mrf.mxu0
        %5946 = vmatprep.mubr.f32.mxu0 0.0
        %5947 = vmatmul.mubr.f32.gmra.mxu0 %v5729
        %v5948 = vpop.f32.mrf.mxu0
        %v5949 = vadd.f32 0.0, %v5948
        %v5950 = vpop.f32.mrf.mxu0
        %5951 = vmatprep.mubr.f32.mxu0 0.0
        %5952 = vmatmul.mubr.f32.gmra.mxu0 %v5730
        %v5953 = vpop.f32.mrf.mxu0
        %v5954 = vadd.f32 0.0, %v5953
        %v5955 = vpop.f32.mrf.mxu0
        %5956 = vmatprep.mubr.f32.mxu0 0.0
        %5957 = vmatmul.mubr.f32.gmra.mxu0 %v5731
        %v5958 = vpop.f32.mrf.mxu0
        %v5959 = vadd.f32 0.0, %v5958
        %v5960 = vpop.f32.mrf.mxu0
        %5961 = vmatprep.mubr.f32.mxu0 0.0
        %5962 = vmatmul.mubr.f32.gmra.mxu0 %v5732
        %v5963 = vpop.f32.mrf.mxu0
        %v5964 = vadd.f32 0.0, %v5963
        %v5965 = vpop.f32.mrf.mxu0
        %5966 = vmatprep.mubr.f32.mxu0 0.0
        %5967 = vmatmul.mubr.f32.gmra.mxu0 %v5733
        %v5968 = vpop.f32.mrf.mxu0
        %v5969 = vadd.f32 0.0, %v5968
        %v5970 = vpop.f32.mrf.mxu0
        %5971 = vmatprep.mubr.f32.mxu0 0.0
        %5972 = vmatmul.mubr.f32.gmra.mxu0 %v5734
        %v5973 = vpop.f32.mrf.mxu0
        %v5974 = vadd.f32 0.0, %v5973
        %v5975 = vpop.f32.mrf.mxu0
        %5976 = vmatprep.mubr.f32.mxu0 0.0
        %5977 = vmatmul.mubr.f32.gmra.mxu0 %v5735
        %v5978 = vpop.f32.mrf.mxu0
        %v5979 = vadd.f32 0.0, %v5978
        %v5980 = vpop.f32.mrf.mxu0
        %5981 = vmatprep.mubr.f32.mxu0 0.0
        %5982 = vmatmul.mubr.f32.gmra.mxu0 %v5736
        %v5983 = vpop.f32.mrf.mxu0
        %v5984 = vadd.f32 0.0, %v5983
        %v5985 = vpop.f32.mrf.mxu0
        %5986 = vmatprep.mubr.f32.mxu0 0.0
        %5987 = vmatmul.mubr.f32.gmra.mxu0 %v5737
        %v5988 = vpop.f32.mrf.mxu0
        %v5989 = vadd.f32 0.0, %v5988
        %v5990 = vpop.f32.mrf.mxu0
        %5991 = vmatprep.mubr.f32.mxu0 0.0
        %5992 = vmatmul.mubr.f32.gmra.mxu0 %v5738
        %v5993 = vpop.f32.mrf.mxu0
        %v5994 = vadd.f32 0.0, %v5993
        %v5995 = vpop.f32.mrf.mxu0
        %5996 = vmatprep.mubr.f32.mxu0 0.0
        %5997 = vmatmul.mubr.f32.gmra.mxu0 %v5739
        %v5998 = vpop.f32.mrf.mxu0
        %v5999 = vadd.f32 0.0, %v5998
        %v6000 = vpop.f32.mrf.mxu0
        %6001 = vmatprep.mubr.f32.mxu0 0.0
        %6002 = vmatmul.mubr.f32.gmra.mxu0 %v5740
        %v6003 = vpop.f32.mrf.mxu0
        %v6004 = vadd.f32 0.0, %v6003
        %v6005 = vpop.f32.mrf.mxu0
        %6006 = vmatprep.mubr.f32.mxu0 0.0
        %6007 = vmatmul.mubr.f32.gmra.mxu0 %v5741
        %v6008 = vpop.f32.mrf.mxu0
        %v6009 = vadd.f32 0.0, %v6008
        %v6010 = vpop.f32.mrf.mxu0
        %6011 = vmatprep.mubr.f32.mxu0 0.0
        %6012 = vmatmul.mubr.f32.gmra.mxu0 %v5742
        %v6013 = vpop.f32.mrf.mxu0
        %v6014 = vadd.f32 0.0, %v6013
        %v6015 = vpop.f32.mrf.mxu0
        %6016 = vmatprep.mubr.f32.mxu0 0.0
        %6017 = vmatmul.mubr.f32.gmra.mxu0 %v5743
        %v6018 = vpop.f32.mrf.mxu0
        %v6019 = vadd.f32 0.0, %v6018
        %v6020 = vpop.f32.mrf.mxu0
        %6021 = vmatprep.mubr.f32.mxu0 0.0
        %6022 = vmatmul.mubr.f32.gmra.mxu0 %v5744
        %v6023 = vpop.f32.mrf.mxu0
        %v6024 = vadd.f32 0.0, %v6023
        %v6025 = vpop.f32.mrf.mxu0
        %6026 = vmatprep.mubr.f32.mxu0 0.0
        %6027 = vmatmul.mubr.f32.gmra.mxu0 %v5745
        %v6028 = vpop.f32.mrf.mxu0
        %v6029 = vadd.f32 0.0, %v6028
        %v6030 = vpop.f32.mrf.mxu0
        %6031 = vmatprep.mubr.f32.mxu0 0.0
        %6032 = vmatmul.mubr.f32.gmra.mxu0 %v5746
        %v6033 = vpop.f32.mrf.mxu0
        %v6034 = vadd.f32 0.0, %v6033
        %v6035 = vpop.f32.mrf.mxu0
        %6036 = vmatprep.mubr.f32.mxu0 0.0
        %6037 = vmatmul.mubr.f32.gmra.mxu0 %v5747
        %v6038 = vpop.f32.mrf.mxu0
        %v6039 = vadd.f32 0.0, %v6038
        %v6040 = vpop.f32.mrf.mxu0
        %6041 = vmatprep.mubr.f32.mxu0 0.0
        %6042 = vmatmul.mubr.f32.gmra.mxu0 %v5748
        %v6043 = vpop.f32.mrf.mxu0
        %v6044 = vadd.f32 0.0, %v6043
        %v6045 = vpop.f32.mrf.mxu0
        %6046 = vmatprep.mubr.f32.mxu0 0.0
        %6047 = vmatmul.mubr.f32.gmra.mxu0 %v5749
        %v6048 = vpop.f32.mrf.mxu0
        %v6049 = vadd.f32 0.0, %v6048
        %v6050 = vpop.f32.mrf.mxu0
        %6051 = vmatprep.mubr.f32.mxu0 0.0
        %6052 = vmatmul.mubr.f32.gmra.mxu0 %v5750
        %v6053 = vpop.f32.mrf.mxu0
        %v6054 = vadd.f32 0.0, %v6053
        %v6055 = vpop.f32.mrf.mxu0
        %6056 = vmatprep.mubr.f32.mxu0 0.0
        %6057 = vmatmul.mubr.f32.gmra.mxu0 %v5751
        %v6058 = vpop.f32.mrf.mxu0
        %v6059 = vadd.f32 0.0, %v6058
        %v6060 = vpop.f32.mrf.mxu0
        %6061 = vmatprep.mubr.f32.mxu0 0.0
        %6062 = vmatmul.mubr.f32.gmra.mxu0 %v5752
        %v6063 = vpop.f32.mrf.mxu0
        %v6064 = vadd.f32 0.0, %v6063
        %v6065 = vpop.f32.mrf.mxu0
        %6066 = vmatprep.mubr.f32.mxu0 0.0
        %6067 = vmatmul.mubr.f32.gmra.mxu0 %v5753
        %v6068 = vpop.f32.mrf.mxu0
        %v6069 = vadd.f32 0.0, %v6068
        %v6070 = vpop.f32.mrf.mxu0
        %6071 = vmatprep.mubr.f32.mxu0 0.0
        %6072 = vmatmul.mubr.f32.gmra.mxu0 %v5754
        %v6073 = vpop.f32.mrf.mxu0
        %v6074 = vadd.f32 0.0, %v6073
        %v6075 = vpop.f32.mrf.mxu0
        %6076 = vmatprep.mubr.f32.mxu0 0.0
        %6077 = vmatmul.mubr.f32.gmra.mxu0 %v5755
        %v6078 = vpop.f32.mrf.mxu0
        %v6079 = vadd.f32 0.0, %v6078
        %v6080 = vpop.f32.mrf.mxu0
        %6081 = vmatprep.mubr.f32.mxu0 0.0
        %6082 = vmatmul.mubr.f32.gmra.mxu0 %v5756
        %v6083 = vpop.f32.mrf.mxu0
        %v6084 = vadd.f32 0.0, %v6083
        %v6085 = vpop.f32.mrf.mxu0
        %6086 = vmatprep.mubr.f32.mxu0 0.0
        %6087 = vmatmul.mubr.f32.gmra.mxu0 %v5757
        %v6088 = vpop.f32.mrf.mxu0
        %v6089 = vadd.f32 0.0, %v6088
        %v6090 = vpop.f32.mrf.mxu0
        %6091 = vmatprep.mubr.f32.mxu0 0.0
        %6092 = vmatmul.mubr.f32.gmra.mxu0 %v5758
        %v6093 = vpop.f32.mrf.mxu0
        %v6094 = vadd.f32 0.0, %v6093
        %v6095 = vpop.f32.mrf.mxu0
        %6096 = vmatprep.mubr.f32.mxu0 0.0
        %6097 = vmatmul.mubr.f32.gmra.mxu0 %v5759
        %v6098 = vpop.f32.mrf.mxu0
        %v6099 = vadd.f32 0.0, %v6098
        %v6100 = vpop.f32.mrf.mxu0
        %6101 = vmatprep.mubr.f32.mxu0 0.0
        %6102 = vmatmul.mubr.f32.gmra.mxu0 %v5760
        %v6103 = vpop.f32.mrf.mxu0
        %v6104 = vadd.f32 0.0, %v6103
        %v6105 = vpop.f32.mrf.mxu0
        %6106 = vmatprep.mubr.f32.mxu0 0.0
        %6107 = vmatmul.mubr.f32.gmra.mxu0 %v5761
        %v6108 = vpop.f32.mrf.mxu0
        %v6109 = vadd.f32 0.0, %v6108
        %v6110 = vpop.f32.mrf.mxu0
        %6111 = vmatprep.mubr.f32.mxu0 0.0
        %6112 = vmatmul.mubr.f32.gmra.mxu0 %v5762
        %v6113 = vpop.f32.mrf.mxu0
        %v6114 = vadd.f32 0.0, %v6113
        %v6115 = vpop.f32.mrf.mxu0
        %6116 = vmatprep.mubr.f32.mxu0 0.0
        %6117 = vmatmul.mubr.f32.gmra.mxu0 %v5763
        %v6118 = vpop.f32.mrf.mxu0
        %v6119 = vadd.f32 0.0, %v6118
        %v6120 = vpop.f32.mrf.mxu0
        %6121 = vmatprep.mubr.f32.mxu0 0.0
        %6122 = vmatmul.mubr.f32.gmra.mxu0 %v5764
        %v6123 = vpop.f32.mrf.mxu0
        %v6124 = vadd.f32 0.0, %v6123
        %v6125 = vpop.f32.mrf.mxu0
        %6126 = vmatprep.mubr.f32.mxu0 0.0
        %6127 = vmatmul.mubr.f32.gmra.mxu0 %v5765
        %v6128 = vpop.f32.mrf.mxu0
        %v6129 = vadd.f32 0.0, %v6128
        %v6130 = vpop.f32.mrf.mxu0
        %6131 = vmatprep.mubr.f32.mxu0 0.0
        %6132 = vmatmul.mubr.f32.gmra.mxu0 %v5766
        %v6133 = vpop.f32.mrf.mxu0
        %v6134 = vadd.f32 0.0, %v6133
        %v6135 = vpop.f32.mrf.mxu0
        %6136 = vmatprep.mubr.f32.mxu0 0.0
        %6137 = vmatmul.mubr.f32.gmra.mxu0 %v5767
        %v6138 = vpop.f32.mrf.mxu0
        %v6139 = vadd.f32 0.0, %v6138
        %v6140 = vpop.f32.mrf.mxu0
        %6141 = vmatprep.mubr.f32.mxu0 0.0
        %6142 = vmatmul.mubr.f32.gmra.mxu0 %v5768
        %v6143 = vpop.f32.mrf.mxu0
        %v6144 = vadd.f32 0.0, %v6143
        %v6145 = vpop.f32.mrf.mxu0
        %6146 = vmatprep.mubr.f32.mxu0 0.0
        %6147 = vmatmul.mubr.f32.gmra.mxu0 %v5769
        %v6148 = vpop.f32.mrf.mxu0
        %v6149 = vadd.f32 0.0, %v6148
        %v6150 = vpop.f32.mrf.mxu0
        %6151 = vmatprep.mubr.f32.mxu0 0.0
        %6152 = vmatmul.mubr.f32.gmra.mxu0 %v5770
        %v6153 = vpop.f32.mrf.mxu0
        %v6154 = vadd.f32 0.0, %v6153
        %v6155 = vpop.f32.mrf.mxu0
        %6156 = vmatprep.mubr.f32.mxu0 0.0
        %6157 = vmatmul.mubr.f32.gmra.mxu0 %v5771
        %v6158 = vpop.f32.mrf.mxu0
        %v6159 = vadd.f32 0.0, %v6158
        %v6160 = vpop.f32.mrf.mxu0
        %6161 = vmatprep.mubr.f32.mxu0 0.0
        %6162 = vmatmul.mubr.f32.gmra.mxu0 %v5772
        %v6163 = vpop.f32.mrf.mxu0
        %v6164 = vadd.f32 0.0, %v6163
        %v6165 = vpop.f32.mrf.mxu0
        %6166 = vmatprep.mubr.f32.mxu0 0.0
        %6167 = vmatmul.mubr.f32.gmra.mxu0 %v5773
        %v6168 = vpop.f32.mrf.mxu0
        %v6169 = vadd.f32 0.0, %v6168
        %v6170 = vpop.f32.mrf.mxu0
        %6171 = vmatprep.mubr.f32.mxu0 0.0
        %6172 = vmatmul.mubr.f32.gmra.mxu0 %v5774
        %v6173 = vpop.f32.mrf.mxu0
        %v6174 = vadd.f32 0.0, %v6173
        %v6175 = vpop.f32.mrf.mxu0
        %6176 = vmatprep.mubr.f32.mxu0 0.0
        %6177 = vmatmul.mubr.f32.gmra.mxu0 %v5775
        %v6178 = vpop.f32.mrf.mxu0
        %v6179 = vadd.f32 0.0, %v6178
        %v6180 = vpop.f32.mrf.mxu0
        %6181 = vdwg.mxu0
        %6182 = vadd.xlane.f32.xlu0 %v5859
        %v6183 = vpop.xlane.xlu0 %6182
        %6184 = vadd.xlane.f32.xlu0 %v5864
        %v6185 = vpop.xlane.xlu0 %6184
        %6186 = vadd.xlane.f32.xlu0 %v5869
        %v6187 = vpop.xlane.xlu0 %6186
        %6188 = vadd.xlane.f32.xlu0 %v5874
        %v6189 = vpop.xlane.xlu0 %6188
        %6190 = vadd.xlane.f32.xlu0 %v5879
        %v6191 = vpop.xlane.xlu0 %6190
        %6192 = vadd.xlane.f32.xlu0 %v5884
        %v6193 = vpop.xlane.xlu0 %6192
        %6194 = vadd.xlane.f32.xlu0 %v5889
        %v6195 = vpop.xlane.xlu0 %6194
        %6196 = vadd.xlane.f32.xlu0 %v5894
        %v6197 = vpop.xlane.xlu0 %6196
        %6198 = vadd.xlane.f32.xlu0 %v5899
        %v6199 = vpop.xlane.xlu0 %6198
        %6200 = vadd.xlane.f32.xlu0 %v5904
        %v6201 = vpop.xlane.xlu0 %6200
        %6202 = vadd.xlane.f32.xlu0 %v5909
        %v6203 = vpop.xlane.xlu0 %6202
        %6204 = vadd.xlane.f32.xlu0 %v5914
        %v6205 = vpop.xlane.xlu0 %6204
        %6206 = vadd.xlane.f32.xlu0 %v5919
        %v6207 = vpop.xlane.xlu0 %6206
        %6208 = vadd.xlane.f32.xlu0 %v5924
        %v6209 = vpop.xlane.xlu0 %6208
        %6210 = vadd.xlane.f32.xlu0 %v5929
        %v6211 = vpop.xlane.xlu0 %6210
        %6212 = vadd.xlane.f32.xlu0 %v5934
        %v6213 = vpop.xlane.xlu0 %6212
        %6214 = vadd.xlane.f32.xlu0 %v5939
        %v6215 = vpop.xlane.xlu0 %6214
        %6216 = vadd.xlane.f32.xlu0 %v5944
        %v6217 = vpop.xlane.xlu0 %6216
        %6218 = vadd.xlane.f32.xlu0 %v5949
        %v6219 = vpop.xlane.xlu0 %6218
        %6220 = vadd.xlane.f32.xlu0 %v5954
        %v6221 = vpop.xlane.xlu0 %6220
        %6222 = vadd.xlane.f32.xlu0 %v5959
        %v6223 = vpop.xlane.xlu0 %6222
        %6224 = vadd.xlane.f32.xlu0 %v5964
        %v6225 = vpop.xlane.xlu0 %6224
        %6226 = vadd.xlane.f32.xlu0 %v5969
        %v6227 = vpop.xlane.xlu0 %6226
        %6228 = vadd.xlane.f32.xlu0 %v5974
        %v6229 = vpop.xlane.xlu0 %6228
        %6230 = vadd.xlane.f32.xlu0 %v5979
        %v6231 = vpop.xlane.xlu0 %6230
        %6232 = vadd.xlane.f32.xlu0 %v5984
        %v6233 = vpop.xlane.xlu0 %6232
        %6234 = vadd.xlane.f32.xlu0 %v5989
        %v6235 = vpop.xlane.xlu0 %6234
        %6236 = vadd.xlane.f32.xlu0 %v5994
        %v6237 = vpop.xlane.xlu0 %6236
        %6238 = vadd.xlane.f32.xlu0 %v5999
        %v6239 = vpop.xlane.xlu0 %6238
        %6240 = vadd.xlane.f32.xlu0 %v6004
        %v6241 = vpop.xlane.xlu0 %6240
        %6242 = vadd.xlane.f32.xlu0 %v6009
        %v6243 = vpop.xlane.xlu0 %6242
        %6244 = vadd.xlane.f32.xlu0 %v6014
        %v6245 = vpop.xlane.xlu0 %6244
        %6246 = vadd.xlane.f32.xlu0 %v6019
        %v6247 = vpop.xlane.xlu0 %6246
        %6248 = vadd.xlane.f32.xlu0 %v6024
        %v6249 = vpop.xlane.xlu0 %6248
        %6250 = vadd.xlane.f32.xlu0 %v6029
        %v6251 = vpop.xlane.xlu0 %6250
        %6252 = vadd.xlane.f32.xlu0 %v6034
        %v6253 = vpop.xlane.xlu0 %6252
        %6254 = vadd.xlane.f32.xlu0 %v6039
        %v6255 = vpop.xlane.xlu0 %6254
        %6256 = vadd.xlane.f32.xlu0 %v6044
        %v6257 = vpop.xlane.xlu0 %6256
        %6258 = vadd.xlane.f32.xlu0 %v6049
        %v6259 = vpop.xlane.xlu0 %6258
        %6260 = vadd.xlane.f32.xlu0 %v6054
        %v6261 = vpop.xlane.xlu0 %6260
        %6262 = vadd.xlane.f32.xlu0 %v6059
        %v6263 = vpop.xlane.xlu0 %6262
        %6264 = vadd.xlane.f32.xlu0 %v6064
        %v6265 = vpop.xlane.xlu0 %6264
        %6266 = vadd.xlane.f32.xlu0 %v6069
        %v6267 = vpop.xlane.xlu0 %6266
        %6268 = vadd.xlane.f32.xlu0 %v6074
        %v6269 = vpop.xlane.xlu0 %6268
        %6270 = vadd.xlane.f32.xlu0 %v6079
        %v6271 = vpop.xlane.xlu0 %6270
        %6272 = vadd.xlane.f32.xlu0 %v6084
        %v6273 = vpop.xlane.xlu0 %6272
        %6274 = vadd.xlane.f32.xlu0 %v6089
        %v6275 = vpop.xlane.xlu0 %6274
        %6276 = vadd.xlane.f32.xlu0 %v6094
        %v6277 = vpop.xlane.xlu0 %6276
        %6278 = vadd.xlane.f32.xlu0 %v6099
        %v6279 = vpop.xlane.xlu0 %6278
        %6280 = vadd.xlane.f32.xlu0 %v6104
        %v6281 = vpop.xlane.xlu0 %6280
        %6282 = vadd.xlane.f32.xlu0 %v6109
        %v6283 = vpop.xlane.xlu0 %6282
        %6284 = vadd.xlane.f32.xlu0 %v6114
        %v6285 = vpop.xlane.xlu0 %6284
        %6286 = vadd.xlane.f32.xlu0 %v6119
        %v6287 = vpop.xlane.xlu0 %6286
        %6288 = vadd.xlane.f32.xlu0 %v6124
        %v6289 = vpop.xlane.xlu0 %6288
        %6290 = vadd.xlane.f32.xlu0 %v6129
        %v6291 = vpop.xlane.xlu0 %6290
        %6292 = vadd.xlane.f32.xlu0 %v6134
        %v6293 = vpop.xlane.xlu0 %6292
        %6294 = vadd.xlane.f32.xlu0 %v6139
        %v6295 = vpop.xlane.xlu0 %6294
        %6296 = vadd.xlane.f32.xlu0 %v6144
        %v6297 = vpop.xlane.xlu0 %6296
        %6298 = vadd.xlane.f32.xlu0 %v6149
        %v6299 = vpop.xlane.xlu0 %6298
        %6300 = vadd.xlane.f32.xlu0 %v6154
        %v6301 = vpop.xlane.xlu0 %6300
        %6302 = vadd.xlane.f32.xlu0 %v6159
        %v6303 = vpop.xlane.xlu0 %6302
        %6304 = vadd.xlane.f32.xlu0 %v6164
        %v6305 = vpop.xlane.xlu0 %6304
        %6306 = vadd.xlane.f32.xlu0 %v6169
        %v6307 = vpop.xlane.xlu0 %6306
        %6308 = vadd.xlane.f32.xlu0 %v6174
        %v6309 = vpop.xlane.xlu0 %6308
        %6310 = vadd.xlane.f32.xlu0 %v6179
        %v6311 = vpop.xlane.xlu0 %6310
        %v6312 = vmul.f32 %v5859, %v5859
        %v6313 = vmul.f32 %v5864, %v5864
        %v6314 = vmul.f32 %v5869, %v5869
        %v6315 = vmul.f32 %v5874, %v5874
        %v6316 = vmul.f32 %v5879, %v5879
        %v6317 = vmul.f32 %v5884, %v5884
        %v6318 = vmul.f32 %v5889, %v5889
        %v6319 = vmul.f32 %v5894, %v5894
        %v6320 = vmul.f32 %v5899, %v5899
        %v6321 = vmul.f32 %v5904, %v5904
        %v6322 = vmul.f32 %v5909, %v5909
        %v6323 = vmul.f32 %v5914, %v5914
        %v6324 = vmul.f32 %v5919, %v5919
        %v6325 = vmul.f32 %v5924, %v5924
        %v6326 = vmul.f32 %v5929, %v5929
        %v6327 = vmul.f32 %v5934, %v5934
        %v6328 = vmul.f32 %v5939, %v5939
        %v6329 = vmul.f32 %v5944, %v5944
        %v6330 = vmul.f32 %v5949, %v5949
        %v6331 = vmul.f32 %v5954, %v5954
        %v6332 = vmul.f32 %v5959, %v5959
        %v6333 = vmul.f32 %v5964, %v5964
        %v6334 = vmul.f32 %v5969, %v5969
        %v6335 = vmul.f32 %v5974, %v5974
        %v6336 = vmul.f32 %v5979, %v5979
        %v6337 = vmul.f32 %v5984, %v5984
        %v6338 = vmul.f32 %v5989, %v5989
        %v6339 = vmul.f32 %v5994, %v5994
        %v6340 = vmul.f32 %v5999, %v5999
        %v6341 = vmul.f32 %v6004, %v6004
        %v6342 = vmul.f32 %v6009, %v6009
        %v6343 = vmul.f32 %v6014, %v6014
        %v6344 = vmul.f32 %v6019, %v6019
        %v6345 = vmul.f32 %v6024, %v6024
        %v6346 = vmul.f32 %v6029, %v6029
        %v6347 = vmul.f32 %v6034, %v6034
        %v6348 = vmul.f32 %v6039, %v6039
        %v6349 = vmul.f32 %v6044, %v6044
        %v6350 = vmul.f32 %v6049, %v6049
        %v6351 = vmul.f32 %v6054, %v6054
        %v6352 = vmul.f32 %v6059, %v6059
        %v6353 = vmul.f32 %v6064, %v6064
        %v6354 = vmul.f32 %v6069, %v6069
        %v6355 = vmul.f32 %v6074, %v6074
        %v6356 = vmul.f32 %v6079, %v6079
        %v6357 = vmul.f32 %v6084, %v6084
        %v6358 = vmul.f32 %v6089, %v6089
        %v6359 = vmul.f32 %v6094, %v6094
        %v6360 = vmul.f32 %v6099, %v6099
        %v6361 = vmul.f32 %v6104, %v6104
        %v6362 = vmul.f32 %v6109, %v6109
        %v6363 = vmul.f32 %v6114, %v6114
        %v6364 = vmul.f32 %v6119, %v6119
        %v6365 = vmul.f32 %v6124, %v6124
        %v6366 = vmul.f32 %v6129, %v6129
        %v6367 = vmul.f32 %v6134, %v6134
        %v6368 = vmul.f32 %v6139, %v6139
        %v6369 = vmul.f32 %v6144, %v6144
        %v6370 = vmul.f32 %v6149, %v6149
        %v6371 = vmul.f32 %v6154, %v6154
        %v6372 = vmul.f32 %v6159, %v6159
        %v6373 = vmul.f32 %v6164, %v6164
        %v6374 = vmul.f32 %v6169, %v6169
        %v6375 = vmul.f32 %v6174, %v6174
        %v6376 = vmul.f32 %v6179, %v6179
        %6377 = vadd.xlane.f32.xlu0 %v6312
        %v6378 = vpop.xlane.xlu0 %6377
        %6379 = vadd.xlane.f32.xlu0 %v6313
        %v6380 = vpop.xlane.xlu0 %6379
        %6381 = vadd.xlane.f32.xlu0 %v6314
        %v6382 = vpop.xlane.xlu0 %6381
        %6383 = vadd.xlane.f32.xlu0 %v6315
        %v6384 = vpop.xlane.xlu0 %6383
        %6385 = vadd.xlane.f32.xlu0 %v6316
        %v6386 = vpop.xlane.xlu0 %6385
        %6387 = vadd.xlane.f32.xlu0 %v6317
        %v6388 = vpop.xlane.xlu0 %6387
        %6389 = vadd.xlane.f32.xlu0 %v6318
        %v6390 = vpop.xlane.xlu0 %6389
        %6391 = vadd.xlane.f32.xlu0 %v6319
        %v6392 = vpop.xlane.xlu0 %6391
        %6393 = vadd.xlane.f32.xlu0 %v6320
        %v6394 = vpop.xlane.xlu0 %6393
        %6395 = vadd.xlane.f32.xlu0 %v6321
        %v6396 = vpop.xlane.xlu0 %6395
        %6397 = vadd.xlane.f32.xlu0 %v6322
        %v6398 = vpop.xlane.xlu0 %6397
        %6399 = vadd.xlane.f32.xlu0 %v6323
        %v6400 = vpop.xlane.xlu0 %6399
        %6401 = vadd.xlane.f32.xlu0 %v6324
        %v6402 = vpop.xlane.xlu0 %6401
        %6403 = vadd.xlane.f32.xlu0 %v6325
        %v6404 = vpop.xlane.xlu0 %6403
        %6405 = vadd.xlane.f32.xlu0 %v6326
        %v6406 = vpop.xlane.xlu0 %6405
        %6407 = vadd.xlane.f32.xlu0 %v6327
        %v6408 = vpop.xlane.xlu0 %6407
        %6409 = vadd.xlane.f32.xlu0 %v6328
        %v6410 = vpop.xlane.xlu0 %6409
        %6411 = vadd.xlane.f32.xlu0 %v6329
        %v6412 = vpop.xlane.xlu0 %6411
        %6413 = vadd.xlane.f32.xlu0 %v6330
        %v6414 = vpop.xlane.xlu0 %6413
        %6415 = vadd.xlane.f32.xlu0 %v6331
        %v6416 = vpop.xlane.xlu0 %6415
        %6417 = vadd.xlane.f32.xlu0 %v6332
        %v6418 = vpop.xlane.xlu0 %6417
        %6419 = vadd.xlane.f32.xlu0 %v6333
        %v6420 = vpop.xlane.xlu0 %6419
        %6421 = vadd.xlane.f32.xlu0 %v6334
        %v6422 = vpop.xlane.xlu0 %6421
        %6423 = vadd.xlane.f32.xlu0 %v6335
        %v6424 = vpop.xlane.xlu0 %6423
        %6425 = vadd.xlane.f32.xlu0 %v6336
        %v6426 = vpop.xlane.xlu0 %6425
        %6427 = vadd.xlane.f32.xlu0 %v6337
        %v6428 = vpop.xlane.xlu0 %6427
        %6429 = vadd.xlane.f32.xlu0 %v6338
        %v6430 = vpop.xlane.xlu0 %6429
        %6431 = vadd.xlane.f32.xlu0 %v6339
        %v6432 = vpop.xlane.xlu0 %6431
        %6433 = vadd.xlane.f32.xlu0 %v6340
        %v6434 = vpop.xlane.xlu0 %6433
        %6435 = vadd.xlane.f32.xlu0 %v6341
        %v6436 = vpop.xlane.xlu0 %6435
        %6437 = vadd.xlane.f32.xlu0 %v6342
        %v6438 = vpop.xlane.xlu0 %6437
        %6439 = vadd.xlane.f32.xlu0 %v6343
        %v6440 = vpop.xlane.xlu0 %6439
        %6441 = vadd.xlane.f32.xlu0 %v6344
        %v6442 = vpop.xlane.xlu0 %6441
        %6443 = vadd.xlane.f32.xlu0 %v6345
        %v6444 = vpop.xlane.xlu0 %6443
        %6445 = vadd.xlane.f32.xlu0 %v6346
        %v6446 = vpop.xlane.xlu0 %6445
        %6447 = vadd.xlane.f32.xlu0 %v6347
        %v6448 = vpop.xlane.xlu0 %6447
        %6449 = vadd.xlane.f32.xlu0 %v6348
        %v6450 = vpop.xlane.xlu0 %6449
        %6451 = vadd.xlane.f32.xlu0 %v6349
        %v6452 = vpop.xlane.xlu0 %6451
        %6453 = vadd.xlane.f32.xlu0 %v6350
        %v6454 = vpop.xlane.xlu0 %6453
        %6455 = vadd.xlane.f32.xlu0 %v6351
        %v6456 = vpop.xlane.xlu0 %6455
        %6457 = vadd.xlane.f32.xlu0 %v6352
        %v6458 = vpop.xlane.xlu0 %6457
        %6459 = vadd.xlane.f32.xlu0 %v6353
        %v6460 = vpop.xlane.xlu0 %6459
        %6461 = vadd.xlane.f32.xlu0 %v6354
        %v6462 = vpop.xlane.xlu0 %6461
        %6463 = vadd.xlane.f32.xlu0 %v6355
        %v6464 = vpop.xlane.xlu0 %6463
        %6465 = vadd.xlane.f32.xlu0 %v6356
        %v6466 = vpop.xlane.xlu0 %6465
        %6467 = vadd.xlane.f32.xlu0 %v6357
        %v6468 = vpop.xlane.xlu0 %6467
        %6469 = vadd.xlane.f32.xlu0 %v6358
        %v6470 = vpop.xlane.xlu0 %6469
        %6471 = vadd.xlane.f32.xlu0 %v6359
        %v6472 = vpop.xlane.xlu0 %6471
        %6473 = vadd.xlane.f32.xlu0 %v6360
        %v6474 = vpop.xlane.xlu0 %6473
        %6475 = vadd.xlane.f32.xlu0 %v6361
        %v6476 = vpop.xlane.xlu0 %6475
        %6477 = vadd.xlane.f32.xlu0 %v6362
        %v6478 = vpop.xlane.xlu0 %6477
        %6479 = vadd.xlane.f32.xlu0 %v6363
        %v6480 = vpop.xlane.xlu0 %6479
        %6481 = vadd.xlane.f32.xlu0 %v6364
        %v6482 = vpop.xlane.xlu0 %6481
        %6483 = vadd.xlane.f32.xlu0 %v6365
        %v6484 = vpop.xlane.xlu0 %6483
        %6485 = vadd.xlane.f32.xlu0 %v6366
        %v6486 = vpop.xlane.xlu0 %6485
        %6487 = vadd.xlane.f32.xlu0 %v6367
        %v6488 = vpop.xlane.xlu0 %6487
        %6489 = vadd.xlane.f32.xlu0 %v6368
        %v6490 = vpop.xlane.xlu0 %6489
        %6491 = vadd.xlane.f32.xlu0 %v6369
        %v6492 = vpop.xlane.xlu0 %6491
        %6493 = vadd.xlane.f32.xlu0 %v6370
        %v6494 = vpop.xlane.xlu0 %6493
        %6495 = vadd.xlane.f32.xlu0 %v6371
        %v6496 = vpop.xlane.xlu0 %6495
        %6497 = vadd.xlane.f32.xlu0 %v6372
        %v6498 = vpop.xlane.xlu0 %6497
        %6499 = vadd.xlane.f32.xlu0 %v6373
        %v6500 = vpop.xlane.xlu0 %6499
        %6501 = vadd.xlane.f32.xlu0 %v6374
        %v6502 = vpop.xlane.xlu0 %6501
        %6503 = vadd.xlane.f32.xlu0 %v6375
        %v6504 = vpop.xlane.xlu0 %6503
        %6505 = vadd.xlane.f32.xlu0 %v6376
        %v6506 = vpop.xlane.xlu0 %6505
        %v6507 = vmul.f32 %v6183, 0.0078125
        %v6508 = vmul.f32 %v6185, 0.0078125
        %v6509 = vmul.f32 %v6187, 0.0078125
        %v6510 = vmul.f32 %v6189, 0.0078125
        %v6511 = vmul.f32 %v6191, 0.0078125
        %v6512 = vmul.f32 %v6193, 0.0078125
        %v6513 = vmul.f32 %v6195, 0.0078125
        %v6514 = vmul.f32 %v6197, 0.0078125
        %v6515 = vmul.f32 %v6199, 0.0078125
        %v6516 = vmul.f32 %v6201, 0.0078125
        %v6517 = vmul.f32 %v6203, 0.0078125
        %v6518 = vmul.f32 %v6205, 0.0078125
        %v6519 = vmul.f32 %v6207, 0.0078125
        %v6520 = vmul.f32 %v6209, 0.0078125
        %v6521 = vmul.f32 %v6211, 0.0078125
        %v6522 = vmul.f32 %v6213, 0.0078125
        %v6523 = vmul.f32 %v6215, 0.0078125
        %v6524 = vmul.f32 %v6217, 0.0078125
        %v6525 = vmul.f32 %v6219, 0.0078125
        %v6526 = vmul.f32 %v6221, 0.0078125
        %v6527 = vmul.f32 %v6223, 0.0078125
        %v6528 = vmul.f32 %v6225, 0.0078125
        %v6529 = vmul.f32 %v6227, 0.0078125
        %v6530 = vmul.f32 %v6229, 0.0078125
        %v6531 = vmul.f32 %v6231, 0.0078125
        %v6532 = vmul.f32 %v6233, 0.0078125
        %v6533 = vmul.f32 %v6235, 0.0078125
        %v6534 = vmul.f32 %v6237, 0.0078125
        %v6535 = vmul.f32 %v6239, 0.0078125
        %v6536 = vmul.f32 %v6241, 0.0078125
        %v6537 = vmul.f32 %v6243, 0.0078125
        %v6538 = vmul.f32 %v6245, 0.0078125
        %v6539 = vmul.f32 %v6247, 0.0078125
        %v6540 = vmul.f32 %v6249, 0.0078125
        %v6541 = vmul.f32 %v6251, 0.0078125
        %v6542 = vmul.f32 %v6253, 0.0078125
        %v6543 = vmul.f32 %v6255, 0.0078125
        %v6544 = vmul.f32 %v6257, 0.0078125
        %v6545 = vmul.f32 %v6259, 0.0078125
        %v6546 = vmul.f32 %v6261, 0.0078125
        %v6547 = vmul.f32 %v6263, 0.0078125
        %v6548 = vmul.f32 %v6265, 0.0078125
        %v6549 = vmul.f32 %v6267, 0.0078125
        %v6550 = vmul.f32 %v6269, 0.0078125
        %v6551 = vmul.f32 %v6271, 0.0078125
        %v6552 = vmul.f32 %v6273, 0.0078125
        %v6553 = vmul.f32 %v6275, 0.0078125
        %v6554 = vmul.f32 %v6277, 0.0078125
        %v6555 = vmul.f32 %v6279, 0.0078125
        %v6556 = vmul.f32 %v6281, 0.0078125
        %v6557 = vmul.f32 %v6283, 0.0078125
        %v6558 = vmul.f32 %v6285, 0.0078125
        %v6559 = vmul.f32 %v6287, 0.0078125
        %v6560 = vmul.f32 %v6289, 0.0078125
        %v6561 = vmul.f32 %v6291, 0.0078125
        %v6562 = vmul.f32 %v6293, 0.0078125
        %v6563 = vmul.f32 %v6295, 0.0078125
        %v6564 = vmul.f32 %v6297, 0.0078125
        %v6565 = vmul.f32 %v6299, 0.0078125
        %v6566 = vmul.f32 %v6301, 0.0078125
        %v6567 = vmul.f32 %v6303, 0.0078125
        %v6568 = vmul.f32 %v6305, 0.0078125
        %v6569 = vmul.f32 %v6307, 0.0078125
        %v6570 = vmul.f32 %v6309, 0.0078125
        %v6571 = vmul.f32 %v6311, 0.0078125
        %v6572 = vmul.f32 %v6378, 0.0078125
        %v6573 = vmul.f32 %v6380, 0.0078125
        %v6574 = vmul.f32 %v6382, 0.0078125
        %v6575 = vmul.f32 %v6384, 0.0078125
        %v6576 = vmul.f32 %v6386, 0.0078125
        %v6577 = vmul.f32 %v6388, 0.0078125
        %v6578 = vmul.f32 %v6390, 0.0078125
        %v6579 = vmul.f32 %v6392, 0.0078125
        %v6580 = vmul.f32 %v6394, 0.0078125
        %v6581 = vmul.f32 %v6396, 0.0078125
        %v6582 = vmul.f32 %v6398, 0.0078125
        %v6583 = vmul.f32 %v6400, 0.0078125
        %v6584 = vmul.f32 %v6402, 0.0078125
        %v6585 = vmul.f32 %v6404, 0.0078125
        %v6586 = vmul.f32 %v6406, 0.0078125
        %v6587 = vmul.f32 %v6408, 0.0078125
        %v6588 = vmul.f32 %v6410, 0.0078125
        %v6589 = vmul.f32 %v6412, 0.0078125
        %v6590 = vmul.f32 %v6414, 0.0078125
        %v6591 = vmul.f32 %v6416, 0.0078125
        %v6592 = vmul.f32 %v6418, 0.0078125
        %v6593 = vmul.f32 %v6420, 0.0078125
        %v6594 = vmul.f32 %v6422, 0.0078125
        %v6595 = vmul.f32 %v6424, 0.0078125
        %v6596 = vmul.f32 %v6426, 0.0078125
        %v6597 = vmul.f32 %v6428, 0.0078125
        %v6598 = vmul.f32 %v6430, 0.0078125
        %v6599 = vmul.f32 %v6432, 0.0078125
        %v6600 = vmul.f32 %v6434, 0.0078125
        %v6601 = vmul.f32 %v6436, 0.0078125
        %v6602 = vmul.f32 %v6438, 0.0078125
        %v6603 = vmul.f32 %v6440, 0.0078125
        %v6604 = vmul.f32 %v6442, 0.0078125
        %v6605 = vmul.f32 %v6444, 0.0078125
        %v6606 = vmul.f32 %v6446, 0.0078125
        %v6607 = vmul.f32 %v6448, 0.0078125
        %v6608 = vmul.f32 %v6450, 0.0078125
        %v6609 = vmul.f32 %v6452, 0.0078125
        %v6610 = vmul.f32 %v6454, 0.0078125
        %v6611 = vmul.f32 %v6456, 0.0078125
        %v6612 = vmul.f32 %v6458, 0.0078125
        %v6613 = vmul.f32 %v6460, 0.0078125
        %v6614 = vmul.f32 %v6462, 0.0078125
        %v6615 = vmul.f32 %v6464, 0.0078125
        %v6616 = vmul.f32 %v6466, 0.0078125
        %v6617 = vmul.f32 %v6468, 0.0078125
        %v6618 = vmul.f32 %v6470, 0.0078125
        %v6619 = vmul.f32 %v6472, 0.0078125
        %v6620 = vmul.f32 %v6474, 0.0078125
        %v6621 = vmul.f32 %v6476, 0.0078125
        %v6622 = vmul.f32 %v6478, 0.0078125
        %v6623 = vmul.f32 %v6480, 0.0078125
        %v6624 = vmul.f32 %v6482, 0.0078125
        %v6625 = vmul.f32 %v6484, 0.0078125
        %v6626 = vmul.f32 %v6486, 0.0078125
        %v6627 = vmul.f32 %v6488, 0.0078125
        %v6628 = vmul.f32 %v6490, 0.0078125
        %v6629 = vmul.f32 %v6492, 0.0078125
        %v6630 = vmul.f32 %v6494, 0.0078125
        %v6631 = vmul.f32 %v6496, 0.0078125
        %v6632 = vmul.f32 %v6498, 0.0078125
        %v6633 = vmul.f32 %v6500, 0.0078125
        %v6634 = vmul.f32 %v6502, 0.0078125
        %v6635 = vmul.f32 %v6504, 0.0078125
        %v6636 = vmul.f32 %v6506, 0.0078125
        %v6637 = vmul.f32 %v6507, %v6507
        %v6638 = vmul.f32 %v6508, %v6508
        %v6639 = vmul.f32 %v6509, %v6509
        %v6640 = vmul.f32 %v6510, %v6510
        %v6641 = vmul.f32 %v6511, %v6511
        %v6642 = vmul.f32 %v6512, %v6512
        %v6643 = vmul.f32 %v6513, %v6513
        %v6644 = vmul.f32 %v6514, %v6514
        %v6645 = vmul.f32 %v6515, %v6515
        %v6646 = vmul.f32 %v6516, %v6516
        %v6647 = vmul.f32 %v6517, %v6517
        %v6648 = vmul.f32 %v6518, %v6518
        %v6649 = vmul.f32 %v6519, %v6519
        %v6650 = vmul.f32 %v6520, %v6520
        %v6651 = vmul.f32 %v6521, %v6521
        %v6652 = vmul.f32 %v6522, %v6522
        %v6653 = vmul.f32 %v6523, %v6523
        %v6654 = vmul.f32 %v6524, %v6524
        %v6655 = vmul.f32 %v6525, %v6525
        %v6656 = vmul.f32 %v6526, %v6526
        %v6657 = vmul.f32 %v6527, %v6527
        %v6658 = vmul.f32 %v6528, %v6528
        %v6659 = vmul.f32 %v6529, %v6529
        %v6660 = vmul.f32 %v6530, %v6530
        %v6661 = vmul.f32 %v6531, %v6531
        %v6662 = vmul.f32 %v6532, %v6532
        %v6663 = vmul.f32 %v6533, %v6533
        %v6664 = vmul.f32 %v6534, %v6534
        %v6665 = vmul.f32 %v6535, %v6535
        %v6666 = vmul.f32 %v6536, %v6536
        %v6667 = vmul.f32 %v6537, %v6537
        %v6668 = vmul.f32 %v6538, %v6538
        %v6669 = vmul.f32 %v6539, %v6539
        %v6670 = vmul.f32 %v6540, %v6540
        %v6671 = vmul.f32 %v6541, %v6541
        %v6672 = vmul.f32 %v6542, %v6542
        %v6673 = vmul.f32 %v6543, %v6543
        %v6674 = vmul.f32 %v6544, %v6544
        %v6675 = vmul.f32 %v6545, %v6545
        %v6676 = vmul.f32 %v6546, %v6546
        %v6677 = vmul.f32 %v6547, %v6547
        %v6678 = vmul.f32 %v6548, %v6548
        %v6679 = vmul.f32 %v6549, %v6549
        %v6680 = vmul.f32 %v6550, %v6550
        %v6681 = vmul.f32 %v6551, %v6551
        %v6682 = vmul.f32 %v6552, %v6552
        %v6683 = vmul.f32 %v6553, %v6553
        %v6684 = vmul.f32 %v6554, %v6554
        %v6685 = vmul.f32 %v6555, %v6555
        %v6686 = vmul.f32 %v6556, %v6556
        %v6687 = vmul.f32 %v6557, %v6557
        %v6688 = vmul.f32 %v6558, %v6558
        %v6689 = vmul.f32 %v6559, %v6559
        %v6690 = vmul.f32 %v6560, %v6560
        %v6691 = vmul.f32 %v6561, %v6561
        %v6692 = vmul.f32 %v6562, %v6562
        %v6693 = vmul.f32 %v6563, %v6563
        %v6694 = vmul.f32 %v6564, %v6564
        %v6695 = vmul.f32 %v6565, %v6565
        %v6696 = vmul.f32 %v6566, %v6566
        %v6697 = vmul.f32 %v6567, %v6567
        %v6698 = vmul.f32 %v6568, %v6568
        %v6699 = vmul.f32 %v6569, %v6569
        %v6700 = vmul.f32 %v6570, %v6570
        %v6701 = vmul.f32 %v6571, %v6571
        %v6702 = vsub.f32 %v6572, %v6637
        %v6703 = vsub.f32 %v6573, %v6638
        %v6704 = vsub.f32 %v6574, %v6639
        %v6705 = vsub.f32 %v6575, %v6640
        %v6706 = vsub.f32 %v6576, %v6641
        %v6707 = vsub.f32 %v6577, %v6642
        %v6708 = vsub.f32 %v6578, %v6643
        %v6709 = vsub.f32 %v6579, %v6644
        %v6710 = vsub.f32 %v6580, %v6645
        %v6711 = vsub.f32 %v6581, %v6646
        %v6712 = vsub.f32 %v6582, %v6647
        %v6713 = vsub.f32 %v6583, %v6648
        %v6714 = vsub.f32 %v6584, %v6649
        %v6715 = vsub.f32 %v6585, %v6650
        %v6716 = vsub.f32 %v6586, %v6651
        %v6717 = vsub.f32 %v6587, %v6652
        %v6718 = vsub.f32 %v6588, %v6653
        %v6719 = vsub.f32 %v6589, %v6654
        %v6720 = vsub.f32 %v6590, %v6655
        %v6721 = vsub.f32 %v6591, %v6656
        %v6722 = vsub.f32 %v6592, %v6657
        %v6723 = vsub.f32 %v6593, %v6658
        %v6724 = vsub.f32 %v6594, %v6659
        %v6725 = vsub.f32 %v6595, %v6660
        %v6726 = vsub.f32 %v6596, %v6661
        %v6727 = vsub.f32 %v6597, %v6662
        %v6728 = vsub.f32 %v6598, %v6663
        %v6729 = vsub.f32 %v6599, %v6664
        %v6730 = vsub.f32 %v6600, %v6665
        %v6731 = vsub.f32 %v6601, %v6666
        %v6732 = vsub.f32 %v6602, %v6667
        %v6733 = vsub.f32 %v6603, %v6668
        %v6734 = vsub.f32 %v6604, %v6669
        %v6735 = vsub.f32 %v6605, %v6670
        %v6736 = vsub.f32 %v6606, %v6671
        %v6737 = vsub.f32 %v6607, %v6672
        %v6738 = vsub.f32 %v6608, %v6673
        %v6739 = vsub.f32 %v6609, %v6674
        %v6740 = vsub.f32 %v6610, %v6675
        %v6741 = vsub.f32 %v6611, %v6676
        %v6742 = vsub.f32 %v6612, %v6677
        %v6743 = vsub.f32 %v6613, %v6678
        %v6744 = vsub.f32 %v6614, %v6679
        %v6745 = vsub.f32 %v6615, %v6680
        %v6746 = vsub.f32 %v6616, %v6681
        %v6747 = vsub.f32 %v6617, %v6682
        %v6748 = vsub.f32 %v6618, %v6683
        %v6749 = vsub.f32 %v6619, %v6684
        %v6750 = vsub.f32 %v6620, %v6685
        %v6751 = vsub.f32 %v6621, %v6686
        %v6752 = vsub.f32 %v6622, %v6687
        %v6753 = vsub.f32 %v6623, %v6688
        %v6754 = vsub.f32 %v6624, %v6689
        %v6755 = vsub.f32 %v6625, %v6690
        %v6756 = vsub.f32 %v6626, %v6691
        %v6757 = vsub.f32 %v6627, %v6692
        %v6758 = vsub.f32 %v6628, %v6693
        %v6759 = vsub.f32 %v6629, %v6694
        %v6760 = vsub.f32 %v6630, %v6695
        %v6761 = vsub.f32 %v6631, %v6696
        %v6762 = vsub.f32 %v6632, %v6697
        %v6763 = vsub.f32 %v6633, %v6698
        %v6764 = vsub.f32 %v6634, %v6699
        %v6765 = vsub.f32 %v6635, %v6700
        %v6766 = vsub.f32 %v6636, %v6701
        %v6767 = vadd.f32 %v6702, 1e-12
        %v6768 = vadd.f32 %v6703, 1e-12
        %v6769 = vadd.f32 %v6704, 1e-12
        %v6770 = vadd.f32 %v6705, 1e-12
        %v6771 = vadd.f32 %v6706, 1e-12
        %v6772 = vadd.f32 %v6707, 1e-12
        %v6773 = vadd.f32 %v6708, 1e-12
        %v6774 = vadd.f32 %v6709, 1e-12
        %v6775 = vadd.f32 %v6710, 1e-12
        %v6776 = vadd.f32 %v6711, 1e-12
        %v6777 = vadd.f32 %v6712, 1e-12
        %v6778 = vadd.f32 %v6713, 1e-12
        %v6779 = vadd.f32 %v6714, 1e-12
        %v6780 = vadd.f32 %v6715, 1e-12
        %v6781 = vadd.f32 %v6716, 1e-12
        %v6782 = vadd.f32 %v6717, 1e-12
        %v6783 = vadd.f32 %v6718, 1e-12
        %v6784 = vadd.f32 %v6719, 1e-12
        %v6785 = vadd.f32 %v6720, 1e-12
        %v6786 = vadd.f32 %v6721, 1e-12
        %v6787 = vadd.f32 %v6722, 1e-12
        %v6788 = vadd.f32 %v6723, 1e-12
        %v6789 = vadd.f32 %v6724, 1e-12
        %v6790 = vadd.f32 %v6725, 1e-12
        %v6791 = vadd.f32 %v6726, 1e-12
        %v6792 = vadd.f32 %v6727, 1e-12
        %v6793 = vadd.f32 %v6728, 1e-12
        %v6794 = vadd.f32 %v6729, 1e-12
        %v6795 = vadd.f32 %v6730, 1e-12
        %v6796 = vadd.f32 %v6731, 1e-12
        %v6797 = vadd.f32 %v6732, 1e-12
        %v6798 = vadd.f32 %v6733, 1e-12
        %v6799 = vadd.f32 %v6734, 1e-12
        %v6800 = vadd.f32 %v6735, 1e-12
        %v6801 = vadd.f32 %v6736, 1e-12
        %v6802 = vadd.f32 %v6737, 1e-12
        %v6803 = vadd.f32 %v6738, 1e-12
        %v6804 = vadd.f32 %v6739, 1e-12
        %v6805 = vadd.f32 %v6740, 1e-12
        %v6806 = vadd.f32 %v6741, 1e-12
        %v6807 = vadd.f32 %v6742, 1e-12
        %v6808 = vadd.f32 %v6743, 1e-12
        %v6809 = vadd.f32 %v6744, 1e-12
        %v6810 = vadd.f32 %v6745, 1e-12
        %v6811 = vadd.f32 %v6746, 1e-12
        %v6812 = vadd.f32 %v6747, 1e-12
        %v6813 = vadd.f32 %v6748, 1e-12
        %v6814 = vadd.f32 %v6749, 1e-12
        %v6815 = vadd.f32 %v6750, 1e-12
        %v6816 = vadd.f32 %v6751, 1e-12
        %v6817 = vadd.f32 %v6752, 1e-12
        %v6818 = vadd.f32 %v6753, 1e-12
        %v6819 = vadd.f32 %v6754, 1e-12
        %v6820 = vadd.f32 %v6755, 1e-12
        %v6821 = vadd.f32 %v6756, 1e-12
        %v6822 = vadd.f32 %v6757, 1e-12
        %v6823 = vadd.f32 %v6758, 1e-12
        %v6824 = vadd.f32 %v6759, 1e-12
        %v6825 = vadd.f32 %v6760, 1e-12
        %v6826 = vadd.f32 %v6761, 1e-12
        %v6827 = vadd.f32 %v6762, 1e-12
        %v6828 = vadd.f32 %v6763, 1e-12
        %v6829 = vadd.f32 %v6764, 1e-12
        %v6830 = vadd.f32 %v6765, 1e-12
        %v6831 = vadd.f32 %v6766, 1e-12
        %v6832 = vrsqrt.pop %v6767
        %v6833 = vrsqrt.pop %v6768
        %v6834 = vrsqrt.pop %v6769
        %v6835 = vrsqrt.pop %v6770
        %v6836 = vrsqrt.pop %v6771
        %v6837 = vrsqrt.pop %v6772
        %v6838 = vrsqrt.pop %v6773
        %v6839 = vrsqrt.pop %v6774
        %v6840 = vrsqrt.pop %v6775
        %v6841 = vrsqrt.pop %v6776
        %v6842 = vrsqrt.pop %v6777
        %v6843 = vrsqrt.pop %v6778
        %v6844 = vrsqrt.pop %v6779
        %v6845 = vrsqrt.pop %v6780
        %v6846 = vrsqrt.pop %v6781
        %v6847 = vrsqrt.pop %v6782
        %v6848 = vrsqrt.pop %v6783
        %v6849 = vrsqrt.pop %v6784
        %v6850 = vrsqrt.pop %v6785
        %v6851 = vrsqrt.pop %v6786
        %v6852 = vrsqrt.pop %v6787
        %v6853 = vrsqrt.pop %v6788
        %v6854 = vrsqrt.pop %v6789
        %v6855 = vrsqrt.pop %v6790
        %v6856 = vrsqrt.pop %v6791
        %v6857 = vrsqrt.pop %v6792
        %v6858 = vrsqrt.pop %v6793
        %v6859 = vrsqrt.pop %v6794
        %v6860 = vrsqrt.pop %v6795
        %v6861 = vrsqrt.pop %v6796
        %v6862 = vrsqrt.pop %v6797
        %v6863 = vrsqrt.pop %v6798
        %v6864 = vrsqrt.pop %v6799
        %v6865 = vrsqrt.pop %v6800
        %v6866 = vrsqrt.pop %v6801
        %v6867 = vrsqrt.pop %v6802
        %v6868 = vrsqrt.pop %v6803
        %v6869 = vrsqrt.pop %v6804
        %v6870 = vrsqrt.pop %v6805
        %v6871 = vrsqrt.pop %v6806
        %v6872 = vrsqrt.pop %v6807
        %v6873 = vrsqrt.pop %v6808
        %v6874 = vrsqrt.pop %v6809
        %v6875 = vrsqrt.pop %v6810
        %v6876 = vrsqrt.pop %v6811
        %v6877 = vrsqrt.pop %v6812
        %v6878 = vrsqrt.pop %v6813
        %v6879 = vrsqrt.pop %v6814
        %v6880 = vrsqrt.pop %v6815
        %v6881 = vrsqrt.pop %v6816
        %v6882 = vrsqrt.pop %v6817
        %v6883 = vrsqrt.pop %v6818
        %v6884 = vrsqrt.pop %v6819
        %v6885 = vrsqrt.pop %v6820
        %v6886 = vrsqrt.pop %v6821
        %v6887 = vrsqrt.pop %v6822
        %v6888 = vrsqrt.pop %v6823
        %v6889 = vrsqrt.pop %v6824
        %v6890 = vrsqrt.pop %v6825
        %v6891 = vrsqrt.pop %v6826
        %v6892 = vrsqrt.pop %v6827
        %v6893 = vrsqrt.pop %v6828
        %v6894 = vrsqrt.pop %v6829
        %v6895 = vrsqrt.pop %v6830
        %v6896 = vrsqrt.pop %v6831
        %v6897 = vsub.f32 %v5859, %v6507
        %v6898 = vsub.f32 %v5864, %v6508
        %v6899 = vsub.f32 %v5869, %v6509
        %v6900 = vsub.f32 %v5874, %v6510
        %v6901 = vsub.f32 %v5879, %v6511
        %v6902 = vsub.f32 %v5884, %v6512
        %v6903 = vsub.f32 %v5889, %v6513
        %v6904 = vsub.f32 %v5894, %v6514
        %v6905 = vsub.f32 %v5899, %v6515
        %v6906 = vsub.f32 %v5904, %v6516
        %v6907 = vsub.f32 %v5909, %v6517
        %v6908 = vsub.f32 %v5914, %v6518
        %v6909 = vsub.f32 %v5919, %v6519
        %v6910 = vsub.f32 %v5924, %v6520
        %v6911 = vsub.f32 %v5929, %v6521
        %v6912 = vsub.f32 %v5934, %v6522
        %v6913 = vsub.f32 %v5939, %v6523
        %v6914 = vsub.f32 %v5944, %v6524
        %v6915 = vsub.f32 %v5949, %v6525
        %v6916 = vsub.f32 %v5954, %v6526
        %v6917 = vsub.f32 %v5959, %v6527
        %v6918 = vsub.f32 %v5964, %v6528
        %v6919 = vsub.f32 %v5969, %v6529
        %v6920 = vsub.f32 %v5974, %v6530
        %v6921 = vsub.f32 %v5979, %v6531
        %v6922 = vsub.f32 %v5984, %v6532
        %v6923 = vsub.f32 %v5989, %v6533
        %v6924 = vsub.f32 %v5994, %v6534
        %v6925 = vsub.f32 %v5999, %v6535
        %v6926 = vsub.f32 %v6004, %v6536
        %v6927 = vsub.f32 %v6009, %v6537
        %v6928 = vsub.f32 %v6014, %v6538
        %v6929 = vsub.f32 %v6019, %v6539
        %v6930 = vsub.f32 %v6024, %v6540
        %v6931 = vsub.f32 %v6029, %v6541
        %v6932 = vsub.f32 %v6034, %v6542
        %v6933 = vsub.f32 %v6039, %v6543
        %v6934 = vsub.f32 %v6044, %v6544
        %v6935 = vsub.f32 %v6049, %v6545
        %v6936 = vsub.f32 %v6054, %v6546
        %v6937 = vsub.f32 %v6059, %v6547
        %v6938 = vsub.f32 %v6064, %v6548
        %v6939 = vsub.f32 %v6069, %v6549
        %v6940 = vsub.f32 %v6074, %v6550
        %v6941 = vsub.f32 %v6079, %v6551
        %v6942 = vsub.f32 %v6084, %v6552
        %v6943 = vsub.f32 %v6089, %v6553
        %v6944 = vsub.f32 %v6094, %v6554
        %v6945 = vsub.f32 %v6099, %v6555
        %v6946 = vsub.f32 %v6104, %v6556
        %v6947 = vsub.f32 %v6109, %v6557
        %v6948 = vsub.f32 %v6114, %v6558
        %v6949 = vsub.f32 %v6119, %v6559
        %v6950 = vsub.f32 %v6124, %v6560
        %v6951 = vsub.f32 %v6129, %v6561
        %v6952 = vsub.f32 %v6134, %v6562
        %v6953 = vsub.f32 %v6139, %v6563
        %v6954 = vsub.f32 %v6144, %v6564
        %v6955 = vsub.f32 %v6149, %v6565
        %v6956 = vsub.f32 %v6154, %v6566
        %v6957 = vsub.f32 %v6159, %v6567
        %v6958 = vsub.f32 %v6164, %v6568
        %v6959 = vsub.f32 %v6169, %v6569
        %v6960 = vsub.f32 %v6174, %v6570
        %v6961 = vsub.f32 %v6179, %v6571
        %v6962 = vmul.f32 %v6897, %v6832
        %v6963 = vmul.f32 %v6898, %v6833
        %v6964 = vmul.f32 %v6899, %v6834
        %v6965 = vmul.f32 %v6900, %v6835
        %v6966 = vmul.f32 %v6901, %v6836
        %v6967 = vmul.f32 %v6902, %v6837
        %v6968 = vmul.f32 %v6903, %v6838
        %v6969 = vmul.f32 %v6904, %v6839
        %v6970 = vmul.f32 %v6905, %v6840
        %v6971 = vmul.f32 %v6906, %v6841
        %v6972 = vmul.f32 %v6907, %v6842
        %v6973 = vmul.f32 %v6908, %v6843
        %v6974 = vmul.f32 %v6909, %v6844
        %v6975 = vmul.f32 %v6910, %v6845
        %v6976 = vmul.f32 %v6911, %v6846
        %v6977 = vmul.f32 %v6912, %v6847
        %v6978 = vmul.f32 %v6913, %v6848
        %v6979 = vmul.f32 %v6914, %v6849
        %v6980 = vmul.f32 %v6915, %v6850
        %v6981 = vmul.f32 %v6916, %v6851
        %v6982 = vmul.f32 %v6917, %v6852
        %v6983 = vmul.f32 %v6918, %v6853
        %v6984 = vmul.f32 %v6919, %v6854
        %v6985 = vmul.f32 %v6920, %v6855
        %v6986 = vmul.f32 %v6921, %v6856
        %v6987 = vmul.f32 %v6922, %v6857
        %v6988 = vmul.f32 %v6923, %v6858
        %v6989 = vmul.f32 %v6924, %v6859
        %v6990 = vmul.f32 %v6925, %v6860
        %v6991 = vmul.f32 %v6926, %v6861
        %v6992 = vmul.f32 %v6927, %v6862
        %v6993 = vmul.f32 %v6928, %v6863
        %v6994 = vmul.f32 %v6929, %v6864
        %v6995 = vmul.f32 %v6930, %v6865
        %v6996 = vmul.f32 %v6931, %v6866
        %v6997 = vmul.f32 %v6932, %v6867
        %v6998 = vmul.f32 %v6933, %v6868
        %v6999 = vmul.f32 %v6934, %v6869
        %v7000 = vmul.f32 %v6935, %v6870
        %v7001 = vmul.f32 %v6936, %v6871
        %v7002 = vmul.f32 %v6937, %v6872
        %v7003 = vmul.f32 %v6938, %v6873
        %v7004 = vmul.f32 %v6939, %v6874
        %v7005 = vmul.f32 %v6940, %v6875
        %v7006 = vmul.f32 %v6941, %v6876
        %v7007 = vmul.f32 %v6942, %v6877
        %v7008 = vmul.f32 %v6943, %v6878
        %v7009 = vmul.f32 %v6944, %v6879
        %v7010 = vmul.f32 %v6945, %v6880
        %v7011 = vmul.f32 %v6946, %v6881
        %v7012 = vmul.f32 %v6947, %v6882
        %v7013 = vmul.f32 %v6948, %v6883
        %v7014 = vmul.f32 %v6949, %v6884
        %v7015 = vmul.f32 %v6950, %v6885
        %v7016 = vmul.f32 %v6951, %v6886
        %v7017 = vmul.f32 %v6952, %v6887
        %v7018 = vmul.f32 %v6953, %v6888
        %v7019 = vmul.f32 %v6954, %v6889
        %v7020 = vmul.f32 %v6955, %v6890
        %v7021 = vmul.f32 %v6956, %v6891
        %v7022 = vmul.f32 %v6957, %v6892
        %v7023 = vmul.f32 %v6958, %v6893
        %v7024 = vmul.f32 %v6959, %v6894
        %v7025 = vmul.f32 %v6960, %v6895
        %v7026 = vmul.f32 %v6961, %v6896
        %v7027 = vld [vmem:[%s3] sm:$0x1]
        %v7029 = vlaneseq
        %v7030 = vshrl.u32 %v7029, 7
        %v7031 = vsub.s32 0, %v7030
        %v7032 = vrot.slane %v7027, %v7031
        %v7034 = vmul.f32 %v6962, %v7032
        %v7035 = vmul.f32 %v6963, %v7032
        %v7036 = vmul.f32 %v6964, %v7032
        %v7037 = vmul.f32 %v6965, %v7032
        %v7038 = vmul.f32 %v6966, %v7032
        %v7039 = vmul.f32 %v6967, %v7032
        %v7040 = vmul.f32 %v6968, %v7032
        %v7041 = vmul.f32 %v6969, %v7032
        %v7042 = vmul.f32 %v6970, %v7032
        %v7043 = vmul.f32 %v6971, %v7032
        %v7044 = vmul.f32 %v6972, %v7032
        %v7045 = vmul.f32 %v6973, %v7032
        %v7046 = vmul.f32 %v6974, %v7032
        %v7047 = vmul.f32 %v6975, %v7032
        %v7048 = vmul.f32 %v6976, %v7032
        %v7049 = vmul.f32 %v6977, %v7032
        %v7050 = vmul.f32 %v6978, %v7032
        %v7051 = vmul.f32 %v6979, %v7032
        %v7052 = vmul.f32 %v6980, %v7032
        %v7053 = vmul.f32 %v6981, %v7032
        %v7054 = vmul.f32 %v6982, %v7032
        %v7055 = vmul.f32 %v6983, %v7032
        %v7056 = vmul.f32 %v6984, %v7032
        %v7057 = vmul.f32 %v6985, %v7032
        %v7058 = vmul.f32 %v6986, %v7032
        %v7059 = vmul.f32 %v6987, %v7032
        %v7060 = vmul.f32 %v6988, %v7032
        %v7061 = vmul.f32 %v6989, %v7032
        %v7062 = vmul.f32 %v6990, %v7032
        %v7063 = vmul.f32 %v6991, %v7032
        %v7064 = vmul.f32 %v6992, %v7032
        %v7065 = vmul.f32 %v6993, %v7032
        %v7066 = vmul.f32 %v6994, %v7032
        %v7067 = vmul.f32 %v6995, %v7032
        %v7068 = vmul.f32 %v6996, %v7032
        %v7069 = vmul.f32 %v6997, %v7032
        %v7070 = vmul.f32 %v6998, %v7032
        %v7071 = vmul.f32 %v6999, %v7032
        %v7072 = vmul.f32 %v7000, %v7032
        %v7073 = vmul.f32 %v7001, %v7032
        %v7074 = vmul.f32 %v7002, %v7032
        %v7075 = vmul.f32 %v7003, %v7032
        %v7076 = vmul.f32 %v7004, %v7032
        %v7077 = vmul.f32 %v7005, %v7032
        %v7078 = vmul.f32 %v7006, %v7032
        %v7079 = vmul.f32 %v7007, %v7032
        %v7080 = vmul.f32 %v7008, %v7032
        %v7081 = vmul.f32 %v7009, %v7032
        %v7082 = vmul.f32 %v7010, %v7032
        %v7083 = vmul.f32 %v7011, %v7032
        %v7084 = vmul.f32 %v7012, %v7032
        %v7085 = vmul.f32 %v7013, %v7032
        %v7086 = vmul.f32 %v7014, %v7032
        %v7087 = vmul.f32 %v7015, %v7032
        %v7088 = vmul.f32 %v7016, %v7032
        %v7089 = vmul.f32 %v7017, %v7032
        %v7090 = vmul.f32 %v7018, %v7032
        %v7091 = vmul.f32 %v7019, %v7032
        %v7092 = vmul.f32 %v7020, %v7032
        %v7093 = vmul.f32 %v7021, %v7032
        %v7094 = vmul.f32 %v7022, %v7032
        %v7095 = vmul.f32 %v7023, %v7032
        %v7096 = vmul.f32 %v7024, %v7032
        %v7097 = vmul.f32 %v7025, %v7032
        %v7098 = vmul.f32 %v7026, %v7032
        %v7099 = vld [vmem:[%s4] sm:$0x1]
        %v7101 = vlaneseq
        %v7102 = vshrl.u32 %v7101, 7
        %v7103 = vsub.s32 0, %v7102
        %v7104 = vrot.slane %v7099, %v7103
        %v7106 = vadd.f32 %v7034, %v7104
        %v7107 = vadd.f32 %v7035, %v7104
        %v7108 = vadd.f32 %v7036, %v7104
        %v7109 = vadd.f32 %v7037, %v7104
        %v7110 = vadd.f32 %v7038, %v7104
        %v7111 = vadd.f32 %v7039, %v7104
        %v7112 = vadd.f32 %v7040, %v7104
        %v7113 = vadd.f32 %v7041, %v7104
        %v7114 = vadd.f32 %v7042, %v7104
        %v7115 = vadd.f32 %v7043, %v7104
        %v7116 = vadd.f32 %v7044, %v7104
        %v7117 = vadd.f32 %v7045, %v7104
        %v7118 = vadd.f32 %v7046, %v7104
        %v7119 = vadd.f32 %v7047, %v7104
        %v7120 = vadd.f32 %v7048, %v7104
        %v7121 = vadd.f32 %v7049, %v7104
        %v7122 = vadd.f32 %v7050, %v7104
        %v7123 = vadd.f32 %v7051, %v7104
        %v7124 = vadd.f32 %v7052, %v7104
        %v7125 = vadd.f32 %v7053, %v7104
        %v7126 = vadd.f32 %v7054, %v7104
        %v7127 = vadd.f32 %v7055, %v7104
        %v7128 = vadd.f32 %v7056, %v7104
        %v7129 = vadd.f32 %v7057, %v7104
        %v7130 = vadd.f32 %v7058, %v7104
        %v7131 = vadd.f32 %v7059, %v7104
        %v7132 = vadd.f32 %v7060, %v7104
        %v7133 = vadd.f32 %v7061, %v7104
        %v7134 = vadd.f32 %v7062, %v7104
        %v7135 = vadd.f32 %v7063, %v7104
        %v7136 = vadd.f32 %v7064, %v7104
        %v7137 = vadd.f32 %v7065, %v7104
        %v7138 = vadd.f32 %v7066, %v7104
        %v7139 = vadd.f32 %v7067, %v7104
        %v7140 = vadd.f32 %v7068, %v7104
        %v7141 = vadd.f32 %v7069, %v7104
        %v7142 = vadd.f32 %v7070, %v7104
        %v7143 = vadd.f32 %v7071, %v7104
        %v7144 = vadd.f32 %v7072, %v7104
        %v7145 = vadd.f32 %v7073, %v7104
        %v7146 = vadd.f32 %v7074, %v7104
        %v7147 = vadd.f32 %v7075, %v7104
        %v7148 = vadd.f32 %v7076, %v7104
        %v7149 = vadd.f32 %v7077, %v7104
        %v7150 = vadd.f32 %v7078, %v7104
        %v7151 = vadd.f32 %v7079, %v7104
        %v7152 = vadd.f32 %v7080, %v7104
        %v7153 = vadd.f32 %v7081, %v7104
        %v7154 = vadd.f32 %v7082, %v7104
        %v7155 = vadd.f32 %v7083, %v7104
        %v7156 = vadd.f32 %v7084, %v7104
        %v7157 = vadd.f32 %v7085, %v7104
        %v7158 = vadd.f32 %v7086, %v7104
        %v7159 = vadd.f32 %v7087, %v7104
        %v7160 = vadd.f32 %v7088, %v7104
        %v7161 = vadd.f32 %v7089, %v7104
        %v7162 = vadd.f32 %v7090, %v7104
        %v7163 = vadd.f32 %v7091, %v7104
        %v7164 = vadd.f32 %v7092, %v7104
        %v7165 = vadd.f32 %v7093, %v7104
        %v7166 = vadd.f32 %v7094, %v7104
        %v7167 = vadd.f32 %v7095, %v7104
        %v7168 = vadd.f32 %v7096, %v7104
        %v7169 = vadd.f32 %v7097, %v7104
        %v7170 = vadd.f32 %v7098, %v7104
        %7171 = vst [vmem:[%s234] sm:$0xff] %v7106
        %7172 = vst [vmem:[%s234 + $0x8] sm:$0xff] %v7107
        %7173 = vst [vmem:[%s234 + $0x10] sm:$0xff] %v7108
        %7174 = vst [vmem:[%s234 + $0x18] sm:$0xff] %v7109
        %7175 = vst [vmem:[%s234 + $0x20] sm:$0xff] %v7110
        %7176 = vst [vmem:[%s234 + $0x28] sm:$0xff] %v7111
        %7177 = vst [vmem:[%s234 + $0x30] sm:$0xff] %v7112
        %7178 = vst [vmem:[%s234 + $0x38] sm:$0xff] %v7113
        %7179 = vst [vmem:[%s234 + $0x40] sm:$0xff] %v7114
        %7180 = vst [vmem:[%s234 + $0x48] sm:$0xff] %v7115
        %7181 = vst [vmem:[%s234 + $0x50] sm:$0xff] %v7116
        %7182 = vst [vmem:[%s234 + $0x58] sm:$0xff] %v7117
        %7183 = vst [vmem:[%s234 + $0x60] sm:$0xff] %v7118
        %7184 = vst [vmem:[%s234 + $0x68] sm:$0xff] %v7119
        %7185 = vst [vmem:[%s234 + $0x70] sm:$0xff] %v7120
        %7186 = vst [vmem:[%s234 + $0x78] sm:$0xff] %v7121
        %7187 = vst [vmem:[%s234 + $0x80] sm:$0xff] %v7122
        %7188 = vst [vmem:[%s234 + $0x88] sm:$0xff] %v7123
        %7189 = vst [vmem:[%s234 + $0x90] sm:$0xff] %v7124
        %7190 = vst [vmem:[%s234 + $0x98] sm:$0xff] %v7125
        %7191 = vst [vmem:[%s234 + $0xa0] sm:$0xff] %v7126
        %7192 = vst [vmem:[%s234 + $0xa8] sm:$0xff] %v7127
        %7193 = vst [vmem:[%s234 + $0xb0] sm:$0xff] %v7128
        %7194 = vst [vmem:[%s234 + $0xb8] sm:$0xff] %v7129
        %7195 = vst [vmem:[%s234 + $0xc0] sm:$0xff] %v7130
        %7196 = vst [vmem:[%s234 + $0xc8] sm:$0xff] %v7131
        %7197 = vst [vmem:[%s234 + $0xd0] sm:$0xff] %v7132
        %7198 = vst [vmem:[%s234 + $0xd8] sm:$0xff] %v7133
        %7199 = vst [vmem:[%s234 + $0xe0] sm:$0xff] %v7134
        %7200 = vst [vmem:[%s234 + $0xe8] sm:$0xff] %v7135
        %7201 = vst [vmem:[%s234 + $0xf0] sm:$0xff] %v7136
        %7202 = vst [vmem:[%s234 + $0xf8] sm:$0xff] %v7137
        %7203 = vst [vmem:[%s234 + $0x100] sm:$0xff] %v7138
        %7204 = vst [vmem:[%s234 + $0x108] sm:$0xff] %v7139
        %7205 = vst [vmem:[%s234 + $0x110] sm:$0xff] %v7140
        %7206 = vst [vmem:[%s234 + $0x118] sm:$0xff] %v7141
        %7207 = vst [vmem:[%s234 + $0x120] sm:$0xff] %v7142
        %7208 = vst [vmem:[%s234 + $0x128] sm:$0xff] %v7143
        %7209 = vst [vmem:[%s234 + $0x130] sm:$0xff] %v7144
        %7210 = vst [vmem:[%s234 + $0x138] sm:$0xff] %v7145
        %7211 = vst [vmem:[%s234 + $0x140] sm:$0xff] %v7146
        %7212 = vst [vmem:[%s234 + $0x148] sm:$0xff] %v7147
        %7213 = vst [vmem:[%s234 + $0x150] sm:$0xff] %v7148
        %7214 = vst [vmem:[%s234 + $0x158] sm:$0xff] %v7149
        %7215 = vst [vmem:[%s234 + $0x160] sm:$0xff] %v7150
        %7216 = vst [vmem:[%s234 + $0x168] sm:$0xff] %v7151
        %7217 = vst [vmem:[%s234 + $0x170] sm:$0xff] %v7152
        %7218 = vst [vmem:[%s234 + $0x178] sm:$0xff] %v7153
        %7219 = vst [vmem:[%s234 + $0x180] sm:$0xff] %v7154
        %7220 = vst [vmem:[%s234 + $0x188] sm:$0xff] %v7155
        %7221 = vst [vmem:[%s234 + $0x190] sm:$0xff] %v7156
        %7222 = vst [vmem:[%s234 + $0x198] sm:$0xff] %v7157
        %7223 = vst [vmem:[%s234 + $0x1a0] sm:$0xff] %v7158
        %7224 = vst [vmem:[%s234 + $0x1a8] sm:$0xff] %v7159
        %7225 = vst [vmem:[%s234 + $0x1b0] sm:$0xff] %v7160
        %7226 = vst [vmem:[%s234 + $0x1b8] sm:$0xff] %v7161
        %7227 = vst [vmem:[%s234 + $0x1c0] sm:$0xff] %v7162
        %7228 = vst [vmem:[%s234 + $0x1c8] sm:$0xff] %v7163
        %7229 = vst [vmem:[%s234 + $0x1d0] sm:$0xff] %v7164
        %7230 = vst [vmem:[%s234 + $0x1d8] sm:$0xff] %v7165
        %7231 = vst [vmem:[%s234 + $0x1e0] sm:$0xff] %v7166
        %7232 = vst [vmem:[%s234 + $0x1e8] sm:$0xff] %v7167
        %7233 = vst [vmem:[%s234 + $0x1f0] sm:$0xff] %v7168
        %7234 = vst [vmem:[%s234 + $0x1f8] sm:$0xff] %v7169
        %7235 = vst [vmem:[%s234 + $0x200] sm:$0xff] %v7170
        %s7236 = sand.u32 %s142, 1
        %s7237 = scalar_lea.sflag [#allocation3], %s7236
        %s7238 = sand.u32 %s142, 1
        %s7239 = smul.addr %s7238, 520
        %s7240 = scalar_lea.vmem [#allocation2], %s7239
        // Predicated region
        $region41: #{tpu_custom_call.1} parent=39 // pred_check
          %p7241 = pneg %p152
        $region42: #{tpu_custom_call.1} parent=39 // pred_check_branch
          %7243 = sbr.rel (%p7241) target = $region44
        $region43: #{tpu_custom_call.1} parent=39 // pred_region
          %s7244 = smul.u32 65, %s19
          %s7246 = ssub.s32 8320, 8320
          %7247 = vsyncadd %s7237, %s7246
          %s7248 = smul.addr %s7244, 128
          %s7249 = scalar_lea.hbm %s5, %s7248
          %s7250 = sshll.u32 %s7240, 4
          %s7251 = int_to_ptr.vmem [resolvable:$true] %s7250
          %7256 = dma.vmem_to_hbm [thread:$0]  %s7251, 8320, %s7249, %s7237, 128, 128, 8
        $region44: #{tpu_custom_call.1} parent=39 // pred_fallthru
          _
      $region40: #{tpu_custom_call.1} parent=5 // pred_fallthru
        _
      %p7257 = scmp.le.s32.totalorder 2, %s14
      // Predicated region
      $region45: #{tpu_custom_call.1} parent=5 // pred_check
        %p7258 = pneg %p7257
      $region46: #{tpu_custom_call.1} parent=5 // pred_check_branch
        %7260 = sbr.rel (%p7258) target = $region48
      $region47: #{tpu_custom_call.1} parent=5 // pred_region
        %s7261 = ssub.s32 %s14, 2
        // Predicated region
        $region49: #{tpu_custom_call.1} parent=47 // pred_check
          %p7262 = pneg %p158
        $region50: #{tpu_custom_call.1} parent=47 // pred_check_branch
          %7264 = sbr.rel (%p7262) target = $region52
        $region51: #{tpu_custom_call.1} parent=47 // pred_region
          %s7265 = sand.u32 %s143, 1
          %s7266 = scalar_lea.sflag [#allocation3], %s7265
          %s7267 = sand.u32 %s143, 1
          %s7268 = smul.addr %s7267, 520
          %s7269 = scalar_lea.vmem [#allocation2], %s7268
          %7270 = dma.done %s7266, 8320
        $region52: #{tpu_custom_call.1} parent=47 // pred_fallthru
          _
      $region48: #{tpu_custom_call.1} parent=5 // pred_fallthru
        _
    $region6: #{tpu_custom_call.1} parent=1 // loop_footer
      %s18 = sadd.s32 1, %s14
    $region7: #{tpu_custom_call.1} parent=1 // loop_footer_branch
      %13 = sbr.rel target = $region3
    $region8: #{tpu_custom_call.1} parent=1 // loop_exit
      _
    %7271 = vsyncpa [#allocation3], 1
    %s7272 = scalar_lea.sflag [#allocation3], 1
    %7273 = vsyncpa %s7272, 1

</llo_original>
